<compile_context>
chip_gen: v5e
topology: v5e:2x2
jax: 0.10.0
libtpu: 0.0.40
codegen_flags: <defaults>
</compile_context>

<pallas_src>
import numpy as np
import jax
import jax.numpy as jnp
from jax.experimental import pallas as pl
from jax.experimental.pallas import tpu as pltpu


_B_TILE = 8  # samples per grid step (review: 8 for v6e/v7x, 4-8 for v5e)


# ----------------------------------------------------------------------------
# Fused forward kernel: B_TILE samples per grid step, everything in VMEM.
# ----------------------------------------------------------------------------
def _make_fused_kernel(b_tile):
    def kernel(x_ref,
               cb1, bc1, cb2, bc2, cb3, bc3,
               r1e, r1o, c1e, c1o,
               r2e, r2o, c2e, c2o,
               r3e, r3o, c3e, c3o,
               wfc1, bfc1, wfc2, bfc2,
               out_ref):
        def dot(a, b):
            # bf16 MXU operands, f32 accumulation.
            return jnp.dot(a.astype(jnp.bfloat16), b,
                           preferred_element_type=jnp.float32)

        # ---- hoist all constant loads out of the per-sample unroll --------
        cb1_0, cb1_1, cb1_2 = cb1[0], cb1[1], cb1[2]
        cb2_0, cb2_1, cb2_2 = cb2[0], cb2[1], cb2[2]
        cb3_0, cb3_1, cb3_2 = cb3[0], cb3[1], cb3[2]
        b1, b2, b3 = bc1[...], bc2[...], bc3[...]
        r1e_v, r1o_v, c1e_v, c1o_v = r1e[...], r1o[...], c1e[...], c1o[...]
        r2e_v, r2o_v, c2e_v, c2o_v = r2e[...], r2o[...], c2e[...], c2o[...]
        r3e_v, r3o_v, c3e_v, c3o_v = r3e[...], r3o[...], c3e[...], c3o[...]
        w1a = wfc1[0:96, :]
        w1b = wfc1[96:192, :]
        w1c = wfc1[192:288, :]
        bf1 = bfc1[...]
        w2 = wfc2[...]
        bf2 = bfc2[...]

        def conv_relu(xp, cb0, cbm, cb2_, brow, h_out):
            # xp: (H+2, (W+2)*Cin) padded activation; cb*: ((W+2)*Cin, W*Cout)
            y = brow + dot(xp[0:h_out, :], cb0)
            y = y + dot(xp[1:h_out + 1, :], cbm)
            y = y + dot(xp[2:h_out + 2, :], cb2_)
            return jnp.maximum(y, 0.0)

        def pool(xr, re, ro, ce, co):
            # 2x2/stride-2 max pool: column-max first, then row selection.
            # The 0/1 selectors also insert the next conv's zero-padding ring.
            colmax = jnp.maximum(dot(xr, ce), dot(xr, co))
            return jnp.maximum(dot(re, colmax), dot(ro, colmax))

        rows = []
        for s in range(b_tile):                          # independent samples
            xp1 = x_ref[s]                               # (26, 26)  padded 24x24x1
            a1 = conv_relu(xp1, cb1_0, cb1_1, cb1_2, b1, 24)   # (24, 192)
            xp2 = pool(a1, r1e_v, r1o_v, c1e_v, c1o_v)   # (14, 112) padded 12x12x8
            a2 = conv_relu(xp2, cb2_0, cb2_1, cb2_2, b2, 12)   # (12, 192)
            xp3 = pool(a2, r2e_v, r2o_v, c2e_v, c2o_v)   # (8, 128)  padded 6x6x16
            a3 = conv_relu(xp3, cb3_0, cb3_1, cb3_2, b3, 6)    # (6, 192)
            feat = pool(a3, r3e_v, r3o_v, c3e_v, c3o_v)  # (3, 96) = 3 x (3*32)

            # fc1 (288 -> 64): contract the (3, 96) feature tile row-block by
            # row-block against the pre-permuted weight (NCHW flatten folded).
            h = bf1 + dot(feat[0:1, :], w1a)
            h = h + dot(feat[1:2, :], w1b)
            h = h + dot(feat[2:3, :], w1c)
            h = jnp.maximum(h, 0.0)

            rows.append(dot(h, w2) + bf2)                # (1, 128) lane-dense

        # One dense (B_TILE, 128) store per grid step.
        out_ref[...] = jnp.concatenate(rows, axis=0)

    return kernel


# ----------------------------------------------------------------------------
# One-time (outside-jit) parameter preparation.
# ----------------------------------------------------------------------------
def _conv_band(w_pt, width):
    """3x3 pad-1 conv as 3 banded matrices acting on (H+2, (W+2)*Cin) rows."""
    w = np.asarray(w_pt, np.float32)                    # (Cout, Cin, 3, 3)
    cout, cin = w.shape[0], w.shape[1]
    wt = np.transpose(w, (2, 3, 1, 0))                  # (3, 3, Cin, Cout)
    band = np.zeros((3, (width + 2) * cin, width * cout), np.float32)
    for di in range(3):
        for x in range(width):
            for dj in range(3):
                band[di,
                     (x + dj) * cin:(x + dj + 1) * cin,
                     x * cout:(x + 1) * cout] = wt[di, dj]
    return band


def _pool_mats(h, w, c, pad_next):
    """0/1 selectors implementing 2x2/2 max pool on a (H, W*C) tile.

    Row selectors pick even/odd image rows, column selectors pick even/odd
    image columns; when pad_next is True they also insert the next conv's
    zero-padding ring ((H/2+2, (W/2+2)*C) output), otherwise (H/2, (W/2)*C).
    """
    ho, wo = h // 2, w // 2
    hn, wn = (ho + 2, wo + 2) if pad_next else (ho, wo)
    off = 1 if pad_next else 0
    re = np.zeros((hn, h), np.float32)
    ro = np.zeros((hn, h), np.float32)
    for i in range(ho):
        re[off + i, 2 * i] = 1.0
        ro[off + i, 2 * i + 1] = 1.0
    ce = np.zeros((w * c, wn * c), np.float32)
    co = np.zeros((w * c, wn * c), np.float32)
    for j in range(wo):
        for ch in range(c):
            ce[(2 * j) * c + ch, (off + j) * c + ch] = 1.0
            co[(2 * j + 1) * c + ch, (off + j) * c + ch] = 1.0
    return re, ro, ce, co


def prepare_params(params):
    """Build all kernel constants once.  Large matrices -> bf16 (halves VMEM
    and guarantees single-pass bf16 MXU input), biases stay f32."""
    bf = jnp.bfloat16
    p = {}
    p["cb1"] = jnp.asarray(_conv_band(params["conv1_w"], 24), bf)   # (3, 26, 192)
    p["cb2"] = jnp.asarray(_conv_band(params["conv2_w"], 12), bf)   # (3, 112, 192)
    p["cb3"] = jnp.asarray(_conv_band(params["conv3_w"], 6), bf)    # (3, 128, 192)
    p["bc1"] = jnp.asarray(np.tile(np.asarray(params["conv1_b"], np.float32), 24)[None, :])
    p["bc2"] = jnp.asarray(np.tile(np.asarray(params["conv2_b"], np.float32), 12)[None, :])
    p["bc3"] = jnp.asarray(np.tile(np.asarray(params["conv3_b"], np.float32), 6)[None, :])
    stage_cfg = [(1, 24, 24, 8, True), (2, 12, 12, 16, True), (3, 6, 6, 32, False)]
    for idx, hh, ww, cc, padn in stage_cfg:
        re, ro, ce, co = _pool_mats(hh, ww, cc, padn)
        p[f"r{idx}e"], p[f"r{idx}o"] = jnp.asarray(re, bf), jnp.asarray(ro, bf)
        p[f"c{idx}e"], p[f"c{idx}o"] = jnp.asarray(ce, bf), jnp.asarray(co, bf)
    # fc1 consumes PyTorch's NCHW flatten (c*9 + h*3 + w); our feature tile is
    # indexed (h, w*32 + c), so permute the 288 input rows once here.
    w1 = np.asarray(params["fc1_w"], np.float32).reshape(64, 32, 3, 3)
    p["wfc1"] = jnp.asarray(np.transpose(w1, (2, 3, 1, 0)).reshape(288, 64), bf)
    p["bfc1"] = jnp.asarray(np.asarray(params["fc1_b"], np.float32)[None, :])
    # fc2 padded to 128 lanes for a dense, unmasked output store.
    w2 = np.zeros((64, 128), np.float32)
    w2[:, :10] = np.asarray(params["fc2_w"], np.float32).T
    b2 = np.zeros((1, 128), np.float32)
    b2[0, :10] = np.asarray(params["fc2_b"], np.float32)
    p["wfc2"] = jnp.asarray(w2, bf)
    p["bfc2"] = jnp.asarray(b2)
    return p


# ----------------------------------------------------------------------------
# Forward pass (single pallas_call, grid over batch tiles of B_TILE samples).
# ----------------------------------------------------------------------------
_ARG_ORDER = ("cb1", "bc1", "cb2", "bc2", "cb3", "bc3",
              "r1e", "r1o", "c1e", "c1o",
              "r2e", "r2o", "c2e", "c2o",
              "r3e", "r3o", "c3e", "c3o",
              "wfc1", "bfc1", "wfc2", "bfc2")


def _full_spec(shape):
    zeros = (0,) * len(shape)
    return pl.BlockSpec(shape, lambda b: zeros)


@jax.jit
def from_scratch_forward(x_nchw, prep):
    b = x_nchw.shape[0]
    x = x_nchw.astype(jnp.float32).reshape(b, 24, 24)        # NCHW, C=1 -> drop
    xpad = jnp.pad(x, ((0, 0), (1, 1), (1, 1)))              # (B, 26, 26)

    bt = _B_TILE
    b_pad = ((b + bt - 1) // bt) * bt
    if b_pad != b:
        xpad = jnp.pad(xpad, ((0, b_pad - b), (0, 0), (0, 0)))

    consts = tuple(prep[k] for k in _ARG_ORDER)
    in_specs = [pl.BlockSpec((bt, 26, 26), lambda i: (i, 0, 0))]
    in_specs += [_full_spec(a.shape) for a in consts]

    out = pl.pallas_call(
        _make_fused_kernel(bt),
        out_shape=jax.ShapeDtypeStruct((b_pad, 128), jnp.float32),
        grid=(b_pad // bt,),
        in_specs=in_specs,
        out_specs=pl.BlockSpec((bt, 128), lambda i: (i, 0)),
        compiler_params=pltpu.CompilerParams(
            dimension_semantics=("parallel",)),   # splits across v7x's 2 TCs
    )(xpad, *consts)
    return out[:b, :10]


# ----------------------------------------------------------------------------
# Deterministic synthetic parameters (PyTorch layouts) and a pure-JAX reference.
# ----------------------------------------------------------------------------
def init_params(key):
    ks = jax.random.split(key, 10)

    def u(k, shape, scale):
        return jax.random.uniform(k, shape, jnp.float32, -scale, scale)

    return {
        "conv1_w": u(ks[0], (8, 1, 3, 3), 1.0 / (1 * 9) ** 0.5),
        "conv1_b": u(ks[1], (8,), 1.0 / (1 * 9) ** 0.5),
        "conv2_w": u(ks[2], (16, 8, 3, 3), 1.0 / (8 * 9) ** 0.5),
        "conv2_b": u(ks[3], (16,), 1.0 / (8 * 9) ** 0.5),
        "conv3_w": u(ks[4], (32, 16, 3, 3), 1.0 / (16 * 9) ** 0.5),
        "conv3_b": u(ks[5], (32,), 1.0 / (16 * 9) ** 0.5),
        "fc1_w": u(ks[6], (64, 288), 1.0 / 288 ** 0.5),
        "fc1_b": u(ks[7], (64,), 1.0 / 288 ** 0.5),
        "fc2_w": u(ks[8], (10, 64), 1.0 / 64 ** 0.5),
        "fc2_b": u(ks[9], (10,), 1.0 / 64 ** 0.5),
    }


def _reference_forward(x_nchw, params):
    def conv(x, w, bias):
        y = jax.lax.conv_general_dilated(
            x, w, window_strides=(1, 1), padding=((1, 1), (1, 1)),
            dimension_numbers=("NCHW", "OIHW", "NCHW"))
        return jax.nn.relu(y + bias.reshape(1, -1, 1, 1))

    def pool(x):
        return jax.lax.reduce_window(x, -jnp.inf, jax.lax.max,
                                     (1, 1, 2, 2), (1, 1, 2, 2), "VALID")

    x = pool(conv(x_nchw, params["conv1_w"], params["conv1_b"]))
    x = pool(conv(x, params["conv2_w"], params["conv2_b"]))
    x = pool(conv(x, params["conv3_w"], params["conv3_b"]))
    x = x.reshape(x.shape[0], -1)
    x = jax.nn.relu(x @ params["fc1_w"].T + params["fc1_b"])
    return x @ params["fc2_w"].T + params["fc2_b"]


if __name__ == "__main__":
    key = jax.random.PRNGKey(0)
    k_in, k_params = jax.random.split(key)

    # fc1 expects 32*3*3 features -> 24x24 single-channel input (NCHW).
    x = jax.random.normal(k_in, (2, 1, 24, 24), dtype=jnp.float32)
    params = init_params(k_params)
    prep = prepare_params(params)

    out = jax.block_until_ready(from_scratch_forward(x, prep))
    assert out.shape == (2, 10), out.shape

    ref = jax.block_until_ready(_reference_forward(x, params))
    # Tolerance accounts for bf16 MXU operands (weights + activations); the
    # f32 reference uses full-precision convolutions.
    np.testing.assert_allclose(np.asarray(out), np.asarray(ref),
                               rtol=4e-2, atol=4e-2)
    print("KERNEL_OK")
</pallas_src>

<mosaic_0001>
module attributes {stable_mosaic.version = 11 : i64} {
  func.func @kernel(%arg0: i32, %arg1: memref<8x26x26xf32, #tpu.memory_space<vmem>>, %arg2: memref<3x26x192xbf16, #tpu.memory_space<vmem>>, %arg3: memref<1x192xf32, #tpu.memory_space<vmem>>, %arg4: memref<3x112x192xbf16, #tpu.memory_space<vmem>>, %arg5: memref<1x192xf32, #tpu.memory_space<vmem>>, %arg6: memref<3x128x192xbf16, #tpu.memory_space<vmem>>, %arg7: memref<1x192xf32, #tpu.memory_space<vmem>>, %arg8: memref<14x24xbf16, #tpu.memory_space<vmem>>, %arg9: memref<14x24xbf16, #tpu.memory_space<vmem>>, %arg10: memref<192x112xbf16, #tpu.memory_space<vmem>>, %arg11: memref<192x112xbf16, #tpu.memory_space<vmem>>, %arg12: memref<8x12xbf16, #tpu.memory_space<vmem>>, %arg13: memref<8x12xbf16, #tpu.memory_space<vmem>>, %arg14: memref<192x128xbf16, #tpu.memory_space<vmem>>, %arg15: memref<192x128xbf16, #tpu.memory_space<vmem>>, %arg16: memref<3x6xbf16, #tpu.memory_space<vmem>>, %arg17: memref<3x6xbf16, #tpu.memory_space<vmem>>, %arg18: memref<192x96xbf16, #tpu.memory_space<vmem>>, %arg19: memref<192x96xbf16, #tpu.memory_space<vmem>>, %arg20: memref<288x64xbf16, #tpu.memory_space<vmem>>, %arg21: memref<1x64xf32, #tpu.memory_space<vmem>>, %arg22: memref<64x128xbf16, #tpu.memory_space<vmem>>, %arg23: memref<1x128xf32, #tpu.memory_space<vmem>>, %arg24: memref<8x128xf32, #tpu.memory_space<vmem>>) attributes {dimension_semantics = [#tpu.dimension_semantics<parallel>], iteration_bounds = array<i64: 1>, scalar_prefetch = 0 : i64, scratch_operands = 0 : i64, tpu.core_type = #tpu.core_type<tc>, window_params = [{transform_indices = @transform_0, window_bounds = array<i64: 8, 26, 26>}, {pipeline_mode = #tpu.pipeline_mode<synchronous>, transform_indices = @transform_1, window_bounds = array<i64: 3, 26, 192>}, {pipeline_mode = #tpu.pipeline_mode<synchronous>, transform_indices = @transform_2, window_bounds = array<i64: 1, 192>}, {pipeline_mode = #tpu.pipeline_mode<synchronous>, transform_indices = @transform_3, window_bounds = array<i64: 3, 112, 192>}, {pipeline_mode = #tpu.pipeline_mode<synchronous>, transform_indices = @transform_4, window_bounds = array<i64: 1, 192>}, {pipeline_mode = #tpu.pipeline_mode<synchronous>, transform_indices = @transform_5, window_bounds = array<i64: 3, 128, 192>}, {pipeline_mode = #tpu.pipeline_mode<synchronous>, transform_indices = @transform_6, window_bounds = array<i64: 1, 192>}, {pipeline_mode = #tpu.pipeline_mode<synchronous>, transform_indices = @transform_7, window_bounds = array<i64: 14, 24>}, {pipeline_mode = #tpu.pipeline_mode<synchronous>, transform_indices = @transform_8, window_bounds = array<i64: 14, 24>}, {pipeline_mode = #tpu.pipeline_mode<synchronous>, transform_indices = @transform_9, window_bounds = array<i64: 192, 112>}, {pipeline_mode = #tpu.pipeline_mode<synchronous>, transform_indices = @transform_10, window_bounds = array<i64: 192, 112>}, {pipeline_mode = #tpu.pipeline_mode<synchronous>, transform_indices = @transform_11, window_bounds = array<i64: 8, 12>}, {pipeline_mode = #tpu.pipeline_mode<synchronous>, transform_indices = @transform_12, window_bounds = array<i64: 8, 12>}, {pipeline_mode = #tpu.pipeline_mode<synchronous>, transform_indices = @transform_13, window_bounds = array<i64: 192, 128>}, {pipeline_mode = #tpu.pipeline_mode<synchronous>, transform_indices = @transform_14, window_bounds = array<i64: 192, 128>}, {pipeline_mode = #tpu.pipeline_mode<synchronous>, transform_indices = @transform_15, window_bounds = array<i64: 3, 6>}, {pipeline_mode = #tpu.pipeline_mode<synchronous>, transform_indices = @transform_16, window_bounds = array<i64: 3, 6>}, {pipeline_mode = #tpu.pipeline_mode<synchronous>, transform_indices = @transform_17, window_bounds = array<i64: 192, 96>}, {pipeline_mode = #tpu.pipeline_mode<synchronous>, transform_indices = @transform_18, window_bounds = array<i64: 192, 96>}, {pipeline_mode = #tpu.pipeline_mode<synchronous>, transform_indices = @transform_19, window_bounds = array<i64: 288, 64>}, {pipeline_mode = #tpu.pipeline_mode<synchronous>, transform_indices = @transform_20, window_bounds = array<i64: 1, 64>}, {pipeline_mode = #tpu.pipeline_mode<synchronous>, transform_indices = @transform_21, window_bounds = array<i64: 64, 128>}, {pipeline_mode = #tpu.pipeline_mode<synchronous>, transform_indices = @transform_22, window_bounds = array<i64: 1, 128>}, {transform_indices = @transform_23, window_bounds = array<i64: 8, 128>}]} {
    %c0 = arith.constant 0 : index
    %c0_0 = arith.constant 0 : index
    %c0_1 = arith.constant 0 : index
    %0 = vector.load %arg2[%c0, %c0_0, %c0_1] : memref<3x26x192xbf16, #tpu.memory_space<vmem>>, vector<1x26x192xbf16>
    %1 = vector.shape_cast %0 : vector<1x26x192xbf16> to vector<26x192xbf16>
    %c1 = arith.constant 1 : index
    %c0_2 = arith.constant 0 : index
    %c0_3 = arith.constant 0 : index
    %2 = vector.load %arg2[%c1, %c0_2, %c0_3] : memref<3x26x192xbf16, #tpu.memory_space<vmem>>, vector<1x26x192xbf16>
    %3 = vector.shape_cast %2 : vector<1x26x192xbf16> to vector<26x192xbf16>
    %c2 = arith.constant 2 : index
    %c0_4 = arith.constant 0 : index
    %c0_5 = arith.constant 0 : index
    %4 = vector.load %arg2[%c2, %c0_4, %c0_5] : memref<3x26x192xbf16, #tpu.memory_space<vmem>>, vector<1x26x192xbf16>
    %5 = vector.shape_cast %4 : vector<1x26x192xbf16> to vector<26x192xbf16>
    %c0_6 = arith.constant 0 : index
    %c0_7 = arith.constant 0 : index
    %c0_8 = arith.constant 0 : index
    %6 = vector.load %arg4[%c0_6, %c0_7, %c0_8] : memref<3x112x192xbf16, #tpu.memory_space<vmem>>, vector<1x112x192xbf16>
    %7 = vector.shape_cast %6 : vector<1x112x192xbf16> to vector<112x192xbf16>
    %c1_9 = arith.constant 1 : index
    %c0_10 = arith.constant 0 : index
    %c0_11 = arith.constant 0 : index
    %8 = vector.load %arg4[%c1_9, %c0_10, %c0_11] : memref<3x112x192xbf16, #tpu.memory_space<vmem>>, vector<1x112x192xbf16>
    %9 = vector.shape_cast %8 : vector<1x112x192xbf16> to vector<112x192xbf16>
    %c2_12 = arith.constant 2 : index
    %c0_13 = arith.constant 0 : index
    %c0_14 = arith.constant 0 : index
    %10 = vector.load %arg4[%c2_12, %c0_13, %c0_14] : memref<3x112x192xbf16, #tpu.memory_space<vmem>>, vector<1x112x192xbf16>
    %11 = vector.shape_cast %10 : vector<1x112x192xbf16> to vector<112x192xbf16>
    %c0_15 = arith.constant 0 : index
    %c0_16 = arith.constant 0 : index
    %c0_17 = arith.constant 0 : index
    %12 = vector.load %arg6[%c0_15, %c0_16, %c0_17] : memref<3x128x192xbf16, #tpu.memory_space<vmem>>, vector<1x128x192xbf16>
    %13 = vector.shape_cast %12 : vector<1x128x192xbf16> to vector<128x192xbf16>
    %c1_18 = arith.constant 1 : index
    %c0_19 = arith.constant 0 : index
    %c0_20 = arith.constant 0 : index
    %14 = vector.load %arg6[%c1_18, %c0_19, %c0_20] : memref<3x128x192xbf16, #tpu.memory_space<vmem>>, vector<1x128x192xbf16>
    %15 = vector.shape_cast %14 : vector<1x128x192xbf16> to vector<128x192xbf16>
    %c2_21 = arith.constant 2 : index
    %c0_22 = arith.constant 0 : index
    %c0_23 = arith.constant 0 : index
    %16 = vector.load %arg6[%c2_21, %c0_22, %c0_23] : memref<3x128x192xbf16, #tpu.memory_space<vmem>>, vector<1x128x192xbf16>
    %17 = vector.shape_cast %16 : vector<1x128x192xbf16> to vector<128x192xbf16>
    %c0_24 = arith.constant 0 : index
    %c0_25 = arith.constant 0 : index
    %18 = vector.load %arg3[%c0_24, %c0_25] : memref<1x192xf32, #tpu.memory_space<vmem>>, vector<1x192xf32>
    %c0_26 = arith.constant 0 : index
    %c0_27 = arith.constant 0 : index
    %19 = vector.load %arg5[%c0_26, %c0_27] : memref<1x192xf32, #tpu.memory_space<vmem>>, vector<1x192xf32>
    %c0_28 = arith.constant 0 : index
    %c0_29 = arith.constant 0 : index
    %20 = vector.load %arg7[%c0_28, %c0_29] : memref<1x192xf32, #tpu.memory_space<vmem>>, vector<1x192xf32>
    %c0_30 = arith.constant 0 : index
    %c0_31 = arith.constant 0 : index
    %21 = vector.load %arg8[%c0_30, %c0_31] : memref<14x24xbf16, #tpu.memory_space<vmem>>, vector<14x24xbf16>
    %c0_32 = arith.constant 0 : index
    %c0_33 = arith.constant 0 : index
    %22 = vector.load %arg9[%c0_32, %c0_33] : memref<14x24xbf16, #tpu.memory_space<vmem>>, vector<14x24xbf16>
    %c0_34 = arith.constant 0 : index
    %c0_35 = arith.constant 0 : index
    %23 = vector.load %arg10[%c0_34, %c0_35] : memref<192x112xbf16, #tpu.memory_space<vmem>>, vector<192x112xbf16>
    %c0_36 = arith.constant 0 : index
    %c0_37 = arith.constant 0 : index
    %24 = vector.load %arg11[%c0_36, %c0_37] : memref<192x112xbf16, #tpu.memory_space<vmem>>, vector<192x112xbf16>
    %c0_38 = arith.constant 0 : index
    %c0_39 = arith.constant 0 : index
    %25 = vector.load %arg12[%c0_38, %c0_39] : memref<8x12xbf16, #tpu.memory_space<vmem>>, vector<8x12xbf16>
    %c0_40 = arith.constant 0 : index
    %c0_41 = arith.constant 0 : index
    %26 = vector.load %arg13[%c0_40, %c0_41] : memref<8x12xbf16, #tpu.memory_space<vmem>>, vector<8x12xbf16>
    %c0_42 = arith.constant 0 : index
    %c0_43 = arith.constant 0 : index
    %27 = vector.load %arg14[%c0_42, %c0_43] : memref<192x128xbf16, #tpu.memory_space<vmem>>, vector<192x128xbf16>
    %c0_44 = arith.constant 0 : index
    %c0_45 = arith.constant 0 : index
    %28 = vector.load %arg15[%c0_44, %c0_45] : memref<192x128xbf16, #tpu.memory_space<vmem>>, vector<192x128xbf16>
    %c0_46 = arith.constant 0 : index
    %c0_47 = arith.constant 0 : index
    %29 = vector.load %arg16[%c0_46, %c0_47] : memref<3x6xbf16, #tpu.memory_space<vmem>>, vector<3x6xbf16>
    %c0_48 = arith.constant 0 : index
    %c0_49 = arith.constant 0 : index
    %30 = vector.load %arg17[%c0_48, %c0_49] : memref<3x6xbf16, #tpu.memory_space<vmem>>, vector<3x6xbf16>
    %c0_50 = arith.constant 0 : index
    %c0_51 = arith.constant 0 : index
    %31 = vector.load %arg18[%c0_50, %c0_51] : memref<192x96xbf16, #tpu.memory_space<vmem>>, vector<192x96xbf16>
    %c0_52 = arith.constant 0 : index
    %c0_53 = arith.constant 0 : index
    %32 = vector.load %arg19[%c0_52, %c0_53] : memref<192x96xbf16, #tpu.memory_space<vmem>>, vector<192x96xbf16>
    %c0_54 = arith.constant 0 : index
    %c0_55 = arith.constant 0 : index
    %33 = vector.load %arg20[%c0_54, %c0_55] : memref<288x64xbf16, #tpu.memory_space<vmem>>, vector<96x64xbf16>
    %c96 = arith.constant 96 : index
    %c0_56 = arith.constant 0 : index
    %34 = vector.load %arg20[%c96, %c0_56] : memref<288x64xbf16, #tpu.memory_space<vmem>>, vector<96x64xbf16>
    %c192 = arith.constant 192 : index
    %c0_57 = arith.constant 0 : index
    %35 = vector.load %arg20[%c192, %c0_57] : memref<288x64xbf16, #tpu.memory_space<vmem>>, vector<96x64xbf16>
    %c0_58 = arith.constant 0 : index
    %c0_59 = arith.constant 0 : index
    %36 = vector.load %arg21[%c0_58, %c0_59] : memref<1x64xf32, #tpu.memory_space<vmem>>, vector<1x64xf32>
    %c0_60 = arith.constant 0 : index
    %c0_61 = arith.constant 0 : index
    %37 = vector.load %arg22[%c0_60, %c0_61] : memref<64x128xbf16, #tpu.memory_space<vmem>>, vector<64x128xbf16>
    %c0_62 = arith.constant 0 : index
    %c0_63 = arith.constant 0 : index
    %38 = vector.load %arg23[%c0_62, %c0_63] : memref<1x128xf32, #tpu.memory_space<vmem>>, vector<1x128xf32>
    %c0_64 = arith.constant 0 : index
    %c0_65 = arith.constant 0 : index
    %c0_66 = arith.constant 0 : index
    %39 = vector.load %arg1[%c0_64, %c0_65, %c0_66] : memref<8x26x26xf32, #tpu.memory_space<vmem>>, vector<1x26x26xf32>
    %40 = vector.shape_cast %39 : vector<1x26x26xf32> to vector<26x26xf32>
    %41 = vector.extract_strided_slice %40 {offsets = [0, 0], sizes = [24, 26], strides = [1, 1]} : vector<26x26xf32> to vector<24x26xf32>
    %42 = arith.truncf %41 : vector<24x26xf32> to vector<24x26xbf16>
    %cst = arith.constant dense<0.000000e+00> : vector<24x192xf32>
    %43 = tpu.matmul %42, %1, %cst {dimension_numbers = #tpu.dot_dimension_numbers<[1], [0], [0], [1], [0, 0, 1, 1], [], []>} : vector<24x26xbf16>, vector<26x192xbf16>, vector<24x192xf32> -> vector<24x192xf32>
    %44 = vector.broadcast %18 : vector<1x192xf32> to vector<24x192xf32>
    %45 = arith.addf %44, %43 : vector<24x192xf32>
    %46 = vector.extract_strided_slice %40 {offsets = [1, 0], sizes = [24, 26], strides = [1, 1]} : vector<26x26xf32> to vector<24x26xf32>
    %47 = arith.truncf %46 : vector<24x26xf32> to vector<24x26xbf16>
    %cst_67 = arith.constant dense<0.000000e+00> : vector<24x192xf32>
    %48 = tpu.matmul %47, %3, %cst_67 {dimension_numbers = #tpu.dot_dimension_numbers<[1], [0], [0], [1], [0, 0, 1, 1], [], []>} : vector<24x26xbf16>, vector<26x192xbf16>, vector<24x192xf32> -> vector<24x192xf32>
    %49 = arith.addf %45, %48 : vector<24x192xf32>
    %50 = vector.extract_strided_slice %40 {offsets = [2, 0], sizes = [24, 26], strides = [1, 1]} : vector<26x26xf32> to vector<24x26xf32>
    %51 = arith.truncf %50 : vector<24x26xf32> to vector<24x26xbf16>
    %cst_68 = arith.constant dense<0.000000e+00> : vector<24x192xf32>
    %52 = tpu.matmul %51, %5, %cst_68 {dimension_numbers = #tpu.dot_dimension_numbers<[1], [0], [0], [1], [0, 0, 1, 1], [], []>} : vector<24x26xbf16>, vector<26x192xbf16>, vector<24x192xf32> -> vector<24x192xf32>
    %53 = arith.addf %49, %52 : vector<24x192xf32>
    %cst_69 = arith.constant 0.000000e+00 : f32
    %54 = vector.broadcast %cst_69 : f32 to vector<24x192xf32>
    %55 = arith.maximumf %53, %54 : vector<24x192xf32>
    %56 = arith.truncf %55 : vector<24x192xf32> to vector<24x192xbf16>
    %cst_70 = arith.constant dense<0.000000e+00> : vector<24x112xf32>
    %57 = tpu.matmul %56, %23, %cst_70 {dimension_numbers = #tpu.dot_dimension_numbers<[1], [0], [0], [1], [0, 0, 1, 1], [], []>} : vector<24x192xbf16>, vector<192x112xbf16>, vector<24x112xf32> -> vector<24x112xf32>
    %58 = arith.truncf %55 : vector<24x192xf32> to vector<24x192xbf16>
    %cst_71 = arith.constant dense<0.000000e+00> : vector<24x112xf32>
    %59 = tpu.matmul %58, %24, %cst_71 {dimension_numbers = #tpu.dot_dimension_numbers<[1], [0], [0], [1], [0, 0, 1, 1], [], []>} : vector<24x192xbf16>, vector<192x112xbf16>, vector<24x112xf32> -> vector<24x112xf32>
    %60 = arith.maximumf %57, %59 : vector<24x112xf32>
    %cst_72 = arith.constant dense<0.000000e+00> : vector<14x112xf32>
    %61 = tpu.matmul %21, %60, %cst_72 {dimension_numbers = #tpu.dot_dimension_numbers<[1], [0], [0], [1], [0, 0, 1, 1], [], []>} : vector<14x24xbf16>, vector<24x112xf32>, vector<14x112xf32> -> vector<14x112xf32>
    %cst_73 = arith.constant dense<0.000000e+00> : vector<14x112xf32>
    %62 = tpu.matmul %22, %60, %cst_73 {dimension_numbers = #tpu.dot_dimension_numbers<[1], [0], [0], [1], [0, 0, 1, 1], [], []>} : vector<14x24xbf16>, vector<24x112xf32>, vector<14x112xf32> -> vector<14x112xf32>
    %63 = arith.maximumf %61, %62 : vector<14x112xf32>
    %64 = vector.extract_strided_slice %63 {offsets = [0, 0], sizes = [12, 112], strides = [1, 1]} : vector<14x112xf32> to vector<12x112xf32>
    %65 = arith.truncf %64 : vector<12x112xf32> to vector<12x112xbf16>
    %cst_74 = arith.constant dense<0.000000e+00> : vector<12x192xf32>
    %66 = tpu.matmul %65, %7, %cst_74 {dimension_numbers = #tpu.dot_dimension_numbers<[1], [0], [0], [1], [0, 0, 1, 1], [], []>} : vector<12x112xbf16>, vector<112x192xbf16>, vector<12x192xf32> -> vector<12x192xf32>
    %67 = vector.broadcast %19 : vector<1x192xf32> to vector<12x192xf32>
    %68 = arith.addf %67, %66 : vector<12x192xf32>
    %69 = vector.extract_strided_slice %63 {offsets = [1, 0], sizes = [12, 112], strides = [1, 1]} : vector<14x112xf32> to vector<12x112xf32>
    %70 = arith.truncf %69 : vector<12x112xf32> to vector<12x112xbf16>
    %cst_75 = arith.constant dense<0.000000e+00> : vector<12x192xf32>
    %71 = tpu.matmul %70, %9, %cst_75 {dimension_numbers = #tpu.dot_dimension_numbers<[1], [0], [0], [1], [0, 0, 1, 1], [], []>} : vector<12x112xbf16>, vector<112x192xbf16>, vector<12x192xf32> -> vector<12x192xf32>
    %72 = arith.addf %68, %71 : vector<12x192xf32>
    %73 = vector.extract_strided_slice %63 {offsets = [2, 0], sizes = [12, 112], strides = [1, 1]} : vector<14x112xf32> to vector<12x112xf32>
    %74 = arith.truncf %73 : vector<12x112xf32> to vector<12x112xbf16>
    %cst_76 = arith.constant dense<0.000000e+00> : vector<12x192xf32>
    %75 = tpu.matmul %74, %11, %cst_76 {dimension_numbers = #tpu.dot_dimension_numbers<[1], [0], [0], [1], [0, 0, 1, 1], [], []>} : vector<12x112xbf16>, vector<112x192xbf16>, vector<12x192xf32> -> vector<12x192xf32>
    %76 = arith.addf %72, %75 : vector<12x192xf32>
    %cst_77 = arith.constant 0.000000e+00 : f32
    %77 = vector.broadcast %cst_77 : f32 to vector<12x192xf32>
    %78 = arith.maximumf %76, %77 : vector<12x192xf32>
    %79 = arith.truncf %78 : vector<12x192xf32> to vector<12x192xbf16>
    %cst_78 = arith.constant dense<0.000000e+00> : vector<12x128xf32>
    %80 = tpu.matmul %79, %27, %cst_78 {dimension_numbers = #tpu.dot_dimension_numbers<[1], [0], [0], [1], [0, 0, 1, 1], [], []>} : vector<12x192xbf16>, vector<192x128xbf16>, vector<12x128xf32> -> vector<12x128xf32>
    %81 = arith.truncf %78 : vector<12x192xf32> to vector<12x192xbf16>
    %cst_79 = arith.constant dense<0.000000e+00> : vector<12x128xf32>
    %82 = tpu.matmul %81, %28, %cst_79 {dimension_numbers = #tpu.dot_dimension_numbers<[1], [0], [0], [1], [0, 0, 1, 1], [], []>} : vector<12x192xbf16>, vector<192x128xbf16>, vector<12x128xf32> -> vector<12x128xf32>
    %83 = arith.maximumf %80, %82 : vector<12x128xf32>
    %cst_80 = arith.constant dense<0.000000e+00> : vector<8x128xf32>
    %84 = tpu.matmul %25, %83, %cst_80 {dimension_numbers = #tpu.dot_dimension_numbers<[1], [0], [0], [1], [0, 0, 1, 1], [], []>} : vector<8x12xbf16>, vector<12x128xf32>, vector<8x128xf32> -> vector<8x128xf32>
    %cst_81 = arith.constant dense<0.000000e+00> : vector<8x128xf32>
    %85 = tpu.matmul %26, %83, %cst_81 {dimension_numbers = #tpu.dot_dimension_numbers<[1], [0], [0], [1], [0, 0, 1, 1], [], []>} : vector<8x12xbf16>, vector<12x128xf32>, vector<8x128xf32> -> vector<8x128xf32>
    %86 = arith.maximumf %84, %85 : vector<8x128xf32>
    %87 = vector.extract_strided_slice %86 {offsets = [0, 0], sizes = [6, 128], strides = [1, 1]} : vector<8x128xf32> to vector<6x128xf32>
    %88 = arith.truncf %87 : vector<6x128xf32> to vector<6x128xbf16>
    %cst_82 = arith.constant dense<0.000000e+00> : vector<6x192xf32>
    %89 = tpu.matmul %88, %13, %cst_82 {dimension_numbers = #tpu.dot_dimension_numbers<[1], [0], [0], [1], [0, 0, 1, 1], [], []>} : vector<6x128xbf16>, vector<128x192xbf16>, vector<6x192xf32> -> vector<6x192xf32>
    %90 = vector.broadcast %20 : vector<1x192xf32> to vector<6x192xf32>
    %91 = arith.addf %90, %89 : vector<6x192xf32>
    %92 = vector.extract_strided_slice %86 {offsets = [1, 0], sizes = [6, 128], strides = [1, 1]} : vector<8x128xf32> to vector<6x128xf32>
    %93 = arith.truncf %92 : vector<6x128xf32> to vector<6x128xbf16>
    %cst_83 = arith.constant dense<0.000000e+00> : vector<6x192xf32>
    %94 = tpu.matmul %93, %15, %cst_83 {dimension_numbers = #tpu.dot_dimension_numbers<[1], [0], [0], [1], [0, 0, 1, 1], [], []>} : vector<6x128xbf16>, vector<128x192xbf16>, vector<6x192xf32> -> vector<6x192xf32>
    %95 = arith.addf %91, %94 : vector<6x192xf32>
    %96 = vector.extract_strided_slice %86 {offsets = [2, 0], sizes = [6, 128], strides = [1, 1]} : vector<8x128xf32> to vector<6x128xf32>
    %97 = arith.truncf %96 : vector<6x128xf32> to vector<6x128xbf16>
    %cst_84 = arith.constant dense<0.000000e+00> : vector<6x192xf32>
    %98 = tpu.matmul %97, %17, %cst_84 {dimension_numbers = #tpu.dot_dimension_numbers<[1], [0], [0], [1], [0, 0, 1, 1], [], []>} : vector<6x128xbf16>, vector<128x192xbf16>, vector<6x192xf32> -> vector<6x192xf32>
    %99 = arith.addf %95, %98 : vector<6x192xf32>
    %cst_85 = arith.constant 0.000000e+00 : f32
    %100 = vector.broadcast %cst_85 : f32 to vector<6x192xf32>
    %101 = arith.maximumf %99, %100 : vector<6x192xf32>
    %102 = arith.truncf %101 : vector<6x192xf32> to vector<6x192xbf16>
    %cst_86 = arith.constant dense<0.000000e+00> : vector<6x96xf32>
    %103 = tpu.matmul %102, %31, %cst_86 {dimension_numbers = #tpu.dot_dimension_numbers<[1], [0], [0], [1], [0, 0, 1, 1], [], []>} : vector<6x192xbf16>, vector<192x96xbf16>, vector<6x96xf32> -> vector<6x96xf32>
    %104 = arith.truncf %101 : vector<6x192xf32> to vector<6x192xbf16>
    %cst_87 = arith.constant dense<0.000000e+00> : vector<6x96xf32>
    %105 = tpu.matmul %104, %32, %cst_87 {dimension_numbers = #tpu.dot_dimension_numbers<[1], [0], [0], [1], [0, 0, 1, 1], [], []>} : vector<6x192xbf16>, vector<192x96xbf16>, vector<6x96xf32> -> vector<6x96xf32>
    %106 = arith.maximumf %103, %105 : vector<6x96xf32>
    %cst_88 = arith.constant dense<0.000000e+00> : vector<3x96xf32>
    %107 = tpu.matmul %29, %106, %cst_88 {dimension_numbers = #tpu.dot_dimension_numbers<[1], [0], [0], [1], [0, 0, 1, 1], [], []>} : vector<3x6xbf16>, vector<6x96xf32>, vector<3x96xf32> -> vector<3x96xf32>
    %cst_89 = arith.constant dense<0.000000e+00> : vector<3x96xf32>
    %108 = tpu.matmul %30, %106, %cst_89 {dimension_numbers = #tpu.dot_dimension_numbers<[1], [0], [0], [1], [0, 0, 1, 1], [], []>} : vector<3x6xbf16>, vector<6x96xf32>, vector<3x96xf32> -> vector<3x96xf32>
    %109 = arith.maximumf %107, %108 : vector<3x96xf32>
    %110 = vector.extract_strided_slice %109 {offsets = [0, 0], sizes = [1, 96], strides = [1, 1]} : vector<3x96xf32> to vector<1x96xf32>
    %111 = arith.truncf %110 : vector<1x96xf32> to vector<1x96xbf16>
    %cst_90 = arith.constant dense<0.000000e+00> : vector<1x64xf32>
    %112 = tpu.matmul %111, %33, %cst_90 {dimension_numbers = #tpu.dot_dimension_numbers<[1], [0], [0], [1], [0, 0, 1, 1], [], []>} : vector<1x96xbf16>, vector<96x64xbf16>, vector<1x64xf32> -> vector<1x64xf32>
    %113 = arith.addf %36, %112 : vector<1x64xf32>
    %114 = vector.extract_strided_slice %109 {offsets = [1, 0], sizes = [1, 96], strides = [1, 1]} : vector<3x96xf32> to vector<1x96xf32>
    %115 = arith.truncf %114 : vector<1x96xf32> to vector<1x96xbf16>
    %cst_91 = arith.constant dense<0.000000e+00> : vector<1x64xf32>
    %116 = tpu.matmul %115, %34, %cst_91 {dimension_numbers = #tpu.dot_dimension_numbers<[1], [0], [0], [1], [0, 0, 1, 1], [], []>} : vector<1x96xbf16>, vector<96x64xbf16>, vector<1x64xf32> -> vector<1x64xf32>
    %117 = arith.addf %113, %116 : vector<1x64xf32>
    %118 = vector.extract_strided_slice %109 {offsets = [2, 0], sizes = [1, 96], strides = [1, 1]} : vector<3x96xf32> to vector<1x96xf32>
    %119 = arith.truncf %118 : vector<1x96xf32> to vector<1x96xbf16>
    %cst_92 = arith.constant dense<0.000000e+00> : vector<1x64xf32>
    %120 = tpu.matmul %119, %35, %cst_92 {dimension_numbers = #tpu.dot_dimension_numbers<[1], [0], [0], [1], [0, 0, 1, 1], [], []>} : vector<1x96xbf16>, vector<96x64xbf16>, vector<1x64xf32> -> vector<1x64xf32>
    %121 = arith.addf %117, %120 : vector<1x64xf32>
    %cst_93 = arith.constant 0.000000e+00 : f32
    %122 = vector.broadcast %cst_93 : f32 to vector<1x64xf32>
    %123 = arith.maximumf %121, %122 : vector<1x64xf32>
    %124 = arith.truncf %123 : vector<1x64xf32> to vector<1x64xbf16>
    %cst_94 = arith.constant dense<0.000000e+00> : vector<1x128xf32>
    %125 = tpu.matmul %124, %37, %cst_94 {dimension_numbers = #tpu.dot_dimension_numbers<[1], [0], [0], [1], [0, 0, 1, 1], [], []>} : vector<1x64xbf16>, vector<64x128xbf16>, vector<1x128xf32> -> vector<1x128xf32>
    %126 = arith.addf %125, %38 : vector<1x128xf32>
    %c1_95 = arith.constant 1 : index
    %c0_96 = arith.constant 0 : index
    %c0_97 = arith.constant 0 : index
    %127 = vector.load %arg1[%c1_95, %c0_96, %c0_97] : memref<8x26x26xf32, #tpu.memory_space<vmem>>, vector<1x26x26xf32>
    %128 = vector.shape_cast %127 : vector<1x26x26xf32> to vector<26x26xf32>
    %129 = vector.extract_strided_slice %128 {offsets = [0, 0], sizes = [24, 26], strides = [1, 1]} : vector<26x26xf32> to vector<24x26xf32>
    %130 = arith.truncf %129 : vector<24x26xf32> to vector<24x26xbf16>
    %cst_98 = arith.constant dense<0.000000e+00> : vector<24x192xf32>
    %131 = tpu.matmul %130, %1, %cst_98 {dimension_numbers = #tpu.dot_dimension_numbers<[1], [0], [0], [1], [0, 0, 1, 1], [], []>} : vector<24x26xbf16>, vector<26x192xbf16>, vector<24x192xf32> -> vector<24x192xf32>
    %132 = vector.broadcast %18 : vector<1x192xf32> to vector<24x192xf32>
    %133 = arith.addf %132, %131 : vector<24x192xf32>
    %134 = vector.extract_strided_slice %128 {offsets = [1, 0], sizes = [24, 26], strides = [1, 1]} : vector<26x26xf32> to vector<24x26xf32>
    %135 = arith.truncf %134 : vector<24x26xf32> to vector<24x26xbf16>
    %cst_99 = arith.constant dense<0.000000e+00> : vector<24x192xf32>
    %136 = tpu.matmul %135, %3, %cst_99 {dimension_numbers = #tpu.dot_dimension_numbers<[1], [0], [0], [1], [0, 0, 1, 1], [], []>} : vector<24x26xbf16>, vector<26x192xbf16>, vector<24x192xf32> -> vector<24x192xf32>
    %137 = arith.addf %133, %136 : vector<24x192xf32>
    %138 = vector.extract_strided_slice %128 {offsets = [2, 0], sizes = [24, 26], strides = [1, 1]} : vector<26x26xf32> to vector<24x26xf32>
    %139 = arith.truncf %138 : vector<24x26xf32> to vector<24x26xbf16>
    %cst_100 = arith.constant dense<0.000000e+00> : vector<24x192xf32>
    %140 = tpu.matmul %139, %5, %cst_100 {dimension_numbers = #tpu.dot_dimension_numbers<[1], [0], [0], [1], [0, 0, 1, 1], [], []>} : vector<24x26xbf16>, vector<26x192xbf16>, vector<24x192xf32> -> vector<24x192xf32>
    %141 = arith.addf %137, %140 : vector<24x192xf32>
    %cst_101 = arith.constant 0.000000e+00 : f32
    %142 = vector.broadcast %cst_101 : f32 to vector<24x192xf32>
    %143 = arith.maximumf %141, %142 : vector<24x192xf32>
    %144 = arith.truncf %143 : vector<24x192xf32> to vector<24x192xbf16>
    %cst_102 = arith.constant dense<0.000000e+00> : vector<24x112xf32>
    %145 = tpu.matmul %144, %23, %cst_102 {dimension_numbers = #tpu.dot_dimension_numbers<[1], [0], [0], [1], [0, 0, 1, 1], [], []>} : vector<24x192xbf16>, vector<192x112xbf16>, vector<24x112xf32> -> vector<24x112xf32>
    %146 = arith.truncf %143 : vector<24x192xf32> to vector<24x192xbf16>
    %cst_103 = arith.constant dense<0.000000e+00> : vector<24x112xf32>
    %147 = tpu.matmul %146, %24, %cst_103 {dimension_numbers = #tpu.dot_dimension_numbers<[1], [0], [0], [1], [0, 0, 1, 1], [], []>} : vector<24x192xbf16>, vector<192x112xbf16>, vector<24x112xf32> -> vector<24x112xf32>
    %148 = arith.maximumf %145, %147 : vector<24x112xf32>
    %cst_104 = arith.constant dense<0.000000e+00> : vector<14x112xf32>
    %149 = tpu.matmul %21, %148, %cst_104 {dimension_numbers = #tpu.dot_dimension_numbers<[1], [0], [0], [1], [0, 0, 1, 1], [], []>} : vector<14x24xbf16>, vector<24x112xf32>, vector<14x112xf32> -> vector<14x112xf32>
    %cst_105 = arith.constant dense<0.000000e+00> : vector<14x112xf32>
    %150 = tpu.matmul %22, %148, %cst_105 {dimension_numbers = #tpu.dot_dimension_numbers<[1], [0], [0], [1], [0, 0, 1, 1], [], []>} : vector<14x24xbf16>, vector<24x112xf32>, vector<14x112xf32> -> vector<14x112xf32>
    %151 = arith.maximumf %149, %150 : vector<14x112xf32>
    %152 = vector.extract_strided_slice %151 {offsets = [0, 0], sizes = [12, 112], strides = [1, 1]} : vector<14x112xf32> to vector<12x112xf32>
    %153 = arith.truncf %152 : vector<12x112xf32> to vector<12x112xbf16>
    %cst_106 = arith.constant dense<0.000000e+00> : vector<12x192xf32>
    %154 = tpu.matmul %153, %7, %cst_106 {dimension_numbers = #tpu.dot_dimension_numbers<[1], [0], [0], [1], [0, 0, 1, 1], [], []>} : vector<12x112xbf16>, vector<112x192xbf16>, vector<12x192xf32> -> vector<12x192xf32>
    %155 = vector.broadcast %19 : vector<1x192xf32> to vector<12x192xf32>
    %156 = arith.addf %155, %154 : vector<12x192xf32>
    %157 = vector.extract_strided_slice %151 {offsets = [1, 0], sizes = [12, 112], strides = [1, 1]} : vector<14x112xf32> to vector<12x112xf32>
    %158 = arith.truncf %157 : vector<12x112xf32> to vector<12x112xbf16>
    %cst_107 = arith.constant dense<0.000000e+00> : vector<12x192xf32>
    %159 = tpu.matmul %158, %9, %cst_107 {dimension_numbers = #tpu.dot_dimension_numbers<[1], [0], [0], [1], [0, 0, 1, 1], [], []>} : vector<12x112xbf16>, vector<112x192xbf16>, vector<12x192xf32> -> vector<12x192xf32>
    %160 = arith.addf %156, %159 : vector<12x192xf32>
    %161 = vector.extract_strided_slice %151 {offsets = [2, 0], sizes = [12, 112], strides = [1, 1]} : vector<14x112xf32> to vector<12x112xf32>
    %162 = arith.truncf %161 : vector<12x112xf32> to vector<12x112xbf16>
    %cst_108 = arith.constant dense<0.000000e+00> : vector<12x192xf32>
    %163 = tpu.matmul %162, %11, %cst_108 {dimension_numbers = #tpu.dot_dimension_numbers<[1], [0], [0], [1], [0, 0, 1, 1], [], []>} : vector<12x112xbf16>, vector<112x192xbf16>, vector<12x192xf32> -> vector<12x192xf32>
    %164 = arith.addf %160, %163 : vector<12x192xf32>
    %cst_109 = arith.constant 0.000000e+00 : f32
    %165 = vector.broadcast %cst_109 : f32 to vector<12x192xf32>
    %166 = arith.maximumf %164, %165 : vector<12x192xf32>
    %167 = arith.truncf %166 : vector<12x192xf32> to vector<12x192xbf16>
    %cst_110 = arith.constant dense<0.000000e+00> : vector<12x128xf32>
    %168 = tpu.matmul %167, %27, %cst_110 {dimension_numbers = #tpu.dot_dimension_numbers<[1], [0], [0], [1], [0, 0, 1, 1], [], []>} : vector<12x192xbf16>, vector<192x128xbf16>, vector<12x128xf32> -> vector<12x128xf32>
    %169 = arith.truncf %166 : vector<12x192xf32> to vector<12x192xbf16>
    %cst_111 = arith.constant dense<0.000000e+00> : vector<12x128xf32>
    %170 = tpu.matmul %169, %28, %cst_111 {dimension_numbers = #tpu.dot_dimension_numbers<[1], [0], [0], [1], [0, 0, 1, 1], [], []>} : vector<12x192xbf16>, vector<192x128xbf16>, vector<12x128xf32> -> vector<12x128xf32>
    %171 = arith.maximumf %168, %170 : vector<12x128xf32>
    %cst_112 = arith.constant dense<0.000000e+00> : vector<8x128xf32>
    %172 = tpu.matmul %25, %171, %cst_112 {dimension_numbers = #tpu.dot_dimension_numbers<[1], [0], [0], [1], [0, 0, 1, 1], [], []>} : vector<8x12xbf16>, vector<12x128xf32>, vector<8x128xf32> -> vector<8x128xf32>
    %cst_113 = arith.constant dense<0.000000e+00> : vector<8x128xf32>
    %173 = tpu.matmul %26, %171, %cst_113 {dimension_numbers = #tpu.dot_dimension_numbers<[1], [0], [0], [1], [0, 0, 1, 1], [], []>} : vector<8x12xbf16>, vector<12x128xf32>, vector<8x128xf32> -> vector<8x128xf32>
    %174 = arith.maximumf %172, %173 : vector<8x128xf32>
    %175 = vector.extract_strided_slice %174 {offsets = [0, 0], sizes = [6, 128], strides = [1, 1]} : vector<8x128xf32> to vector<6x128xf32>
    %176 = arith.truncf %175 : vector<6x128xf32> to vector<6x128xbf16>
    %cst_114 = arith.constant dense<0.000000e+00> : vector<6x192xf32>
    %177 = tpu.matmul %176, %13, %cst_114 {dimension_numbers = #tpu.dot_dimension_numbers<[1], [0], [0], [1], [0, 0, 1, 1], [], []>} : vector<6x128xbf16>, vector<128x192xbf16>, vector<6x192xf32> -> vector<6x192xf32>
    %178 = vector.broadcast %20 : vector<1x192xf32> to vector<6x192xf32>
    %179 = arith.addf %178, %177 : vector<6x192xf32>
    %180 = vector.extract_strided_slice %174 {offsets = [1, 0], sizes = [6, 128], strides = [1, 1]} : vector<8x128xf32> to vector<6x128xf32>
    %181 = arith.truncf %180 : vector<6x128xf32> to vector<6x128xbf16>
    %cst_115 = arith.constant dense<0.000000e+00> : vector<6x192xf32>
    %182 = tpu.matmul %181, %15, %cst_115 {dimension_numbers = #tpu.dot_dimension_numbers<[1], [0], [0], [1], [0, 0, 1, 1], [], []>} : vector<6x128xbf16>, vector<128x192xbf16>, vector<6x192xf32> -> vector<6x192xf32>
    %183 = arith.addf %179, %182 : vector<6x192xf32>
    %184 = vector.extract_strided_slice %174 {offsets = [2, 0], sizes = [6, 128], strides = [1, 1]} : vector<8x128xf32> to vector<6x128xf32>
    %185 = arith.truncf %184 : vector<6x128xf32> to vector<6x128xbf16>
    %cst_116 = arith.constant dense<0.000000e+00> : vector<6x192xf32>
    %186 = tpu.matmul %185, %17, %cst_116 {dimension_numbers = #tpu.dot_dimension_numbers<[1], [0], [0], [1], [0, 0, 1, 1], [], []>} : vector<6x128xbf16>, vector<128x192xbf16>, vector<6x192xf32> -> vector<6x192xf32>
    %187 = arith.addf %183, %186 : vector<6x192xf32>
    %cst_117 = arith.constant 0.000000e+00 : f32
    %188 = vector.broadcast %cst_117 : f32 to vector<6x192xf32>
    %189 = arith.maximumf %187, %188 : vector<6x192xf32>
    %190 = arith.truncf %189 : vector<6x192xf32> to vector<6x192xbf16>
    %cst_118 = arith.constant dense<0.000000e+00> : vector<6x96xf32>
    %191 = tpu.matmul %190, %31, %cst_118 {dimension_numbers = #tpu.dot_dimension_numbers<[1], [0], [0], [1], [0, 0, 1, 1], [], []>} : vector<6x192xbf16>, vector<192x96xbf16>, vector<6x96xf32> -> vector<6x96xf32>
    %192 = arith.truncf %189 : vector<6x192xf32> to vector<6x192xbf16>
    %cst_119 = arith.constant dense<0.000000e+00> : vector<6x96xf32>
    %193 = tpu.matmul %192, %32, %cst_119 {dimension_numbers = #tpu.dot_dimension_numbers<[1], [0], [0], [1], [0, 0, 1, 1], [], []>} : vector<6x192xbf16>, vector<192x96xbf16>, vector<6x96xf32> -> vector<6x96xf32>
    %194 = arith.maximumf %191, %193 : vector<6x96xf32>
    %cst_120 = arith.constant dense<0.000000e+00> : vector<3x96xf32>
    %195 = tpu.matmul %29, %194, %cst_120 {dimension_numbers = #tpu.dot_dimension_numbers<[1], [0], [0], [1], [0, 0, 1, 1], [], []>} : vector<3x6xbf16>, vector<6x96xf32>, vector<3x96xf32> -> vector<3x96xf32>
    %cst_121 = arith.constant dense<0.000000e+00> : vector<3x96xf32>
    %196 = tpu.matmul %30, %194, %cst_121 {dimension_numbers = #tpu.dot_dimension_numbers<[1], [0], [0], [1], [0, 0, 1, 1], [], []>} : vector<3x6xbf16>, vector<6x96xf32>, vector<3x96xf32> -> vector<3x96xf32>
    %197 = arith.maximumf %195, %196 : vector<3x96xf32>
    %198 = vector.extract_strided_slice %197 {offsets = [0, 0], sizes = [1, 96], strides = [1, 1]} : vector<3x96xf32> to vector<1x96xf32>
    %199 = arith.truncf %198 : vector<1x96xf32> to vector<1x96xbf16>
    %cst_122 = arith.constant dense<0.000000e+00> : vector<1x64xf32>
    %200 = tpu.matmul %199, %33, %cst_122 {dimension_numbers = #tpu.dot_dimension_numbers<[1], [0], [0], [1], [0, 0, 1, 1], [], []>} : vector<1x96xbf16>, vector<96x64xbf16>, vector<1x64xf32> -> vector<1x64xf32>
    %201 = arith.addf %36, %200 : vector<1x64xf32>
    %202 = vector.extract_strided_slice %197 {offsets = [1, 0], sizes = [1, 96], strides = [1, 1]} : vector<3x96xf32> to vector<1x96xf32>
    %203 = arith.truncf %202 : vector<1x96xf32> to vector<1x96xbf16>
    %cst_123 = arith.constant dense<0.000000e+00> : vector<1x64xf32>
    %204 = tpu.matmul %203, %34, %cst_123 {dimension_numbers = #tpu.dot_dimension_numbers<[1], [0], [0], [1], [0, 0, 1, 1], [], []>} : vector<1x96xbf16>, vector<96x64xbf16>, vector<1x64xf32> -> vector<1x64xf32>
    %205 = arith.addf %201, %204 : vector<1x64xf32>
    %206 = vector.extract_strided_slice %197 {offsets = [2, 0], sizes = [1, 96], strides = [1, 1]} : vector<3x96xf32> to vector<1x96xf32>
    %207 = arith.truncf %206 : vector<1x96xf32> to vector<1x96xbf16>
    %cst_124 = arith.constant dense<0.000000e+00> : vector<1x64xf32>
    %208 = tpu.matmul %207, %35, %cst_124 {dimension_numbers = #tpu.dot_dimension_numbers<[1], [0], [0], [1], [0, 0, 1, 1], [], []>} : vector<1x96xbf16>, vector<96x64xbf16>, vector<1x64xf32> -> vector<1x64xf32>
    %209 = arith.addf %205, %208 : vector<1x64xf32>
    %cst_125 = arith.constant 0.000000e+00 : f32
    %210 = vector.broadcast %cst_125 : f32 to vector<1x64xf32>
    %211 = arith.maximumf %209, %210 : vector<1x64xf32>
    %212 = arith.truncf %211 : vector<1x64xf32> to vector<1x64xbf16>
    %cst_126 = arith.constant dense<0.000000e+00> : vector<1x128xf32>
    %213 = tpu.matmul %212, %37, %cst_126 {dimension_numbers = #tpu.dot_dimension_numbers<[1], [0], [0], [1], [0, 0, 1, 1], [], []>} : vector<1x64xbf16>, vector<64x128xbf16>, vector<1x128xf32> -> vector<1x128xf32>
    %214 = arith.addf %213, %38 : vector<1x128xf32>
    %c2_127 = arith.constant 2 : index
    %c0_128 = arith.constant 0 : index
    %c0_129 = arith.constant 0 : index
    %215 = vector.load %arg1[%c2_127, %c0_128, %c0_129] : memref<8x26x26xf32, #tpu.memory_space<vmem>>, vector<1x26x26xf32>
    %216 = vector.shape_cast %215 : vector<1x26x26xf32> to vector<26x26xf32>
    %217 = vector.extract_strided_slice %216 {offsets = [0, 0], sizes = [24, 26], strides = [1, 1]} : vector<26x26xf32> to vector<24x26xf32>
    %218 = arith.truncf %217 : vector<24x26xf32> to vector<24x26xbf16>
    %cst_130 = arith.constant dense<0.000000e+00> : vector<24x192xf32>
    %219 = tpu.matmul %218, %1, %cst_130 {dimension_numbers = #tpu.dot_dimension_numbers<[1], [0], [0], [1], [0, 0, 1, 1], [], []>} : vector<24x26xbf16>, vector<26x192xbf16>, vector<24x192xf32> -> vector<24x192xf32>
    %220 = vector.broadcast %18 : vector<1x192xf32> to vector<24x192xf32>
    %221 = arith.addf %220, %219 : vector<24x192xf32>
    %222 = vector.extract_strided_slice %216 {offsets = [1, 0], sizes = [24, 26], strides = [1, 1]} : vector<26x26xf32> to vector<24x26xf32>
    %223 = arith.truncf %222 : vector<24x26xf32> to vector<24x26xbf16>
    %cst_131 = arith.constant dense<0.000000e+00> : vector<24x192xf32>
    %224 = tpu.matmul %223, %3, %cst_131 {dimension_numbers = #tpu.dot_dimension_numbers<[1], [0], [0], [1], [0, 0, 1, 1], [], []>} : vector<24x26xbf16>, vector<26x192xbf16>, vector<24x192xf32> -> vector<24x192xf32>
    %225 = arith.addf %221, %224 : vector<24x192xf32>
    %226 = vector.extract_strided_slice %216 {offsets = [2, 0], sizes = [24, 26], strides = [1, 1]} : vector<26x26xf32> to vector<24x26xf32>
    %227 = arith.truncf %226 : vector<24x26xf32> to vector<24x26xbf16>
    %cst_132 = arith.constant dense<0.000000e+00> : vector<24x192xf32>
    %228 = tpu.matmul %227, %5, %cst_132 {dimension_numbers = #tpu.dot_dimension_numbers<[1], [0], [0], [1], [0, 0, 1, 1], [], []>} : vector<24x26xbf16>, vector<26x192xbf16>, vector<24x192xf32> -> vector<24x192xf32>
    %229 = arith.addf %225, %228 : vector<24x192xf32>
    %cst_133 = arith.constant 0.000000e+00 : f32
    %230 = vector.broadcast %cst_133 : f32 to vector<24x192xf32>
    %231 = arith.maximumf %229, %230 : vector<24x192xf32>
    %232 = arith.truncf %231 : vector<24x192xf32> to vector<24x192xbf16>
    %cst_134 = arith.constant dense<0.000000e+00> : vector<24x112xf32>
    %233 = tpu.matmul %232, %23, %cst_134 {dimension_numbers = #tpu.dot_dimension_numbers<[1], [0], [0], [1], [0, 0, 1, 1], [], []>} : vector<24x192xbf16>, vector<192x112xbf16>, vector<24x112xf32> -> vector<24x112xf32>
    %234 = arith.truncf %231 : vector<24x192xf32> to vector<24x192xbf16>
    %cst_135 = arith.constant dense<0.000000e+00> : vector<24x112xf32>
    %235 = tpu.matmul %234, %24, %cst_135 {dimension_numbers = #tpu.dot_dimension_numbers<[1], [0], [0], [1], [0, 0, 1, 1], [], []>} : vector<24x192xbf16>, vector<192x112xbf16>, vector<24x112xf32> -> vector<24x112xf32>
    %236 = arith.maximumf %233, %235 : vector<24x112xf32>
    %cst_136 = arith.constant dense<0.000000e+00> : vector<14x112xf32>
    %237 = tpu.matmul %21, %236, %cst_136 {dimension_numbers = #tpu.dot_dimension_numbers<[1], [0], [0], [1], [0, 0, 1, 1], [], []>} : vector<14x24xbf16>, vector<24x112xf32>, vector<14x112xf32> -> vector<14x112xf32>
    %cst_137 = arith.constant dense<0.000000e+00> : vector<14x112xf32>
    %238 = tpu.matmul %22, %236, %cst_137 {dimension_numbers = #tpu.dot_dimension_numbers<[1], [0], [0], [1], [0, 0, 1, 1], [], []>} : vector<14x24xbf16>, vector<24x112xf32>, vector<14x112xf32> -> vector<14x112xf32>
    %239 = arith.maximumf %237, %238 : vector<14x112xf32>
    %240 = vector.extract_strided_slice %239 {offsets = [0, 0], sizes = [12, 112], strides = [1, 1]} : vector<14x112xf32> to vector<12x112xf32>
    %241 = arith.truncf %240 : vector<12x112xf32> to vector<12x112xbf16>
    %cst_138 = arith.constant dense<0.000000e+00> : vector<12x192xf32>
    %242 = tpu.matmul %241, %7, %cst_138 {dimension_numbers = #tpu.dot_dimension_numbers<[1], [0], [0], [1], [0, 0, 1, 1], [], []>} : vector<12x112xbf16>, vector<112x192xbf16>, vector<12x192xf32> -> vector<12x192xf32>
    %243 = vector.broadcast %19 : vector<1x192xf32> to vector<12x192xf32>
    %244 = arith.addf %243, %242 : vector<12x192xf32>
    %245 = vector.extract_strided_slice %239 {offsets = [1, 0], sizes = [12, 112], strides = [1, 1]} : vector<14x112xf32> to vector<12x112xf32>
    %246 = arith.truncf %245 : vector<12x112xf32> to vector<12x112xbf16>
    %cst_139 = arith.constant dense<0.000000e+00> : vector<12x192xf32>
    %247 = tpu.matmul %246, %9, %cst_139 {dimension_numbers = #tpu.dot_dimension_numbers<[1], [0], [0], [1], [0, 0, 1, 1], [], []>} : vector<12x112xbf16>, vector<112x192xbf16>, vector<12x192xf32> -> vector<12x192xf32>
    %248 = arith.addf %244, %247 : vector<12x192xf32>
    %249 = vector.extract_strided_slice %239 {offsets = [2, 0], sizes = [12, 112], strides = [1, 1]} : vector<14x112xf32> to vector<12x112xf32>
    %250 = arith.truncf %249 : vector<12x112xf32> to vector<12x112xbf16>
    %cst_140 = arith.constant dense<0.000000e+00> : vector<12x192xf32>
    %251 = tpu.matmul %250, %11, %cst_140 {dimension_numbers = #tpu.dot_dimension_numbers<[1], [0], [0], [1], [0, 0, 1, 1], [], []>} : vector<12x112xbf16>, vector<112x192xbf16>, vector<12x192xf32> -> vector<12x192xf32>
    %252 = arith.addf %248, %251 : vector<12x192xf32>
    %cst_141 = arith.constant 0.000000e+00 : f32
    %253 = vector.broadcast %cst_141 : f32 to vector<12x192xf32>
    %254 = arith.maximumf %252, %253 : vector<12x192xf32>
    %255 = arith.truncf %254 : vector<12x192xf32> to vector<12x192xbf16>
    %cst_142 = arith.constant dense<0.000000e+00> : vector<12x128xf32>
    %256 = tpu.matmul %255, %27, %cst_142 {dimension_numbers = #tpu.dot_dimension_numbers<[1], [0], [0], [1], [0, 0, 1, 1], [], []>} : vector<12x192xbf16>, vector<192x128xbf16>, vector<12x128xf32> -> vector<12x128xf32>
    %257 = arith.truncf %254 : vector<12x192xf32> to vector<12x192xbf16>
    %cst_143 = arith.constant dense<0.000000e+00> : vector<12x128xf32>
    %258 = tpu.matmul %257, %28, %cst_143 {dimension_numbers = #tpu.dot_dimension_numbers<[1], [0], [0], [1], [0, 0, 1, 1], [], []>} : vector<12x192xbf16>, vector<192x128xbf16>, vector<12x128xf32> -> vector<12x128xf32>
    %259 = arith.maximumf %256, %258 : vector<12x128xf32>
    %cst_144 = arith.constant dense<0.000000e+00> : vector<8x128xf32>
    %260 = tpu.matmul %25, %259, %cst_144 {dimension_numbers = #tpu.dot_dimension_numbers<[1], [0], [0], [1], [0, 0, 1, 1], [], []>} : vector<8x12xbf16>, vector<12x128xf32>, vector<8x128xf32> -> vector<8x128xf32>
    %cst_145 = arith.constant dense<0.000000e+00> : vector<8x128xf32>
    %261 = tpu.matmul %26, %259, %cst_145 {dimension_numbers = #tpu.dot_dimension_numbers<[1], [0], [0], [1], [0, 0, 1, 1], [], []>} : vector<8x12xbf16>, vector<12x128xf32>, vector<8x128xf32> -> vector<8x128xf32>
    %262 = arith.maximumf %260, %261 : vector<8x128xf32>
    %263 = vector.extract_strided_slice %262 {offsets = [0, 0], sizes = [6, 128], strides = [1, 1]} : vector<8x128xf32> to vector<6x128xf32>
    %264 = arith.truncf %263 : vector<6x128xf32> to vector<6x128xbf16>
    %cst_146 = arith.constant dense<0.000000e+00> : vector<6x192xf32>
    %265 = tpu.matmul %264, %13, %cst_146 {dimension_numbers = #tpu.dot_dimension_numbers<[1], [0], [0], [1], [0, 0, 1, 1], [], []>} : vector<6x128xbf16>, vector<128x192xbf16>, vector<6x192xf32> -> vector<6x192xf32>
    %266 = vector.broadcast %20 : vector<1x192xf32> to vector<6x192xf32>
    %267 = arith.addf %266, %265 : vector<6x192xf32>
    %268 = vector.extract_strided_slice %262 {offsets = [1, 0], sizes = [6, 128], strides = [1, 1]} : vector<8x128xf32> to vector<6x128xf32>
    %269 = arith.truncf %268 : vector<6x128xf32> to vector<6x128xbf16>
    %cst_147 = arith.constant dense<0.000000e+00> : vector<6x192xf32>
    %270 = tpu.matmul %269, %15, %cst_147 {dimension_numbers = #tpu.dot_dimension_numbers<[1], [0], [0], [1], [0, 0, 1, 1], [], []>} : vector<6x128xbf16>, vector<128x192xbf16>, vector<6x192xf32> -> vector<6x192xf32>
    %271 = arith.addf %267, %270 : vector<6x192xf32>
    %272 = vector.extract_strided_slice %262 {offsets = [2, 0], sizes = [6, 128], strides = [1, 1]} : vector<8x128xf32> to vector<6x128xf32>
    %273 = arith.truncf %272 : vector<6x128xf32> to vector<6x128xbf16>
    %cst_148 = arith.constant dense<0.000000e+00> : vector<6x192xf32>
    %274 = tpu.matmul %273, %17, %cst_148 {dimension_numbers = #tpu.dot_dimension_numbers<[1], [0], [0], [1], [0, 0, 1, 1], [], []>} : vector<6x128xbf16>, vector<128x192xbf16>, vector<6x192xf32> -> vector<6x192xf32>
    %275 = arith.addf %271, %274 : vector<6x192xf32>
    %cst_149 = arith.constant 0.000000e+00 : f32
    %276 = vector.broadcast %cst_149 : f32 to vector<6x192xf32>
    %277 = arith.maximumf %275, %276 : vector<6x192xf32>
    %278 = arith.truncf %277 : vector<6x192xf32> to vector<6x192xbf16>
    %cst_150 = arith.constant dense<0.000000e+00> : vector<6x96xf32>
    %279 = tpu.matmul %278, %31, %cst_150 {dimension_numbers = #tpu.dot_dimension_numbers<[1], [0], [0], [1], [0, 0, 1, 1], [], []>} : vector<6x192xbf16>, vector<192x96xbf16>, vector<6x96xf32> -> vector<6x96xf32>
    %280 = arith.truncf %277 : vector<6x192xf32> to vector<6x192xbf16>
    %cst_151 = arith.constant dense<0.000000e+00> : vector<6x96xf32>
    %281 = tpu.matmul %280, %32, %cst_151 {dimension_numbers = #tpu.dot_dimension_numbers<[1], [0], [0], [1], [0, 0, 1, 1], [], []>} : vector<6x192xbf16>, vector<192x96xbf16>, vector<6x96xf32> -> vector<6x96xf32>
    %282 = arith.maximumf %279, %281 : vector<6x96xf32>
    %cst_152 = arith.constant dense<0.000000e+00> : vector<3x96xf32>
    %283 = tpu.matmul %29, %282, %cst_152 {dimension_numbers = #tpu.dot_dimension_numbers<[1], [0], [0], [1], [0, 0, 1, 1], [], []>} : vector<3x6xbf16>, vector<6x96xf32>, vector<3x96xf32> -> vector<3x96xf32>
    %cst_153 = arith.constant dense<0.000000e+00> : vector<3x96xf32>
    %284 = tpu.matmul %30, %282, %cst_153 {dimension_numbers = #tpu.dot_dimension_numbers<[1], [0], [0], [1], [0, 0, 1, 1], [], []>} : vector<3x6xbf16>, vector<6x96xf32>, vector<3x96xf32> -> vector<3x96xf32>
    %285 = arith.maximumf %283, %284 : vector<3x96xf32>
    %286 = vector.extract_strided_slice %285 {offsets = [0, 0], sizes = [1, 96], strides = [1, 1]} : vector<3x96xf32> to vector<1x96xf32>
    %287 = arith.truncf %286 : vector<1x96xf32> to vector<1x96xbf16>
    %cst_154 = arith.constant dense<0.000000e+00> : vector<1x64xf32>
    %288 = tpu.matmul %287, %33, %cst_154 {dimension_numbers = #tpu.dot_dimension_numbers<[1], [0], [0], [1], [0, 0, 1, 1], [], []>} : vector<1x96xbf16>, vector<96x64xbf16>, vector<1x64xf32> -> vector<1x64xf32>
    %289 = arith.addf %36, %288 : vector<1x64xf32>
    %290 = vector.extract_strided_slice %285 {offsets = [1, 0], sizes = [1, 96], strides = [1, 1]} : vector<3x96xf32> to vector<1x96xf32>
    %291 = arith.truncf %290 : vector<1x96xf32> to vector<1x96xbf16>
    %cst_155 = arith.constant dense<0.000000e+00> : vector<1x64xf32>
    %292 = tpu.matmul %291, %34, %cst_155 {dimension_numbers = #tpu.dot_dimension_numbers<[1], [0], [0], [1], [0, 0, 1, 1], [], []>} : vector<1x96xbf16>, vector<96x64xbf16>, vector<1x64xf32> -> vector<1x64xf32>
    %293 = arith.addf %289, %292 : vector<1x64xf32>
    %294 = vector.extract_strided_slice %285 {offsets = [2, 0], sizes = [1, 96], strides = [1, 1]} : vector<3x96xf32> to vector<1x96xf32>
    %295 = arith.truncf %294 : vector<1x96xf32> to vector<1x96xbf16>
    %cst_156 = arith.constant dense<0.000000e+00> : vector<1x64xf32>
    %296 = tpu.matmul %295, %35, %cst_156 {dimension_numbers = #tpu.dot_dimension_numbers<[1], [0], [0], [1], [0, 0, 1, 1], [], []>} : vector<1x96xbf16>, vector<96x64xbf16>, vector<1x64xf32> -> vector<1x64xf32>
    %297 = arith.addf %293, %296 : vector<1x64xf32>
    %cst_157 = arith.constant 0.000000e+00 : f32
    %298 = vector.broadcast %cst_157 : f32 to vector<1x64xf32>
    %299 = arith.maximumf %297, %298 : vector<1x64xf32>
    %300 = arith.truncf %299 : vector<1x64xf32> to vector<1x64xbf16>
    %cst_158 = arith.constant dense<0.000000e+00> : vector<1x128xf32>
    %301 = tpu.matmul %300, %37, %cst_158 {dimension_numbers = #tpu.dot_dimension_numbers<[1], [0], [0], [1], [0, 0, 1, 1], [], []>} : vector<1x64xbf16>, vector<64x128xbf16>, vector<1x128xf32> -> vector<1x128xf32>
    %302 = arith.addf %301, %38 : vector<1x128xf32>
    %c3 = arith.constant 3 : index
    %c0_159 = arith.constant 0 : index
    %c0_160 = arith.constant 0 : index
    %303 = vector.load %arg1[%c3, %c0_159, %c0_160] : memref<8x26x26xf32, #tpu.memory_space<vmem>>, vector<1x26x26xf32>
    %304 = vector.shape_cast %303 : vector<1x26x26xf32> to vector<26x26xf32>
    %305 = vector.extract_strided_slice %304 {offsets = [0, 0], sizes = [24, 26], strides = [1, 1]} : vector<26x26xf32> to vector<24x26xf32>
    %306 = arith.truncf %305 : vector<24x26xf32> to vector<24x26xbf16>
    %cst_161 = arith.constant dense<0.000000e+00> : vector<24x192xf32>
    %307 = tpu.matmul %306, %1, %cst_161 {dimension_numbers = #tpu.dot_dimension_numbers<[1], [0], [0], [1], [0, 0, 1, 1], [], []>} : vector<24x26xbf16>, vector<26x192xbf16>, vector<24x192xf32> -> vector<24x192xf32>
    %308 = vector.broadcast %18 : vector<1x192xf32> to vector<24x192xf32>
    %309 = arith.addf %308, %307 : vector<24x192xf32>
    %310 = vector.extract_strided_slice %304 {offsets = [1, 0], sizes = [24, 26], strides = [1, 1]} : vector<26x26xf32> to vector<24x26xf32>
    %311 = arith.truncf %310 : vector<24x26xf32> to vector<24x26xbf16>
    %cst_162 = arith.constant dense<0.000000e+00> : vector<24x192xf32>
    %312 = tpu.matmul %311, %3, %cst_162 {dimension_numbers = #tpu.dot_dimension_numbers<[1], [0], [0], [1], [0, 0, 1, 1], [], []>} : vector<24x26xbf16>, vector<26x192xbf16>, vector<24x192xf32> -> vector<24x192xf32>
    %313 = arith.addf %309, %312 : vector<24x192xf32>
    %314 = vector.extract_strided_slice %304 {offsets = [2, 0], sizes = [24, 26], strides = [1, 1]} : vector<26x26xf32> to vector<24x26xf32>
    %315 = arith.truncf %314 : vector<24x26xf32> to vector<24x26xbf16>
    %cst_163 = arith.constant dense<0.000000e+00> : vector<24x192xf32>
    %316 = tpu.matmul %315, %5, %cst_163 {dimension_numbers = #tpu.dot_dimension_numbers<[1], [0], [0], [1], [0, 0, 1, 1], [], []>} : vector<24x26xbf16>, vector<26x192xbf16>, vector<24x192xf32> -> vector<24x192xf32>
    %317 = arith.addf %313, %316 : vector<24x192xf32>
    %cst_164 = arith.constant 0.000000e+00 : f32
    %318 = vector.broadcast %cst_164 : f32 to vector<24x192xf32>
    %319 = arith.maximumf %317, %318 : vector<24x192xf32>
    %320 = arith.truncf %319 : vector<24x192xf32> to vector<24x192xbf16>
    %cst_165 = arith.constant dense<0.000000e+00> : vector<24x112xf32>
    %321 = tpu.matmul %320, %23, %cst_165 {dimension_numbers = #tpu.dot_dimension_numbers<[1], [0], [0], [1], [0, 0, 1, 1], [], []>} : vector<24x192xbf16>, vector<192x112xbf16>, vector<24x112xf32> -> vector<24x112xf32>
    %322 = arith.truncf %319 : vector<24x192xf32> to vector<24x192xbf16>
    %cst_166 = arith.constant dense<0.000000e+00> : vector<24x112xf32>
    %323 = tpu.matmul %322, %24, %cst_166 {dimension_numbers = #tpu.dot_dimension_numbers<[1], [0], [0], [1], [0, 0, 1, 1], [], []>} : vector<24x192xbf16>, vector<192x112xbf16>, vector<24x112xf32> -> vector<24x112xf32>
    %324 = arith.maximumf %321, %323 : vector<24x112xf32>
    %cst_167 = arith.constant dense<0.000000e+00> : vector<14x112xf32>
    %325 = tpu.matmul %21, %324, %cst_167 {dimension_numbers = #tpu.dot_dimension_numbers<[1], [0], [0], [1], [0, 0, 1, 1], [], []>} : vector<14x24xbf16>, vector<24x112xf32>, vector<14x112xf32> -> vector<14x112xf32>
    %cst_168 = arith.constant dense<0.000000e+00> : vector<14x112xf32>
    %326 = tpu.matmul %22, %324, %cst_168 {dimension_numbers = #tpu.dot_dimension_numbers<[1], [0], [0], [1], [0, 0, 1, 1], [], []>} : vector<14x24xbf16>, vector<24x112xf32>, vector<14x112xf32> -> vector<14x112xf32>
    %327 = arith.maximumf %325, %326 : vector<14x112xf32>
    %328 = vector.extract_strided_slice %327 {offsets = [0, 0], sizes = [12, 112], strides = [1, 1]} : vector<14x112xf32> to vector<12x112xf32>
    %329 = arith.truncf %328 : vector<12x112xf32> to vector<12x112xbf16>
    %cst_169 = arith.constant dense<0.000000e+00> : vector<12x192xf32>
    %330 = tpu.matmul %329, %7, %cst_169 {dimension_numbers = #tpu.dot_dimension_numbers<[1], [0], [0], [1], [0, 0, 1, 1], [], []>} : vector<12x112xbf16>, vector<112x192xbf16>, vector<12x192xf32> -> vector<12x192xf32>
    %331 = vector.broadcast %19 : vector<1x192xf32> to vector<12x192xf32>
    %332 = arith.addf %331, %330 : vector<12x192xf32>
    %333 = vector.extract_strided_slice %327 {offsets = [1, 0], sizes = [12, 112], strides = [1, 1]} : vector<14x112xf32> to vector<12x112xf32>
    %334 = arith.truncf %333 : vector<12x112xf32> to vector<12x112xbf16>
    %cst_170 = arith.constant dense<0.000000e+00> : vector<12x192xf32>
    %335 = tpu.matmul %334, %9, %cst_170 {dimension_numbers = #tpu.dot_dimension_numbers<[1], [0], [0], [1], [0, 0, 1, 1], [], []>} : vector<12x112xbf16>, vector<112x192xbf16>, vector<12x192xf32> -> vector<12x192xf32>
    %336 = arith.addf %332, %335 : vector<12x192xf32>
    %337 = vector.extract_strided_slice %327 {offsets = [2, 0], sizes = [12, 112], strides = [1, 1]} : vector<14x112xf32> to vector<12x112xf32>
    %338 = arith.truncf %337 : vector<12x112xf32> to vector<12x112xbf16>
    %cst_171 = arith.constant dense<0.000000e+00> : vector<12x192xf32>
    %339 = tpu.matmul %338, %11, %cst_171 {dimension_numbers = #tpu.dot_dimension_numbers<[1], [0], [0], [1], [0, 0, 1, 1], [], []>} : vector<12x112xbf16>, vector<112x192xbf16>, vector<12x192xf32> -> vector<12x192xf32>
    %340 = arith.addf %336, %339 : vector<12x192xf32>
    %cst_172 = arith.constant 0.000000e+00 : f32
    %341 = vector.broadcast %cst_172 : f32 to vector<12x192xf32>
    %342 = arith.maximumf %340, %341 : vector<12x192xf32>
    %343 = arith.truncf %342 : vector<12x192xf32> to vector<12x192xbf16>
    %cst_173 = arith.constant dense<0.000000e+00> : vector<12x128xf32>
    %344 = tpu.matmul %343, %27, %cst_173 {dimension_numbers = #tpu.dot_dimension_numbers<[1], [0], [0], [1], [0, 0, 1, 1], [], []>} : vector<12x192xbf16>, vector<192x128xbf16>, vector<12x128xf32> -> vector<12x128xf32>
    %345 = arith.truncf %342 : vector<12x192xf32> to vector<12x192xbf16>
    %cst_174 = arith.constant dense<0.000000e+00> : vector<12x128xf32>
    %346 = tpu.matmul %345, %28, %cst_174 {dimension_numbers = #tpu.dot_dimension_numbers<[1], [0], [0], [1], [0, 0, 1, 1], [], []>} : vector<12x192xbf16>, vector<192x128xbf16>, vector<12x128xf32> -> vector<12x128xf32>
    %347 = arith.maximumf %344, %346 : vector<12x128xf32>
    %cst_175 = arith.constant dense<0.000000e+00> : vector<8x128xf32>
    %348 = tpu.matmul %25, %347, %cst_175 {dimension_numbers = #tpu.dot_dimension_numbers<[1], [0], [0], [1], [0, 0, 1, 1], [], []>} : vector<8x12xbf16>, vector<12x128xf32>, vector<8x128xf32> -> vector<8x128xf32>
    %cst_176 = arith.constant dense<0.000000e+00> : vector<8x128xf32>
    %349 = tpu.matmul %26, %347, %cst_176 {dimension_numbers = #tpu.dot_dimension_numbers<[1], [0], [0], [1], [0, 0, 1, 1], [], []>} : vector<8x12xbf16>, vector<12x128xf32>, vector<8x128xf32> -> vector<8x128xf32>
    %350 = arith.maximumf %348, %349 : vector<8x128xf32>
    %351 = vector.extract_strided_slice %350 {offsets = [0, 0], sizes = [6, 128], strides = [1, 1]} : vector<8x128xf32> to vector<6x128xf32>
    %352 = arith.truncf %351 : vector<6x128xf32> to vector<6x128xbf16>
    %cst_177 = arith.constant dense<0.000000e+00> : vector<6x192xf32>
    %353 = tpu.matmul %352, %13, %cst_177 {dimension_numbers = #tpu.dot_dimension_numbers<[1], [0], [0], [1], [0, 0, 1, 1], [], []>} : vector<6x128xbf16>, vector<128x192xbf16>, vector<6x192xf32> -> vector<6x192xf32>
    %354 = vector.broadcast %20 : vector<1x192xf32> to vector<6x192xf32>
    %355 = arith.addf %354, %353 : vector<6x192xf32>
    %356 = vector.extract_strided_slice %350 {offsets = [1, 0], sizes = [6, 128], strides = [1, 1]} : vector<8x128xf32> to vector<6x128xf32>
    %357 = arith.truncf %356 : vector<6x128xf32> to vector<6x128xbf16>
    %cst_178 = arith.constant dense<0.000000e+00> : vector<6x192xf32>
    %358 = tpu.matmul %357, %15, %cst_178 {dimension_numbers = #tpu.dot_dimension_numbers<[1], [0], [0], [1], [0, 0, 1, 1], [], []>} : vector<6x128xbf16>, vector<128x192xbf16>, vector<6x192xf32> -> vector<6x192xf32>
    %359 = arith.addf %355, %358 : vector<6x192xf32>
    %360 = vector.extract_strided_slice %350 {offsets = [2, 0], sizes = [6, 128], strides = [1, 1]} : vector<8x128xf32> to vector<6x128xf32>
    %361 = arith.truncf %360 : vector<6x128xf32> to vector<6x128xbf16>
    %cst_179 = arith.constant dense<0.000000e+00> : vector<6x192xf32>
    %362 = tpu.matmul %361, %17, %cst_179 {dimension_numbers = #tpu.dot_dimension_numbers<[1], [0], [0], [1], [0, 0, 1, 1], [], []>} : vector<6x128xbf16>, vector<128x192xbf16>, vector<6x192xf32> -> vector<6x192xf32>
    %363 = arith.addf %359, %362 : vector<6x192xf32>
    %cst_180 = arith.constant 0.000000e+00 : f32
    %364 = vector.broadcast %cst_180 : f32 to vector<6x192xf32>
    %365 = arith.maximumf %363, %364 : vector<6x192xf32>
    %366 = arith.truncf %365 : vector<6x192xf32> to vector<6x192xbf16>
    %cst_181 = arith.constant dense<0.000000e+00> : vector<6x96xf32>
    %367 = tpu.matmul %366, %31, %cst_181 {dimension_numbers = #tpu.dot_dimension_numbers<[1], [0], [0], [1], [0, 0, 1, 1], [], []>} : vector<6x192xbf16>, vector<192x96xbf16>, vector<6x96xf32> -> vector<6x96xf32>
    %368 = arith.truncf %365 : vector<6x192xf32> to vector<6x192xbf16>
    %cst_182 = arith.constant dense<0.000000e+00> : vector<6x96xf32>
    %369 = tpu.matmul %368, %32, %cst_182 {dimension_numbers = #tpu.dot_dimension_numbers<[1], [0], [0], [1], [0, 0, 1, 1], [], []>} : vector<6x192xbf16>, vector<192x96xbf16>, vector<6x96xf32> -> vector<6x96xf32>
    %370 = arith.maximumf %367, %369 : vector<6x96xf32>
    %cst_183 = arith.constant dense<0.000000e+00> : vector<3x96xf32>
    %371 = tpu.matmul %29, %370, %cst_183 {dimension_numbers = #tpu.dot_dimension_numbers<[1], [0], [0], [1], [0, 0, 1, 1], [], []>} : vector<3x6xbf16>, vector<6x96xf32>, vector<3x96xf32> -> vector<3x96xf32>
    %cst_184 = arith.constant dense<0.000000e+00> : vector<3x96xf32>
    %372 = tpu.matmul %30, %370, %cst_184 {dimension_numbers = #tpu.dot_dimension_numbers<[1], [0], [0], [1], [0, 0, 1, 1], [], []>} : vector<3x6xbf16>, vector<6x96xf32>, vector<3x96xf32> -> vector<3x96xf32>
    %373 = arith.maximumf %371, %372 : vector<3x96xf32>
    %374 = vector.extract_strided_slice %373 {offsets = [0, 0], sizes = [1, 96], strides = [1, 1]} : vector<3x96xf32> to vector<1x96xf32>
    %375 = arith.truncf %374 : vector<1x96xf32> to vector<1x96xbf16>
    %cst_185 = arith.constant dense<0.000000e+00> : vector<1x64xf32>
    %376 = tpu.matmul %375, %33, %cst_185 {dimension_numbers = #tpu.dot_dimension_numbers<[1], [0], [0], [1], [0, 0, 1, 1], [], []>} : vector<1x96xbf16>, vector<96x64xbf16>, vector<1x64xf32> -> vector<1x64xf32>
    %377 = arith.addf %36, %376 : vector<1x64xf32>
    %378 = vector.extract_strided_slice %373 {offsets = [1, 0], sizes = [1, 96], strides = [1, 1]} : vector<3x96xf32> to vector<1x96xf32>
    %379 = arith.truncf %378 : vector<1x96xf32> to vector<1x96xbf16>
    %cst_186 = arith.constant dense<0.000000e+00> : vector<1x64xf32>
    %380 = tpu.matmul %379, %34, %cst_186 {dimension_numbers = #tpu.dot_dimension_numbers<[1], [0], [0], [1], [0, 0, 1, 1], [], []>} : vector<1x96xbf16>, vector<96x64xbf16>, vector<1x64xf32> -> vector<1x64xf32>
    %381 = arith.addf %377, %380 : vector<1x64xf32>
    %382 = vector.extract_strided_slice %373 {offsets = [2, 0], sizes = [1, 96], strides = [1, 1]} : vector<3x96xf32> to vector<1x96xf32>
    %383 = arith.truncf %382 : vector<1x96xf32> to vector<1x96xbf16>
    %cst_187 = arith.constant dense<0.000000e+00> : vector<1x64xf32>
    %384 = tpu.matmul %383, %35, %cst_187 {dimension_numbers = #tpu.dot_dimension_numbers<[1], [0], [0], [1], [0, 0, 1, 1], [], []>} : vector<1x96xbf16>, vector<96x64xbf16>, vector<1x64xf32> -> vector<1x64xf32>
    %385 = arith.addf %381, %384 : vector<1x64xf32>
    %cst_188 = arith.constant 0.000000e+00 : f32
    %386 = vector.broadcast %cst_188 : f32 to vector<1x64xf32>
    %387 = arith.maximumf %385, %386 : vector<1x64xf32>
    %388 = arith.truncf %387 : vector<1x64xf32> to vector<1x64xbf16>
    %cst_189 = arith.constant dense<0.000000e+00> : vector<1x128xf32>
    %389 = tpu.matmul %388, %37, %cst_189 {dimension_numbers = #tpu.dot_dimension_numbers<[1], [0], [0], [1], [0, 0, 1, 1], [], []>} : vector<1x64xbf16>, vector<64x128xbf16>, vector<1x128xf32> -> vector<1x128xf32>
    %390 = arith.addf %389, %38 : vector<1x128xf32>
    %c4 = arith.constant 4 : index
    %c0_190 = arith.constant 0 : index
    %c0_191 = arith.constant 0 : index
    %391 = vector.load %arg1[%c4, %c0_190, %c0_191] : memref<8x26x26xf32, #tpu.memory_space<vmem>>, vector<1x26x26xf32>
    %392 = vector.shape_cast %391 : vector<1x26x26xf32> to vector<26x26xf32>
    %393 = vector.extract_strided_slice %392 {offsets = [0, 0], sizes = [24, 26], strides = [1, 1]} : vector<26x26xf32> to vector<24x26xf32>
    %394 = arith.truncf %393 : vector<24x26xf32> to vector<24x26xbf16>
    %cst_192 = arith.constant dense<0.000000e+00> : vector<24x192xf32>
    %395 = tpu.matmul %394, %1, %cst_192 {dimension_numbers = #tpu.dot_dimension_numbers<[1], [0], [0], [1], [0, 0, 1, 1], [], []>} : vector<24x26xbf16>, vector<26x192xbf16>, vector<24x192xf32> -> vector<24x192xf32>
    %396 = vector.broadcast %18 : vector<1x192xf32> to vector<24x192xf32>
    %397 = arith.addf %396, %395 : vector<24x192xf32>
    %398 = vector.extract_strided_slice %392 {offsets = [1, 0], sizes = [24, 26], strides = [1, 1]} : vector<26x26xf32> to vector<24x26xf32>
    %399 = arith.truncf %398 : vector<24x26xf32> to vector<24x26xbf16>
    %cst_193 = arith.constant dense<0.000000e+00> : vector<24x192xf32>
    %400 = tpu.matmul %399, %3, %cst_193 {dimension_numbers = #tpu.dot_dimension_numbers<[1], [0], [0], [1], [0, 0, 1, 1], [], []>} : vector<24x26xbf16>, vector<26x192xbf16>, vector<24x192xf32> -> vector<24x192xf32>
    %401 = arith.addf %397, %400 : vector<24x192xf32>
    %402 = vector.extract_strided_slice %392 {offsets = [2, 0], sizes = [24, 26], strides = [1, 1]} : vector<26x26xf32> to vector<24x26xf32>
    %403 = arith.truncf %402 : vector<24x26xf32> to vector<24x26xbf16>
    %cst_194 = arith.constant dense<0.000000e+00> : vector<24x192xf32>
    %404 = tpu.matmul %403, %5, %cst_194 {dimension_numbers = #tpu.dot_dimension_numbers<[1], [0], [0], [1], [0, 0, 1, 1], [], []>} : vector<24x26xbf16>, vector<26x192xbf16>, vector<24x192xf32> -> vector<24x192xf32>
    %405 = arith.addf %401, %404 : vector<24x192xf32>
    %cst_195 = arith.constant 0.000000e+00 : f32
    %406 = vector.broadcast %cst_195 : f32 to vector<24x192xf32>
    %407 = arith.maximumf %405, %406 : vector<24x192xf32>
    %408 = arith.truncf %407 : vector<24x192xf32> to vector<24x192xbf16>
    %cst_196 = arith.constant dense<0.000000e+00> : vector<24x112xf32>
    %409 = tpu.matmul %408, %23, %cst_196 {dimension_numbers = #tpu.dot_dimension_numbers<[1], [0], [0], [1], [0, 0, 1, 1], [], []>} : vector<24x192xbf16>, vector<192x112xbf16>, vector<24x112xf32> -> vector<24x112xf32>
    %410 = arith.truncf %407 : vector<24x192xf32> to vector<24x192xbf16>
    %cst_197 = arith.constant dense<0.000000e+00> : vector<24x112xf32>
    %411 = tpu.matmul %410, %24, %cst_197 {dimension_numbers = #tpu.dot_dimension_numbers<[1], [0], [0], [1], [0, 0, 1, 1], [], []>} : vector<24x192xbf16>, vector<192x112xbf16>, vector<24x112xf32> -> vector<24x112xf32>
    %412 = arith.maximumf %409, %411 : vector<24x112xf32>
    %cst_198 = arith.constant dense<0.000000e+00> : vector<14x112xf32>
    %413 = tpu.matmul %21, %412, %cst_198 {dimension_numbers = #tpu.dot_dimension_numbers<[1], [0], [0], [1], [0, 0, 1, 1], [], []>} : vector<14x24xbf16>, vector<24x112xf32>, vector<14x112xf32> -> vector<14x112xf32>
    %cst_199 = arith.constant dense<0.000000e+00> : vector<14x112xf32>
    %414 = tpu.matmul %22, %412, %cst_199 {dimension_numbers = #tpu.dot_dimension_numbers<[1], [0], [0], [1], [0, 0, 1, 1], [], []>} : vector<14x24xbf16>, vector<24x112xf32>, vector<14x112xf32> -> vector<14x112xf32>
    %415 = arith.maximumf %413, %414 : vector<14x112xf32>
    %416 = vector.extract_strided_slice %415 {offsets = [0, 0], sizes = [12, 112], strides = [1, 1]} : vector<14x112xf32> to vector<12x112xf32>
    %417 = arith.truncf %416 : vector<12x112xf32> to vector<12x112xbf16>
    %cst_200 = arith.constant dense<0.000000e+00> : vector<12x192xf32>
    %418 = tpu.matmul %417, %7, %cst_200 {dimension_numbers = #tpu.dot_dimension_numbers<[1], [0], [0], [1], [0, 0, 1, 1], [], []>} : vector<12x112xbf16>, vector<112x192xbf16>, vector<12x192xf32> -> vector<12x192xf32>
    %419 = vector.broadcast %19 : vector<1x192xf32> to vector<12x192xf32>
    %420 = arith.addf %419, %418 : vector<12x192xf32>
    %421 = vector.extract_strided_slice %415 {offsets = [1, 0], sizes = [12, 112], strides = [1, 1]} : vector<14x112xf32> to vector<12x112xf32>
    %422 = arith.truncf %421 : vector<12x112xf32> to vector<12x112xbf16>
    %cst_201 = arith.constant dense<0.000000e+00> : vector<12x192xf32>
    %423 = tpu.matmul %422, %9, %cst_201 {dimension_numbers = #tpu.dot_dimension_numbers<[1], [0], [0], [1], [0, 0, 1, 1], [], []>} : vector<12x112xbf16>, vector<112x192xbf16>, vector<12x192xf32> -> vector<12x192xf32>
    %424 = arith.addf %420, %423 : vector<12x192xf32>
    %425 = vector.extract_strided_slice %415 {offsets = [2, 0], sizes = [12, 112], strides = [1, 1]} : vector<14x112xf32> to vector<12x112xf32>
    %426 = arith.truncf %425 : vector<12x112xf32> to vector<12x112xbf16>
    %cst_202 = arith.constant dense<0.000000e+00> : vector<12x192xf32>
    %427 = tpu.matmul %426, %11, %cst_202 {dimension_numbers = #tpu.dot_dimension_numbers<[1], [0], [0], [1], [0, 0, 1, 1], [], []>} : vector<12x112xbf16>, vector<112x192xbf16>, vector<12x192xf32> -> vector<12x192xf32>
    %428 = arith.addf %424, %427 : vector<12x192xf32>
    %cst_203 = arith.constant 0.000000e+00 : f32
    %429 = vector.broadcast %cst_203 : f32 to vector<12x192xf32>
    %430 = arith.maximumf %428, %429 : vector<12x192xf32>
    %431 = arith.truncf %430 : vector<12x192xf32> to vector<12x192xbf16>
    %cst_204 = arith.constant dense<0.000000e+00> : vector<12x128xf32>
    %432 = tpu.matmul %431, %27, %cst_204 {dimension_numbers = #tpu.dot_dimension_numbers<[1], [0], [0], [1], [0, 0, 1, 1], [], []>} : vector<12x192xbf16>, vector<192x128xbf16>, vector<12x128xf32> -> vector<12x128xf32>
    %433 = arith.truncf %430 : vector<12x192xf32> to vector<12x192xbf16>
    %cst_205 = arith.constant dense<0.000000e+00> : vector<12x128xf32>
    %434 = tpu.matmul %433, %28, %cst_205 {dimension_numbers = #tpu.dot_dimension_numbers<[1], [0], [0], [1], [0, 0, 1, 1], [], []>} : vector<12x192xbf16>, vector<192x128xbf16>, vector<12x128xf32> -> vector<12x128xf32>
    %435 = arith.maximumf %432, %434 : vector<12x128xf32>
    %cst_206 = arith.constant dense<0.000000e+00> : vector<8x128xf32>
    %436 = tpu.matmul %25, %435, %cst_206 {dimension_numbers = #tpu.dot_dimension_numbers<[1], [0], [0], [1], [0, 0, 1, 1], [], []>} : vector<8x12xbf16>, vector<12x128xf32>, vector<8x128xf32> -> vector<8x128xf32>
    %cst_207 = arith.constant dense<0.000000e+00> : vector<8x128xf32>
    %437 = tpu.matmul %26, %435, %cst_207 {dimension_numbers = #tpu.dot_dimension_numbers<[1], [0], [0], [1], [0, 0, 1, 1], [], []>} : vector<8x12xbf16>, vector<12x128xf32>, vector<8x128xf32> -> vector<8x128xf32>
    %438 = arith.maximumf %436, %437 : vector<8x128xf32>
    %439 = vector.extract_strided_slice %438 {offsets = [0, 0], sizes = [6, 128], strides = [1, 1]} : vector<8x128xf32> to vector<6x128xf32>
    %440 = arith.truncf %439 : vector<6x128xf32> to vector<6x128xbf16>
    %cst_208 = arith.constant dense<0.000000e+00> : vector<6x192xf32>
    %441 = tpu.matmul %440, %13, %cst_208 {dimension_numbers = #tpu.dot_dimension_numbers<[1], [0], [0], [1], [0, 0, 1, 1], [], []>} : vector<6x128xbf16>, vector<128x192xbf16>, vector<6x192xf32> -> vector<6x192xf32>
    %442 = vector.broadcast %20 : vector<1x192xf32> to vector<6x192xf32>
    %443 = arith.addf %442, %441 : vector<6x192xf32>
    %444 = vector.extract_strided_slice %438 {offsets = [1, 0], sizes = [6, 128], strides = [1, 1]} : vector<8x128xf32> to vector<6x128xf32>
    %445 = arith.truncf %444 : vector<6x128xf32> to vector<6x128xbf16>
    %cst_209 = arith.constant dense<0.000000e+00> : vector<6x192xf32>
    %446 = tpu.matmul %445, %15, %cst_209 {dimension_numbers = #tpu.dot_dimension_numbers<[1], [0], [0], [1], [0, 0, 1, 1], [], []>} : vector<6x128xbf16>, vector<128x192xbf16>, vector<6x192xf32> -> vector<6x192xf32>
    %447 = arith.addf %443, %446 : vector<6x192xf32>
    %448 = vector.extract_strided_slice %438 {offsets = [2, 0], sizes = [6, 128], strides = [1, 1]} : vector<8x128xf32> to vector<6x128xf32>
    %449 = arith.truncf %448 : vector<6x128xf32> to vector<6x128xbf16>
    %cst_210 = arith.constant dense<0.000000e+00> : vector<6x192xf32>
    %450 = tpu.matmul %449, %17, %cst_210 {dimension_numbers = #tpu.dot_dimension_numbers<[1], [0], [0], [1], [0, 0, 1, 1], [], []>} : vector<6x128xbf16>, vector<128x192xbf16>, vector<6x192xf32> -> vector<6x192xf32>
    %451 = arith.addf %447, %450 : vector<6x192xf32>
    %cst_211 = arith.constant 0.000000e+00 : f32
    %452 = vector.broadcast %cst_211 : f32 to vector<6x192xf32>
    %453 = arith.maximumf %451, %452 : vector<6x192xf32>
    %454 = arith.truncf %453 : vector<6x192xf32> to vector<6x192xbf16>
    %cst_212 = arith.constant dense<0.000000e+00> : vector<6x96xf32>
    %455 = tpu.matmul %454, %31, %cst_212 {dimension_numbers = #tpu.dot_dimension_numbers<[1], [0], [0], [1], [0, 0, 1, 1], [], []>} : vector<6x192xbf16>, vector<192x96xbf16>, vector<6x96xf32> -> vector<6x96xf32>
    %456 = arith.truncf %453 : vector<6x192xf32> to vector<6x192xbf16>
    %cst_213 = arith.constant dense<0.000000e+00> : vector<6x96xf32>
    %457 = tpu.matmul %456, %32, %cst_213 {dimension_numbers = #tpu.dot_dimension_numbers<[1], [0], [0], [1], [0, 0, 1, 1], [], []>} : vector<6x192xbf16>, vector<192x96xbf16>, vector<6x96xf32> -> vector<6x96xf32>
    %458 = arith.maximumf %455, %457 : vector<6x96xf32>
    %cst_214 = arith.constant dense<0.000000e+00> : vector<3x96xf32>
    %459 = tpu.matmul %29, %458, %cst_214 {dimension_numbers = #tpu.dot_dimension_numbers<[1], [0], [0], [1], [0, 0, 1, 1], [], []>} : vector<3x6xbf16>, vector<6x96xf32>, vector<3x96xf32> -> vector<3x96xf32>
    %cst_215 = arith.constant dense<0.000000e+00> : vector<3x96xf32>
    %460 = tpu.matmul %30, %458, %cst_215 {dimension_numbers = #tpu.dot_dimension_numbers<[1], [0], [0], [1], [0, 0, 1, 1], [], []>} : vector<3x6xbf16>, vector<6x96xf32>, vector<3x96xf32> -> vector<3x96xf32>
    %461 = arith.maximumf %459, %460 : vector<3x96xf32>
    %462 = vector.extract_strided_slice %461 {offsets = [0, 0], sizes = [1, 96], strides = [1, 1]} : vector<3x96xf32> to vector<1x96xf32>
    %463 = arith.truncf %462 : vector<1x96xf32> to vector<1x96xbf16>
    %cst_216 = arith.constant dense<0.000000e+00> : vector<1x64xf32>
    %464 = tpu.matmul %463, %33, %cst_216 {dimension_numbers = #tpu.dot_dimension_numbers<[1], [0], [0], [1], [0, 0, 1, 1], [], []>} : vector<1x96xbf16>, vector<96x64xbf16>, vector<1x64xf32> -> vector<1x64xf32>
    %465 = arith.addf %36, %464 : vector<1x64xf32>
    %466 = vector.extract_strided_slice %461 {offsets = [1, 0], sizes = [1, 96], strides = [1, 1]} : vector<3x96xf32> to vector<1x96xf32>
    %467 = arith.truncf %466 : vector<1x96xf32> to vector<1x96xbf16>
    %cst_217 = arith.constant dense<0.000000e+00> : vector<1x64xf32>
    %468 = tpu.matmul %467, %34, %cst_217 {dimension_numbers = #tpu.dot_dimension_numbers<[1], [0], [0], [1], [0, 0, 1, 1], [], []>} : vector<1x96xbf16>, vector<96x64xbf16>, vector<1x64xf32> -> vector<1x64xf32>
    %469 = arith.addf %465, %468 : vector<1x64xf32>
    %470 = vector.extract_strided_slice %461 {offsets = [2, 0], sizes = [1, 96], strides = [1, 1]} : vector<3x96xf32> to vector<1x96xf32>
    %471 = arith.truncf %470 : vector<1x96xf32> to vector<1x96xbf16>
    %cst_218 = arith.constant dense<0.000000e+00> : vector<1x64xf32>
    %472 = tpu.matmul %471, %35, %cst_218 {dimension_numbers = #tpu.dot_dimension_numbers<[1], [0], [0], [1], [0, 0, 1, 1], [], []>} : vector<1x96xbf16>, vector<96x64xbf16>, vector<1x64xf32> -> vector<1x64xf32>
    %473 = arith.addf %469, %472 : vector<1x64xf32>
    %cst_219 = arith.constant 0.000000e+00 : f32
    %474 = vector.broadcast %cst_219 : f32 to vector<1x64xf32>
    %475 = arith.maximumf %473, %474 : vector<1x64xf32>
    %476 = arith.truncf %475 : vector<1x64xf32> to vector<1x64xbf16>
    %cst_220 = arith.constant dense<0.000000e+00> : vector<1x128xf32>
    %477 = tpu.matmul %476, %37, %cst_220 {dimension_numbers = #tpu.dot_dimension_numbers<[1], [0], [0], [1], [0, 0, 1, 1], [], []>} : vector<1x64xbf16>, vector<64x128xbf16>, vector<1x128xf32> -> vector<1x128xf32>
    %478 = arith.addf %477, %38 : vector<1x128xf32>
    %c5 = arith.constant 5 : index
    %c0_221 = arith.constant 0 : index
    %c0_222 = arith.constant 0 : index
    %479 = vector.load %arg1[%c5, %c0_221, %c0_222] : memref<8x26x26xf32, #tpu.memory_space<vmem>>, vector<1x26x26xf32>
    %480 = vector.shape_cast %479 : vector<1x26x26xf32> to vector<26x26xf32>
    %481 = vector.extract_strided_slice %480 {offsets = [0, 0], sizes = [24, 26], strides = [1, 1]} : vector<26x26xf32> to vector<24x26xf32>
    %482 = arith.truncf %481 : vector<24x26xf32> to vector<24x26xbf16>
    %cst_223 = arith.constant dense<0.000000e+00> : vector<24x192xf32>
    %483 = tpu.matmul %482, %1, %cst_223 {dimension_numbers = #tpu.dot_dimension_numbers<[1], [0], [0], [1], [0, 0, 1, 1], [], []>} : vector<24x26xbf16>, vector<26x192xbf16>, vector<24x192xf32> -> vector<24x192xf32>
    %484 = vector.broadcast %18 : vector<1x192xf32> to vector<24x192xf32>
    %485 = arith.addf %484, %483 : vector<24x192xf32>
    %486 = vector.extract_strided_slice %480 {offsets = [1, 0], sizes = [24, 26], strides = [1, 1]} : vector<26x26xf32> to vector<24x26xf32>
    %487 = arith.truncf %486 : vector<24x26xf32> to vector<24x26xbf16>
    %cst_224 = arith.constant dense<0.000000e+00> : vector<24x192xf32>
    %488 = tpu.matmul %487, %3, %cst_224 {dimension_numbers = #tpu.dot_dimension_numbers<[1], [0], [0], [1], [0, 0, 1, 1], [], []>} : vector<24x26xbf16>, vector<26x192xbf16>, vector<24x192xf32> -> vector<24x192xf32>
    %489 = arith.addf %485, %488 : vector<24x192xf32>
    %490 = vector.extract_strided_slice %480 {offsets = [2, 0], sizes = [24, 26], strides = [1, 1]} : vector<26x26xf32> to vector<24x26xf32>
    %491 = arith.truncf %490 : vector<24x26xf32> to vector<24x26xbf16>
    %cst_225 = arith.constant dense<0.000000e+00> : vector<24x192xf32>
    %492 = tpu.matmul %491, %5, %cst_225 {dimension_numbers = #tpu.dot_dimension_numbers<[1], [0], [0], [1], [0, 0, 1, 1], [], []>} : vector<24x26xbf16>, vector<26x192xbf16>, vector<24x192xf32> -> vector<24x192xf32>
    %493 = arith.addf %489, %492 : vector<24x192xf32>
    %cst_226 = arith.constant 0.000000e+00 : f32
    %494 = vector.broadcast %cst_226 : f32 to vector<24x192xf32>
    %495 = arith.maximumf %493, %494 : vector<24x192xf32>
    %496 = arith.truncf %495 : vector<24x192xf32> to vector<24x192xbf16>
    %cst_227 = arith.constant dense<0.000000e+00> : vector<24x112xf32>
    %497 = tpu.matmul %496, %23, %cst_227 {dimension_numbers = #tpu.dot_dimension_numbers<[1], [0], [0], [1], [0, 0, 1, 1], [], []>} : vector<24x192xbf16>, vector<192x112xbf16>, vector<24x112xf32> -> vector<24x112xf32>
    %498 = arith.truncf %495 : vector<24x192xf32> to vector<24x192xbf16>
    %cst_228 = arith.constant dense<0.000000e+00> : vector<24x112xf32>
    %499 = tpu.matmul %498, %24, %cst_228 {dimension_numbers = #tpu.dot_dimension_numbers<[1], [0], [0], [1], [0, 0, 1, 1], [], []>} : vector<24x192xbf16>, vector<192x112xbf16>, vector<24x112xf32> -> vector<24x112xf32>
    %500 = arith.maximumf %497, %499 : vector<24x112xf32>
    %cst_229 = arith.constant dense<0.000000e+00> : vector<14x112xf32>
    %501 = tpu.matmul %21, %500, %cst_229 {dimension_numbers = #tpu.dot_dimension_numbers<[1], [0], [0], [1], [0, 0, 1, 1], [], []>} : vector<14x24xbf16>, vector<24x112xf32>, vector<14x112xf32> -> vector<14x112xf32>
    %cst_230 = arith.constant dense<0.000000e+00> : vector<14x112xf32>
    %502 = tpu.matmul %22, %500, %cst_230 {dimension_numbers = #tpu.dot_dimension_numbers<[1], [0], [0], [1], [0, 0, 1, 1], [], []>} : vector<14x24xbf16>, vector<24x112xf32>, vector<14x112xf32> -> vector<14x112xf32>
    %503 = arith.maximumf %501, %502 : vector<14x112xf32>
    %504 = vector.extract_strided_slice %503 {offsets = [0, 0], sizes = [12, 112], strides = [1, 1]} : vector<14x112xf32> to vector<12x112xf32>
    %505 = arith.truncf %504 : vector<12x112xf32> to vector<12x112xbf16>
    %cst_231 = arith.constant dense<0.000000e+00> : vector<12x192xf32>
    %506 = tpu.matmul %505, %7, %cst_231 {dimension_numbers = #tpu.dot_dimension_numbers<[1], [0], [0], [1], [0, 0, 1, 1], [], []>} : vector<12x112xbf16>, vector<112x192xbf16>, vector<12x192xf32> -> vector<12x192xf32>
    %507 = vector.broadcast %19 : vector<1x192xf32> to vector<12x192xf32>
    %508 = arith.addf %507, %506 : vector<12x192xf32>
    %509 = vector.extract_strided_slice %503 {offsets = [1, 0], sizes = [12, 112], strides = [1, 1]} : vector<14x112xf32> to vector<12x112xf32>
    %510 = arith.truncf %509 : vector<12x112xf32> to vector<12x112xbf16>
    %cst_232 = arith.constant dense<0.000000e+00> : vector<12x192xf32>
    %511 = tpu.matmul %510, %9, %cst_232 {dimension_numbers = #tpu.dot_dimension_numbers<[1], [0], [0], [1], [0, 0, 1, 1], [], []>} : vector<12x112xbf16>, vector<112x192xbf16>, vector<12x192xf32> -> vector<12x192xf32>
    %512 = arith.addf %508, %511 : vector<12x192xf32>
    %513 = vector.extract_strided_slice %503 {offsets = [2, 0], sizes = [12, 112], strides = [1, 1]} : vector<14x112xf32> to vector<12x112xf32>
    %514 = arith.truncf %513 : vector<12x112xf32> to vector<12x112xbf16>
    %cst_233 = arith.constant dense<0.000000e+00> : vector<12x192xf32>
    %515 = tpu.matmul %514, %11, %cst_233 {dimension_numbers = #tpu.dot_dimension_numbers<[1], [0], [0], [1], [0, 0, 1, 1], [], []>} : vector<12x112xbf16>, vector<112x192xbf16>, vector<12x192xf32> -> vector<12x192xf32>
    %516 = arith.addf %512, %515 : vector<12x192xf32>
    %cst_234 = arith.constant 0.000000e+00 : f32
    %517 = vector.broadcast %cst_234 : f32 to vector<12x192xf32>
    %518 = arith.maximumf %516, %517 : vector<12x192xf32>
    %519 = arith.truncf %518 : vector<12x192xf32> to vector<12x192xbf16>
    %cst_235 = arith.constant dense<0.000000e+00> : vector<12x128xf32>
    %520 = tpu.matmul %519, %27, %cst_235 {dimension_numbers = #tpu.dot_dimension_numbers<[1], [0], [0], [1], [0, 0, 1, 1], [], []>} : vector<12x192xbf16>, vector<192x128xbf16>, vector<12x128xf32> -> vector<12x128xf32>
    %521 = arith.truncf %518 : vector<12x192xf32> to vector<12x192xbf16>
    %cst_236 = arith.constant dense<0.000000e+00> : vector<12x128xf32>
    %522 = tpu.matmul %521, %28, %cst_236 {dimension_numbers = #tpu.dot_dimension_numbers<[1], [0], [0], [1], [0, 0, 1, 1], [], []>} : vector<12x192xbf16>, vector<192x128xbf16>, vector<12x128xf32> -> vector<12x128xf32>
    %523 = arith.maximumf %520, %522 : vector<12x128xf32>
    %cst_237 = arith.constant dense<0.000000e+00> : vector<8x128xf32>
    %524 = tpu.matmul %25, %523, %cst_237 {dimension_numbers = #tpu.dot_dimension_numbers<[1], [0], [0], [1], [0, 0, 1, 1], [], []>} : vector<8x12xbf16>, vector<12x128xf32>, vector<8x128xf32> -> vector<8x128xf32>
    %cst_238 = arith.constant dense<0.000000e+00> : vector<8x128xf32>
    %525 = tpu.matmul %26, %523, %cst_238 {dimension_numbers = #tpu.dot_dimension_numbers<[1], [0], [0], [1], [0, 0, 1, 1], [], []>} : vector<8x12xbf16>, vector<12x128xf32>, vector<8x128xf32> -> vector<8x128xf32>
    %526 = arith.maximumf %524, %525 : vector<8x128xf32>
    %527 = vector.extract_strided_slice %526 {offsets = [0, 0], sizes = [6, 128], strides = [1, 1]} : vector<8x128xf32> to vector<6x128xf32>
    %528 = arith.truncf %527 : vector<6x128xf32> to vector<6x128xbf16>
    %cst_239 = arith.constant dense<0.000000e+00> : vector<6x192xf32>
    %529 = tpu.matmul %528, %13, %cst_239 {dimension_numbers = #tpu.dot_dimension_numbers<[1], [0], [0], [1], [0, 0, 1, 1], [], []>} : vector<6x128xbf16>, vector<128x192xbf16>, vector<6x192xf32> -> vector<6x192xf32>
    %530 = vector.broadcast %20 : vector<1x192xf32> to vector<6x192xf32>
    %531 = arith.addf %530, %529 : vector<6x192xf32>
    %532 = vector.extract_strided_slice %526 {offsets = [1, 0], sizes = [6, 128], strides = [1, 1]} : vector<8x128xf32> to vector<6x128xf32>
    %533 = arith.truncf %532 : vector<6x128xf32> to vector<6x128xbf16>
    %cst_240 = arith.constant dense<0.000000e+00> : vector<6x192xf32>
    %534 = tpu.matmul %533, %15, %cst_240 {dimension_numbers = #tpu.dot_dimension_numbers<[1], [0], [0], [1], [0, 0, 1, 1], [], []>} : vector<6x128xbf16>, vector<128x192xbf16>, vector<6x192xf32> -> vector<6x192xf32>
    %535 = arith.addf %531, %534 : vector<6x192xf32>
    %536 = vector.extract_strided_slice %526 {offsets = [2, 0], sizes = [6, 128], strides = [1, 1]} : vector<8x128xf32> to vector<6x128xf32>
    %537 = arith.truncf %536 : vector<6x128xf32> to vector<6x128xbf16>
    %cst_241 = arith.constant dense<0.000000e+00> : vector<6x192xf32>
    %538 = tpu.matmul %537, %17, %cst_241 {dimension_numbers = #tpu.dot_dimension_numbers<[1], [0], [0], [1], [0, 0, 1, 1], [], []>} : vector<6x128xbf16>, vector<128x192xbf16>, vector<6x192xf32> -> vector<6x192xf32>
    %539 = arith.addf %535, %538 : vector<6x192xf32>
    %cst_242 = arith.constant 0.000000e+00 : f32
    %540 = vector.broadcast %cst_242 : f32 to vector<6x192xf32>
    %541 = arith.maximumf %539, %540 : vector<6x192xf32>
    %542 = arith.truncf %541 : vector<6x192xf32> to vector<6x192xbf16>
    %cst_243 = arith.constant dense<0.000000e+00> : vector<6x96xf32>
    %543 = tpu.matmul %542, %31, %cst_243 {dimension_numbers = #tpu.dot_dimension_numbers<[1], [0], [0], [1], [0, 0, 1, 1], [], []>} : vector<6x192xbf16>, vector<192x96xbf16>, vector<6x96xf32> -> vector<6x96xf32>
    %544 = arith.truncf %541 : vector<6x192xf32> to vector<6x192xbf16>
    %cst_244 = arith.constant dense<0.000000e+00> : vector<6x96xf32>
    %545 = tpu.matmul %544, %32, %cst_244 {dimension_numbers = #tpu.dot_dimension_numbers<[1], [0], [0], [1], [0, 0, 1, 1], [], []>} : vector<6x192xbf16>, vector<192x96xbf16>, vector<6x96xf32> -> vector<6x96xf32>
    %546 = arith.maximumf %543, %545 : vector<6x96xf32>
    %cst_245 = arith.constant dense<0.000000e+00> : vector<3x96xf32>
    %547 = tpu.matmul %29, %546, %cst_245 {dimension_numbers = #tpu.dot_dimension_numbers<[1], [0], [0], [1], [0, 0, 1, 1], [], []>} : vector<3x6xbf16>, vector<6x96xf32>, vector<3x96xf32> -> vector<3x96xf32>
    %cst_246 = arith.constant dense<0.000000e+00> : vector<3x96xf32>
    %548 = tpu.matmul %30, %546, %cst_246 {dimension_numbers = #tpu.dot_dimension_numbers<[1], [0], [0], [1], [0, 0, 1, 1], [], []>} : vector<3x6xbf16>, vector<6x96xf32>, vector<3x96xf32> -> vector<3x96xf32>
    %549 = arith.maximumf %547, %548 : vector<3x96xf32>
    %550 = vector.extract_strided_slice %549 {offsets = [0, 0], sizes = [1, 96], strides = [1, 1]} : vector<3x96xf32> to vector<1x96xf32>
    %551 = arith.truncf %550 : vector<1x96xf32> to vector<1x96xbf16>
    %cst_247 = arith.constant dense<0.000000e+00> : vector<1x64xf32>
    %552 = tpu.matmul %551, %33, %cst_247 {dimension_numbers = #tpu.dot_dimension_numbers<[1], [0], [0], [1], [0, 0, 1, 1], [], []>} : vector<1x96xbf16>, vector<96x64xbf16>, vector<1x64xf32> -> vector<1x64xf32>
    %553 = arith.addf %36, %552 : vector<1x64xf32>
    %554 = vector.extract_strided_slice %549 {offsets = [1, 0], sizes = [1, 96], strides = [1, 1]} : vector<3x96xf32> to vector<1x96xf32>
    %555 = arith.truncf %554 : vector<1x96xf32> to vector<1x96xbf16>
    %cst_248 = arith.constant dense<0.000000e+00> : vector<1x64xf32>
    %556 = tpu.matmul %555, %34, %cst_248 {dimension_numbers = #tpu.dot_dimension_numbers<[1], [0], [0], [1], [0, 0, 1, 1], [], []>} : vector<1x96xbf16>, vector<96x64xbf16>, vector<1x64xf32> -> vector<1x64xf32>
    %557 = arith.addf %553, %556 : vector<1x64xf32>
    %558 = vector.extract_strided_slice %549 {offsets = [2, 0], sizes = [1, 96], strides = [1, 1]} : vector<3x96xf32> to vector<1x96xf32>
    %559 = arith.truncf %558 : vector<1x96xf32> to vector<1x96xbf16>
    %cst_249 = arith.constant dense<0.000000e+00> : vector<1x64xf32>
    %560 = tpu.matmul %559, %35, %cst_249 {dimension_numbers = #tpu.dot_dimension_numbers<[1], [0], [0], [1], [0, 0, 1, 1], [], []>} : vector<1x96xbf16>, vector<96x64xbf16>, vector<1x64xf32> -> vector<1x64xf32>
    %561 = arith.addf %557, %560 : vector<1x64xf32>
    %cst_250 = arith.constant 0.000000e+00 : f32
    %562 = vector.broadcast %cst_250 : f32 to vector<1x64xf32>
    %563 = arith.maximumf %561, %562 : vector<1x64xf32>
    %564 = arith.truncf %563 : vector<1x64xf32> to vector<1x64xbf16>
    %cst_251 = arith.constant dense<0.000000e+00> : vector<1x128xf32>
    %565 = tpu.matmul %564, %37, %cst_251 {dimension_numbers = #tpu.dot_dimension_numbers<[1], [0], [0], [1], [0, 0, 1, 1], [], []>} : vector<1x64xbf16>, vector<64x128xbf16>, vector<1x128xf32> -> vector<1x128xf32>
    %566 = arith.addf %565, %38 : vector<1x128xf32>
    %c6 = arith.constant 6 : index
    %c0_252 = arith.constant 0 : index
    %c0_253 = arith.constant 0 : index
    %567 = vector.load %arg1[%c6, %c0_252, %c0_253] : memref<8x26x26xf32, #tpu.memory_space<vmem>>, vector<1x26x26xf32>
    %568 = vector.shape_cast %567 : vector<1x26x26xf32> to vector<26x26xf32>
    %569 = vector.extract_strided_slice %568 {offsets = [0, 0], sizes = [24, 26], strides = [1, 1]} : vector<26x26xf32> to vector<24x26xf32>
    %570 = arith.truncf %569 : vector<24x26xf32> to vector<24x26xbf16>
    %cst_254 = arith.constant dense<0.000000e+00> : vector<24x192xf32>
    %571 = tpu.matmul %570, %1, %cst_254 {dimension_numbers = #tpu.dot_dimension_numbers<[1], [0], [0], [1], [0, 0, 1, 1], [], []>} : vector<24x26xbf16>, vector<26x192xbf16>, vector<24x192xf32> -> vector<24x192xf32>
    %572 = vector.broadcast %18 : vector<1x192xf32> to vector<24x192xf32>
    %573 = arith.addf %572, %571 : vector<24x192xf32>
    %574 = vector.extract_strided_slice %568 {offsets = [1, 0], sizes = [24, 26], strides = [1, 1]} : vector<26x26xf32> to vector<24x26xf32>
    %575 = arith.truncf %574 : vector<24x26xf32> to vector<24x26xbf16>
    %cst_255 = arith.constant dense<0.000000e+00> : vector<24x192xf32>
    %576 = tpu.matmul %575, %3, %cst_255 {dimension_numbers = #tpu.dot_dimension_numbers<[1], [0], [0], [1], [0, 0, 1, 1], [], []>} : vector<24x26xbf16>, vector<26x192xbf16>, vector<24x192xf32> -> vector<24x192xf32>
    %577 = arith.addf %573, %576 : vector<24x192xf32>
    %578 = vector.extract_strided_slice %568 {offsets = [2, 0], sizes = [24, 26], strides = [1, 1]} : vector<26x26xf32> to vector<24x26xf32>
    %579 = arith.truncf %578 : vector<24x26xf32> to vector<24x26xbf16>
    %cst_256 = arith.constant dense<0.000000e+00> : vector<24x192xf32>
    %580 = tpu.matmul %579, %5, %cst_256 {dimension_numbers = #tpu.dot_dimension_numbers<[1], [0], [0], [1], [0, 0, 1, 1], [], []>} : vector<24x26xbf16>, vector<26x192xbf16>, vector<24x192xf32> -> vector<24x192xf32>
    %581 = arith.addf %577, %580 : vector<24x192xf32>
    %cst_257 = arith.constant 0.000000e+00 : f32
    %582 = vector.broadcast %cst_257 : f32 to vector<24x192xf32>
    %583 = arith.maximumf %581, %582 : vector<24x192xf32>
    %584 = arith.truncf %583 : vector<24x192xf32> to vector<24x192xbf16>
    %cst_258 = arith.constant dense<0.000000e+00> : vector<24x112xf32>
    %585 = tpu.matmul %584, %23, %cst_258 {dimension_numbers = #tpu.dot_dimension_numbers<[1], [0], [0], [1], [0, 0, 1, 1], [], []>} : vector<24x192xbf16>, vector<192x112xbf16>, vector<24x112xf32> -> vector<24x112xf32>
    %586 = arith.truncf %583 : vector<24x192xf32> to vector<24x192xbf16>
    %cst_259 = arith.constant dense<0.000000e+00> : vector<24x112xf32>
    %587 = tpu.matmul %586, %24, %cst_259 {dimension_numbers = #tpu.dot_dimension_numbers<[1], [0], [0], [1], [0, 0, 1, 1], [], []>} : vector<24x192xbf16>, vector<192x112xbf16>, vector<24x112xf32> -> vector<24x112xf32>
    %588 = arith.maximumf %585, %587 : vector<24x112xf32>
    %cst_260 = arith.constant dense<0.000000e+00> : vector<14x112xf32>
    %589 = tpu.matmul %21, %588, %cst_260 {dimension_numbers = #tpu.dot_dimension_numbers<[1], [0], [0], [1], [0, 0, 1, 1], [], []>} : vector<14x24xbf16>, vector<24x112xf32>, vector<14x112xf32> -> vector<14x112xf32>
    %cst_261 = arith.constant dense<0.000000e+00> : vector<14x112xf32>
    %590 = tpu.matmul %22, %588, %cst_261 {dimension_numbers = #tpu.dot_dimension_numbers<[1], [0], [0], [1], [0, 0, 1, 1], [], []>} : vector<14x24xbf16>, vector<24x112xf32>, vector<14x112xf32> -> vector<14x112xf32>
    %591 = arith.maximumf %589, %590 : vector<14x112xf32>
    %592 = vector.extract_strided_slice %591 {offsets = [0, 0], sizes = [12, 112], strides = [1, 1]} : vector<14x112xf32> to vector<12x112xf32>
    %593 = arith.truncf %592 : vector<12x112xf32> to vector<12x112xbf16>
    %cst_262 = arith.constant dense<0.000000e+00> : vector<12x192xf32>
    %594 = tpu.matmul %593, %7, %cst_262 {dimension_numbers = #tpu.dot_dimension_numbers<[1], [0], [0], [1], [0, 0, 1, 1], [], []>} : vector<12x112xbf16>, vector<112x192xbf16>, vector<12x192xf32> -> vector<12x192xf32>
    %595 = vector.broadcast %19 : vector<1x192xf32> to vector<12x192xf32>
    %596 = arith.addf %595, %594 : vector<12x192xf32>
    %597 = vector.extract_strided_slice %591 {offsets = [1, 0], sizes = [12, 112], strides = [1, 1]} : vector<14x112xf32> to vector<12x112xf32>
    %598 = arith.truncf %597 : vector<12x112xf32> to vector<12x112xbf16>
    %cst_263 = arith.constant dense<0.000000e+00> : vector<12x192xf32>
    %599 = tpu.matmul %598, %9, %cst_263 {dimension_numbers = #tpu.dot_dimension_numbers<[1], [0], [0], [1], [0, 0, 1, 1], [], []>} : vector<12x112xbf16>, vector<112x192xbf16>, vector<12x192xf32> -> vector<12x192xf32>
    %600 = arith.addf %596, %599 : vector<12x192xf32>
    %601 = vector.extract_strided_slice %591 {offsets = [2, 0], sizes = [12, 112], strides = [1, 1]} : vector<14x112xf32> to vector<12x112xf32>
    %602 = arith.truncf %601 : vector<12x112xf32> to vector<12x112xbf16>
    %cst_264 = arith.constant dense<0.000000e+00> : vector<12x192xf32>
    %603 = tpu.matmul %602, %11, %cst_264 {dimension_numbers = #tpu.dot_dimension_numbers<[1], [0], [0], [1], [0, 0, 1, 1], [], []>} : vector<12x112xbf16>, vector<112x192xbf16>, vector<12x192xf32> -> vector<12x192xf32>
    %604 = arith.addf %600, %603 : vector<12x192xf32>
    %cst_265 = arith.constant 0.000000e+00 : f32
    %605 = vector.broadcast %cst_265 : f32 to vector<12x192xf32>
    %606 = arith.maximumf %604, %605 : vector<12x192xf32>
    %607 = arith.truncf %606 : vector<12x192xf32> to vector<12x192xbf16>
    %cst_266 = arith.constant dense<0.000000e+00> : vector<12x128xf32>
    %608 = tpu.matmul %607, %27, %cst_266 {dimension_numbers = #tpu.dot_dimension_numbers<[1], [0], [0], [1], [0, 0, 1, 1], [], []>} : vector<12x192xbf16>, vector<192x128xbf16>, vector<12x128xf32> -> vector<12x128xf32>
    %609 = arith.truncf %606 : vector<12x192xf32> to vector<12x192xbf16>
    %cst_267 = arith.constant dense<0.000000e+00> : vector<12x128xf32>
    %610 = tpu.matmul %609, %28, %cst_267 {dimension_numbers = #tpu.dot_dimension_numbers<[1], [0], [0], [1], [0, 0, 1, 1], [], []>} : vector<12x192xbf16>, vector<192x128xbf16>, vector<12x128xf32> -> vector<12x128xf32>
    %611 = arith.maximumf %608, %610 : vector<12x128xf32>
    %cst_268 = arith.constant dense<0.000000e+00> : vector<8x128xf32>
    %612 = tpu.matmul %25, %611, %cst_268 {dimension_numbers = #tpu.dot_dimension_numbers<[1], [0], [0], [1], [0, 0, 1, 1], [], []>} : vector<8x12xbf16>, vector<12x128xf32>, vector<8x128xf32> -> vector<8x128xf32>
    %cst_269 = arith.constant dense<0.000000e+00> : vector<8x128xf32>
    %613 = tpu.matmul %26, %611, %cst_269 {dimension_numbers = #tpu.dot_dimension_numbers<[1], [0], [0], [1], [0, 0, 1, 1], [], []>} : vector<8x12xbf16>, vector<12x128xf32>, vector<8x128xf32> -> vector<8x128xf32>
    %614 = arith.maximumf %612, %613 : vector<8x128xf32>
    %615 = vector.extract_strided_slice %614 {offsets = [0, 0], sizes = [6, 128], strides = [1, 1]} : vector<8x128xf32> to vector<6x128xf32>
    %616 = arith.truncf %615 : vector<6x128xf32> to vector<6x128xbf16>
    %cst_270 = arith.constant dense<0.000000e+00> : vector<6x192xf32>
    %617 = tpu.matmul %616, %13, %cst_270 {dimension_numbers = #tpu.dot_dimension_numbers<[1], [0], [0], [1], [0, 0, 1, 1], [], []>} : vector<6x128xbf16>, vector<128x192xbf16>, vector<6x192xf32> -> vector<6x192xf32>
    %618 = vector.broadcast %20 : vector<1x192xf32> to vector<6x192xf32>
    %619 = arith.addf %618, %617 : vector<6x192xf32>
    %620 = vector.extract_strided_slice %614 {offsets = [1, 0], sizes = [6, 128], strides = [1, 1]} : vector<8x128xf32> to vector<6x128xf32>
    %621 = arith.truncf %620 : vector<6x128xf32> to vector<6x128xbf16>
    %cst_271 = arith.constant dense<0.000000e+00> : vector<6x192xf32>
    %622 = tpu.matmul %621, %15, %cst_271 {dimension_numbers = #tpu.dot_dimension_numbers<[1], [0], [0], [1], [0, 0, 1, 1], [], []>} : vector<6x128xbf16>, vector<128x192xbf16>, vector<6x192xf32> -> vector<6x192xf32>
    %623 = arith.addf %619, %622 : vector<6x192xf32>
    %624 = vector.extract_strided_slice %614 {offsets = [2, 0], sizes = [6, 128], strides = [1, 1]} : vector<8x128xf32> to vector<6x128xf32>
    %625 = arith.truncf %624 : vector<6x128xf32> to vector<6x128xbf16>
    %cst_272 = arith.constant dense<0.000000e+00> : vector<6x192xf32>
    %626 = tpu.matmul %625, %17, %cst_272 {dimension_numbers = #tpu.dot_dimension_numbers<[1], [0], [0], [1], [0, 0, 1, 1], [], []>} : vector<6x128xbf16>, vector<128x192xbf16>, vector<6x192xf32> -> vector<6x192xf32>
    %627 = arith.addf %623, %626 : vector<6x192xf32>
    %cst_273 = arith.constant 0.000000e+00 : f32
    %628 = vector.broadcast %cst_273 : f32 to vector<6x192xf32>
    %629 = arith.maximumf %627, %628 : vector<6x192xf32>
    %630 = arith.truncf %629 : vector<6x192xf32> to vector<6x192xbf16>
    %cst_274 = arith.constant dense<0.000000e+00> : vector<6x96xf32>
    %631 = tpu.matmul %630, %31, %cst_274 {dimension_numbers = #tpu.dot_dimension_numbers<[1], [0], [0], [1], [0, 0, 1, 1], [], []>} : vector<6x192xbf16>, vector<192x96xbf16>, vector<6x96xf32> -> vector<6x96xf32>
    %632 = arith.truncf %629 : vector<6x192xf32> to vector<6x192xbf16>
    %cst_275 = arith.constant dense<0.000000e+00> : vector<6x96xf32>
    %633 = tpu.matmul %632, %32, %cst_275 {dimension_numbers = #tpu.dot_dimension_numbers<[1], [0], [0], [1], [0, 0, 1, 1], [], []>} : vector<6x192xbf16>, vector<192x96xbf16>, vector<6x96xf32> -> vector<6x96xf32>
    %634 = arith.maximumf %631, %633 : vector<6x96xf32>
    %cst_276 = arith.constant dense<0.000000e+00> : vector<3x96xf32>
    %635 = tpu.matmul %29, %634, %cst_276 {dimension_numbers = #tpu.dot_dimension_numbers<[1], [0], [0], [1], [0, 0, 1, 1], [], []>} : vector<3x6xbf16>, vector<6x96xf32>, vector<3x96xf32> -> vector<3x96xf32>
    %cst_277 = arith.constant dense<0.000000e+00> : vector<3x96xf32>
    %636 = tpu.matmul %30, %634, %cst_277 {dimension_numbers = #tpu.dot_dimension_numbers<[1], [0], [0], [1], [0, 0, 1, 1], [], []>} : vector<3x6xbf16>, vector<6x96xf32>, vector<3x96xf32> -> vector<3x96xf32>
    %637 = arith.maximumf %635, %636 : vector<3x96xf32>
    %638 = vector.extract_strided_slice %637 {offsets = [0, 0], sizes = [1, 96], strides = [1, 1]} : vector<3x96xf32> to vector<1x96xf32>
    %639 = arith.truncf %638 : vector<1x96xf32> to vector<1x96xbf16>
    %cst_278 = arith.constant dense<0.000000e+00> : vector<1x64xf32>
    %640 = tpu.matmul %639, %33, %cst_278 {dimension_numbers = #tpu.dot_dimension_numbers<[1], [0], [0], [1], [0, 0, 1, 1], [], []>} : vector<1x96xbf16>, vector<96x64xbf16>, vector<1x64xf32> -> vector<1x64xf32>
    %641 = arith.addf %36, %640 : vector<1x64xf32>
    %642 = vector.extract_strided_slice %637 {offsets = [1, 0], sizes = [1, 96], strides = [1, 1]} : vector<3x96xf32> to vector<1x96xf32>
    %643 = arith.truncf %642 : vector<1x96xf32> to vector<1x96xbf16>
    %cst_279 = arith.constant dense<0.000000e+00> : vector<1x64xf32>
    %644 = tpu.matmul %643, %34, %cst_279 {dimension_numbers = #tpu.dot_dimension_numbers<[1], [0], [0], [1], [0, 0, 1, 1], [], []>} : vector<1x96xbf16>, vector<96x64xbf16>, vector<1x64xf32> -> vector<1x64xf32>
    %645 = arith.addf %641, %644 : vector<1x64xf32>
    %646 = vector.extract_strided_slice %637 {offsets = [2, 0], sizes = [1, 96], strides = [1, 1]} : vector<3x96xf32> to vector<1x96xf32>
    %647 = arith.truncf %646 : vector<1x96xf32> to vector<1x96xbf16>
    %cst_280 = arith.constant dense<0.000000e+00> : vector<1x64xf32>
    %648 = tpu.matmul %647, %35, %cst_280 {dimension_numbers = #tpu.dot_dimension_numbers<[1], [0], [0], [1], [0, 0, 1, 1], [], []>} : vector<1x96xbf16>, vector<96x64xbf16>, vector<1x64xf32> -> vector<1x64xf32>
    %649 = arith.addf %645, %648 : vector<1x64xf32>
    %cst_281 = arith.constant 0.000000e+00 : f32
    %650 = vector.broadcast %cst_281 : f32 to vector<1x64xf32>
    %651 = arith.maximumf %649, %650 : vector<1x64xf32>
    %652 = arith.truncf %651 : vector<1x64xf32> to vector<1x64xbf16>
    %cst_282 = arith.constant dense<0.000000e+00> : vector<1x128xf32>
    %653 = tpu.matmul %652, %37, %cst_282 {dimension_numbers = #tpu.dot_dimension_numbers<[1], [0], [0], [1], [0, 0, 1, 1], [], []>} : vector<1x64xbf16>, vector<64x128xbf16>, vector<1x128xf32> -> vector<1x128xf32>
    %654 = arith.addf %653, %38 : vector<1x128xf32>
    %c7 = arith.constant 7 : index
    %c0_283 = arith.constant 0 : index
    %c0_284 = arith.constant 0 : index
    %655 = vector.load %arg1[%c7, %c0_283, %c0_284] : memref<8x26x26xf32, #tpu.memory_space<vmem>>, vector<1x26x26xf32>
    %656 = vector.shape_cast %655 : vector<1x26x26xf32> to vector<26x26xf32>
    %657 = vector.extract_strided_slice %656 {offsets = [0, 0], sizes = [24, 26], strides = [1, 1]} : vector<26x26xf32> to vector<24x26xf32>
    %658 = arith.truncf %657 : vector<24x26xf32> to vector<24x26xbf16>
    %cst_285 = arith.constant dense<0.000000e+00> : vector<24x192xf32>
    %659 = tpu.matmul %658, %1, %cst_285 {dimension_numbers = #tpu.dot_dimension_numbers<[1], [0], [0], [1], [0, 0, 1, 1], [], []>} : vector<24x26xbf16>, vector<26x192xbf16>, vector<24x192xf32> -> vector<24x192xf32>
    %660 = vector.broadcast %18 : vector<1x192xf32> to vector<24x192xf32>
    %661 = arith.addf %660, %659 : vector<24x192xf32>
    %662 = vector.extract_strided_slice %656 {offsets = [1, 0], sizes = [24, 26], strides = [1, 1]} : vector<26x26xf32> to vector<24x26xf32>
    %663 = arith.truncf %662 : vector<24x26xf32> to vector<24x26xbf16>
    %cst_286 = arith.constant dense<0.000000e+00> : vector<24x192xf32>
    %664 = tpu.matmul %663, %3, %cst_286 {dimension_numbers = #tpu.dot_dimension_numbers<[1], [0], [0], [1], [0, 0, 1, 1], [], []>} : vector<24x26xbf16>, vector<26x192xbf16>, vector<24x192xf32> -> vector<24x192xf32>
    %665 = arith.addf %661, %664 : vector<24x192xf32>
    %666 = vector.extract_strided_slice %656 {offsets = [2, 0], sizes = [24, 26], strides = [1, 1]} : vector<26x26xf32> to vector<24x26xf32>
    %667 = arith.truncf %666 : vector<24x26xf32> to vector<24x26xbf16>
    %cst_287 = arith.constant dense<0.000000e+00> : vector<24x192xf32>
    %668 = tpu.matmul %667, %5, %cst_287 {dimension_numbers = #tpu.dot_dimension_numbers<[1], [0], [0], [1], [0, 0, 1, 1], [], []>} : vector<24x26xbf16>, vector<26x192xbf16>, vector<24x192xf32> -> vector<24x192xf32>
    %669 = arith.addf %665, %668 : vector<24x192xf32>
    %cst_288 = arith.constant 0.000000e+00 : f32
    %670 = vector.broadcast %cst_288 : f32 to vector<24x192xf32>
    %671 = arith.maximumf %669, %670 : vector<24x192xf32>
    %672 = arith.truncf %671 : vector<24x192xf32> to vector<24x192xbf16>
    %cst_289 = arith.constant dense<0.000000e+00> : vector<24x112xf32>
    %673 = tpu.matmul %672, %23, %cst_289 {dimension_numbers = #tpu.dot_dimension_numbers<[1], [0], [0], [1], [0, 0, 1, 1], [], []>} : vector<24x192xbf16>, vector<192x112xbf16>, vector<24x112xf32> -> vector<24x112xf32>
    %674 = arith.truncf %671 : vector<24x192xf32> to vector<24x192xbf16>
    %cst_290 = arith.constant dense<0.000000e+00> : vector<24x112xf32>
    %675 = tpu.matmul %674, %24, %cst_290 {dimension_numbers = #tpu.dot_dimension_numbers<[1], [0], [0], [1], [0, 0, 1, 1], [], []>} : vector<24x192xbf16>, vector<192x112xbf16>, vector<24x112xf32> -> vector<24x112xf32>
    %676 = arith.maximumf %673, %675 : vector<24x112xf32>
    %cst_291 = arith.constant dense<0.000000e+00> : vector<14x112xf32>
    %677 = tpu.matmul %21, %676, %cst_291 {dimension_numbers = #tpu.dot_dimension_numbers<[1], [0], [0], [1], [0, 0, 1, 1], [], []>} : vector<14x24xbf16>, vector<24x112xf32>, vector<14x112xf32> -> vector<14x112xf32>
    %cst_292 = arith.constant dense<0.000000e+00> : vector<14x112xf32>
    %678 = tpu.matmul %22, %676, %cst_292 {dimension_numbers = #tpu.dot_dimension_numbers<[1], [0], [0], [1], [0, 0, 1, 1], [], []>} : vector<14x24xbf16>, vector<24x112xf32>, vector<14x112xf32> -> vector<14x112xf32>
    %679 = arith.maximumf %677, %678 : vector<14x112xf32>
    %680 = vector.extract_strided_slice %679 {offsets = [0, 0], sizes = [12, 112], strides = [1, 1]} : vector<14x112xf32> to vector<12x112xf32>
    %681 = arith.truncf %680 : vector<12x112xf32> to vector<12x112xbf16>
    %cst_293 = arith.constant dense<0.000000e+00> : vector<12x192xf32>
    %682 = tpu.matmul %681, %7, %cst_293 {dimension_numbers = #tpu.dot_dimension_numbers<[1], [0], [0], [1], [0, 0, 1, 1], [], []>} : vector<12x112xbf16>, vector<112x192xbf16>, vector<12x192xf32> -> vector<12x192xf32>
    %683 = vector.broadcast %19 : vector<1x192xf32> to vector<12x192xf32>
    %684 = arith.addf %683, %682 : vector<12x192xf32>
    %685 = vector.extract_strided_slice %679 {offsets = [1, 0], sizes = [12, 112], strides = [1, 1]} : vector<14x112xf32> to vector<12x112xf32>
    %686 = arith.truncf %685 : vector<12x112xf32> to vector<12x112xbf16>
    %cst_294 = arith.constant dense<0.000000e+00> : vector<12x192xf32>
    %687 = tpu.matmul %686, %9, %cst_294 {dimension_numbers = #tpu.dot_dimension_numbers<[1], [0], [0], [1], [0, 0, 1, 1], [], []>} : vector<12x112xbf16>, vector<112x192xbf16>, vector<12x192xf32> -> vector<12x192xf32>
    %688 = arith.addf %684, %687 : vector<12x192xf32>
    %689 = vector.extract_strided_slice %679 {offsets = [2, 0], sizes = [12, 112], strides = [1, 1]} : vector<14x112xf32> to vector<12x112xf32>
    %690 = arith.truncf %689 : vector<12x112xf32> to vector<12x112xbf16>
    %cst_295 = arith.constant dense<0.000000e+00> : vector<12x192xf32>
    %691 = tpu.matmul %690, %11, %cst_295 {dimension_numbers = #tpu.dot_dimension_numbers<[1], [0], [0], [1], [0, 0, 1, 1], [], []>} : vector<12x112xbf16>, vector<112x192xbf16>, vector<12x192xf32> -> vector<12x192xf32>
    %692 = arith.addf %688, %691 : vector<12x192xf32>
    %cst_296 = arith.constant 0.000000e+00 : f32
    %693 = vector.broadcast %cst_296 : f32 to vector<12x192xf32>
    %694 = arith.maximumf %692, %693 : vector<12x192xf32>
    %695 = arith.truncf %694 : vector<12x192xf32> to vector<12x192xbf16>
    %cst_297 = arith.constant dense<0.000000e+00> : vector<12x128xf32>
    %696 = tpu.matmul %695, %27, %cst_297 {dimension_numbers = #tpu.dot_dimension_numbers<[1], [0], [0], [1], [0, 0, 1, 1], [], []>} : vector<12x192xbf16>, vector<192x128xbf16>, vector<12x128xf32> -> vector<12x128xf32>
    %697 = arith.truncf %694 : vector<12x192xf32> to vector<12x192xbf16>
    %cst_298 = arith.constant dense<0.000000e+00> : vector<12x128xf32>
    %698 = tpu.matmul %697, %28, %cst_298 {dimension_numbers = #tpu.dot_dimension_numbers<[1], [0], [0], [1], [0, 0, 1, 1], [], []>} : vector<12x192xbf16>, vector<192x128xbf16>, vector<12x128xf32> -> vector<12x128xf32>
    %699 = arith.maximumf %696, %698 : vector<12x128xf32>
    %cst_299 = arith.constant dense<0.000000e+00> : vector<8x128xf32>
    %700 = tpu.matmul %25, %699, %cst_299 {dimension_numbers = #tpu.dot_dimension_numbers<[1], [0], [0], [1], [0, 0, 1, 1], [], []>} : vector<8x12xbf16>, vector<12x128xf32>, vector<8x128xf32> -> vector<8x128xf32>
    %cst_300 = arith.constant dense<0.000000e+00> : vector<8x128xf32>
    %701 = tpu.matmul %26, %699, %cst_300 {dimension_numbers = #tpu.dot_dimension_numbers<[1], [0], [0], [1], [0, 0, 1, 1], [], []>} : vector<8x12xbf16>, vector<12x128xf32>, vector<8x128xf32> -> vector<8x128xf32>
    %702 = arith.maximumf %700, %701 : vector<8x128xf32>
    %703 = vector.extract_strided_slice %702 {offsets = [0, 0], sizes = [6, 128], strides = [1, 1]} : vector<8x128xf32> to vector<6x128xf32>
    %704 = arith.truncf %703 : vector<6x128xf32> to vector<6x128xbf16>
    %cst_301 = arith.constant dense<0.000000e+00> : vector<6x192xf32>
    %705 = tpu.matmul %704, %13, %cst_301 {dimension_numbers = #tpu.dot_dimension_numbers<[1], [0], [0], [1], [0, 0, 1, 1], [], []>} : vector<6x128xbf16>, vector<128x192xbf16>, vector<6x192xf32> -> vector<6x192xf32>
    %706 = vector.broadcast %20 : vector<1x192xf32> to vector<6x192xf32>
    %707 = arith.addf %706, %705 : vector<6x192xf32>
    %708 = vector.extract_strided_slice %702 {offsets = [1, 0], sizes = [6, 128], strides = [1, 1]} : vector<8x128xf32> to vector<6x128xf32>
    %709 = arith.truncf %708 : vector<6x128xf32> to vector<6x128xbf16>
    %cst_302 = arith.constant dense<0.000000e+00> : vector<6x192xf32>
    %710 = tpu.matmul %709, %15, %cst_302 {dimension_numbers = #tpu.dot_dimension_numbers<[1], [0], [0], [1], [0, 0, 1, 1], [], []>} : vector<6x128xbf16>, vector<128x192xbf16>, vector<6x192xf32> -> vector<6x192xf32>
    %711 = arith.addf %707, %710 : vector<6x192xf32>
    %712 = vector.extract_strided_slice %702 {offsets = [2, 0], sizes = [6, 128], strides = [1, 1]} : vector<8x128xf32> to vector<6x128xf32>
    %713 = arith.truncf %712 : vector<6x128xf32> to vector<6x128xbf16>
    %cst_303 = arith.constant dense<0.000000e+00> : vector<6x192xf32>
    %714 = tpu.matmul %713, %17, %cst_303 {dimension_numbers = #tpu.dot_dimension_numbers<[1], [0], [0], [1], [0, 0, 1, 1], [], []>} : vector<6x128xbf16>, vector<128x192xbf16>, vector<6x192xf32> -> vector<6x192xf32>
    %715 = arith.addf %711, %714 : vector<6x192xf32>
    %cst_304 = arith.constant 0.000000e+00 : f32
    %716 = vector.broadcast %cst_304 : f32 to vector<6x192xf32>
    %717 = arith.maximumf %715, %716 : vector<6x192xf32>
    %718 = arith.truncf %717 : vector<6x192xf32> to vector<6x192xbf16>
    %cst_305 = arith.constant dense<0.000000e+00> : vector<6x96xf32>
    %719 = tpu.matmul %718, %31, %cst_305 {dimension_numbers = #tpu.dot_dimension_numbers<[1], [0], [0], [1], [0, 0, 1, 1], [], []>} : vector<6x192xbf16>, vector<192x96xbf16>, vector<6x96xf32> -> vector<6x96xf32>
    %720 = arith.truncf %717 : vector<6x192xf32> to vector<6x192xbf16>
    %cst_306 = arith.constant dense<0.000000e+00> : vector<6x96xf32>
    %721 = tpu.matmul %720, %32, %cst_306 {dimension_numbers = #tpu.dot_dimension_numbers<[1], [0], [0], [1], [0, 0, 1, 1], [], []>} : vector<6x192xbf16>, vector<192x96xbf16>, vector<6x96xf32> -> vector<6x96xf32>
    %722 = arith.maximumf %719, %721 : vector<6x96xf32>
    %cst_307 = arith.constant dense<0.000000e+00> : vector<3x96xf32>
    %723 = tpu.matmul %29, %722, %cst_307 {dimension_numbers = #tpu.dot_dimension_numbers<[1], [0], [0], [1], [0, 0, 1, 1], [], []>} : vector<3x6xbf16>, vector<6x96xf32>, vector<3x96xf32> -> vector<3x96xf32>
    %cst_308 = arith.constant dense<0.000000e+00> : vector<3x96xf32>
    %724 = tpu.matmul %30, %722, %cst_308 {dimension_numbers = #tpu.dot_dimension_numbers<[1], [0], [0], [1], [0, 0, 1, 1], [], []>} : vector<3x6xbf16>, vector<6x96xf32>, vector<3x96xf32> -> vector<3x96xf32>
    %725 = arith.maximumf %723, %724 : vector<3x96xf32>
    %726 = vector.extract_strided_slice %725 {offsets = [0, 0], sizes = [1, 96], strides = [1, 1]} : vector<3x96xf32> to vector<1x96xf32>
    %727 = arith.truncf %726 : vector<1x96xf32> to vector<1x96xbf16>
    %cst_309 = arith.constant dense<0.000000e+00> : vector<1x64xf32>
    %728 = tpu.matmul %727, %33, %cst_309 {dimension_numbers = #tpu.dot_dimension_numbers<[1], [0], [0], [1], [0, 0, 1, 1], [], []>} : vector<1x96xbf16>, vector<96x64xbf16>, vector<1x64xf32> -> vector<1x64xf32>
    %729 = arith.addf %36, %728 : vector<1x64xf32>
    %730 = vector.extract_strided_slice %725 {offsets = [1, 0], sizes = [1, 96], strides = [1, 1]} : vector<3x96xf32> to vector<1x96xf32>
    %731 = arith.truncf %730 : vector<1x96xf32> to vector<1x96xbf16>
    %cst_310 = arith.constant dense<0.000000e+00> : vector<1x64xf32>
    %732 = tpu.matmul %731, %34, %cst_310 {dimension_numbers = #tpu.dot_dimension_numbers<[1], [0], [0], [1], [0, 0, 1, 1], [], []>} : vector<1x96xbf16>, vector<96x64xbf16>, vector<1x64xf32> -> vector<1x64xf32>
    %733 = arith.addf %729, %732 : vector<1x64xf32>
    %734 = vector.extract_strided_slice %725 {offsets = [2, 0], sizes = [1, 96], strides = [1, 1]} : vector<3x96xf32> to vector<1x96xf32>
    %735 = arith.truncf %734 : vector<1x96xf32> to vector<1x96xbf16>
    %cst_311 = arith.constant dense<0.000000e+00> : vector<1x64xf32>
    %736 = tpu.matmul %735, %35, %cst_311 {dimension_numbers = #tpu.dot_dimension_numbers<[1], [0], [0], [1], [0, 0, 1, 1], [], []>} : vector<1x96xbf16>, vector<96x64xbf16>, vector<1x64xf32> -> vector<1x64xf32>
    %737 = arith.addf %733, %736 : vector<1x64xf32>
    %cst_312 = arith.constant 0.000000e+00 : f32
    %738 = vector.broadcast %cst_312 : f32 to vector<1x64xf32>
    %739 = arith.maximumf %737, %738 : vector<1x64xf32>
    %740 = arith.truncf %739 : vector<1x64xf32> to vector<1x64xbf16>
    %cst_313 = arith.constant dense<0.000000e+00> : vector<1x128xf32>
    %741 = tpu.matmul %740, %37, %cst_313 {dimension_numbers = #tpu.dot_dimension_numbers<[1], [0], [0], [1], [0, 0, 1, 1], [], []>} : vector<1x64xbf16>, vector<64x128xbf16>, vector<1x128xf32> -> vector<1x128xf32>
    %742 = arith.addf %741, %38 : vector<1x128xf32>
    %743 = tpu.concatenate %126, %214, %302, %390, %478, %566, %654, %742 in 0 : vector<1x128xf32>, vector<1x128xf32>, vector<1x128xf32>, vector<1x128xf32>, vector<1x128xf32>, vector<1x128xf32>, vector<1x128xf32>, vector<1x128xf32> -> vector<8x128xf32>
    %c0_314 = arith.constant 0 : index
    %c0_315 = arith.constant 0 : index
    %744 = vector.load %arg24[%c0_314, %c0_315] : memref<8x128xf32, #tpu.memory_space<vmem>>, vector<8x128xf32>
    tpu.vector_store %arg24[%c0_314, %c0_315], %743 {strides = array<i32>} : memref<8x128xf32, #tpu.memory_space<vmem>>, vector<8x128xf32>,
    return
  }
  func.func @transform_0(%arg0: i32) -> (i32, i32, i32) {
    %c0_i32 = arith.constant 0 : i32
    %c0_i32_0 = arith.constant 0 : i32
    %c0_i32_1 = arith.constant 0 : i32
    return %arg0, %c0_i32, %c0_i32_0 : i32, i32, i32
  }
  func.func @transform_1(%arg0: i32) -> (i32, i32, i32) {
    %c0_i32 = arith.constant 0 : i32
    %c0_i32_0 = arith.constant 0 : i32
    %c0_i32_1 = arith.constant 0 : i32
    %c0_i32_2 = arith.constant 0 : i32
    return %c0_i32, %c0_i32_0, %c0_i32_1 : i32, i32, i32
  }
  func.func @transform_2(%arg0: i32) -> (i32, i32) {
    %c0_i32 = arith.constant 0 : i32
    %c0_i32_0 = arith.constant 0 : i32
    %c0_i32_1 = arith.constant 0 : i32
    return %c0_i32, %c0_i32_0 : i32, i32
  }
  func.func @transform_3(%arg0: i32) -> (i32, i32, i32) {
    %c0_i32 = arith.constant 0 : i32
    %c0_i32_0 = arith.constant 0 : i32
    %c0_i32_1 = arith.constant 0 : i32
    %c0_i32_2 = arith.constant 0 : i32
    return %c0_i32, %c0_i32_0, %c0_i32_1 : i32, i32, i32
  }
  func.func @transform_4(%arg0: i32) -> (i32, i32) {
    %c0_i32 = arith.constant 0 : i32
    %c0_i32_0 = arith.constant 0 : i32
    %c0_i32_1 = arith.constant 0 : i32
    return %c0_i32, %c0_i32_0 : i32, i32
  }
  func.func @transform_5(%arg0: i32) -> (i32, i32, i32) {
    %c0_i32 = arith.constant 0 : i32
    %c0_i32_0 = arith.constant 0 : i32
    %c0_i32_1 = arith.constant 0 : i32
    %c0_i32_2 = arith.constant 0 : i32
    return %c0_i32, %c0_i32_0, %c0_i32_1 : i32, i32, i32
  }
  func.func @transform_6(%arg0: i32) -> (i32, i32) {
    %c0_i32 = arith.constant 0 : i32
    %c0_i32_0 = arith.constant 0 : i32
    %c0_i32_1 = arith.constant 0 : i32
    return %c0_i32, %c0_i32_0 : i32, i32
  }
  func.func @transform_7(%arg0: i32) -> (i32, i32) {
    %c0_i32 = arith.constant 0 : i32
    %c0_i32_0 = arith.constant 0 : i32
    %c0_i32_1 = arith.constant 0 : i32
    return %c0_i32, %c0_i32_0 : i32, i32
  }
  func.func @transform_8(%arg0: i32) -> (i32, i32) {
    %c0_i32 = arith.constant 0 : i32
    %c0_i32_0 = arith.constant 0 : i32
    %c0_i32_1 = arith.constant 0 : i32
    return %c0_i32, %c0_i32_0 : i32, i32
  }
  func.func @transform_9(%arg0: i32) -> (i32, i32) {
    %c0_i32 = arith.constant 0 : i32
    %c0_i32_0 = arith.constant 0 : i32
    %c0_i32_1 = arith.constant 0 : i32
    return %c0_i32, %c0_i32_0 : i32, i32
  }
  func.func @transform_10(%arg0: i32) -> (i32, i32) {
    %c0_i32 = arith.constant 0 : i32
    %c0_i32_0 = arith.constant 0 : i32
    %c0_i32_1 = arith.constant 0 : i32
    return %c0_i32, %c0_i32_0 : i32, i32
  }
  func.func @transform_11(%arg0: i32) -> (i32, i32) {
    %c0_i32 = arith.constant 0 : i32
    %c0_i32_0 = arith.constant 0 : i32
    %c0_i32_1 = arith.constant 0 : i32
    return %c0_i32, %c0_i32_0 : i32, i32
  }
  func.func @transform_12(%arg0: i32) -> (i32, i32) {
    %c0_i32 = arith.constant 0 : i32
    %c0_i32_0 = arith.constant 0 : i32
    %c0_i32_1 = arith.constant 0 : i32
    return %c0_i32, %c0_i32_0 : i32, i32
  }
  func.func @transform_13(%arg0: i32) -> (i32, i32) {
    %c0_i32 = arith.constant 0 : i32
    %c0_i32_0 = arith.constant 0 : i32
    %c0_i32_1 = arith.constant 0 : i32
    return %c0_i32, %c0_i32_0 : i32, i32
  }
  func.func @transform_14(%arg0: i32) -> (i32, i32) {
    %c0_i32 = arith.constant 0 : i32
    %c0_i32_0 = arith.constant 0 : i32
    %c0_i32_1 = arith.constant 0 : i32
    return %c0_i32, %c0_i32_0 : i32, i32
  }
  func.func @transform_15(%arg0: i32) -> (i32, i32) {
    %c0_i32 = arith.constant 0 : i32
    %c0_i32_0 = arith.constant 0 : i32
    %c0_i32_1 = arith.constant 0 : i32
    return %c0_i32, %c0_i32_0 : i32, i32
  }
  func.func @transform_16(%arg0: i32) -> (i32, i32) {
    %c0_i32 = arith.constant 0 : i32
    %c0_i32_0 = arith.constant 0 : i32
    %c0_i32_1 = arith.constant 0 : i32
    return %c0_i32, %c0_i32_0 : i32, i32
  }
  func.func @transform_17(%arg0: i32) -> (i32, i32) {
    %c0_i32 = arith.constant 0 : i32
    %c0_i32_0 = arith.constant 0 : i32
    %c0_i32_1 = arith.constant 0 : i32
    return %c0_i32, %c0_i32_0 : i32, i32
  }
  func.func @transform_18(%arg0: i32) -> (i32, i32) {
    %c0_i32 = arith.constant 0 : i32
    %c0_i32_0 = arith.constant 0 : i32
    %c0_i32_1 = arith.constant 0 : i32
    return %c0_i32, %c0_i32_0 : i32, i32
  }
  func.func @transform_19(%arg0: i32) -> (i32, i32) {
    %c0_i32 = arith.constant 0 : i32
    %c0_i32_0 = arith.constant 0 : i32
    %c0_i32_1 = arith.constant 0 : i32
    return %c0_i32, %c0_i32_0 : i32, i32
  }
  func.func @transform_20(%arg0: i32) -> (i32, i32) {
    %c0_i32 = arith.constant 0 : i32
    %c0_i32_0 = arith.constant 0 : i32
    %c0_i32_1 = arith.constant 0 : i32
    return %c0_i32, %c0_i32_0 : i32, i32
  }
  func.func @transform_21(%arg0: i32) -> (i32, i32) {
    %c0_i32 = arith.constant 0 : i32
    %c0_i32_0 = arith.constant 0 : i32
    %c0_i32_1 = arith.constant 0 : i32
    return %c0_i32, %c0_i32_0 : i32, i32
  }
  func.func @transform_22(%arg0: i32) -> (i32, i32) {
    %c0_i32 = arith.constant 0 : i32
    %c0_i32_0 = arith.constant 0 : i32
    %c0_i32_1 = arith.constant 0 : i32
    return %c0_i32, %c0_i32_0 : i32, i32
  }
  func.func @transform_23(%arg0: i32) -> (i32, i32) {
    %c0_i32 = arith.constant 0 : i32
    %c0_i32_0 = arith.constant 0 : i32
    return %arg0, %c0_i32 : i32, i32
  }
}

</mosaic_0001>

<llo_original>
// kernel: from_scratch_forward.1
$region0: #{from_scratch_forward.1}
  #allocation0 [shape = 'u32[]', space=smem, size = 0x4, offset = 0x4, fixed_abs, tag = 'smem constant byte address 0x4 - core index']
  #allocation1 [shape = 'u32[72,128]{1,0:T(1,128)}', space=vmem, size = 0x9000, scoped, tag = 'internal scratch']
  %s0 = inlined_call_operand.vmem [shape: f32[8,26,26], index: 0, kind: input, shape index: {}]
  %s1 = inlined_call_operand.vmem [shape: bf16[3,26,192], index: 1, kind: input, shape index: {}]
  %s2 = inlined_call_operand.vmem [shape: f32[1,192], index: 2, kind: input, shape index: {}]
  %s3 = inlined_call_operand.vmem [shape: bf16[3,112,192], index: 3, kind: input, shape index: {}]
  %s4 = inlined_call_operand.vmem [shape: f32[1,192], index: 4, kind: input, shape index: {}]
  %s5 = inlined_call_operand.vmem [shape: bf16[3,128,192], index: 5, kind: input, shape index: {}]
  %s6 = inlined_call_operand.vmem [shape: f32[1,192], index: 6, kind: input, shape index: {}]
  %s7 = inlined_call_operand.vmem [shape: bf16[14,24], index: 7, kind: input, shape index: {}]
  %s8 = inlined_call_operand.vmem [shape: bf16[14,24], index: 8, kind: input, shape index: {}]
  %s9 = inlined_call_operand.vmem [shape: bf16[192,112], index: 9, kind: input, shape index: {}]
  %s10 = inlined_call_operand.vmem [shape: bf16[192,112], index: 10, kind: input, shape index: {}]
  %s11 = inlined_call_operand.vmem [shape: bf16[8,12], index: 11, kind: input, shape index: {}]
  %s12 = inlined_call_operand.vmem [shape: bf16[8,12], index: 12, kind: input, shape index: {}]
  %s13 = inlined_call_operand.vmem [shape: bf16[192,128], index: 13, kind: input, shape index: {}]
  %s14 = inlined_call_operand.vmem [shape: bf16[192,128], index: 14, kind: input, shape index: {}]
  %s15 = inlined_call_operand.vmem [shape: bf16[3,6], index: 15, kind: input, shape index: {}]
  %s16 = inlined_call_operand.vmem [shape: bf16[3,6], index: 16, kind: input, shape index: {}]
  %s17 = inlined_call_operand.vmem [shape: bf16[192,96], index: 17, kind: input, shape index: {}]
  %s18 = inlined_call_operand.vmem [shape: bf16[192,96], index: 18, kind: input, shape index: {}]
  %s19 = inlined_call_operand.vmem [shape: bf16[288,64], index: 19, kind: input, shape index: {}]
  %s20 = inlined_call_operand.vmem [shape: f32[1,64], index: 20, kind: input, shape index: {}]
  %s21 = inlined_call_operand.vmem [shape: bf16[64,128], index: 21, kind: input, shape index: {}]
  %s22 = inlined_call_operand.vmem [shape: f32[1,128], index: 22, kind: input, shape index: {}]
  %s23 = inlined_call_operand.vmem [shape: f32[8,128], index: 23, kind: output, shape index: {}]
  %s24 = sld [smem:[#allocation0]]
  $region102: #{from_scratch_forward.1} parent=0
    _
  %s26 = ssub.s32 1, %s24
  %s27 = scalar_select 0, %s26, %s24
  // Predicated region
  $region2: #{from_scratch_forward.1} parent=0 // pred_check
    _
  $region3: #{from_scratch_forward.1} parent=0 // pred_check_branch
    %29 = sbr.rel (0) target = $region5
  $region4: #{from_scratch_forward.1} parent=0 // pred_region
    _
  $region5: #{from_scratch_forward.1} parent=0 // pred_fallthru
    _
  // Predicated region
  $region6: #{from_scratch_forward.1} parent=0 // pred_check
    _
  $region7: #{from_scratch_forward.1} parent=0 // pred_check_branch
    %31 = sbr.rel (0) target = $region9
  $region8: #{from_scratch_forward.1} parent=0 // pred_region
    _
  $region9: #{from_scratch_forward.1} parent=0 // pred_fallthru
    _
  // Predicated region
  $region10: #{from_scratch_forward.1} parent=0 // pred_check
    _
  $region11: #{from_scratch_forward.1} parent=0 // pred_check_branch
    %33 = sbr.rel (0) target = $region13
  $region12: #{from_scratch_forward.1} parent=0 // pred_region
    _
  $region13: #{from_scratch_forward.1} parent=0 // pred_fallthru
    _
  // Predicated region
  $region14: #{from_scratch_forward.1} parent=0 // pred_check
    _
  $region15: #{from_scratch_forward.1} parent=0 // pred_check_branch
    %35 = sbr.rel (0) target = $region17
  $region16: #{from_scratch_forward.1} parent=0 // pred_region
    _
  $region17: #{from_scratch_forward.1} parent=0 // pred_fallthru
    _
  // Predicated region
  $region18: #{from_scratch_forward.1} parent=0 // pred_check
    _
  $region19: #{from_scratch_forward.1} parent=0 // pred_check_branch
    %37 = sbr.rel (0) target = $region21
  $region20: #{from_scratch_forward.1} parent=0 // pred_region
    _
  $region21: #{from_scratch_forward.1} parent=0 // pred_fallthru
    _
  // Predicated region
  $region22: #{from_scratch_forward.1} parent=0 // pred_check
    _
  $region23: #{from_scratch_forward.1} parent=0 // pred_check_branch
    %39 = sbr.rel (0) target = $region25
  $region24: #{from_scratch_forward.1} parent=0 // pred_region
    _
  $region25: #{from_scratch_forward.1} parent=0 // pred_fallthru
    _
  // Predicated region
  $region26: #{from_scratch_forward.1} parent=0 // pred_check
    _
  $region27: #{from_scratch_forward.1} parent=0 // pred_check_branch
    %41 = sbr.rel (0) target = $region29
  $region28: #{from_scratch_forward.1} parent=0 // pred_region
    _
  $region29: #{from_scratch_forward.1} parent=0 // pred_fallthru
    _
  // Predicated region
  $region30: #{from_scratch_forward.1} parent=0 // pred_check
    _
  $region31: #{from_scratch_forward.1} parent=0 // pred_check_branch
    %43 = sbr.rel (0) target = $region33
  $region32: #{from_scratch_forward.1} parent=0 // pred_region
    _
  $region33: #{from_scratch_forward.1} parent=0 // pred_fallthru
    _
  // Predicated region
  $region34: #{from_scratch_forward.1} parent=0 // pred_check
    _
  $region35: #{from_scratch_forward.1} parent=0 // pred_check_branch
    %45 = sbr.rel (0) target = $region37
  $region36: #{from_scratch_forward.1} parent=0 // pred_region
    _
  $region37: #{from_scratch_forward.1} parent=0 // pred_fallthru
    _
  // Predicated region
  $region38: #{from_scratch_forward.1} parent=0 // pred_check
    _
  $region39: #{from_scratch_forward.1} parent=0 // pred_check_branch
    %47 = sbr.rel (0) target = $region41
  $region40: #{from_scratch_forward.1} parent=0 // pred_region
    _
  $region41: #{from_scratch_forward.1} parent=0 // pred_fallthru
    _
  // Predicated region
  $region42: #{from_scratch_forward.1} parent=0 // pred_check
    _
  $region43: #{from_scratch_forward.1} parent=0 // pred_check_branch
    %49 = sbr.rel (0) target = $region45
  $region44: #{from_scratch_forward.1} parent=0 // pred_region
    _
  $region45: #{from_scratch_forward.1} parent=0 // pred_fallthru
    _
  // Predicated region
  $region46: #{from_scratch_forward.1} parent=0 // pred_check
    _
  $region47: #{from_scratch_forward.1} parent=0 // pred_check_branch
    %51 = sbr.rel (0) target = $region49
  $region48: #{from_scratch_forward.1} parent=0 // pred_region
    _
  $region49: #{from_scratch_forward.1} parent=0 // pred_fallthru
    _
  // Predicated region
  $region50: #{from_scratch_forward.1} parent=0 // pred_check
    _
  $region51: #{from_scratch_forward.1} parent=0 // pred_check_branch
    %53 = sbr.rel (0) target = $region53
  $region52: #{from_scratch_forward.1} parent=0 // pred_region
    _
  $region53: #{from_scratch_forward.1} parent=0 // pred_fallthru
    _
  // Predicated region
  $region54: #{from_scratch_forward.1} parent=0 // pred_check
    _
  $region55: #{from_scratch_forward.1} parent=0 // pred_check_branch
    %55 = sbr.rel (0) target = $region57
  $region56: #{from_scratch_forward.1} parent=0 // pred_region
    _
  $region57: #{from_scratch_forward.1} parent=0 // pred_fallthru
    _
  // Predicated region
  $region58: #{from_scratch_forward.1} parent=0 // pred_check
    _
  $region59: #{from_scratch_forward.1} parent=0 // pred_check_branch
    %57 = sbr.rel (0) target = $region61
  $region60: #{from_scratch_forward.1} parent=0 // pred_region
    _
  $region61: #{from_scratch_forward.1} parent=0 // pred_fallthru
    _
  // Predicated region
  $region62: #{from_scratch_forward.1} parent=0 // pred_check
    _
  $region63: #{from_scratch_forward.1} parent=0 // pred_check_branch
    %59 = sbr.rel (0) target = $region65
  $region64: #{from_scratch_forward.1} parent=0 // pred_region
    _
  $region65: #{from_scratch_forward.1} parent=0 // pred_fallthru
    _
  // Predicated region
  $region66: #{from_scratch_forward.1} parent=0 // pred_check
    _
  $region67: #{from_scratch_forward.1} parent=0 // pred_check_branch
    %61 = sbr.rel (0) target = $region69
  $region68: #{from_scratch_forward.1} parent=0 // pred_region
    _
  $region69: #{from_scratch_forward.1} parent=0 // pred_fallthru
    _
  // Predicated region
  $region70: #{from_scratch_forward.1} parent=0 // pred_check
    _
  $region71: #{from_scratch_forward.1} parent=0 // pred_check_branch
    %63 = sbr.rel (0) target = $region73
  $region72: #{from_scratch_forward.1} parent=0 // pred_region
    _
  $region73: #{from_scratch_forward.1} parent=0 // pred_fallthru
    _
  // Predicated region
  $region74: #{from_scratch_forward.1} parent=0 // pred_check
    _
  $region75: #{from_scratch_forward.1} parent=0 // pred_check_branch
    %65 = sbr.rel (0) target = $region77
  $region76: #{from_scratch_forward.1} parent=0 // pred_region
    _
  $region77: #{from_scratch_forward.1} parent=0 // pred_fallthru
    _
  // Predicated region
  $region78: #{from_scratch_forward.1} parent=0 // pred_check
    _
  $region79: #{from_scratch_forward.1} parent=0 // pred_check_branch
    %67 = sbr.rel (0) target = $region81
  $region80: #{from_scratch_forward.1} parent=0 // pred_region
    _
  $region81: #{from_scratch_forward.1} parent=0 // pred_fallthru
    _
  // Predicated region
  $region82: #{from_scratch_forward.1} parent=0 // pred_check
    _
  $region83: #{from_scratch_forward.1} parent=0 // pred_check_branch
    %69 = sbr.rel (0) target = $region85
  $region84: #{from_scratch_forward.1} parent=0 // pred_region
    _
  $region85: #{from_scratch_forward.1} parent=0 // pred_fallthru
    _
  // Predicated region
  $region86: #{from_scratch_forward.1} parent=0 // pred_check
    _
  $region87: #{from_scratch_forward.1} parent=0 // pred_check_branch
    %71 = sbr.rel (0) target = $region89
  $region88: #{from_scratch_forward.1} parent=0 // pred_region
    _
  $region89: #{from_scratch_forward.1} parent=0 // pred_fallthru
    _
  // Predicated region
  $region90: #{from_scratch_forward.1} parent=0 // pred_check
    _
  $region91: #{from_scratch_forward.1} parent=0 // pred_check_branch
    %73 = sbr.rel (0) target = $region93
  $region92: #{from_scratch_forward.1} parent=0 // pred_region
    _
  $region93: #{from_scratch_forward.1} parent=0 // pred_fallthru
    _
  %v75 = vld [vmem:[%s1] sm:$0xff]
  %v76 = vld [vmem:[%s1 + $0x8] sm:$0xff]
  %v77 = vld [vmem:[%s1 + $0x10] sm:$0xff]
  %v78 = vld [vmem:[%s1 + $0x18] sm:$0x11]
  %s79 = scalar_lea.vmem %s1, 32
  %v80 = vld [vmem:[%s79] sm:$0xff]
  %v81 = vld [vmem:[%s79 + $0x8] sm:$0xff]
  %v82 = vld [vmem:[%s79 + $0x10] sm:$0xff]
  %v83 = vld [vmem:[%s79 + $0x18] sm:$0x11]
  %s84 = scalar_lea.vmem %s1, 64
  %v85 = vld [vmem:[%s84] sm:$0xff]
  %v86 = vld [vmem:[%s84 + $0x8] sm:$0xff]
  %v87 = vld [vmem:[%s84 + $0x10] sm:$0xff]
  %v88 = vld [vmem:[%s84 + $0x18] sm:$0x11]
  %v89 = vld [vmem:[%s3] sm:$0xff]
  %v90 = vld [vmem:[%s3 + $0x8] sm:$0xff]
  %v91 = vld [vmem:[%s3 + $0x10] sm:$0xff]
  %v92 = vld [vmem:[%s3 + $0x18] sm:$0xff]
  %v93 = vld [vmem:[%s3 + $0x20] sm:$0xff]
  %v94 = vld [vmem:[%s3 + $0x28] sm:$0xff]
  %v95 = vld [vmem:[%s3 + $0x30] sm:$0xff]
  %v96 = vld [vmem:[%s3 + $0x38] sm:$0xff]
  %v97 = vld [vmem:[%s3 + $0x40] sm:$0xff]
  %v98 = vld [vmem:[%s3 + $0x48] sm:$0xff]
  %v99 = vld [vmem:[%s3 + $0x50] sm:$0xff]
  %v100 = vld [vmem:[%s3 + $0x58] sm:$0xff]
  %v101 = vld [vmem:[%s3 + $0x60] sm:$0xff]
  %v102 = vld [vmem:[%s3 + $0x68] sm:$0xff]
  %s103 = scalar_lea.vmem %s3, 112
  %v104 = vld [vmem:[%s103] sm:$0xff]
  %v105 = vld [vmem:[%s103 + $0x8] sm:$0xff]
  %v106 = vld [vmem:[%s103 + $0x10] sm:$0xff]
  %v107 = vld [vmem:[%s103 + $0x18] sm:$0xff]
  %v108 = vld [vmem:[%s103 + $0x20] sm:$0xff]
  %v109 = vld [vmem:[%s103 + $0x28] sm:$0xff]
  %v110 = vld [vmem:[%s103 + $0x30] sm:$0xff]
  %v111 = vld [vmem:[%s103 + $0x38] sm:$0xff]
  %v112 = vld [vmem:[%s103 + $0x40] sm:$0xff]
  %v113 = vld [vmem:[%s103 + $0x48] sm:$0xff]
  %v114 = vld [vmem:[%s103 + $0x50] sm:$0xff]
  %v115 = vld [vmem:[%s103 + $0x58] sm:$0xff]
  %v116 = vld [vmem:[%s103 + $0x60] sm:$0xff]
  %v117 = vld [vmem:[%s103 + $0x68] sm:$0xff]
  %s118 = scalar_lea.vmem %s3, 224
  %v119 = vld [vmem:[%s118] sm:$0xff]
  %v120 = vld [vmem:[%s118 + $0x8] sm:$0xff]
  %v121 = vld [vmem:[%s118 + $0x10] sm:$0xff]
  %v122 = vld [vmem:[%s118 + $0x18] sm:$0xff]
  %v123 = vld [vmem:[%s118 + $0x20] sm:$0xff]
  %v124 = vld [vmem:[%s118 + $0x28] sm:$0xff]
  %v125 = vld [vmem:[%s118 + $0x30] sm:$0xff]
  %v126 = vld [vmem:[%s118 + $0x38] sm:$0xff]
  %v127 = vld [vmem:[%s118 + $0x40] sm:$0xff]
  %v128 = vld [vmem:[%s118 + $0x48] sm:$0xff]
  %v129 = vld [vmem:[%s118 + $0x50] sm:$0xff]
  %v130 = vld [vmem:[%s118 + $0x58] sm:$0xff]
  %v131 = vld [vmem:[%s118 + $0x60] sm:$0xff]
  %v132 = vld [vmem:[%s118 + $0x68] sm:$0xff]
  %v133 = vld [vmem:[%s5] sm:$0xff]
  %v134 = vld [vmem:[%s5 + $0x8] sm:$0xff]
  %v135 = vld [vmem:[%s5 + $0x10] sm:$0xff]
  %v136 = vld [vmem:[%s5 + $0x18] sm:$0xff]
  %v137 = vld [vmem:[%s5 + $0x20] sm:$0xff]
  %v138 = vld [vmem:[%s5 + $0x28] sm:$0xff]
  %v139 = vld [vmem:[%s5 + $0x30] sm:$0xff]
  %v140 = vld [vmem:[%s5 + $0x38] sm:$0xff]
  %v141 = vld [vmem:[%s5 + $0x40] sm:$0xff]
  %v142 = vld [vmem:[%s5 + $0x48] sm:$0xff]
  %v143 = vld [vmem:[%s5 + $0x50] sm:$0xff]
  %v144 = vld [vmem:[%s5 + $0x58] sm:$0xff]
  %v145 = vld [vmem:[%s5 + $0x60] sm:$0xff]
  %v146 = vld [vmem:[%s5 + $0x68] sm:$0xff]
  %v147 = vld [vmem:[%s5 + $0x70] sm:$0xff]
  %v148 = vld [vmem:[%s5 + $0x78] sm:$0xff]
  %s149 = scalar_lea.vmem %s5, 128
  %v150 = vld [vmem:[%s149] sm:$0xff]
  %v151 = vld [vmem:[%s149 + $0x8] sm:$0xff]
  %v152 = vld [vmem:[%s149 + $0x10] sm:$0xff]
  %v153 = vld [vmem:[%s149 + $0x18] sm:$0xff]
  %v154 = vld [vmem:[%s149 + $0x20] sm:$0xff]
  %v155 = vld [vmem:[%s149 + $0x28] sm:$0xff]
  %v156 = vld [vmem:[%s149 + $0x30] sm:$0xff]
  %v157 = vld [vmem:[%s149 + $0x38] sm:$0xff]
  %v158 = vld [vmem:[%s149 + $0x40] sm:$0xff]
  %v159 = vld [vmem:[%s149 + $0x48] sm:$0xff]
  %v160 = vld [vmem:[%s149 + $0x50] sm:$0xff]
  %v161 = vld [vmem:[%s149 + $0x58] sm:$0xff]
  %v162 = vld [vmem:[%s149 + $0x60] sm:$0xff]
  %v163 = vld [vmem:[%s149 + $0x68] sm:$0xff]
  %v164 = vld [vmem:[%s149 + $0x70] sm:$0xff]
  %v165 = vld [vmem:[%s149 + $0x78] sm:$0xff]
  %s166 = scalar_lea.vmem %s5, 256
  %v167 = vld [vmem:[%s166] sm:$0xff]
  %v168 = vld [vmem:[%s166 + $0x8] sm:$0xff]
  %v169 = vld [vmem:[%s166 + $0x10] sm:$0xff]
  %v170 = vld [vmem:[%s166 + $0x18] sm:$0xff]
  %v171 = vld [vmem:[%s166 + $0x20] sm:$0xff]
  %v172 = vld [vmem:[%s166 + $0x28] sm:$0xff]
  %v173 = vld [vmem:[%s166 + $0x30] sm:$0xff]
  %v174 = vld [vmem:[%s166 + $0x38] sm:$0xff]
  %v175 = vld [vmem:[%s166 + $0x40] sm:$0xff]
  %v176 = vld [vmem:[%s166 + $0x48] sm:$0xff]
  %v177 = vld [vmem:[%s166 + $0x50] sm:$0xff]
  %v178 = vld [vmem:[%s166 + $0x58] sm:$0xff]
  %v179 = vld [vmem:[%s166 + $0x60] sm:$0xff]
  %v180 = vld [vmem:[%s166 + $0x68] sm:$0xff]
  %v181 = vld [vmem:[%s166 + $0x70] sm:$0xff]
  %v182 = vld [vmem:[%s166 + $0x78] sm:$0xff]
  %v183 = vld [vmem:[%s2] sm:$0x3]
  %v184 = vld [vmem:[%s4] sm:$0x3]
  %v185 = vld [vmem:[%s6] sm:$0x3]
  %v186 = vld [vmem:[%s7] sm:$0xf]
  %v187 = vld [vmem:[%s7 + $0x4] sm:$0x7]
  %v188 = vld [vmem:[%s8] sm:$0xf]
  %v189 = vld [vmem:[%s8 + $0x4] sm:$0x7]
  %v190 = vld [vmem:[%s9] sm:$0xf]
  %v191 = vld [vmem:[%s9 + $0x4] sm:$0xf]
  %v192 = vld [vmem:[%s9 + $0x8] sm:$0xf]
  %v193 = vld [vmem:[%s9 + $0xc] sm:$0xf]
  %v194 = vld [vmem:[%s9 + $0x10] sm:$0xf]
  %v195 = vld [vmem:[%s9 + $0x14] sm:$0xf]
  %v196 = vld [vmem:[%s9 + $0x18] sm:$0xf]
  %v197 = vld [vmem:[%s9 + $0x1c] sm:$0xf]
  %v198 = vld [vmem:[%s9 + $0x20] sm:$0xf]
  %v199 = vld [vmem:[%s9 + $0x24] sm:$0xf]
  %v200 = vld [vmem:[%s9 + $0x28] sm:$0xf]
  %v201 = vld [vmem:[%s9 + $0x2c] sm:$0xf]
  %v202 = vld [vmem:[%s9 + $0x30] sm:$0xf]
  %v203 = vld [vmem:[%s9 + $0x34] sm:$0xf]
  %v204 = vld [vmem:[%s9 + $0x38] sm:$0xf]
  %v205 = vld [vmem:[%s9 + $0x3c] sm:$0xf]
  %v206 = vld [vmem:[%s9 + $0x40] sm:$0xf]
  %v207 = vld [vmem:[%s9 + $0x44] sm:$0xf]
  %v208 = vld [vmem:[%s9 + $0x48] sm:$0xf]
  %v209 = vld [vmem:[%s9 + $0x4c] sm:$0xf]
  %v210 = vld [vmem:[%s9 + $0x50] sm:$0xf]
  %v211 = vld [vmem:[%s9 + $0x54] sm:$0xf]
  %v212 = vld [vmem:[%s9 + $0x58] sm:$0xf]
  %v213 = vld [vmem:[%s9 + $0x5c] sm:$0xf]
  %v214 = vld [vmem:[%s10] sm:$0xf]
  %v215 = vld [vmem:[%s10 + $0x4] sm:$0xf]
  %v216 = vld [vmem:[%s10 + $0x8] sm:$0xf]
  %v217 = vld [vmem:[%s10 + $0xc] sm:$0xf]
  %v218 = vld [vmem:[%s10 + $0x10] sm:$0xf]
  %v219 = vld [vmem:[%s10 + $0x14] sm:$0xf]
  %v220 = vld [vmem:[%s10 + $0x18] sm:$0xf]
  %v221 = vld [vmem:[%s10 + $0x1c] sm:$0xf]
  %v222 = vld [vmem:[%s10 + $0x20] sm:$0xf]
  %v223 = vld [vmem:[%s10 + $0x24] sm:$0xf]
  %v224 = vld [vmem:[%s10 + $0x28] sm:$0xf]
  %v225 = vld [vmem:[%s10 + $0x2c] sm:$0xf]
  %v226 = vld [vmem:[%s10 + $0x30] sm:$0xf]
  %v227 = vld [vmem:[%s10 + $0x34] sm:$0xf]
  %v228 = vld [vmem:[%s10 + $0x38] sm:$0xf]
  %v229 = vld [vmem:[%s10 + $0x3c] sm:$0xf]
  %v230 = vld [vmem:[%s10 + $0x40] sm:$0xf]
  %v231 = vld [vmem:[%s10 + $0x44] sm:$0xf]
  %v232 = vld [vmem:[%s10 + $0x48] sm:$0xf]
  %v233 = vld [vmem:[%s10 + $0x4c] sm:$0xf]
  %v234 = vld [vmem:[%s10 + $0x50] sm:$0xf]
  %v235 = vld [vmem:[%s10 + $0x54] sm:$0xf]
  %v236 = vld [vmem:[%s10 + $0x58] sm:$0xf]
  %v237 = vld [vmem:[%s10 + $0x5c] sm:$0xf]
  %v238 = vld [vmem:[%s11] sm:$0xf]
  %v239 = vld [vmem:[%s12] sm:$0xf]
  %v240 = vld [vmem:[%s13] sm:$0xf]
  %v241 = vld [vmem:[%s13 + $0x4] sm:$0xf]
  %v242 = vld [vmem:[%s13 + $0x8] sm:$0xf]
  %v243 = vld [vmem:[%s13 + $0xc] sm:$0xf]
  %v244 = vld [vmem:[%s13 + $0x10] sm:$0xf]
  %v245 = vld [vmem:[%s13 + $0x14] sm:$0xf]
  %v246 = vld [vmem:[%s13 + $0x18] sm:$0xf]
  %v247 = vld [vmem:[%s13 + $0x1c] sm:$0xf]
  %v248 = vld [vmem:[%s13 + $0x20] sm:$0xf]
  %v249 = vld [vmem:[%s13 + $0x24] sm:$0xf]
  %v250 = vld [vmem:[%s13 + $0x28] sm:$0xf]
  %v251 = vld [vmem:[%s13 + $0x2c] sm:$0xf]
  %v252 = vld [vmem:[%s13 + $0x30] sm:$0xf]
  %v253 = vld [vmem:[%s13 + $0x34] sm:$0xf]
  %v254 = vld [vmem:[%s13 + $0x38] sm:$0xf]
  %v255 = vld [vmem:[%s13 + $0x3c] sm:$0xf]
  %v256 = vld [vmem:[%s13 + $0x40] sm:$0xf]
  %v257 = vld [vmem:[%s13 + $0x44] sm:$0xf]
  %v258 = vld [vmem:[%s13 + $0x48] sm:$0xf]
  %v259 = vld [vmem:[%s13 + $0x4c] sm:$0xf]
  %v260 = vld [vmem:[%s13 + $0x50] sm:$0xf]
  %v261 = vld [vmem:[%s13 + $0x54] sm:$0xf]
  %v262 = vld [vmem:[%s13 + $0x58] sm:$0xf]
  %v263 = vld [vmem:[%s13 + $0x5c] sm:$0xf]
  %v264 = vld [vmem:[%s14] sm:$0xf]
  %v265 = vld [vmem:[%s14 + $0x4] sm:$0xf]
  %v266 = vld [vmem:[%s14 + $0x8] sm:$0xf]
  %v267 = vld [vmem:[%s14 + $0xc] sm:$0xf]
  %v268 = vld [vmem:[%s14 + $0x10] sm:$0xf]
  %v269 = vld [vmem:[%s14 + $0x14] sm:$0xf]
  %v270 = vld [vmem:[%s14 + $0x18] sm:$0xf]
  %v271 = vld [vmem:[%s14 + $0x1c] sm:$0xf]
  %v272 = vld [vmem:[%s14 + $0x20] sm:$0xf]
  %v273 = vld [vmem:[%s14 + $0x24] sm:$0xf]
  %v274 = vld [vmem:[%s14 + $0x28] sm:$0xf]
  %v275 = vld [vmem:[%s14 + $0x2c] sm:$0xf]
  %v276 = vld [vmem:[%s14 + $0x30] sm:$0xf]
  %v277 = vld [vmem:[%s14 + $0x34] sm:$0xf]
  %v278 = vld [vmem:[%s14 + $0x38] sm:$0xf]
  %v279 = vld [vmem:[%s14 + $0x3c] sm:$0xf]
  %v280 = vld [vmem:[%s14 + $0x40] sm:$0xf]
  %v281 = vld [vmem:[%s14 + $0x44] sm:$0xf]
  %v282 = vld [vmem:[%s14 + $0x48] sm:$0xf]
  %v283 = vld [vmem:[%s14 + $0x4c] sm:$0xf]
  %v284 = vld [vmem:[%s14 + $0x50] sm:$0xf]
  %v285 = vld [vmem:[%s14 + $0x54] sm:$0xf]
  %v286 = vld [vmem:[%s14 + $0x58] sm:$0xf]
  %v287 = vld [vmem:[%s14 + $0x5c] sm:$0xf]
  %v288 = vld [vmem:[%s15] sm:$0x3]
  %v289 = vld [vmem:[%s16] sm:$0x3]
  %v290 = vld [vmem:[%s17] sm:$0xf]
  %v291 = vld [vmem:[%s17 + $0x4] sm:$0xf]
  %v292 = vld [vmem:[%s17 + $0x8] sm:$0xf]
  %v293 = vld [vmem:[%s17 + $0xc] sm:$0xf]
  %v294 = vld [vmem:[%s17 + $0x10] sm:$0xf]
  %v295 = vld [vmem:[%s17 + $0x14] sm:$0xf]
  %v296 = vld [vmem:[%s17 + $0x18] sm:$0xf]
  %v297 = vld [vmem:[%s17 + $0x1c] sm:$0xf]
  %v298 = vld [vmem:[%s17 + $0x20] sm:$0xf]
  %v299 = vld [vmem:[%s17 + $0x24] sm:$0xf]
  %v300 = vld [vmem:[%s17 + $0x28] sm:$0xf]
  %v301 = vld [vmem:[%s17 + $0x2c] sm:$0xf]
  %v302 = vld [vmem:[%s17 + $0x30] sm:$0xf]
  %v303 = vld [vmem:[%s17 + $0x34] sm:$0xf]
  %v304 = vld [vmem:[%s17 + $0x38] sm:$0xf]
  %v305 = vld [vmem:[%s17 + $0x3c] sm:$0xf]
  %v306 = vld [vmem:[%s17 + $0x40] sm:$0xf]
  %v307 = vld [vmem:[%s17 + $0x44] sm:$0xf]
  %v308 = vld [vmem:[%s17 + $0x48] sm:$0xf]
  %v309 = vld [vmem:[%s17 + $0x4c] sm:$0xf]
  %v310 = vld [vmem:[%s17 + $0x50] sm:$0xf]
  %v311 = vld [vmem:[%s17 + $0x54] sm:$0xf]
  %v312 = vld [vmem:[%s17 + $0x58] sm:$0xf]
  %v313 = vld [vmem:[%s17 + $0x5c] sm:$0xf]
  %v314 = vld [vmem:[%s18] sm:$0xf]
  %v315 = vld [vmem:[%s18 + $0x4] sm:$0xf]
  %v316 = vld [vmem:[%s18 + $0x8] sm:$0xf]
  %v317 = vld [vmem:[%s18 + $0xc] sm:$0xf]
  %v318 = vld [vmem:[%s18 + $0x10] sm:$0xf]
  %v319 = vld [vmem:[%s18 + $0x14] sm:$0xf]
  %v320 = vld [vmem:[%s18 + $0x18] sm:$0xf]
  %v321 = vld [vmem:[%s18 + $0x1c] sm:$0xf]
  %v322 = vld [vmem:[%s18 + $0x20] sm:$0xf]
  %v323 = vld [vmem:[%s18 + $0x24] sm:$0xf]
  %v324 = vld [vmem:[%s18 + $0x28] sm:$0xf]
  %v325 = vld [vmem:[%s18 + $0x2c] sm:$0xf]
  %v326 = vld [vmem:[%s18 + $0x30] sm:$0xf]
  %v327 = vld [vmem:[%s18 + $0x34] sm:$0xf]
  %v328 = vld [vmem:[%s18 + $0x38] sm:$0xf]
  %v329 = vld [vmem:[%s18 + $0x3c] sm:$0xf]
  %v330 = vld [vmem:[%s18 + $0x40] sm:$0xf]
  %v331 = vld [vmem:[%s18 + $0x44] sm:$0xf]
  %v332 = vld [vmem:[%s18 + $0x48] sm:$0xf]
  %v333 = vld [vmem:[%s18 + $0x4c] sm:$0xf]
  %v334 = vld [vmem:[%s18 + $0x50] sm:$0xf]
  %v335 = vld [vmem:[%s18 + $0x54] sm:$0xf]
  %v336 = vld [vmem:[%s18 + $0x58] sm:$0xf]
  %v337 = vld [vmem:[%s18 + $0x5c] sm:$0xf]
  %v338 = vld [vmem:[%s19] sm:$0xf]
  %v339 = vld [vmem:[%s19 + $0x4] sm:$0xf]
  %v340 = vld [vmem:[%s19 + $0x8] sm:$0xf]
  %v341 = vld [vmem:[%s19 + $0xc] sm:$0xf]
  %v342 = vld [vmem:[%s19 + $0x10] sm:$0xf]
  %v343 = vld [vmem:[%s19 + $0x14] sm:$0xf]
  %v344 = vld [vmem:[%s19 + $0x18] sm:$0xf]
  %v345 = vld [vmem:[%s19 + $0x1c] sm:$0xf]
  %v346 = vld [vmem:[%s19 + $0x20] sm:$0xf]
  %v347 = vld [vmem:[%s19 + $0x24] sm:$0xf]
  %v348 = vld [vmem:[%s19 + $0x28] sm:$0xf]
  %v349 = vld [vmem:[%s19 + $0x2c] sm:$0xf]
  %v350 = vld [vmem:[%s19 + $0x30] sm:$0xf]
  %v351 = vld [vmem:[%s19 + $0x34] sm:$0xf]
  %v352 = vld [vmem:[%s19 + $0x38] sm:$0xf]
  %v353 = vld [vmem:[%s19 + $0x3c] sm:$0xf]
  %v354 = vld [vmem:[%s19 + $0x40] sm:$0xf]
  %v355 = vld [vmem:[%s19 + $0x44] sm:$0xf]
  %v356 = vld [vmem:[%s19 + $0x48] sm:$0xf]
  %v357 = vld [vmem:[%s19 + $0x4c] sm:$0xf]
  %v358 = vld [vmem:[%s19 + $0x50] sm:$0xf]
  %v359 = vld [vmem:[%s19 + $0x54] sm:$0xf]
  %v360 = vld [vmem:[%s19 + $0x58] sm:$0xf]
  %v361 = vld [vmem:[%s19 + $0x5c] sm:$0xf]
  %v362 = vld [vmem:[%s19 + $0x60] sm:$0xf]
  %v363 = vld [vmem:[%s19 + $0x64] sm:$0xf]
  %v364 = vld [vmem:[%s19 + $0x68] sm:$0xf]
  %v365 = vld [vmem:[%s19 + $0x6c] sm:$0xf]
  %v366 = vld [vmem:[%s19 + $0x70] sm:$0xf]
  %v367 = vld [vmem:[%s19 + $0x74] sm:$0xf]
  %v368 = vld [vmem:[%s19 + $0x78] sm:$0xf]
  %v369 = vld [vmem:[%s19 + $0x7c] sm:$0xf]
  %v370 = vld [vmem:[%s19 + $0x80] sm:$0xf]
  %v371 = vld [vmem:[%s19 + $0x84] sm:$0xf]
  %v372 = vld [vmem:[%s19 + $0x88] sm:$0xf]
  %v373 = vld [vmem:[%s19 + $0x8c] sm:$0xf]
  %v374 = vld [vmem:[%s20] sm:$0x1]
  %v375 = vld [vmem:[%s21] sm:$0xf]
  %v376 = vld [vmem:[%s21 + $0x4] sm:$0xf]
  %v377 = vld [vmem:[%s21 + $0x8] sm:$0xf]
  %v378 = vld [vmem:[%s21 + $0xc] sm:$0xf]
  %v379 = vld [vmem:[%s21 + $0x10] sm:$0xf]
  %v380 = vld [vmem:[%s21 + $0x14] sm:$0xf]
  %v381 = vld [vmem:[%s21 + $0x18] sm:$0xf]
  %v382 = vld [vmem:[%s21 + $0x1c] sm:$0xf]
  %v383 = vld [vmem:[%s22] sm:$0x1]
  %v384 = vld [vmem:[%s0] sm:$0xff]
  %v385 = vld [vmem:[%s0 + $0x8] sm:$0xff]
  %v386 = vld [vmem:[%s0 + $0x10] sm:$0xff]
  %v387 = vld [vmem:[%s0 + $0x18] sm:$0x3]
  %v388 = vpack.c.bf16 %v385, %v384
  %v389 = vpack.c.bf16 %v386, %v386
  %v394 = vunpack.c.l.b16 %v75
  %v395 = vunpack.c.h.b16 %v75
  %v396 = vunpack.c.l.b16 %v76
  %v397 = vunpack.c.h.b16 %v76
  %v398 = vunpack.c.l.b16 %v77
  %v399 = vunpack.c.h.b16 %v77
  %v400 = vunpack.c.l.b16 %v78
  %v401 = vunpack.c.h.b16 %v78
  %v402 = vpack.c.b16 %v396, %v394
  %v403 = vpack.c.b16 %v397, %v395
  %v404 = vpack.c.b16 %v400, %v398
  %v405 = vpack.c.b16 %v401, %v399
  %vm408 = vcmask 211968
  %v410 = vsel %vm408, %v388, 0
  %v413 = vsel %vm408, %v389, 0
  %vm415 = vcmask 1044480
  %v417 = vsel %vm415, %v404, 0
  %v420 = vsel %vm415, %v405, 0
  %422 = vmatpush.bf16.msra.mxu0 0
  %423 = vmatpush.bf16.msra.mxu0 0
  %424 = vmatpush.bf16.msra.mxu0 0
  %425 = vmatpush.bf16.msra.mxu0 0
  %426 = vmatpush.bf16.msra.mxu0 0
  %427 = vmatpush.bf16.msra.mxu0 0
  %428 = vmatpush.bf16.msra.mxu0 %v417
  %429 = vmatpush.bf16.msra.mxu0 %v402
  %430 = vmatmul.bf16.gmra.mxu0 %v410
  %v431 = vpop.f32.mrf.mxu0
  %v432 = vadd.f32 0.0, %v431
  %v433 = vpop.f32.mrf.mxu0
  %v434 = vadd.f32 0.0, %v433
  %435 = vmatmul.bf16.gmra.mxu0 %v413
  %v436 = vpop.f32.mrf.mxu0
  %v437 = vadd.f32 0.0, %v436
  %v438 = vpop.f32.mrf.mxu0
  %439 = vdwg.mxu0
  %440 = vmatpush.bf16.msra.mxu0 0
  %441 = vmatpush.bf16.msra.mxu0 0
  %442 = vmatpush.bf16.msra.mxu0 0
  %443 = vmatpush.bf16.msra.mxu0 0
  %444 = vmatpush.bf16.msra.mxu0 0
  %445 = vmatpush.bf16.msra.mxu0 0
  %446 = vmatpush.bf16.msra.mxu0 %v420
  %447 = vmatpush.bf16.msra.mxu0 %v403
  %448 = vmatmul.bf16.gmra.mxu0 %v410
  %v449 = vpop.f32.mrf.mxu0
  %v450 = vadd.f32 0.0, %v449
  %v451 = vpop.f32.mrf.mxu0
  %v452 = vadd.f32 0.0, %v451
  %453 = vmatmul.bf16.gmra.mxu0 %v413
  %v454 = vpop.f32.mrf.mxu0
  %v455 = vadd.f32 0.0, %v454
  %v456 = vpop.f32.mrf.mxu0
  %457 = vdwg.mxu0
  %v459 = vperm.slane %v183, 0
  %v460 = vperm.slane %v183, 1
  %v463 = vadd.f32 %v459, %v432
  %v464 = vadd.f32 %v460, %v450
  %v465 = vadd.f32 %v459, %v434
  %v466 = vadd.f32 %v460, %v452
  %v467 = vadd.f32 %v459, %v437
  %v468 = vadd.f32 %v460, %v455
  %v469 = vpack.c.bf16 %v387, %v386
  %vm470 = vsmask.f32 7424
  %v471 = vshrl.u32 %v388, 16
  %v473 = vshll.u32 %v388, 16
  %v475 = vrot.slane %v473, 1
  %v476 = vor.u32 %v471, %v475
  %v478 = vshll.u32 %v469, 16
  %v480 = vrot.slane %v478, 1
  %v481 = vsel %vm470, %v476, %v480
  %v482 = vshrl.u32 %v469, 16
  %v484 = vor.u32 %v482, %v480
  %v489 = vunpack.c.l.b16 %v80
  %v490 = vunpack.c.h.b16 %v80
  %v491 = vunpack.c.l.b16 %v81
  %v492 = vunpack.c.h.b16 %v81
  %v493 = vunpack.c.l.b16 %v82
  %v494 = vunpack.c.h.b16 %v82
  %v495 = vunpack.c.l.b16 %v83
  %v496 = vunpack.c.h.b16 %v83
  %v497 = vpack.c.b16 %v491, %v489
  %v498 = vpack.c.b16 %v492, %v490
  %v499 = vpack.c.b16 %v495, %v493
  %v500 = vpack.c.b16 %v496, %v494
  %v504 = vsel %vm408, %v481, 0
  %v507 = vsel %vm408, %v484, 0
  %v510 = vsel %vm415, %v499, 0
  %v513 = vsel %vm415, %v500, 0
  %515 = vmatpush.bf16.msra.mxu0 0
  %516 = vmatpush.bf16.msra.mxu0 0
  %517 = vmatpush.bf16.msra.mxu0 0
  %518 = vmatpush.bf16.msra.mxu0 0
  %519 = vmatpush.bf16.msra.mxu0 0
  %520 = vmatpush.bf16.msra.mxu0 0
  %521 = vmatpush.bf16.msra.mxu0 %v510
  %522 = vmatpush.bf16.msra.mxu0 %v497
  %523 = vmatmul.bf16.gmra.mxu0 %v504
  %v524 = vpop.f32.mrf.mxu0
  %v525 = vadd.f32 0.0, %v524
  %v526 = vpop.f32.mrf.mxu0
  %v527 = vadd.f32 0.0, %v526
  %528 = vmatmul.bf16.gmra.mxu0 %v507
  %v529 = vpop.f32.mrf.mxu0
  %v530 = vadd.f32 0.0, %v529
  %v531 = vpop.f32.mrf.mxu0
  %532 = vdwg.mxu0
  %533 = vmatpush.bf16.msra.mxu0 0
  %534 = vmatpush.bf16.msra.mxu0 0
  %535 = vmatpush.bf16.msra.mxu0 0
  %536 = vmatpush.bf16.msra.mxu0 0
  %537 = vmatpush.bf16.msra.mxu0 0
  %538 = vmatpush.bf16.msra.mxu0 0
  %539 = vmatpush.bf16.msra.mxu0 %v513
  %540 = vmatpush.bf16.msra.mxu0 %v498
  %541 = vmatmul.bf16.gmra.mxu0 %v504
  %v542 = vpop.f32.mrf.mxu0
  %v543 = vadd.f32 0.0, %v542
  %v544 = vpop.f32.mrf.mxu0
  %v545 = vadd.f32 0.0, %v544
  %546 = vmatmul.bf16.gmra.mxu0 %v507
  %v547 = vpop.f32.mrf.mxu0
  %v548 = vadd.f32 0.0, %v547
  %v549 = vpop.f32.mrf.mxu0
  %550 = vdwg.mxu0
  %v551 = vadd.f32 %v463, %v525
  %v552 = vadd.f32 %v464, %v543
  %v553 = vadd.f32 %v465, %v527
  %v554 = vadd.f32 %v466, %v545
  %v555 = vadd.f32 %v467, %v530
  %v556 = vadd.f32 %v468, %v548
  %vm559 = vcmask 1046528
  %v560 = vrot.slane %v388, 1
  %v561 = vrot.slane %v469, 1
  %v562 = vsel %vm559, %v560, %v561
  %v567 = vunpack.c.l.b16 %v85
  %v568 = vunpack.c.h.b16 %v85
  %v569 = vunpack.c.l.b16 %v86
  %v570 = vunpack.c.h.b16 %v86
  %v571 = vunpack.c.l.b16 %v87
  %v572 = vunpack.c.h.b16 %v87
  %v573 = vunpack.c.l.b16 %v88
  %v574 = vunpack.c.h.b16 %v88
  %v575 = vpack.c.b16 %v569, %v567
  %v576 = vpack.c.b16 %v570, %v568
  %v577 = vpack.c.b16 %v573, %v571
  %v578 = vpack.c.b16 %v574, %v572
  %v582 = vsel %vm408, %v562, 0
  %v585 = vsel %vm408, %v561, 0
  %v588 = vsel %vm415, %v577, 0
  %v591 = vsel %vm415, %v578, 0
  %593 = vmatpush.bf16.msra.mxu0 0
  %594 = vmatpush.bf16.msra.mxu0 0
  %595 = vmatpush.bf16.msra.mxu0 0
  %596 = vmatpush.bf16.msra.mxu0 0
  %597 = vmatpush.bf16.msra.mxu0 0
  %598 = vmatpush.bf16.msra.mxu0 0
  %599 = vmatpush.bf16.msra.mxu0 %v588
  %600 = vmatpush.bf16.msra.mxu0 %v575
  %601 = vmatmul.bf16.gmra.mxu0 %v582
  %v602 = vpop.f32.mrf.mxu0
  %v603 = vadd.f32 0.0, %v602
  %v604 = vpop.f32.mrf.mxu0
  %v605 = vadd.f32 0.0, %v604
  %606 = vmatmul.bf16.gmra.mxu0 %v585
  %v607 = vpop.f32.mrf.mxu0
  %v608 = vadd.f32 0.0, %v607
  %v609 = vpop.f32.mrf.mxu0
  %610 = vdwg.mxu0
  %611 = vmatpush.bf16.msra.mxu0 0
  %612 = vmatpush.bf16.msra.mxu0 0
  %613 = vmatpush.bf16.msra.mxu0 0
  %614 = vmatpush.bf16.msra.mxu0 0
  %615 = vmatpush.bf16.msra.mxu0 0
  %616 = vmatpush.bf16.msra.mxu0 0
  %617 = vmatpush.bf16.msra.mxu0 %v591
  %618 = vmatpush.bf16.msra.mxu0 %v576
  %619 = vmatmul.bf16.gmra.mxu0 %v582
  %v620 = vpop.f32.mrf.mxu0
  %v621 = vadd.f32 0.0, %v620
  %v622 = vpop.f32.mrf.mxu0
  %v623 = vadd.f32 0.0, %v622
  %624 = vmatmul.bf16.gmra.mxu0 %v585
  %v625 = vpop.f32.mrf.mxu0
  %v626 = vadd.f32 0.0, %v625
  %v627 = vpop.f32.mrf.mxu0
  %628 = vdwg.mxu0
  %v629 = vadd.f32 %v551, %v603
  %v630 = vadd.f32 %v552, %v621
  %v631 = vadd.f32 %v553, %v605
  %v632 = vadd.f32 %v554, %v623
  %v633 = vadd.f32 %v555, %v608
  %v634 = vadd.f32 %v556, %v626
  %v635 = vmax.f32 %v629, 0.0
  %v636 = vmax.f32 %v630, 0.0
  %v637 = vmax.f32 %v631, 0.0
  %v638 = vmax.f32 %v632, 0.0
  %v639 = vmax.f32 %v633, 0.0
  %v640 = vmax.f32 %v634, 0.0
  %v641 = vpack.c.bf16 %v637, %v635
  %v642 = vpack.c.bf16 %v638, %v636
  %v643 = vpack.c.bf16 %v639, %v639
  %v644 = vpack.c.bf16 %v640, %v640
  %v669 = vunpack.c.l.b16 %v190
  %v670 = vunpack.c.l.b16 %v191
  %v671 = vunpack.c.l.b16 %v192
  %v672 = vunpack.c.l.b16 %v193
  %v673 = vunpack.c.l.b16 %v194
  %v674 = vunpack.c.l.b16 %v195
  %v675 = vunpack.c.l.b16 %v196
  %v676 = vunpack.c.l.b16 %v197
  %v677 = vunpack.c.l.b16 %v198
  %v678 = vunpack.c.l.b16 %v199
  %v679 = vunpack.c.l.b16 %v200
  %v680 = vunpack.c.l.b16 %v201
  %v681 = vunpack.c.l.b16 %v202
  %v682 = vunpack.c.l.b16 %v203
  %v683 = vunpack.c.l.b16 %v204
  %v684 = vunpack.c.l.b16 %v205
  %v685 = vunpack.c.l.b16 %v206
  %v686 = vunpack.c.l.b16 %v207
  %v687 = vunpack.c.l.b16 %v208
  %v688 = vunpack.c.l.b16 %v209
  %v689 = vunpack.c.l.b16 %v210
  %v690 = vunpack.c.l.b16 %v211
  %v691 = vunpack.c.l.b16 %v212
  %v692 = vunpack.c.l.b16 %v213
  %v693 = vpack.c.b16 %v670, %v669
  %v694 = vpack.c.b16 %v672, %v671
  %v695 = vpack.c.b16 %v674, %v673
  %v696 = vpack.c.b16 %v676, %v675
  %v697 = vpack.c.b16 %v678, %v677
  %v698 = vpack.c.b16 %v680, %v679
  %v699 = vpack.c.b16 %v682, %v681
  %v700 = vpack.c.b16 %v684, %v683
  %v701 = vpack.c.b16 %v686, %v685
  %v702 = vpack.c.b16 %v688, %v687
  %v703 = vpack.c.b16 %v690, %v689
  %v704 = vpack.c.b16 %v692, %v691
  %vm717 = vcmask 523264
  %v719 = vsel %vm717, %v642, 0
  %v722 = vsel %vm717, %v644, 0
  %724 = vmatpush.bf16.msra.mxu0 %v700
  %725 = vmatpush.bf16.msra.mxu0 %v699
  %726 = vmatpush.bf16.msra.mxu0 %v698
  %727 = vmatpush.bf16.msra.mxu0 %v697
  %728 = vmatpush.bf16.msra.mxu0 %v696
  %729 = vmatpush.bf16.msra.mxu0 %v695
  %730 = vmatpush.bf16.msra.mxu0 %v694
  %731 = vmatpush.bf16.msra.mxu0 %v693
  %732 = vmatmul.bf16.gmra.mxu0 %v641
  %v733 = vpop.f32.mrf.mxu0
  %v734 = vadd.f32 0.0, %v733
  %v735 = vpop.f32.mrf.mxu0
  %v736 = vadd.f32 0.0, %v735
  %737 = vmatmul.bf16.gmra.mxu0 %v643
  %v738 = vpop.f32.mrf.mxu0
  %v739 = vadd.f32 0.0, %v738
  %v740 = vpop.f32.mrf.mxu0
  %741 = vdwg.mxu0
  %742 = vmatpush.bf16.msra.mxu0 0
  %743 = vmatpush.bf16.msra.mxu0 0
  %744 = vmatpush.bf16.msra.mxu0 0
  %745 = vmatpush.bf16.msra.mxu0 0
  %746 = vmatpush.bf16.msra.mxu0 %v704
  %747 = vmatpush.bf16.msra.mxu0 %v703
  %748 = vmatpush.bf16.msra.mxu0 %v702
  %749 = vmatpush.bf16.msra.mxu0 %v701
  %750 = vmatmul.bf16.gmra.mxu0 %v719
  %v751 = vpop.f32.mrf.mxu0
  %v752 = vadd.f32 %v734, %v751
  %v753 = vpop.f32.mrf.mxu0
  %v754 = vadd.f32 %v736, %v753
  %755 = vmatmul.bf16.gmra.mxu0 %v722
  %v756 = vpop.f32.mrf.mxu0
  %v757 = vadd.f32 %v739, %v756
  %v758 = vpop.f32.mrf.mxu0
  %759 = vdwg.mxu0
  %v784 = vunpack.c.l.b16 %v214
  %v785 = vunpack.c.l.b16 %v215
  %v786 = vunpack.c.l.b16 %v216
  %v787 = vunpack.c.l.b16 %v217
  %v788 = vunpack.c.l.b16 %v218
  %v789 = vunpack.c.l.b16 %v219
  %v790 = vunpack.c.l.b16 %v220
  %v791 = vunpack.c.l.b16 %v221
  %v792 = vunpack.c.l.b16 %v222
  %v793 = vunpack.c.l.b16 %v223
  %v794 = vunpack.c.l.b16 %v224
  %v795 = vunpack.c.l.b16 %v225
  %v796 = vunpack.c.l.b16 %v226
  %v797 = vunpack.c.l.b16 %v227
  %v798 = vunpack.c.l.b16 %v228
  %v799 = vunpack.c.l.b16 %v229
  %v800 = vunpack.c.l.b16 %v230
  %v801 = vunpack.c.l.b16 %v231
  %v802 = vunpack.c.l.b16 %v232
  %v803 = vunpack.c.l.b16 %v233
  %v804 = vunpack.c.l.b16 %v234
  %v805 = vunpack.c.l.b16 %v235
  %v806 = vunpack.c.l.b16 %v236
  %v807 = vunpack.c.l.b16 %v237
  %v808 = vpack.c.b16 %v785, %v784
  %v809 = vpack.c.b16 %v787, %v786
  %v810 = vpack.c.b16 %v789, %v788
  %v811 = vpack.c.b16 %v791, %v790
  %v812 = vpack.c.b16 %v793, %v792
  %v813 = vpack.c.b16 %v795, %v794
  %v814 = vpack.c.b16 %v797, %v796
  %v815 = vpack.c.b16 %v799, %v798
  %v816 = vpack.c.b16 %v801, %v800
  %v817 = vpack.c.b16 %v803, %v802
  %v818 = vpack.c.b16 %v805, %v804
  %v819 = vpack.c.b16 %v807, %v806
  %832 = vmatpush.bf16.msra.mxu0 %v815
  %833 = vmatpush.bf16.msra.mxu0 %v814
  %834 = vmatpush.bf16.msra.mxu0 %v813
  %835 = vmatpush.bf16.msra.mxu0 %v812
  %836 = vmatpush.bf16.msra.mxu0 %v811
  %837 = vmatpush.bf16.msra.mxu0 %v810
  %838 = vmatpush.bf16.msra.mxu0 %v809
  %839 = vmatpush.bf16.msra.mxu0 %v808
  %840 = vmatmul.bf16.gmra.mxu0 %v641
  %v841 = vpop.f32.mrf.mxu0
  %v842 = vadd.f32 0.0, %v841
  %v843 = vpop.f32.mrf.mxu0
  %v844 = vadd.f32 0.0, %v843
  %845 = vmatmul.bf16.gmra.mxu0 %v643
  %v846 = vpop.f32.mrf.mxu0
  %v847 = vadd.f32 0.0, %v846
  %v848 = vpop.f32.mrf.mxu0
  %849 = vdwg.mxu0
  %850 = vmatpush.bf16.msra.mxu0 0
  %851 = vmatpush.bf16.msra.mxu0 0
  %852 = vmatpush.bf16.msra.mxu0 0
  %853 = vmatpush.bf16.msra.mxu0 0
  %854 = vmatpush.bf16.msra.mxu0 %v819
  %855 = vmatpush.bf16.msra.mxu0 %v818
  %856 = vmatpush.bf16.msra.mxu0 %v817
  %857 = vmatpush.bf16.msra.mxu0 %v816
  %858 = vmatmul.bf16.gmra.mxu0 %v719
  %v859 = vpop.f32.mrf.mxu0
  %v860 = vadd.f32 %v842, %v859
  %v861 = vpop.f32.mrf.mxu0
  %v862 = vadd.f32 %v844, %v861
  %863 = vmatmul.bf16.gmra.mxu0 %v722
  %v864 = vpop.f32.mrf.mxu0
  %v865 = vadd.f32 %v847, %v864
  %v866 = vpop.f32.mrf.mxu0
  %867 = vdwg.mxu0
  %v868 = vmax.f32 %v752, %v860
  %v869 = vmax.f32 %v754, %v862
  %v870 = vmax.f32 %v757, %v865
  %v873 = vunpack.c.l.b16 %v186
  %v874 = vunpack.c.l.b16 %v187
  %v875 = vpack.c.b16 %v874, %v873
  %vm876 = vcmask 195584
  %v878 = vsel %vm876, %v875, 0
  %880 = vmatpush.msra.mxu0 0.0
  %881 = vmatpush.msra.mxu0 0.0
  %882 = vmatpush.msra.mxu0 0.0
  %883 = vmatpush.msra.mxu0 0.0
  %884 = vmatpush.msra.mxu0 0.0
  %885 = vmatpush.msra.mxu0 0.0
  %886 = vmatpush.msra.mxu0 0.0
  %887 = vmatpush.msra.mxu0 0.0
  %888 = vmatpush.msra.mxu0 0.0
  %889 = vmatpush.msra.mxu0 0.0
  %890 = vmatpush.msra.mxu0 0.0
  %891 = vmatpush.msra.mxu0 0.0
  %892 = vmatpush.msra.mxu0 0.0
  %893 = vmatpush.msra.mxu0 %v870
  %894 = vmatpush.msra.mxu0 %v869
  %895 = vmatpush.msra.mxu0 %v868
  %896 = vmatmul.bf16.gmra.mxu0 %v878
  %v897 = vpop.f32.mrf.mxu0
  %v898 = vadd.f32 0.0, %v897
  %v899 = vpop.f32.mrf.mxu0
  %v900 = vadd.f32 0.0, %v899
  %901 = vdwg.mxu0
  %v904 = vunpack.c.l.b16 %v188
  %v905 = vunpack.c.l.b16 %v189
  %v906 = vpack.c.b16 %v905, %v904
  %v908 = vsel %vm876, %v906, 0
  %910 = vmatpush.msra.mxu0 0.0
  %911 = vmatpush.msra.mxu0 0.0
  %912 = vmatpush.msra.mxu0 0.0
  %913 = vmatpush.msra.mxu0 0.0
  %914 = vmatpush.msra.mxu0 0.0
  %915 = vmatpush.msra.mxu0 0.0
  %916 = vmatpush.msra.mxu0 0.0
  %917 = vmatpush.msra.mxu0 0.0
  %918 = vmatpush.msra.mxu0 0.0
  %919 = vmatpush.msra.mxu0 0.0
  %920 = vmatpush.msra.mxu0 0.0
  %921 = vmatpush.msra.mxu0 0.0
  %922 = vmatpush.msra.mxu0 0.0
  %923 = vmatpush.msra.mxu0 %v870
  %924 = vmatpush.msra.mxu0 %v869
  %925 = vmatpush.msra.mxu0 %v868
  %926 = vmatmul.bf16.gmra.mxu0 %v908
  %v927 = vpop.f32.mrf.mxu0
  %v928 = vadd.f32 0.0, %v927
  %v929 = vpop.f32.mrf.mxu0
  %v930 = vadd.f32 0.0, %v929
  %931 = vdwg.mxu0
  %v932 = vmax.f32 %v898, %v928
  %v933 = vmax.f32 %v900, %v930
  %v934 = vpack.c.bf16 %v933, %v932
  %v949 = vunpack.c.l.b16 %v89
  %v950 = vunpack.c.h.b16 %v89
  %v951 = vunpack.c.l.b16 %v90
  %v952 = vunpack.c.h.b16 %v90
  %v953 = vunpack.c.l.b16 %v91
  %v954 = vunpack.c.h.b16 %v91
  %v955 = vunpack.c.l.b16 %v92
  %v956 = vunpack.c.h.b16 %v92
  %v957 = vunpack.c.l.b16 %v93
  %v958 = vunpack.c.h.b16 %v93
  %v959 = vunpack.c.l.b16 %v94
  %v960 = vunpack.c.h.b16 %v94
  %v961 = vunpack.c.l.b16 %v95
  %v962 = vunpack.c.h.b16 %v95
  %v963 = vunpack.c.l.b16 %v96
  %v964 = vunpack.c.h.b16 %v96
  %v965 = vunpack.c.l.b16 %v97
  %v966 = vunpack.c.h.b16 %v97
  %v967 = vunpack.c.l.b16 %v98
  %v968 = vunpack.c.h.b16 %v98
  %v969 = vunpack.c.l.b16 %v99
  %v970 = vunpack.c.h.b16 %v99
  %v971 = vunpack.c.l.b16 %v100
  %v972 = vunpack.c.h.b16 %v100
  %v973 = vunpack.c.l.b16 %v101
  %v974 = vunpack.c.h.b16 %v101
  %v975 = vunpack.c.l.b16 %v102
  %v976 = vunpack.c.h.b16 %v102
  %v977 = vpack.c.b16 %v951, %v949
  %v978 = vpack.c.b16 %v952, %v950
  %v979 = vpack.c.b16 %v955, %v953
  %v980 = vpack.c.b16 %v956, %v954
  %v981 = vpack.c.b16 %v959, %v957
  %v982 = vpack.c.b16 %v960, %v958
  %v983 = vpack.c.b16 %v963, %v961
  %v984 = vpack.c.b16 %v964, %v962
  %v985 = vpack.c.b16 %v967, %v965
  %v986 = vpack.c.b16 %v968, %v966
  %v987 = vpack.c.b16 %v971, %v969
  %v988 = vpack.c.b16 %v972, %v970
  %v989 = vpack.c.b16 %v975, %v973
  %v990 = vpack.c.b16 %v976, %v974
  %vm1005 = vcmask 916480
  %v1007 = vsel %vm1005, %v934, 0
  %1009 = vmatpush.bf16.msra.mxu0 0
  %1010 = vmatpush.bf16.msra.mxu0 %v989
  %1011 = vmatpush.bf16.msra.mxu0 %v987
  %1012 = vmatpush.bf16.msra.mxu0 %v985
  %1013 = vmatpush.bf16.msra.mxu0 %v983
  %1014 = vmatpush.bf16.msra.mxu0 %v981
  %1015 = vmatpush.bf16.msra.mxu0 %v979
  %1016 = vmatpush.bf16.msra.mxu0 %v977
  %1017 = vmatmul.bf16.gmra.mxu0 %v1007
  %v1018 = vpop.f32.mrf.mxu0
  %v1019 = vadd.f32 0.0, %v1018
  %v1020 = vpop.f32.mrf.mxu0
  %v1021 = vadd.f32 0.0, %v1020
  %1022 = vdwg.mxu0
  %1023 = vmatpush.bf16.msra.mxu0 0
  %1024 = vmatpush.bf16.msra.mxu0 %v990
  %1025 = vmatpush.bf16.msra.mxu0 %v988
  %1026 = vmatpush.bf16.msra.mxu0 %v986
  %1027 = vmatpush.bf16.msra.mxu0 %v984
  %1028 = vmatpush.bf16.msra.mxu0 %v982
  %1029 = vmatpush.bf16.msra.mxu0 %v980
  %1030 = vmatpush.bf16.msra.mxu0 %v978
  %1031 = vmatmul.bf16.gmra.mxu0 %v1007
  %v1032 = vpop.f32.mrf.mxu0
  %v1033 = vadd.f32 0.0, %v1032
  %v1034 = vpop.f32.mrf.mxu0
  %v1035 = vadd.f32 0.0, %v1034
  %1036 = vdwg.mxu0
  %v1038 = vperm.slane %v184, 0
  %v1039 = vperm.slane %v184, 1
  %v1042 = vadd.f32 %v1038, %v1019
  %v1043 = vadd.f32 %v1039, %v1033
  %v1044 = vadd.f32 %v1038, %v1021
  %v1045 = vadd.f32 %v1039, %v1035
  %v1046 = vshrl.u32 %v934, 16
  %v1048 = vshll.u32 %v934, 16
  %v1050 = vrot.slane %v1048, 1
  %v1051 = vor.u32 %v1046, %v1050
  %v1066 = vunpack.c.l.b16 %v104
  %v1067 = vunpack.c.h.b16 %v104
  %v1068 = vunpack.c.l.b16 %v105
  %v1069 = vunpack.c.h.b16 %v105
  %v1070 = vunpack.c.l.b16 %v106
  %v1071 = vunpack.c.h.b16 %v106
  %v1072 = vunpack.c.l.b16 %v107
  %v1073 = vunpack.c.h.b16 %v107
  %v1074 = vunpack.c.l.b16 %v108
  %v1075 = vunpack.c.h.b16 %v108
  %v1076 = vunpack.c.l.b16 %v109
  %v1077 = vunpack.c.h.b16 %v109
  %v1078 = vunpack.c.l.b16 %v110
  %v1079 = vunpack.c.h.b16 %v110
  %v1080 = vunpack.c.l.b16 %v111
  %v1081 = vunpack.c.h.b16 %v111
  %v1082 = vunpack.c.l.b16 %v112
  %v1083 = vunpack.c.h.b16 %v112
  %v1084 = vunpack.c.l.b16 %v113
  %v1085 = vunpack.c.h.b16 %v113
  %v1086 = vunpack.c.l.b16 %v114
  %v1087 = vunpack.c.h.b16 %v114
  %v1088 = vunpack.c.l.b16 %v115
  %v1089 = vunpack.c.h.b16 %v115
  %v1090 = vunpack.c.l.b16 %v116
  %v1091 = vunpack.c.h.b16 %v116
  %v1092 = vunpack.c.l.b16 %v117
  %v1093 = vunpack.c.h.b16 %v117
  %v1094 = vpack.c.b16 %v1068, %v1066
  %v1095 = vpack.c.b16 %v1069, %v1067
  %v1096 = vpack.c.b16 %v1072, %v1070
  %v1097 = vpack.c.b16 %v1073, %v1071
  %v1098 = vpack.c.b16 %v1076, %v1074
  %v1099 = vpack.c.b16 %v1077, %v1075
  %v1100 = vpack.c.b16 %v1080, %v1078
  %v1101 = vpack.c.b16 %v1081, %v1079
  %v1102 = vpack.c.b16 %v1084, %v1082
  %v1103 = vpack.c.b16 %v1085, %v1083
  %v1104 = vpack.c.b16 %v1088, %v1086
  %v1105 = vpack.c.b16 %v1089, %v1087
  %v1106 = vpack.c.b16 %v1092, %v1090
  %v1107 = vpack.c.b16 %v1093, %v1091
  %v1123 = vsel %vm1005, %v1051, 0
  %1125 = vmatpush.bf16.msra.mxu0 0
  %1126 = vmatpush.bf16.msra.mxu0 %v1106
  %1127 = vmatpush.bf16.msra.mxu0 %v1104
  %1128 = vmatpush.bf16.msra.mxu0 %v1102
  %1129 = vmatpush.bf16.msra.mxu0 %v1100
  %1130 = vmatpush.bf16.msra.mxu0 %v1098
  %1131 = vmatpush.bf16.msra.mxu0 %v1096
  %1132 = vmatpush.bf16.msra.mxu0 %v1094
  %1133 = vmatmul.bf16.gmra.mxu0 %v1123
  %v1134 = vpop.f32.mrf.mxu0
  %v1135 = vadd.f32 0.0, %v1134
  %v1136 = vpop.f32.mrf.mxu0
  %v1137 = vadd.f32 0.0, %v1136
  %1138 = vdwg.mxu0
  %1139 = vmatpush.bf16.msra.mxu0 0
  %1140 = vmatpush.bf16.msra.mxu0 %v1107
  %1141 = vmatpush.bf16.msra.mxu0 %v1105
  %1142 = vmatpush.bf16.msra.mxu0 %v1103
  %1143 = vmatpush.bf16.msra.mxu0 %v1101
  %1144 = vmatpush.bf16.msra.mxu0 %v1099
  %1145 = vmatpush.bf16.msra.mxu0 %v1097
  %1146 = vmatpush.bf16.msra.mxu0 %v1095
  %1147 = vmatmul.bf16.gmra.mxu0 %v1123
  %v1148 = vpop.f32.mrf.mxu0
  %v1149 = vadd.f32 0.0, %v1148
  %v1150 = vpop.f32.mrf.mxu0
  %v1151 = vadd.f32 0.0, %v1150
  %1152 = vdwg.mxu0
  %v1153 = vadd.f32 %v1042, %v1135
  %v1154 = vadd.f32 %v1043, %v1149
  %v1155 = vadd.f32 %v1044, %v1137
  %v1156 = vadd.f32 %v1045, %v1151
  %v1158 = vrot.slane %v934, 1
  %v1173 = vunpack.c.l.b16 %v119
  %v1174 = vunpack.c.h.b16 %v119
  %v1175 = vunpack.c.l.b16 %v120
  %v1176 = vunpack.c.h.b16 %v120
  %v1177 = vunpack.c.l.b16 %v121
  %v1178 = vunpack.c.h.b16 %v121
  %v1179 = vunpack.c.l.b16 %v122
  %v1180 = vunpack.c.h.b16 %v122
  %v1181 = vunpack.c.l.b16 %v123
  %v1182 = vunpack.c.h.b16 %v123
  %v1183 = vunpack.c.l.b16 %v124
  %v1184 = vunpack.c.h.b16 %v124
  %v1185 = vunpack.c.l.b16 %v125
  %v1186 = vunpack.c.h.b16 %v125
  %v1187 = vunpack.c.l.b16 %v126
  %v1188 = vunpack.c.h.b16 %v126
  %v1189 = vunpack.c.l.b16 %v127
  %v1190 = vunpack.c.h.b16 %v127
  %v1191 = vunpack.c.l.b16 %v128
  %v1192 = vunpack.c.h.b16 %v128
  %v1193 = vunpack.c.l.b16 %v129
  %v1194 = vunpack.c.h.b16 %v129
  %v1195 = vunpack.c.l.b16 %v130
  %v1196 = vunpack.c.h.b16 %v130
  %v1197 = vunpack.c.l.b16 %v131
  %v1198 = vunpack.c.h.b16 %v131
  %v1199 = vunpack.c.l.b16 %v132
  %v1200 = vunpack.c.h.b16 %v132
  %v1201 = vpack.c.b16 %v1175, %v1173
  %v1202 = vpack.c.b16 %v1176, %v1174
  %v1203 = vpack.c.b16 %v1179, %v1177
  %v1204 = vpack.c.b16 %v1180, %v1178
  %v1205 = vpack.c.b16 %v1183, %v1181
  %v1206 = vpack.c.b16 %v1184, %v1182
  %v1207 = vpack.c.b16 %v1187, %v1185
  %v1208 = vpack.c.b16 %v1188, %v1186
  %v1209 = vpack.c.b16 %v1191, %v1189
  %v1210 = vpack.c.b16 %v1192, %v1190
  %v1211 = vpack.c.b16 %v1195, %v1193
  %v1212 = vpack.c.b16 %v1196, %v1194
  %v1213 = vpack.c.b16 %v1199, %v1197
  %v1214 = vpack.c.b16 %v1200, %v1198
  %v1230 = vsel %vm1005, %v1158, 0
  %1232 = vmatpush.bf16.msra.mxu0 0
  %1233 = vmatpush.bf16.msra.mxu0 %v1213
  %1234 = vmatpush.bf16.msra.mxu0 %v1211
  %1235 = vmatpush.bf16.msra.mxu0 %v1209
  %1236 = vmatpush.bf16.msra.mxu0 %v1207
  %1237 = vmatpush.bf16.msra.mxu0 %v1205
  %1238 = vmatpush.bf16.msra.mxu0 %v1203
  %1239 = vmatpush.bf16.msra.mxu0 %v1201
  %1240 = vmatmul.bf16.gmra.mxu0 %v1230
  %v1241 = vpop.f32.mrf.mxu0
  %v1242 = vadd.f32 0.0, %v1241
  %v1243 = vpop.f32.mrf.mxu0
  %v1244 = vadd.f32 0.0, %v1243
  %1245 = vdwg.mxu0
  %1246 = vmatpush.bf16.msra.mxu0 0
  %1247 = vmatpush.bf16.msra.mxu0 %v1214
  %1248 = vmatpush.bf16.msra.mxu0 %v1212
  %1249 = vmatpush.bf16.msra.mxu0 %v1210
  %1250 = vmatpush.bf16.msra.mxu0 %v1208
  %1251 = vmatpush.bf16.msra.mxu0 %v1206
  %1252 = vmatpush.bf16.msra.mxu0 %v1204
  %1253 = vmatpush.bf16.msra.mxu0 %v1202
  %1254 = vmatmul.bf16.gmra.mxu0 %v1230
  %v1255 = vpop.f32.mrf.mxu0
  %v1256 = vadd.f32 0.0, %v1255
  %v1257 = vpop.f32.mrf.mxu0
  %v1258 = vadd.f32 0.0, %v1257
  %1259 = vdwg.mxu0
  %v1260 = vadd.f32 %v1153, %v1242
  %v1261 = vadd.f32 %v1154, %v1256
  %v1262 = vadd.f32 %v1155, %v1244
  %v1263 = vadd.f32 %v1156, %v1258
  %v1264 = vmax.f32 %v1260, 0.0
  %v1265 = vmax.f32 %v1261, 0.0
  %v1266 = vmax.f32 %v1262, 0.0
  %v1267 = vmax.f32 %v1263, 0.0
  %v1268 = vpack.c.bf16 %v1266, %v1264
  %v1269 = vpack.c.bf16 %v1267, %v1265
  %v1294 = vunpack.c.l.b16 %v240
  %v1295 = vunpack.c.l.b16 %v241
  %v1296 = vunpack.c.l.b16 %v242
  %v1297 = vunpack.c.l.b16 %v243
  %v1298 = vunpack.c.l.b16 %v244
  %v1299 = vunpack.c.l.b16 %v245
  %v1300 = vunpack.c.l.b16 %v246
  %v1301 = vunpack.c.l.b16 %v247
  %v1302 = vunpack.c.l.b16 %v248
  %v1303 = vunpack.c.l.b16 %v249
  %v1304 = vunpack.c.l.b16 %v250
  %v1305 = vunpack.c.l.b16 %v251
  %v1306 = vunpack.c.l.b16 %v252
  %v1307 = vunpack.c.l.b16 %v253
  %v1308 = vunpack.c.l.b16 %v254
  %v1309 = vunpack.c.l.b16 %v255
  %v1310 = vunpack.c.l.b16 %v256
  %v1311 = vunpack.c.l.b16 %v257
  %v1312 = vunpack.c.l.b16 %v258
  %v1313 = vunpack.c.l.b16 %v259
  %v1314 = vunpack.c.l.b16 %v260
  %v1315 = vunpack.c.l.b16 %v261
  %v1316 = vunpack.c.l.b16 %v262
  %v1317 = vunpack.c.l.b16 %v263
  %v1318 = vpack.c.b16 %v1295, %v1294
  %v1319 = vpack.c.b16 %v1297, %v1296
  %v1320 = vpack.c.b16 %v1299, %v1298
  %v1321 = vpack.c.b16 %v1301, %v1300
  %v1322 = vpack.c.b16 %v1303, %v1302
  %v1323 = vpack.c.b16 %v1305, %v1304
  %v1324 = vpack.c.b16 %v1307, %v1306
  %v1325 = vpack.c.b16 %v1309, %v1308
  %v1326 = vpack.c.b16 %v1311, %v1310
  %v1327 = vpack.c.b16 %v1313, %v1312
  %v1328 = vpack.c.b16 %v1315, %v1314
  %v1329 = vpack.c.b16 %v1317, %v1316
  %v1343 = vsel %vm717, %v1269, 0
  %1345 = vmatpush.bf16.msra.mxu0 %v1325
  %1346 = vmatpush.bf16.msra.mxu0 %v1324
  %1347 = vmatpush.bf16.msra.mxu0 %v1323
  %1348 = vmatpush.bf16.msra.mxu0 %v1322
  %1349 = vmatpush.bf16.msra.mxu0 %v1321
  %1350 = vmatpush.bf16.msra.mxu0 %v1320
  %1351 = vmatpush.bf16.msra.mxu0 %v1319
  %1352 = vmatpush.bf16.msra.mxu0 %v1318
  %1353 = vmatmul.bf16.gmra.mxu0 %v1268
  %v1354 = vpop.f32.mrf.mxu0
  %v1355 = vadd.f32 0.0, %v1354
  %v1356 = vpop.f32.mrf.mxu0
  %v1357 = vadd.f32 0.0, %v1356
  %1358 = vdwg.mxu0
  %1359 = vmatpush.bf16.msra.mxu0 0
  %1360 = vmatpush.bf16.msra.mxu0 0
  %1361 = vmatpush.bf16.msra.mxu0 0
  %1362 = vmatpush.bf16.msra.mxu0 0
  %1363 = vmatpush.bf16.msra.mxu0 %v1329
  %1364 = vmatpush.bf16.msra.mxu0 %v1328
  %1365 = vmatpush.bf16.msra.mxu0 %v1327
  %1366 = vmatpush.bf16.msra.mxu0 %v1326
  %1367 = vmatmul.bf16.gmra.mxu0 %v1343
  %v1368 = vpop.f32.mrf.mxu0
  %v1369 = vadd.f32 %v1355, %v1368
  %v1370 = vpop.f32.mrf.mxu0
  %v1371 = vadd.f32 %v1357, %v1370
  %1372 = vdwg.mxu0
  %v1397 = vunpack.c.l.b16 %v264
  %v1398 = vunpack.c.l.b16 %v265
  %v1399 = vunpack.c.l.b16 %v266
  %v1400 = vunpack.c.l.b16 %v267
  %v1401 = vunpack.c.l.b16 %v268
  %v1402 = vunpack.c.l.b16 %v269
  %v1403 = vunpack.c.l.b16 %v270
  %v1404 = vunpack.c.l.b16 %v271
  %v1405 = vunpack.c.l.b16 %v272
  %v1406 = vunpack.c.l.b16 %v273
  %v1407 = vunpack.c.l.b16 %v274
  %v1408 = vunpack.c.l.b16 %v275
  %v1409 = vunpack.c.l.b16 %v276
  %v1410 = vunpack.c.l.b16 %v277
  %v1411 = vunpack.c.l.b16 %v278
  %v1412 = vunpack.c.l.b16 %v279
  %v1413 = vunpack.c.l.b16 %v280
  %v1414 = vunpack.c.l.b16 %v281
  %v1415 = vunpack.c.l.b16 %v282
  %v1416 = vunpack.c.l.b16 %v283
  %v1417 = vunpack.c.l.b16 %v284
  %v1418 = vunpack.c.l.b16 %v285
  %v1419 = vunpack.c.l.b16 %v286
  %v1420 = vunpack.c.l.b16 %v287
  %v1421 = vpack.c.b16 %v1398, %v1397
  %v1422 = vpack.c.b16 %v1400, %v1399
  %v1423 = vpack.c.b16 %v1402, %v1401
  %v1424 = vpack.c.b16 %v1404, %v1403
  %v1425 = vpack.c.b16 %v1406, %v1405
  %v1426 = vpack.c.b16 %v1408, %v1407
  %v1427 = vpack.c.b16 %v1410, %v1409
  %v1428 = vpack.c.b16 %v1412, %v1411
  %v1429 = vpack.c.b16 %v1414, %v1413
  %v1430 = vpack.c.b16 %v1416, %v1415
  %v1431 = vpack.c.b16 %v1418, %v1417
  %v1432 = vpack.c.b16 %v1420, %v1419
  %1445 = vmatpush.bf16.msra.mxu0 %v1428
  %1446 = vmatpush.bf16.msra.mxu0 %v1427
  %1447 = vmatpush.bf16.msra.mxu0 %v1426
  %1448 = vmatpush.bf16.msra.mxu0 %v1425
  %1449 = vmatpush.bf16.msra.mxu0 %v1424
  %1450 = vmatpush.bf16.msra.mxu0 %v1423
  %1451 = vmatpush.bf16.msra.mxu0 %v1422
  %1452 = vmatpush.bf16.msra.mxu0 %v1421
  %1453 = vmatmul.bf16.gmra.mxu0 %v1268
  %v1454 = vpop.f32.mrf.mxu0
  %v1455 = vadd.f32 0.0, %v1454
  %v1456 = vpop.f32.mrf.mxu0
  %v1457 = vadd.f32 0.0, %v1456
  %1458 = vdwg.mxu0
  %1459 = vmatpush.bf16.msra.mxu0 0
  %1460 = vmatpush.bf16.msra.mxu0 0
  %1461 = vmatpush.bf16.msra.mxu0 0
  %1462 = vmatpush.bf16.msra.mxu0 0
  %1463 = vmatpush.bf16.msra.mxu0 %v1432
  %1464 = vmatpush.bf16.msra.mxu0 %v1431
  %1465 = vmatpush.bf16.msra.mxu0 %v1430
  %1466 = vmatpush.bf16.msra.mxu0 %v1429
  %1467 = vmatmul.bf16.gmra.mxu0 %v1343
  %v1468 = vpop.f32.mrf.mxu0
  %v1469 = vadd.f32 %v1455, %v1468
  %v1470 = vpop.f32.mrf.mxu0
  %v1471 = vadd.f32 %v1457, %v1470
  %1472 = vdwg.mxu0
  %v1473 = vmax.f32 %v1369, %v1469
  %v1474 = vmax.f32 %v1371, %v1471
  %vm1475 = vcmask 97280
  %v1477 = vsel %vm1475, %v238, 0
  %vm1479 = vcmask 1043456
  %v1481 = vsel %vm1479, %v1474, 0
  %1483 = vmatpush.msra.mxu0 0.0
  %1484 = vmatpush.msra.mxu0 0.0
  %1485 = vmatpush.msra.mxu0 0.0
  %1486 = vmatpush.msra.mxu0 0.0
  %1487 = vmatpush.msra.mxu0 0.0
  %1488 = vmatpush.msra.mxu0 0.0
  %1489 = vmatpush.msra.mxu0 0.0
  %1490 = vmatpush.msra.mxu0 0.0
  %1491 = vmatpush.msra.mxu0 0.0
  %1492 = vmatpush.msra.mxu0 0.0
  %1493 = vmatpush.msra.mxu0 0.0
  %1494 = vmatpush.msra.mxu0 0.0
  %1495 = vmatpush.msra.mxu0 0.0
  %1496 = vmatpush.msra.mxu0 0.0
  %1497 = vmatpush.msra.mxu0 %v1481
  %1498 = vmatpush.msra.mxu0 %v1473
  %1499 = vmatmul.bf16.gmra.mxu0 %v1477
  %v1500 = vpop.f32.mrf.mxu0
  %v1501 = vadd.f32 0.0, %v1500
  %v1502 = vpop.f32.mrf.mxu0
  %1503 = vdwg.mxu0
  %v1505 = vsel %vm1475, %v239, 0
  %1507 = vmatpush.msra.mxu0 0.0
  %1508 = vmatpush.msra.mxu0 0.0
  %1509 = vmatpush.msra.mxu0 0.0
  %1510 = vmatpush.msra.mxu0 0.0
  %1511 = vmatpush.msra.mxu0 0.0
  %1512 = vmatpush.msra.mxu0 0.0
  %1513 = vmatpush.msra.mxu0 0.0
  %1514 = vmatpush.msra.mxu0 0.0
  %1515 = vmatpush.msra.mxu0 0.0
  %1516 = vmatpush.msra.mxu0 0.0
  %1517 = vmatpush.msra.mxu0 0.0
  %1518 = vmatpush.msra.mxu0 0.0
  %1519 = vmatpush.msra.mxu0 0.0
  %1520 = vmatpush.msra.mxu0 0.0
  %1521 = vmatpush.msra.mxu0 %v1481
  %1522 = vmatpush.msra.mxu0 %v1473
  %1523 = vmatmul.bf16.gmra.mxu0 %v1505
  %v1524 = vpop.f32.mrf.mxu0
  %v1525 = vadd.f32 0.0, %v1524
  %v1526 = vpop.f32.mrf.mxu0
  %1527 = vdwg.mxu0
  %v1528 = vmax.f32 %v1501, %v1525
  %v1529 = vpack.c.bf16 %v1528, %v1528
  %v1546 = vunpack.c.l.b16 %v133
  %v1547 = vunpack.c.h.b16 %v133
  %v1548 = vunpack.c.l.b16 %v134
  %v1549 = vunpack.c.h.b16 %v134
  %v1550 = vunpack.c.l.b16 %v135
  %v1551 = vunpack.c.h.b16 %v135
  %v1552 = vunpack.c.l.b16 %v136
  %v1553 = vunpack.c.h.b16 %v136
  %v1554 = vunpack.c.l.b16 %v137
  %v1555 = vunpack.c.h.b16 %v137
  %v1556 = vunpack.c.l.b16 %v138
  %v1557 = vunpack.c.h.b16 %v138
  %v1558 = vunpack.c.l.b16 %v139
  %v1559 = vunpack.c.h.b16 %v139
  %v1560 = vunpack.c.l.b16 %v140
  %v1561 = vunpack.c.h.b16 %v140
  %v1562 = vunpack.c.l.b16 %v141
  %v1563 = vunpack.c.h.b16 %v141
  %v1564 = vunpack.c.l.b16 %v142
  %v1565 = vunpack.c.h.b16 %v142
  %v1566 = vunpack.c.l.b16 %v143
  %v1567 = vunpack.c.h.b16 %v143
  %v1568 = vunpack.c.l.b16 %v144
  %v1569 = vunpack.c.h.b16 %v144
  %v1570 = vunpack.c.l.b16 %v145
  %v1571 = vunpack.c.h.b16 %v145
  %v1572 = vunpack.c.l.b16 %v146
  %v1573 = vunpack.c.h.b16 %v146
  %v1574 = vunpack.c.l.b16 %v147
  %v1575 = vunpack.c.h.b16 %v147
  %v1576 = vunpack.c.l.b16 %v148
  %v1577 = vunpack.c.h.b16 %v148
  %v1578 = vpack.c.b16 %v1548, %v1546
  %v1579 = vpack.c.b16 %v1549, %v1547
  %v1580 = vpack.c.b16 %v1552, %v1550
  %v1581 = vpack.c.b16 %v1553, %v1551
  %v1582 = vpack.c.b16 %v1556, %v1554
  %v1583 = vpack.c.b16 %v1557, %v1555
  %v1584 = vpack.c.b16 %v1560, %v1558
  %v1585 = vpack.c.b16 %v1561, %v1559
  %v1586 = vpack.c.b16 %v1564, %v1562
  %v1587 = vpack.c.b16 %v1565, %v1563
  %v1588 = vpack.c.b16 %v1568, %v1566
  %v1589 = vpack.c.b16 %v1569, %v1567
  %v1590 = vpack.c.b16 %v1572, %v1570
  %v1591 = vpack.c.b16 %v1573, %v1571
  %v1592 = vpack.c.b16 %v1576, %v1574
  %v1593 = vpack.c.b16 %v1577, %v1575
  %1610 = vmatpush.bf16.msra.mxu0 %v1592
  %1611 = vmatpush.bf16.msra.mxu0 %v1590
  %1612 = vmatpush.bf16.msra.mxu0 %v1588
  %1613 = vmatpush.bf16.msra.mxu0 %v1586
  %1614 = vmatpush.bf16.msra.mxu0 %v1584
  %1615 = vmatpush.bf16.msra.mxu0 %v1582
  %1616 = vmatpush.bf16.msra.mxu0 %v1580
  %1617 = vmatpush.bf16.msra.mxu0 %v1578
  %1618 = vmatmul.bf16.gmra.mxu0 %v1529
  %v1619 = vpop.f32.mrf.mxu0
  %v1620 = vadd.f32 0.0, %v1619
  %v1621 = vpop.f32.mrf.mxu0
  %1622 = vdwg.mxu0
  %1623 = vmatpush.bf16.msra.mxu0 %v1593
  %1624 = vmatpush.bf16.msra.mxu0 %v1591
  %1625 = vmatpush.bf16.msra.mxu0 %v1589
  %1626 = vmatpush.bf16.msra.mxu0 %v1587
  %1627 = vmatpush.bf16.msra.mxu0 %v1585
  %1628 = vmatpush.bf16.msra.mxu0 %v1583
  %1629 = vmatpush.bf16.msra.mxu0 %v1581
  %1630 = vmatpush.bf16.msra.mxu0 %v1579
  %1631 = vmatmul.bf16.gmra.mxu0 %v1529
  %v1632 = vpop.f32.mrf.mxu0
  %v1633 = vadd.f32 0.0, %v1632
  %v1634 = vpop.f32.mrf.mxu0
  %1635 = vdwg.mxu0
  %v1637 = vperm.slane %v185, 0
  %v1638 = vperm.slane %v185, 1
  %v1641 = vadd.f32 %v1637, %v1620
  %v1642 = vadd.f32 %v1638, %v1633
  %v1644 = vshrl.u32 %v1529, 16
  %v1646 = vshll.u32 %v1529, 16
  %v1648 = vrot.slane %v1646, 1
  %v1649 = vor.u32 %v1644, %v1648
  %v1667 = vunpack.c.l.b16 %v150
  %v1668 = vunpack.c.h.b16 %v150
  %v1669 = vunpack.c.l.b16 %v151
  %v1670 = vunpack.c.h.b16 %v151
  %v1671 = vunpack.c.l.b16 %v152
  %v1672 = vunpack.c.h.b16 %v152
  %v1673 = vunpack.c.l.b16 %v153
  %v1674 = vunpack.c.h.b16 %v153
  %v1675 = vunpack.c.l.b16 %v154
  %v1676 = vunpack.c.h.b16 %v154
  %v1677 = vunpack.c.l.b16 %v155
  %v1678 = vunpack.c.h.b16 %v155
  %v1679 = vunpack.c.l.b16 %v156
  %v1680 = vunpack.c.h.b16 %v156
  %v1681 = vunpack.c.l.b16 %v157
  %v1682 = vunpack.c.h.b16 %v157
  %v1683 = vunpack.c.l.b16 %v158
  %v1684 = vunpack.c.h.b16 %v158
  %v1685 = vunpack.c.l.b16 %v159
  %v1686 = vunpack.c.h.b16 %v159
  %v1687 = vunpack.c.l.b16 %v160
  %v1688 = vunpack.c.h.b16 %v160
  %v1689 = vunpack.c.l.b16 %v161
  %v1690 = vunpack.c.h.b16 %v161
  %v1691 = vunpack.c.l.b16 %v162
  %v1692 = vunpack.c.h.b16 %v162
  %v1693 = vunpack.c.l.b16 %v163
  %v1694 = vunpack.c.h.b16 %v163
  %v1695 = vunpack.c.l.b16 %v164
  %v1696 = vunpack.c.h.b16 %v164
  %v1697 = vunpack.c.l.b16 %v165
  %v1698 = vunpack.c.h.b16 %v165
  %v1699 = vpack.c.b16 %v1669, %v1667
  %v1700 = vpack.c.b16 %v1670, %v1668
  %v1701 = vpack.c.b16 %v1673, %v1671
  %v1702 = vpack.c.b16 %v1674, %v1672
  %v1703 = vpack.c.b16 %v1677, %v1675
  %v1704 = vpack.c.b16 %v1678, %v1676
  %v1705 = vpack.c.b16 %v1681, %v1679
  %v1706 = vpack.c.b16 %v1682, %v1680
  %v1707 = vpack.c.b16 %v1685, %v1683
  %v1708 = vpack.c.b16 %v1686, %v1684
  %v1709 = vpack.c.b16 %v1689, %v1687
  %v1710 = vpack.c.b16 %v1690, %v1688
  %v1711 = vpack.c.b16 %v1693, %v1691
  %v1712 = vpack.c.b16 %v1694, %v1692
  %v1713 = vpack.c.b16 %v1697, %v1695
  %v1714 = vpack.c.b16 %v1698, %v1696
  %1731 = vmatpush.bf16.msra.mxu0 %v1713
  %1732 = vmatpush.bf16.msra.mxu0 %v1711
  %1733 = vmatpush.bf16.msra.mxu0 %v1709
  %1734 = vmatpush.bf16.msra.mxu0 %v1707
  %1735 = vmatpush.bf16.msra.mxu0 %v1705
  %1736 = vmatpush.bf16.msra.mxu0 %v1703
  %1737 = vmatpush.bf16.msra.mxu0 %v1701
  %1738 = vmatpush.bf16.msra.mxu0 %v1699
  %1739 = vmatmul.bf16.gmra.mxu0 %v1649
  %v1740 = vpop.f32.mrf.mxu0
  %v1741 = vadd.f32 0.0, %v1740
  %v1742 = vpop.f32.mrf.mxu0
  %1743 = vdwg.mxu0
  %1744 = vmatpush.bf16.msra.mxu0 %v1714
  %1745 = vmatpush.bf16.msra.mxu0 %v1712
  %1746 = vmatpush.bf16.msra.mxu0 %v1710
  %1747 = vmatpush.bf16.msra.mxu0 %v1708
  %1748 = vmatpush.bf16.msra.mxu0 %v1706
  %1749 = vmatpush.bf16.msra.mxu0 %v1704
  %1750 = vmatpush.bf16.msra.mxu0 %v1702
  %1751 = vmatpush.bf16.msra.mxu0 %v1700
  %1752 = vmatmul.bf16.gmra.mxu0 %v1649
  %v1753 = vpop.f32.mrf.mxu0
  %v1754 = vadd.f32 0.0, %v1753
  %v1755 = vpop.f32.mrf.mxu0
  %1756 = vdwg.mxu0
  %v1757 = vadd.f32 %v1641, %v1741
  %v1758 = vadd.f32 %v1642, %v1754
  %v1760 = vrot.slane %v1529, 1
  %v1778 = vunpack.c.l.b16 %v167
  %v1779 = vunpack.c.h.b16 %v167
  %v1780 = vunpack.c.l.b16 %v168
  %v1781 = vunpack.c.h.b16 %v168
  %v1782 = vunpack.c.l.b16 %v169
  %v1783 = vunpack.c.h.b16 %v169
  %v1784 = vunpack.c.l.b16 %v170
  %v1785 = vunpack.c.h.b16 %v170
  %v1786 = vunpack.c.l.b16 %v171
  %v1787 = vunpack.c.h.b16 %v171
  %v1788 = vunpack.c.l.b16 %v172
  %v1789 = vunpack.c.h.b16 %v172
  %v1790 = vunpack.c.l.b16 %v173
  %v1791 = vunpack.c.h.b16 %v173
  %v1792 = vunpack.c.l.b16 %v174
  %v1793 = vunpack.c.h.b16 %v174
  %v1794 = vunpack.c.l.b16 %v175
  %v1795 = vunpack.c.h.b16 %v175
  %v1796 = vunpack.c.l.b16 %v176
  %v1797 = vunpack.c.h.b16 %v176
  %v1798 = vunpack.c.l.b16 %v177
  %v1799 = vunpack.c.h.b16 %v177
  %v1800 = vunpack.c.l.b16 %v178
  %v1801 = vunpack.c.h.b16 %v178
  %v1802 = vunpack.c.l.b16 %v179
  %v1803 = vunpack.c.h.b16 %v179
  %v1804 = vunpack.c.l.b16 %v180
  %v1805 = vunpack.c.h.b16 %v180
  %v1806 = vunpack.c.l.b16 %v181
  %v1807 = vunpack.c.h.b16 %v181
  %v1808 = vunpack.c.l.b16 %v182
  %v1809 = vunpack.c.h.b16 %v182
  %v1810 = vpack.c.b16 %v1780, %v1778
  %v1811 = vpack.c.b16 %v1781, %v1779
  %v1812 = vpack.c.b16 %v1784, %v1782
  %v1813 = vpack.c.b16 %v1785, %v1783
  %v1814 = vpack.c.b16 %v1788, %v1786
  %v1815 = vpack.c.b16 %v1789, %v1787
  %v1816 = vpack.c.b16 %v1792, %v1790
  %v1817 = vpack.c.b16 %v1793, %v1791
  %v1818 = vpack.c.b16 %v1796, %v1794
  %v1819 = vpack.c.b16 %v1797, %v1795
  %v1820 = vpack.c.b16 %v1800, %v1798
  %v1821 = vpack.c.b16 %v1801, %v1799
  %v1822 = vpack.c.b16 %v1804, %v1802
  %v1823 = vpack.c.b16 %v1805, %v1803
  %v1824 = vpack.c.b16 %v1808, %v1806
  %v1825 = vpack.c.b16 %v1809, %v1807
  %1842 = vmatpush.bf16.msra.mxu0 %v1824
  %1843 = vmatpush.bf16.msra.mxu0 %v1822
  %1844 = vmatpush.bf16.msra.mxu0 %v1820
  %1845 = vmatpush.bf16.msra.mxu0 %v1818
  %1846 = vmatpush.bf16.msra.mxu0 %v1816
  %1847 = vmatpush.bf16.msra.mxu0 %v1814
  %1848 = vmatpush.bf16.msra.mxu0 %v1812
  %1849 = vmatpush.bf16.msra.mxu0 %v1810
  %1850 = vmatmul.bf16.gmra.mxu0 %v1760
  %v1851 = vpop.f32.mrf.mxu0
  %v1852 = vadd.f32 0.0, %v1851
  %v1853 = vpop.f32.mrf.mxu0
  %1854 = vdwg.mxu0
  %1855 = vmatpush.bf16.msra.mxu0 %v1825
  %1856 = vmatpush.bf16.msra.mxu0 %v1823
  %1857 = vmatpush.bf16.msra.mxu0 %v1821
  %1858 = vmatpush.bf16.msra.mxu0 %v1819
  %1859 = vmatpush.bf16.msra.mxu0 %v1817
  %1860 = vmatpush.bf16.msra.mxu0 %v1815
  %1861 = vmatpush.bf16.msra.mxu0 %v1813
  %1862 = vmatpush.bf16.msra.mxu0 %v1811
  %1863 = vmatmul.bf16.gmra.mxu0 %v1760
  %v1864 = vpop.f32.mrf.mxu0
  %v1865 = vadd.f32 0.0, %v1864
  %v1866 = vpop.f32.mrf.mxu0
  %1867 = vdwg.mxu0
  %v1868 = vadd.f32 %v1757, %v1852
  %v1869 = vadd.f32 %v1758, %v1865
  %v1870 = vmax.f32 %v1868, 0.0
  %v1871 = vmax.f32 %v1869, 0.0
  %v1872 = vpack.c.bf16 %v1870, %v1870
  %v1873 = vpack.c.bf16 %v1871, %v1871
  %v1898 = vunpack.c.l.b16 %v290
  %v1899 = vunpack.c.l.b16 %v291
  %v1900 = vunpack.c.l.b16 %v292
  %v1901 = vunpack.c.l.b16 %v293
  %v1902 = vunpack.c.l.b16 %v294
  %v1903 = vunpack.c.l.b16 %v295
  %v1904 = vunpack.c.l.b16 %v296
  %v1905 = vunpack.c.l.b16 %v297
  %v1906 = vunpack.c.l.b16 %v298
  %v1907 = vunpack.c.l.b16 %v299
  %v1908 = vunpack.c.l.b16 %v300
  %v1909 = vunpack.c.l.b16 %v301
  %v1910 = vunpack.c.l.b16 %v302
  %v1911 = vunpack.c.l.b16 %v303
  %v1912 = vunpack.c.l.b16 %v304
  %v1913 = vunpack.c.l.b16 %v305
  %v1914 = vunpack.c.l.b16 %v306
  %v1915 = vunpack.c.l.b16 %v307
  %v1916 = vunpack.c.l.b16 %v308
  %v1917 = vunpack.c.l.b16 %v309
  %v1918 = vunpack.c.l.b16 %v310
  %v1919 = vunpack.c.l.b16 %v311
  %v1920 = vunpack.c.l.b16 %v312
  %v1921 = vunpack.c.l.b16 %v313
  %v1922 = vpack.c.b16 %v1899, %v1898
  %v1923 = vpack.c.b16 %v1901, %v1900
  %v1924 = vpack.c.b16 %v1903, %v1902
  %v1925 = vpack.c.b16 %v1905, %v1904
  %v1926 = vpack.c.b16 %v1907, %v1906
  %v1927 = vpack.c.b16 %v1909, %v1908
  %v1928 = vpack.c.b16 %v1911, %v1910
  %v1929 = vpack.c.b16 %v1913, %v1912
  %v1930 = vpack.c.b16 %v1915, %v1914
  %v1931 = vpack.c.b16 %v1917, %v1916
  %v1932 = vpack.c.b16 %v1919, %v1918
  %v1933 = vpack.c.b16 %v1921, %v1920
  %v1947 = vsel %vm717, %v1873, 0
  %1949 = vmatpush.bf16.msra.mxu0 %v1929
  %1950 = vmatpush.bf16.msra.mxu0 %v1928
  %1951 = vmatpush.bf16.msra.mxu0 %v1927
  %1952 = vmatpush.bf16.msra.mxu0 %v1926
  %1953 = vmatpush.bf16.msra.mxu0 %v1925
  %1954 = vmatpush.bf16.msra.mxu0 %v1924
  %1955 = vmatpush.bf16.msra.mxu0 %v1923
  %1956 = vmatpush.bf16.msra.mxu0 %v1922
  %1957 = vmatmul.bf16.gmra.mxu0 %v1872
  %v1958 = vpop.f32.mrf.mxu0
  %v1959 = vadd.f32 0.0, %v1958
  %v1960 = vpop.f32.mrf.mxu0
  %1961 = vdwg.mxu0
  %1962 = vmatpush.bf16.msra.mxu0 0
  %1963 = vmatpush.bf16.msra.mxu0 0
  %1964 = vmatpush.bf16.msra.mxu0 0
  %1965 = vmatpush.bf16.msra.mxu0 0
  %1966 = vmatpush.bf16.msra.mxu0 %v1933
  %1967 = vmatpush.bf16.msra.mxu0 %v1932
  %1968 = vmatpush.bf16.msra.mxu0 %v1931
  %1969 = vmatpush.bf16.msra.mxu0 %v1930
  %1970 = vmatmul.bf16.gmra.mxu0 %v1947
  %v1971 = vpop.f32.mrf.mxu0
  %v1972 = vadd.f32 %v1959, %v1971
  %v1973 = vpop.f32.mrf.mxu0
  %1974 = vdwg.mxu0
  %v1999 = vunpack.c.l.b16 %v314
  %v2000 = vunpack.c.l.b16 %v315
  %v2001 = vunpack.c.l.b16 %v316
  %v2002 = vunpack.c.l.b16 %v317
  %v2003 = vunpack.c.l.b16 %v318
  %v2004 = vunpack.c.l.b16 %v319
  %v2005 = vunpack.c.l.b16 %v320
  %v2006 = vunpack.c.l.b16 %v321
  %v2007 = vunpack.c.l.b16 %v322
  %v2008 = vunpack.c.l.b16 %v323
  %v2009 = vunpack.c.l.b16 %v324
  %v2010 = vunpack.c.l.b16 %v325
  %v2011 = vunpack.c.l.b16 %v326
  %v2012 = vunpack.c.l.b16 %v327
  %v2013 = vunpack.c.l.b16 %v328
  %v2014 = vunpack.c.l.b16 %v329
  %v2015 = vunpack.c.l.b16 %v330
  %v2016 = vunpack.c.l.b16 %v331
  %v2017 = vunpack.c.l.b16 %v332
  %v2018 = vunpack.c.l.b16 %v333
  %v2019 = vunpack.c.l.b16 %v334
  %v2020 = vunpack.c.l.b16 %v335
  %v2021 = vunpack.c.l.b16 %v336
  %v2022 = vunpack.c.l.b16 %v337
  %v2023 = vpack.c.b16 %v2000, %v1999
  %v2024 = vpack.c.b16 %v2002, %v2001
  %v2025 = vpack.c.b16 %v2004, %v2003
  %v2026 = vpack.c.b16 %v2006, %v2005
  %v2027 = vpack.c.b16 %v2008, %v2007
  %v2028 = vpack.c.b16 %v2010, %v2009
  %v2029 = vpack.c.b16 %v2012, %v2011
  %v2030 = vpack.c.b16 %v2014, %v2013
  %v2031 = vpack.c.b16 %v2016, %v2015
  %v2032 = vpack.c.b16 %v2018, %v2017
  %v2033 = vpack.c.b16 %v2020, %v2019
  %v2034 = vpack.c.b16 %v2022, %v2021
  %2047 = vmatpush.bf16.msra.mxu0 %v2030
  %2048 = vmatpush.bf16.msra.mxu0 %v2029
  %2049 = vmatpush.bf16.msra.mxu0 %v2028
  %2050 = vmatpush.bf16.msra.mxu0 %v2027
  %2051 = vmatpush.bf16.msra.mxu0 %v2026
  %2052 = vmatpush.bf16.msra.mxu0 %v2025
  %2053 = vmatpush.bf16.msra.mxu0 %v2024
  %2054 = vmatpush.bf16.msra.mxu0 %v2023
  %2055 = vmatmul.bf16.gmra.mxu0 %v1872
  %v2056 = vpop.f32.mrf.mxu0
  %v2057 = vadd.f32 0.0, %v2056
  %v2058 = vpop.f32.mrf.mxu0
  %2059 = vdwg.mxu0
  %2060 = vmatpush.bf16.msra.mxu0 0
  %2061 = vmatpush.bf16.msra.mxu0 0
  %2062 = vmatpush.bf16.msra.mxu0 0
  %2063 = vmatpush.bf16.msra.mxu0 0
  %2064 = vmatpush.bf16.msra.mxu0 %v2034
  %2065 = vmatpush.bf16.msra.mxu0 %v2033
  %2066 = vmatpush.bf16.msra.mxu0 %v2032
  %2067 = vmatpush.bf16.msra.mxu0 %v2031
  %2068 = vmatmul.bf16.gmra.mxu0 %v1947
  %v2069 = vpop.f32.mrf.mxu0
  %v2070 = vadd.f32 %v2057, %v2069
  %v2071 = vpop.f32.mrf.mxu0
  %2072 = vdwg.mxu0
  %v2073 = vmax.f32 %v1972, %v2070
  %vm2074 = vcmask 48128
  %v2076 = vsel %vm2074, %v288, 0
  %vm2078 = vcmask 1045504
  %v2080 = vsel %vm2078, %v2073, 0
  %2082 = vmatpush.msra.mxu0 0.0
  %2083 = vmatpush.msra.mxu0 0.0
  %2084 = vmatpush.msra.mxu0 0.0
  %2085 = vmatpush.msra.mxu0 0.0
  %2086 = vmatpush.msra.mxu0 0.0
  %2087 = vmatpush.msra.mxu0 0.0
  %2088 = vmatpush.msra.mxu0 0.0
  %2089 = vmatpush.msra.mxu0 0.0
  %2090 = vmatpush.msra.mxu0 0.0
  %2091 = vmatpush.msra.mxu0 0.0
  %2092 = vmatpush.msra.mxu0 0.0
  %2093 = vmatpush.msra.mxu0 0.0
  %2094 = vmatpush.msra.mxu0 0.0
  %2095 = vmatpush.msra.mxu0 0.0
  %2096 = vmatpush.msra.mxu0 0.0
  %2097 = vmatpush.msra.mxu0 %v2080
  %2098 = vmatmul.bf16.gmra.mxu0 %v2076
  %v2099 = vpop.f32.mrf.mxu0
  %v2100 = vadd.f32 0.0, %v2099
  %v2101 = vpop.f32.mrf.mxu0
  %2102 = vdwg.mxu0
  %v2104 = vsel %vm2074, %v289, 0
  %2106 = vmatpush.msra.mxu0 0.0
  %2107 = vmatpush.msra.mxu0 0.0
  %2108 = vmatpush.msra.mxu0 0.0
  %2109 = vmatpush.msra.mxu0 0.0
  %2110 = vmatpush.msra.mxu0 0.0
  %2111 = vmatpush.msra.mxu0 0.0
  %2112 = vmatpush.msra.mxu0 0.0
  %2113 = vmatpush.msra.mxu0 0.0
  %2114 = vmatpush.msra.mxu0 0.0
  %2115 = vmatpush.msra.mxu0 0.0
  %2116 = vmatpush.msra.mxu0 0.0
  %2117 = vmatpush.msra.mxu0 0.0
  %2118 = vmatpush.msra.mxu0 0.0
  %2119 = vmatpush.msra.mxu0 0.0
  %2120 = vmatpush.msra.mxu0 0.0
  %2121 = vmatpush.msra.mxu0 %v2080
  %2122 = vmatmul.bf16.gmra.mxu0 %v2104
  %v2123 = vpop.f32.mrf.mxu0
  %v2124 = vadd.f32 0.0, %v2123
  %v2125 = vpop.f32.mrf.mxu0
  %2126 = vdwg.mxu0
  %v2127 = vmax.f32 %v2100, %v2124
  %v2128 = vpack.c.bf16 %v2127, %v2127
  %v2141 = vunpack.c.l.b16 %v338
  %v2142 = vunpack.c.l.b16 %v339
  %v2143 = vunpack.c.l.b16 %v340
  %v2144 = vunpack.c.l.b16 %v341
  %v2145 = vunpack.c.l.b16 %v342
  %v2146 = vunpack.c.l.b16 %v343
  %v2147 = vunpack.c.l.b16 %v344
  %v2148 = vunpack.c.l.b16 %v345
  %v2149 = vunpack.c.l.b16 %v346
  %v2150 = vunpack.c.l.b16 %v347
  %v2151 = vunpack.c.l.b16 %v348
  %v2152 = vunpack.c.l.b16 %v349
  %v2153 = vpack.c.b16 %v2142, %v2141
  %v2154 = vpack.c.b16 %v2144, %v2143
  %v2155 = vpack.c.b16 %v2146, %v2145
  %v2156 = vpack.c.b16 %v2148, %v2147
  %v2157 = vpack.c.b16 %v2150, %v2149
  %v2158 = vpack.c.b16 %v2152, %v2151
  %vm2165 = vcmask 785408
  %v2167 = vsel %vm2165, %v2128, 0
  %2169 = vmatpush.bf16.msra.mxu0 0
  %2170 = vmatpush.bf16.msra.mxu0 0
  %2171 = vmatpush.bf16.msra.mxu0 %v2158
  %2172 = vmatpush.bf16.msra.mxu0 %v2157
  %2173 = vmatpush.bf16.msra.mxu0 %v2156
  %2174 = vmatpush.bf16.msra.mxu0 %v2155
  %2175 = vmatpush.bf16.msra.mxu0 %v2154
  %2176 = vmatpush.bf16.msra.mxu0 %v2153
  %2177 = vmatmul.bf16.gmra.mxu0 %v2167
  %v2178 = vpop.f32.mrf.mxu0
  %v2179 = vadd.f32 0.0, %v2178
  %v2180 = vpop.f32.mrf.mxu0
  %2181 = vdwg.mxu0
  %v2182 = vadd.f32 %v374, %v2179
  %v2183 = vshrl.u32 %v2128, 16
  %v2197 = vunpack.c.l.b16 %v350
  %v2198 = vunpack.c.l.b16 %v351
  %v2199 = vunpack.c.l.b16 %v352
  %v2200 = vunpack.c.l.b16 %v353
  %v2201 = vunpack.c.l.b16 %v354
  %v2202 = vunpack.c.l.b16 %v355
  %v2203 = vunpack.c.l.b16 %v356
  %v2204 = vunpack.c.l.b16 %v357
  %v2205 = vunpack.c.l.b16 %v358
  %v2206 = vunpack.c.l.b16 %v359
  %v2207 = vunpack.c.l.b16 %v360
  %v2208 = vunpack.c.l.b16 %v361
  %v2209 = vpack.c.b16 %v2198, %v2197
  %v2210 = vpack.c.b16 %v2200, %v2199
  %v2211 = vpack.c.b16 %v2202, %v2201
  %v2212 = vpack.c.b16 %v2204, %v2203
  %v2213 = vpack.c.b16 %v2206, %v2205
  %v2214 = vpack.c.b16 %v2208, %v2207
  %v2222 = vsel %vm2165, %v2183, 0
  %2224 = vmatpush.bf16.msra.mxu0 0
  %2225 = vmatpush.bf16.msra.mxu0 0
  %2226 = vmatpush.bf16.msra.mxu0 %v2214
  %2227 = vmatpush.bf16.msra.mxu0 %v2213
  %2228 = vmatpush.bf16.msra.mxu0 %v2212
  %2229 = vmatpush.bf16.msra.mxu0 %v2211
  %2230 = vmatpush.bf16.msra.mxu0 %v2210
  %2231 = vmatpush.bf16.msra.mxu0 %v2209
  %2232 = vmatmul.bf16.gmra.mxu0 %v2222
  %v2233 = vpop.f32.mrf.mxu0
  %v2234 = vadd.f32 0.0, %v2233
  %v2235 = vpop.f32.mrf.mxu0
  %2236 = vdwg.mxu0
  %v2237 = vadd.f32 %v2182, %v2234
  %v2239 = vrot.slane %v2128, 1
  %v2252 = vunpack.c.l.b16 %v362
  %v2253 = vunpack.c.l.b16 %v363
  %v2254 = vunpack.c.l.b16 %v364
  %v2255 = vunpack.c.l.b16 %v365
  %v2256 = vunpack.c.l.b16 %v366
  %v2257 = vunpack.c.l.b16 %v367
  %v2258 = vunpack.c.l.b16 %v368
  %v2259 = vunpack.c.l.b16 %v369
  %v2260 = vunpack.c.l.b16 %v370
  %v2261 = vunpack.c.l.b16 %v371
  %v2262 = vunpack.c.l.b16 %v372
  %v2263 = vunpack.c.l.b16 %v373
  %v2264 = vpack.c.b16 %v2253, %v2252
  %v2265 = vpack.c.b16 %v2255, %v2254
  %v2266 = vpack.c.b16 %v2257, %v2256
  %v2267 = vpack.c.b16 %v2259, %v2258
  %v2268 = vpack.c.b16 %v2261, %v2260
  %v2269 = vpack.c.b16 %v2263, %v2262
  %v2277 = vsel %vm2165, %v2239, 0
  %2279 = vmatpush.bf16.msra.mxu0 0
  %2280 = vmatpush.bf16.msra.mxu0 0
  %2281 = vmatpush.bf16.msra.mxu0 %v2269
  %2282 = vmatpush.bf16.msra.mxu0 %v2268
  %2283 = vmatpush.bf16.msra.mxu0 %v2267
  %2284 = vmatpush.bf16.msra.mxu0 %v2266
  %2285 = vmatpush.bf16.msra.mxu0 %v2265
  %2286 = vmatpush.bf16.msra.mxu0 %v2264
  %2287 = vmatmul.bf16.gmra.mxu0 %v2277
  %v2288 = vpop.f32.mrf.mxu0
  %v2289 = vadd.f32 0.0, %v2288
  %v2290 = vpop.f32.mrf.mxu0
  %2291 = vdwg.mxu0
  %v2292 = vadd.f32 %v2237, %v2289
  %v2293 = vmax.f32 %v2292, 0.0
  %v2294 = vpack.c.bf16 %v2293, %v2293
  %v2303 = vunpack.c.l.b16 %v375
  %v2304 = vunpack.c.l.b16 %v376
  %v2305 = vunpack.c.l.b16 %v377
  %v2306 = vunpack.c.l.b16 %v378
  %v2307 = vunpack.c.l.b16 %v379
  %v2308 = vunpack.c.l.b16 %v380
  %v2309 = vunpack.c.l.b16 %v381
  %v2310 = vunpack.c.l.b16 %v382
  %v2311 = vpack.c.b16 %v2304, %v2303
  %v2312 = vpack.c.b16 %v2306, %v2305
  %v2313 = vpack.c.b16 %v2308, %v2307
  %v2314 = vpack.c.b16 %v2310, %v2309
  %v2320 = vsel %vm717, %v2294, 0
  %2322 = vmatpush.bf16.msra.mxu0 0
  %2323 = vmatpush.bf16.msra.mxu0 0
  %2324 = vmatpush.bf16.msra.mxu0 0
  %2325 = vmatpush.bf16.msra.mxu0 0
  %2326 = vmatpush.bf16.msra.mxu0 %v2314
  %2327 = vmatpush.bf16.msra.mxu0 %v2313
  %2328 = vmatpush.bf16.msra.mxu0 %v2312
  %2329 = vmatpush.bf16.msra.mxu0 %v2311
  %2330 = vmatmul.bf16.gmra.mxu0 %v2320
  %v2331 = vpop.f32.mrf.mxu0
  %v2332 = vadd.f32 %v383, %v2331
  %v2333 = vpop.f32.mrf.mxu0
  %2334 = vdwg.mxu0
  %s2335 = scalar_lea.vmem %s0, 32
  %v2336 = vld [vmem:[%s2335] sm:$0xff]
  %v2337 = vld [vmem:[%s2335 + $0x8] sm:$0xff]
  %v2338 = vld [vmem:[%s2335 + $0x10] sm:$0xff]
  %v2339 = vld [vmem:[%s2335 + $0x18] sm:$0x3]
  %v2340 = vpack.c.bf16 %v2337, %v2336
  %v2341 = vpack.c.bf16 %v2338, %v2338
  %v2343 = vsel %vm408, %v2340, 0
  %v2346 = vsel %vm408, %v2341, 0
  %2348 = vmatpush.bf16.msra.mxu0 0
  %2349 = vmatpush.bf16.msra.mxu0 0
  %2350 = vmatpush.bf16.msra.mxu0 0
  %2351 = vmatpush.bf16.msra.mxu0 0
  %2352 = vmatpush.bf16.msra.mxu0 0
  %2353 = vmatpush.bf16.msra.mxu0 0
  %2354 = vmatpush.bf16.msra.mxu0 %v417
  %2355 = vmatpush.bf16.msra.mxu0 %v402
  %2356 = vmatmul.bf16.gmra.mxu0 %v2343
  %v2357 = vpop.f32.mrf.mxu0
  %v2358 = vadd.f32 0.0, %v2357
  %v2359 = vpop.f32.mrf.mxu0
  %v2360 = vadd.f32 0.0, %v2359
  %2361 = vmatmul.bf16.gmra.mxu0 %v2346
  %v2362 = vpop.f32.mrf.mxu0
  %v2363 = vadd.f32 0.0, %v2362
  %v2364 = vpop.f32.mrf.mxu0
  %2365 = vdwg.mxu0
  %2366 = vmatpush.bf16.msra.mxu0 0
  %2367 = vmatpush.bf16.msra.mxu0 0
  %2368 = vmatpush.bf16.msra.mxu0 0
  %2369 = vmatpush.bf16.msra.mxu0 0
  %2370 = vmatpush.bf16.msra.mxu0 0
  %2371 = vmatpush.bf16.msra.mxu0 0
  %2372 = vmatpush.bf16.msra.mxu0 %v420
  %2373 = vmatpush.bf16.msra.mxu0 %v403
  %2374 = vmatmul.bf16.gmra.mxu0 %v2343
  %v2375 = vpop.f32.mrf.mxu0
  %v2376 = vadd.f32 0.0, %v2375
  %v2377 = vpop.f32.mrf.mxu0
  %v2378 = vadd.f32 0.0, %v2377
  %2379 = vmatmul.bf16.gmra.mxu0 %v2346
  %v2380 = vpop.f32.mrf.mxu0
  %v2381 = vadd.f32 0.0, %v2380
  %v2382 = vpop.f32.mrf.mxu0
  %2383 = vdwg.mxu0
  %v2384 = vadd.f32 %v459, %v2358
  %v2385 = vadd.f32 %v460, %v2376
  %v2386 = vadd.f32 %v459, %v2360
  %v2387 = vadd.f32 %v460, %v2378
  %v2388 = vadd.f32 %v459, %v2363
  %v2389 = vadd.f32 %v460, %v2381
  %v2390 = vpack.c.bf16 %v2339, %v2338
  %v2391 = vshrl.u32 %v2340, 16
  %v2393 = vshll.u32 %v2340, 16
  %v2395 = vrot.slane %v2393, 1
  %v2396 = vor.u32 %v2391, %v2395
  %v2398 = vshll.u32 %v2390, 16
  %v2400 = vrot.slane %v2398, 1
  %v2401 = vsel %vm470, %v2396, %v2400
  %v2402 = vshrl.u32 %v2390, 16
  %v2404 = vor.u32 %v2402, %v2400
  %v2406 = vsel %vm408, %v2401, 0
  %v2409 = vsel %vm408, %v2404, 0
  %2411 = vmatpush.bf16.msra.mxu0 0
  %2412 = vmatpush.bf16.msra.mxu0 0
  %2413 = vmatpush.bf16.msra.mxu0 0
  %2414 = vmatpush.bf16.msra.mxu0 0
  %2415 = vmatpush.bf16.msra.mxu0 0
  %2416 = vmatpush.bf16.msra.mxu0 0
  %2417 = vmatpush.bf16.msra.mxu0 %v510
  %2418 = vmatpush.bf16.msra.mxu0 %v497
  %2419 = vmatmul.bf16.gmra.mxu0 %v2406
  %v2420 = vpop.f32.mrf.mxu0
  %v2421 = vadd.f32 0.0, %v2420
  %v2422 = vpop.f32.mrf.mxu0
  %v2423 = vadd.f32 0.0, %v2422
  %2424 = vmatmul.bf16.gmra.mxu0 %v2409
  %v2425 = vpop.f32.mrf.mxu0
  %v2426 = vadd.f32 0.0, %v2425
  %v2427 = vpop.f32.mrf.mxu0
  %2428 = vdwg.mxu0
  %2429 = vmatpush.bf16.msra.mxu0 0
  %2430 = vmatpush.bf16.msra.mxu0 0
  %2431 = vmatpush.bf16.msra.mxu0 0
  %2432 = vmatpush.bf16.msra.mxu0 0
  %2433 = vmatpush.bf16.msra.mxu0 0
  %2434 = vmatpush.bf16.msra.mxu0 0
  %2435 = vmatpush.bf16.msra.mxu0 %v513
  %2436 = vmatpush.bf16.msra.mxu0 %v498
  %2437 = vmatmul.bf16.gmra.mxu0 %v2406
  %v2438 = vpop.f32.mrf.mxu0
  %v2439 = vadd.f32 0.0, %v2438
  %v2440 = vpop.f32.mrf.mxu0
  %v2441 = vadd.f32 0.0, %v2440
  %2442 = vmatmul.bf16.gmra.mxu0 %v2409
  %v2443 = vpop.f32.mrf.mxu0
  %v2444 = vadd.f32 0.0, %v2443
  %v2445 = vpop.f32.mrf.mxu0
  %2446 = vdwg.mxu0
  %v2447 = vadd.f32 %v2384, %v2421
  %v2448 = vadd.f32 %v2385, %v2439
  %v2449 = vadd.f32 %v2386, %v2423
  %v2450 = vadd.f32 %v2387, %v2441
  %v2451 = vadd.f32 %v2388, %v2426
  %v2452 = vadd.f32 %v2389, %v2444
  %v2455 = vrot.slane %v2340, 1
  %v2456 = vrot.slane %v2390, 1
  %v2457 = vsel %vm559, %v2455, %v2456
  %v2459 = vsel %vm408, %v2457, 0
  %v2462 = vsel %vm408, %v2456, 0
  %2464 = vmatpush.bf16.msra.mxu0 0
  %2465 = vmatpush.bf16.msra.mxu0 0
  %2466 = vmatpush.bf16.msra.mxu0 0
  %2467 = vmatpush.bf16.msra.mxu0 0
  %2468 = vmatpush.bf16.msra.mxu0 0
  %2469 = vmatpush.bf16.msra.mxu0 0
  %2470 = vmatpush.bf16.msra.mxu0 %v588
  %2471 = vmatpush.bf16.msra.mxu0 %v575
  %2472 = vmatmul.bf16.gmra.mxu0 %v2459
  %v2473 = vpop.f32.mrf.mxu0
  %v2474 = vadd.f32 0.0, %v2473
  %v2475 = vpop.f32.mrf.mxu0
  %v2476 = vadd.f32 0.0, %v2475
  %2477 = vmatmul.bf16.gmra.mxu0 %v2462
  %v2478 = vpop.f32.mrf.mxu0
  %v2479 = vadd.f32 0.0, %v2478
  %v2480 = vpop.f32.mrf.mxu0
  %2481 = vdwg.mxu0
  %2482 = vmatpush.bf16.msra.mxu0 0
  %2483 = vmatpush.bf16.msra.mxu0 0
  %2484 = vmatpush.bf16.msra.mxu0 0
  %2485 = vmatpush.bf16.msra.mxu0 0
  %2486 = vmatpush.bf16.msra.mxu0 0
  %2487 = vmatpush.bf16.msra.mxu0 0
  %2488 = vmatpush.bf16.msra.mxu0 %v591
  %2489 = vmatpush.bf16.msra.mxu0 %v576
  %2490 = vmatmul.bf16.gmra.mxu0 %v2459
  %v2491 = vpop.f32.mrf.mxu0
  %v2492 = vadd.f32 0.0, %v2491
  %v2493 = vpop.f32.mrf.mxu0
  %v2494 = vadd.f32 0.0, %v2493
  %2495 = vmatmul.bf16.gmra.mxu0 %v2462
  %v2496 = vpop.f32.mrf.mxu0
  %v2497 = vadd.f32 0.0, %v2496
  %v2498 = vpop.f32.mrf.mxu0
  %2499 = vdwg.mxu0
  %v2500 = vadd.f32 %v2447, %v2474
  %v2501 = vadd.f32 %v2448, %v2492
  %v2502 = vadd.f32 %v2449, %v2476
  %v2503 = vadd.f32 %v2450, %v2494
  %v2504 = vadd.f32 %v2451, %v2479
  %v2505 = vadd.f32 %v2452, %v2497
  %v2506 = vmax.f32 %v2500, 0.0
  %v2507 = vmax.f32 %v2501, 0.0
  %v2508 = vmax.f32 %v2502, 0.0
  %v2509 = vmax.f32 %v2503, 0.0
  %v2510 = vmax.f32 %v2504, 0.0
  %v2511 = vmax.f32 %v2505, 0.0
  %v2512 = vpack.c.bf16 %v2508, %v2506
  %v2513 = vpack.c.bf16 %v2509, %v2507
  %v2514 = vpack.c.bf16 %v2510, %v2510
  %v2515 = vpack.c.bf16 %v2511, %v2511
  %v2517 = vsel %vm717, %v2513, 0
  %v2520 = vsel %vm717, %v2515, 0
  %2522 = vmatpush.bf16.msra.mxu0 %v700
  %2523 = vmatpush.bf16.msra.mxu0 %v699
  %2524 = vmatpush.bf16.msra.mxu0 %v698
  %2525 = vmatpush.bf16.msra.mxu0 %v697
  %2526 = vmatpush.bf16.msra.mxu0 %v696
  %2527 = vmatpush.bf16.msra.mxu0 %v695
  %2528 = vmatpush.bf16.msra.mxu0 %v694
  %2529 = vmatpush.bf16.msra.mxu0 %v693
  %2530 = vmatmul.bf16.gmra.mxu0 %v2512
  %v2531 = vpop.f32.mrf.mxu0
  %v2532 = vadd.f32 0.0, %v2531
  %v2533 = vpop.f32.mrf.mxu0
  %v2534 = vadd.f32 0.0, %v2533
  %2535 = vmatmul.bf16.gmra.mxu0 %v2514
  %v2536 = vpop.f32.mrf.mxu0
  %v2537 = vadd.f32 0.0, %v2536
  %v2538 = vpop.f32.mrf.mxu0
  %2539 = vdwg.mxu0
  %2540 = vmatpush.bf16.msra.mxu0 0
  %2541 = vmatpush.bf16.msra.mxu0 0
  %2542 = vmatpush.bf16.msra.mxu0 0
  %2543 = vmatpush.bf16.msra.mxu0 0
  %2544 = vmatpush.bf16.msra.mxu0 %v704
  %2545 = vmatpush.bf16.msra.mxu0 %v703
  %2546 = vmatpush.bf16.msra.mxu0 %v702
  %2547 = vmatpush.bf16.msra.mxu0 %v701
  %2548 = vmatmul.bf16.gmra.mxu0 %v2517
  %v2549 = vpop.f32.mrf.mxu0
  %v2550 = vadd.f32 %v2532, %v2549
  %v2551 = vpop.f32.mrf.mxu0
  %v2552 = vadd.f32 %v2534, %v2551
  %2553 = vmatmul.bf16.gmra.mxu0 %v2520
  %v2554 = vpop.f32.mrf.mxu0
  %v2555 = vadd.f32 %v2537, %v2554
  %v2556 = vpop.f32.mrf.mxu0
  %2557 = vdwg.mxu0
  %2558 = vmatpush.bf16.msra.mxu0 %v815
  %2559 = vmatpush.bf16.msra.mxu0 %v814
  %2560 = vmatpush.bf16.msra.mxu0 %v813
  %2561 = vmatpush.bf16.msra.mxu0 %v812
  %2562 = vmatpush.bf16.msra.mxu0 %v811
  %2563 = vmatpush.bf16.msra.mxu0 %v810
  %2564 = vmatpush.bf16.msra.mxu0 %v809
  %2565 = vmatpush.bf16.msra.mxu0 %v808
  %2566 = vmatmul.bf16.gmra.mxu0 %v2512
  %v2567 = vpop.f32.mrf.mxu0
  %v2568 = vadd.f32 0.0, %v2567
  %v2569 = vpop.f32.mrf.mxu0
  %v2570 = vadd.f32 0.0, %v2569
  %2571 = vmatmul.bf16.gmra.mxu0 %v2514
  %v2572 = vpop.f32.mrf.mxu0
  %v2573 = vadd.f32 0.0, %v2572
  %v2574 = vpop.f32.mrf.mxu0
  %2575 = vdwg.mxu0
  %2576 = vmatpush.bf16.msra.mxu0 0
  %2577 = vmatpush.bf16.msra.mxu0 0
  %2578 = vmatpush.bf16.msra.mxu0 0
  %2579 = vmatpush.bf16.msra.mxu0 0
  %2580 = vmatpush.bf16.msra.mxu0 %v819
  %2581 = vmatpush.bf16.msra.mxu0 %v818
  %2582 = vmatpush.bf16.msra.mxu0 %v817
  %2583 = vmatpush.bf16.msra.mxu0 %v816
  %2584 = vmatmul.bf16.gmra.mxu0 %v2517
  %v2585 = vpop.f32.mrf.mxu0
  %v2586 = vadd.f32 %v2568, %v2585
  %v2587 = vpop.f32.mrf.mxu0
  %v2588 = vadd.f32 %v2570, %v2587
  %2589 = vmatmul.bf16.gmra.mxu0 %v2520
  %v2590 = vpop.f32.mrf.mxu0
  %v2591 = vadd.f32 %v2573, %v2590
  %v2592 = vpop.f32.mrf.mxu0
  %2593 = vdwg.mxu0
  %v2594 = vmax.f32 %v2550, %v2586
  %v2595 = vmax.f32 %v2552, %v2588
  %v2596 = vmax.f32 %v2555, %v2591
  %2597 = vmatpush.msra.mxu0 0.0
  %2598 = vmatpush.msra.mxu0 0.0
  %2599 = vmatpush.msra.mxu0 0.0
  %2600 = vmatpush.msra.mxu0 0.0
  %2601 = vmatpush.msra.mxu0 0.0
  %2602 = vmatpush.msra.mxu0 0.0
  %2603 = vmatpush.msra.mxu0 0.0
  %2604 = vmatpush.msra.mxu0 0.0
  %2605 = vmatpush.msra.mxu0 0.0
  %2606 = vmatpush.msra.mxu0 0.0
  %2607 = vmatpush.msra.mxu0 0.0
  %2608 = vmatpush.msra.mxu0 0.0
  %2609 = vmatpush.msra.mxu0 0.0
  %2610 = vmatpush.msra.mxu0 %v2596
  %2611 = vmatpush.msra.mxu0 %v2595
  %2612 = vmatpush.msra.mxu0 %v2594
  %2613 = vmatmul.bf16.gmra.mxu0 %v878
  %v2614 = vpop.f32.mrf.mxu0
  %v2615 = vadd.f32 0.0, %v2614
  %v2616 = vpop.f32.mrf.mxu0
  %v2617 = vadd.f32 0.0, %v2616
  %2618 = vdwg.mxu0
  %2619 = vmatpush.msra.mxu0 0.0
  %2620 = vmatpush.msra.mxu0 0.0
  %2621 = vmatpush.msra.mxu0 0.0
  %2622 = vmatpush.msra.mxu0 0.0
  %2623 = vmatpush.msra.mxu0 0.0
  %2624 = vmatpush.msra.mxu0 0.0
  %2625 = vmatpush.msra.mxu0 0.0
  %2626 = vmatpush.msra.mxu0 0.0
  %2627 = vmatpush.msra.mxu0 0.0
  %2628 = vmatpush.msra.mxu0 0.0
  %2629 = vmatpush.msra.mxu0 0.0
  %2630 = vmatpush.msra.mxu0 0.0
  %2631 = vmatpush.msra.mxu0 0.0
  %2632 = vmatpush.msra.mxu0 %v2596
  %2633 = vmatpush.msra.mxu0 %v2595
  %2634 = vmatpush.msra.mxu0 %v2594
  %2635 = vmatmul.bf16.gmra.mxu0 %v908
  %v2636 = vpop.f32.mrf.mxu0
  %v2637 = vadd.f32 0.0, %v2636
  %v2638 = vpop.f32.mrf.mxu0
  %v2639 = vadd.f32 0.0, %v2638
  %2640 = vdwg.mxu0
  %v2641 = vmax.f32 %v2615, %v2637
  %v2642 = vmax.f32 %v2617, %v2639
  %v2643 = vpack.c.bf16 %v2642, %v2641
  %v2645 = vsel %vm1005, %v2643, 0
  %2647 = vmatpush.bf16.msra.mxu0 0
  %2648 = vmatpush.bf16.msra.mxu0 %v989
  %2649 = vmatpush.bf16.msra.mxu0 %v987
  %2650 = vmatpush.bf16.msra.mxu0 %v985
  %2651 = vmatpush.bf16.msra.mxu0 %v983
  %2652 = vmatpush.bf16.msra.mxu0 %v981
  %2653 = vmatpush.bf16.msra.mxu0 %v979
  %2654 = vmatpush.bf16.msra.mxu0 %v977
  %2655 = vmatmul.bf16.gmra.mxu0 %v2645
  %v2656 = vpop.f32.mrf.mxu0
  %v2657 = vadd.f32 0.0, %v2656
  %v2658 = vpop.f32.mrf.mxu0
  %v2659 = vadd.f32 0.0, %v2658
  %2660 = vdwg.mxu0
  %2661 = vmatpush.bf16.msra.mxu0 0
  %2662 = vmatpush.bf16.msra.mxu0 %v990
  %2663 = vmatpush.bf16.msra.mxu0 %v988
  %2664 = vmatpush.bf16.msra.mxu0 %v986
  %2665 = vmatpush.bf16.msra.mxu0 %v984
  %2666 = vmatpush.bf16.msra.mxu0 %v982
  %2667 = vmatpush.bf16.msra.mxu0 %v980
  %2668 = vmatpush.bf16.msra.mxu0 %v978
  %2669 = vmatmul.bf16.gmra.mxu0 %v2645
  %v2670 = vpop.f32.mrf.mxu0
  %v2671 = vadd.f32 0.0, %v2670
  %v2672 = vpop.f32.mrf.mxu0
  %v2673 = vadd.f32 0.0, %v2672
  %2674 = vdwg.mxu0
  %v2675 = vadd.f32 %v1038, %v2657
  %v2676 = vadd.f32 %v1039, %v2671
  %v2677 = vadd.f32 %v1038, %v2659
  %v2678 = vadd.f32 %v1039, %v2673
  %v2679 = vshrl.u32 %v2643, 16
  %v2681 = vshll.u32 %v2643, 16
  %v2683 = vrot.slane %v2681, 1
  %v2684 = vor.u32 %v2679, %v2683
  %v2686 = vsel %vm1005, %v2684, 0
  %2688 = vmatpush.bf16.msra.mxu0 0
  %2689 = vmatpush.bf16.msra.mxu0 %v1106
  %2690 = vmatpush.bf16.msra.mxu0 %v1104
  %2691 = vmatpush.bf16.msra.mxu0 %v1102
  %2692 = vmatpush.bf16.msra.mxu0 %v1100
  %2693 = vmatpush.bf16.msra.mxu0 %v1098
  %2694 = vmatpush.bf16.msra.mxu0 %v1096
  %2695 = vmatpush.bf16.msra.mxu0 %v1094
  %2696 = vmatmul.bf16.gmra.mxu0 %v2686
  %v2697 = vpop.f32.mrf.mxu0
  %v2698 = vadd.f32 0.0, %v2697
  %v2699 = vpop.f32.mrf.mxu0
  %v2700 = vadd.f32 0.0, %v2699
  %2701 = vdwg.mxu0
  %2702 = vmatpush.bf16.msra.mxu0 0
  %2703 = vmatpush.bf16.msra.mxu0 %v1107
  %2704 = vmatpush.bf16.msra.mxu0 %v1105
  %2705 = vmatpush.bf16.msra.mxu0 %v1103
  %2706 = vmatpush.bf16.msra.mxu0 %v1101
  %2707 = vmatpush.bf16.msra.mxu0 %v1099
  %2708 = vmatpush.bf16.msra.mxu0 %v1097
  %2709 = vmatpush.bf16.msra.mxu0 %v1095
  %2710 = vmatmul.bf16.gmra.mxu0 %v2686
  %v2711 = vpop.f32.mrf.mxu0
  %v2712 = vadd.f32 0.0, %v2711
  %v2713 = vpop.f32.mrf.mxu0
  %v2714 = vadd.f32 0.0, %v2713
  %2715 = vdwg.mxu0
  %v2716 = vadd.f32 %v2675, %v2698
  %v2717 = vadd.f32 %v2676, %v2712
  %v2718 = vadd.f32 %v2677, %v2700
  %v2719 = vadd.f32 %v2678, %v2714
  %v2721 = vrot.slane %v2643, 1
  %v2723 = vsel %vm1005, %v2721, 0
  %2725 = vmatpush.bf16.msra.mxu0 0
  %2726 = vmatpush.bf16.msra.mxu0 %v1213
  %2727 = vmatpush.bf16.msra.mxu0 %v1211
  %2728 = vmatpush.bf16.msra.mxu0 %v1209
  %2729 = vmatpush.bf16.msra.mxu0 %v1207
  %2730 = vmatpush.bf16.msra.mxu0 %v1205
  %2731 = vmatpush.bf16.msra.mxu0 %v1203
  %2732 = vmatpush.bf16.msra.mxu0 %v1201
  %2733 = vmatmul.bf16.gmra.mxu0 %v2723
  %v2734 = vpop.f32.mrf.mxu0
  %v2735 = vadd.f32 0.0, %v2734
  %v2736 = vpop.f32.mrf.mxu0
  %v2737 = vadd.f32 0.0, %v2736
  %2738 = vdwg.mxu0
  %2739 = vmatpush.bf16.msra.mxu0 0
  %2740 = vmatpush.bf16.msra.mxu0 %v1214
  %2741 = vmatpush.bf16.msra.mxu0 %v1212
  %2742 = vmatpush.bf16.msra.mxu0 %v1210
  %2743 = vmatpush.bf16.msra.mxu0 %v1208
  %2744 = vmatpush.bf16.msra.mxu0 %v1206
  %2745 = vmatpush.bf16.msra.mxu0 %v1204
  %2746 = vmatpush.bf16.msra.mxu0 %v1202
  %2747 = vmatmul.bf16.gmra.mxu0 %v2723
  %v2748 = vpop.f32.mrf.mxu0
  %v2749 = vadd.f32 0.0, %v2748
  %v2750 = vpop.f32.mrf.mxu0
  %v2751 = vadd.f32 0.0, %v2750
  %2752 = vdwg.mxu0
  %v2753 = vadd.f32 %v2716, %v2735
  %v2754 = vadd.f32 %v2717, %v2749
  %v2755 = vadd.f32 %v2718, %v2737
  %v2756 = vadd.f32 %v2719, %v2751
  %v2757 = vmax.f32 %v2753, 0.0
  %v2758 = vmax.f32 %v2754, 0.0
  %v2759 = vmax.f32 %v2755, 0.0
  %v2760 = vmax.f32 %v2756, 0.0
  %v2761 = vpack.c.bf16 %v2759, %v2757
  %v2762 = vpack.c.bf16 %v2760, %v2758
  %v2764 = vsel %vm717, %v2762, 0
  %2766 = vmatpush.bf16.msra.mxu0 %v1325
  %2767 = vmatpush.bf16.msra.mxu0 %v1324
  %2768 = vmatpush.bf16.msra.mxu0 %v1323
  %2769 = vmatpush.bf16.msra.mxu0 %v1322
  %2770 = vmatpush.bf16.msra.mxu0 %v1321
  %2771 = vmatpush.bf16.msra.mxu0 %v1320
  %2772 = vmatpush.bf16.msra.mxu0 %v1319
  %2773 = vmatpush.bf16.msra.mxu0 %v1318
  %2774 = vmatmul.bf16.gmra.mxu0 %v2761
  %v2775 = vpop.f32.mrf.mxu0
  %v2776 = vadd.f32 0.0, %v2775
  %v2777 = vpop.f32.mrf.mxu0
  %v2778 = vadd.f32 0.0, %v2777
  %2779 = vdwg.mxu0
  %2780 = vmatpush.bf16.msra.mxu0 0
  %2781 = vmatpush.bf16.msra.mxu0 0
  %2782 = vmatpush.bf16.msra.mxu0 0
  %2783 = vmatpush.bf16.msra.mxu0 0
  %2784 = vmatpush.bf16.msra.mxu0 %v1329
  %2785 = vmatpush.bf16.msra.mxu0 %v1328
  %2786 = vmatpush.bf16.msra.mxu0 %v1327
  %2787 = vmatpush.bf16.msra.mxu0 %v1326
  %2788 = vmatmul.bf16.gmra.mxu0 %v2764
  %v2789 = vpop.f32.mrf.mxu0
  %v2790 = vadd.f32 %v2776, %v2789
  %v2791 = vpop.f32.mrf.mxu0
  %v2792 = vadd.f32 %v2778, %v2791
  %2793 = vdwg.mxu0
  %2794 = vmatpush.bf16.msra.mxu0 %v1428
  %2795 = vmatpush.bf16.msra.mxu0 %v1427
  %2796 = vmatpush.bf16.msra.mxu0 %v1426
  %2797 = vmatpush.bf16.msra.mxu0 %v1425
  %2798 = vmatpush.bf16.msra.mxu0 %v1424
  %2799 = vmatpush.bf16.msra.mxu0 %v1423
  %2800 = vmatpush.bf16.msra.mxu0 %v1422
  %2801 = vmatpush.bf16.msra.mxu0 %v1421
  %2802 = vmatmul.bf16.gmra.mxu0 %v2761
  %v2803 = vpop.f32.mrf.mxu0
  %v2804 = vadd.f32 0.0, %v2803
  %v2805 = vpop.f32.mrf.mxu0
  %v2806 = vadd.f32 0.0, %v2805
  %2807 = vdwg.mxu0
  %2808 = vmatpush.bf16.msra.mxu0 0
  %2809 = vmatpush.bf16.msra.mxu0 0
  %2810 = vmatpush.bf16.msra.mxu0 0
  %2811 = vmatpush.bf16.msra.mxu0 0
  %2812 = vmatpush.bf16.msra.mxu0 %v1432
  %2813 = vmatpush.bf16.msra.mxu0 %v1431
  %2814 = vmatpush.bf16.msra.mxu0 %v1430
  %2815 = vmatpush.bf16.msra.mxu0 %v1429
  %2816 = vmatmul.bf16.gmra.mxu0 %v2764
  %v2817 = vpop.f32.mrf.mxu0
  %v2818 = vadd.f32 %v2804, %v2817
  %v2819 = vpop.f32.mrf.mxu0
  %v2820 = vadd.f32 %v2806, %v2819
  %2821 = vdwg.mxu0
  %v2822 = vmax.f32 %v2790, %v2818
  %v2823 = vmax.f32 %v2792, %v2820
  %v2825 = vsel %vm1479, %v2823, 0
  %2827 = vmatpush.msra.mxu0 0.0
  %2828 = vmatpush.msra.mxu0 0.0
  %2829 = vmatpush.msra.mxu0 0.0
  %2830 = vmatpush.msra.mxu0 0.0
  %2831 = vmatpush.msra.mxu0 0.0
  %2832 = vmatpush.msra.mxu0 0.0
  %2833 = vmatpush.msra.mxu0 0.0
  %2834 = vmatpush.msra.mxu0 0.0
  %2835 = vmatpush.msra.mxu0 0.0
  %2836 = vmatpush.msra.mxu0 0.0
  %2837 = vmatpush.msra.mxu0 0.0
  %2838 = vmatpush.msra.mxu0 0.0
  %2839 = vmatpush.msra.mxu0 0.0
  %2840 = vmatpush.msra.mxu0 0.0
  %2841 = vmatpush.msra.mxu0 %v2825
  %2842 = vmatpush.msra.mxu0 %v2822
  %2843 = vmatmul.bf16.gmra.mxu0 %v1477
  %v2844 = vpop.f32.mrf.mxu0
  %v2845 = vadd.f32 0.0, %v2844
  %v2846 = vpop.f32.mrf.mxu0
  %2847 = vdwg.mxu0
  %2848 = vmatpush.msra.mxu0 0.0
  %2849 = vmatpush.msra.mxu0 0.0
  %2850 = vmatpush.msra.mxu0 0.0
  %2851 = vmatpush.msra.mxu0 0.0
  %2852 = vmatpush.msra.mxu0 0.0
  %2853 = vmatpush.msra.mxu0 0.0
  %2854 = vmatpush.msra.mxu0 0.0
  %2855 = vmatpush.msra.mxu0 0.0
  %2856 = vmatpush.msra.mxu0 0.0
  %2857 = vmatpush.msra.mxu0 0.0
  %2858 = vmatpush.msra.mxu0 0.0
  %2859 = vmatpush.msra.mxu0 0.0
  %2860 = vmatpush.msra.mxu0 0.0
  %2861 = vmatpush.msra.mxu0 0.0
  %2862 = vmatpush.msra.mxu0 %v2825
  %2863 = vmatpush.msra.mxu0 %v2822
  %2864 = vmatmul.bf16.gmra.mxu0 %v1505
  %v2865 = vpop.f32.mrf.mxu0
  %v2866 = vadd.f32 0.0, %v2865
  %v2867 = vpop.f32.mrf.mxu0
  %2868 = vdwg.mxu0
  %v2869 = vmax.f32 %v2845, %v2866
  %v2870 = vpack.c.bf16 %v2869, %v2869
  %2871 = vmatpush.bf16.msra.mxu0 %v1592
  %2872 = vmatpush.bf16.msra.mxu0 %v1590
  %2873 = vmatpush.bf16.msra.mxu0 %v1588
  %2874 = vmatpush.bf16.msra.mxu0 %v1586
  %2875 = vmatpush.bf16.msra.mxu0 %v1584
  %2876 = vmatpush.bf16.msra.mxu0 %v1582
  %2877 = vmatpush.bf16.msra.mxu0 %v1580
  %2878 = vmatpush.bf16.msra.mxu0 %v1578
  %2879 = vmatmul.bf16.gmra.mxu0 %v2870
  %v2880 = vpop.f32.mrf.mxu0
  %v2881 = vadd.f32 0.0, %v2880
  %v2882 = vpop.f32.mrf.mxu0
  %2883 = vdwg.mxu0
  %2884 = vmatpush.bf16.msra.mxu0 %v1593
  %2885 = vmatpush.bf16.msra.mxu0 %v1591
  %2886 = vmatpush.bf16.msra.mxu0 %v1589
  %2887 = vmatpush.bf16.msra.mxu0 %v1587
  %2888 = vmatpush.bf16.msra.mxu0 %v1585
  %2889 = vmatpush.bf16.msra.mxu0 %v1583
  %2890 = vmatpush.bf16.msra.mxu0 %v1581
  %2891 = vmatpush.bf16.msra.mxu0 %v1579
  %2892 = vmatmul.bf16.gmra.mxu0 %v2870
  %v2893 = vpop.f32.mrf.mxu0
  %v2894 = vadd.f32 0.0, %v2893
  %v2895 = vpop.f32.mrf.mxu0
  %2896 = vdwg.mxu0
  %v2897 = vadd.f32 %v1637, %v2881
  %v2898 = vadd.f32 %v1638, %v2894
  %v2900 = vshrl.u32 %v2870, 16
  %v2902 = vshll.u32 %v2870, 16
  %v2904 = vrot.slane %v2902, 1
  %v2905 = vor.u32 %v2900, %v2904
  %2907 = vmatpush.bf16.msra.mxu0 %v1713
  %2908 = vmatpush.bf16.msra.mxu0 %v1711
  %2909 = vmatpush.bf16.msra.mxu0 %v1709
  %2910 = vmatpush.bf16.msra.mxu0 %v1707
  %2911 = vmatpush.bf16.msra.mxu0 %v1705
  %2912 = vmatpush.bf16.msra.mxu0 %v1703
  %2913 = vmatpush.bf16.msra.mxu0 %v1701
  %2914 = vmatpush.bf16.msra.mxu0 %v1699
  %2915 = vmatmul.bf16.gmra.mxu0 %v2905
  %v2916 = vpop.f32.mrf.mxu0
  %v2917 = vadd.f32 0.0, %v2916
  %v2918 = vpop.f32.mrf.mxu0
  %2919 = vdwg.mxu0
  %2920 = vmatpush.bf16.msra.mxu0 %v1714
  %2921 = vmatpush.bf16.msra.mxu0 %v1712
  %2922 = vmatpush.bf16.msra.mxu0 %v1710
  %2923 = vmatpush.bf16.msra.mxu0 %v1708
  %2924 = vmatpush.bf16.msra.mxu0 %v1706
  %2925 = vmatpush.bf16.msra.mxu0 %v1704
  %2926 = vmatpush.bf16.msra.mxu0 %v1702
  %2927 = vmatpush.bf16.msra.mxu0 %v1700
  %2928 = vmatmul.bf16.gmra.mxu0 %v2905
  %v2929 = vpop.f32.mrf.mxu0
  %v2930 = vadd.f32 0.0, %v2929
  %v2931 = vpop.f32.mrf.mxu0
  %2932 = vdwg.mxu0
  %v2933 = vadd.f32 %v2897, %v2917
  %v2934 = vadd.f32 %v2898, %v2930
  %v2936 = vrot.slane %v2870, 1
  %2938 = vmatpush.bf16.msra.mxu0 %v1824
  %2939 = vmatpush.bf16.msra.mxu0 %v1822
  %2940 = vmatpush.bf16.msra.mxu0 %v1820
  %2941 = vmatpush.bf16.msra.mxu0 %v1818
  %2942 = vmatpush.bf16.msra.mxu0 %v1816
  %2943 = vmatpush.bf16.msra.mxu0 %v1814
  %2944 = vmatpush.bf16.msra.mxu0 %v1812
  %2945 = vmatpush.bf16.msra.mxu0 %v1810
  %2946 = vmatmul.bf16.gmra.mxu0 %v2936
  %v2947 = vpop.f32.mrf.mxu0
  %v2948 = vadd.f32 0.0, %v2947
  %v2949 = vpop.f32.mrf.mxu0
  %2950 = vdwg.mxu0
  %2951 = vmatpush.bf16.msra.mxu0 %v1825
  %2952 = vmatpush.bf16.msra.mxu0 %v1823
  %2953 = vmatpush.bf16.msra.mxu0 %v1821
  %2954 = vmatpush.bf16.msra.mxu0 %v1819
  %2955 = vmatpush.bf16.msra.mxu0 %v1817
  %2956 = vmatpush.bf16.msra.mxu0 %v1815
  %2957 = vmatpush.bf16.msra.mxu0 %v1813
  %2958 = vmatpush.bf16.msra.mxu0 %v1811
  %2959 = vmatmul.bf16.gmra.mxu0 %v2936
  %v2960 = vpop.f32.mrf.mxu0
  %v2961 = vadd.f32 0.0, %v2960
  %v2962 = vpop.f32.mrf.mxu0
  %2963 = vdwg.mxu0
  %v2964 = vadd.f32 %v2933, %v2948
  %v2965 = vadd.f32 %v2934, %v2961
  %v2966 = vmax.f32 %v2964, 0.0
  %v2967 = vmax.f32 %v2965, 0.0
  %v2968 = vpack.c.bf16 %v2966, %v2966
  %v2969 = vpack.c.bf16 %v2967, %v2967
  %v2971 = vsel %vm717, %v2969, 0
  %2973 = vmatpush.bf16.msra.mxu0 %v1929
  %2974 = vmatpush.bf16.msra.mxu0 %v1928
  %2975 = vmatpush.bf16.msra.mxu0 %v1927
  %2976 = vmatpush.bf16.msra.mxu0 %v1926
  %2977 = vmatpush.bf16.msra.mxu0 %v1925
  %2978 = vmatpush.bf16.msra.mxu0 %v1924
  %2979 = vmatpush.bf16.msra.mxu0 %v1923
  %2980 = vmatpush.bf16.msra.mxu0 %v1922
  %2981 = vmatmul.bf16.gmra.mxu0 %v2968
  %v2982 = vpop.f32.mrf.mxu0
  %v2983 = vadd.f32 0.0, %v2982
  %v2984 = vpop.f32.mrf.mxu0
  %2985 = vdwg.mxu0
  %2986 = vmatpush.bf16.msra.mxu0 0
  %2987 = vmatpush.bf16.msra.mxu0 0
  %2988 = vmatpush.bf16.msra.mxu0 0
  %2989 = vmatpush.bf16.msra.mxu0 0
  %2990 = vmatpush.bf16.msra.mxu0 %v1933
  %2991 = vmatpush.bf16.msra.mxu0 %v1932
  %2992 = vmatpush.bf16.msra.mxu0 %v1931
  %2993 = vmatpush.bf16.msra.mxu0 %v1930
  %2994 = vmatmul.bf16.gmra.mxu0 %v2971
  %v2995 = vpop.f32.mrf.mxu0
  %v2996 = vadd.f32 %v2983, %v2995
  %v2997 = vpop.f32.mrf.mxu0
  %2998 = vdwg.mxu0
  %2999 = vmatpush.bf16.msra.mxu0 %v2030
  %3000 = vmatpush.bf16.msra.mxu0 %v2029
  %3001 = vmatpush.bf16.msra.mxu0 %v2028
  %3002 = vmatpush.bf16.msra.mxu0 %v2027
  %3003 = vmatpush.bf16.msra.mxu0 %v2026
  %3004 = vmatpush.bf16.msra.mxu0 %v2025
  %3005 = vmatpush.bf16.msra.mxu0 %v2024
  %3006 = vmatpush.bf16.msra.mxu0 %v2023
  %3007 = vmatmul.bf16.gmra.mxu0 %v2968
  %v3008 = vpop.f32.mrf.mxu0
  %v3009 = vadd.f32 0.0, %v3008
  %v3010 = vpop.f32.mrf.mxu0
  %3011 = vdwg.mxu0
  %3012 = vmatpush.bf16.msra.mxu0 0
  %3013 = vmatpush.bf16.msra.mxu0 0
  %3014 = vmatpush.bf16.msra.mxu0 0
  %3015 = vmatpush.bf16.msra.mxu0 0
  %3016 = vmatpush.bf16.msra.mxu0 %v2034
  %3017 = vmatpush.bf16.msra.mxu0 %v2033
  %3018 = vmatpush.bf16.msra.mxu0 %v2032
  %3019 = vmatpush.bf16.msra.mxu0 %v2031
  %3020 = vmatmul.bf16.gmra.mxu0 %v2971
  %v3021 = vpop.f32.mrf.mxu0
  %v3022 = vadd.f32 %v3009, %v3021
  %v3023 = vpop.f32.mrf.mxu0
  %3024 = vdwg.mxu0
  %v3025 = vmax.f32 %v2996, %v3022
  %v3027 = vsel %vm2078, %v3025, 0
  %3029 = vmatpush.msra.mxu0 0.0
  %3030 = vmatpush.msra.mxu0 0.0
  %3031 = vmatpush.msra.mxu0 0.0
  %3032 = vmatpush.msra.mxu0 0.0
  %3033 = vmatpush.msra.mxu0 0.0
  %3034 = vmatpush.msra.mxu0 0.0
  %3035 = vmatpush.msra.mxu0 0.0
  %3036 = vmatpush.msra.mxu0 0.0
  %3037 = vmatpush.msra.mxu0 0.0
  %3038 = vmatpush.msra.mxu0 0.0
  %3039 = vmatpush.msra.mxu0 0.0
  %3040 = vmatpush.msra.mxu0 0.0
  %3041 = vmatpush.msra.mxu0 0.0
  %3042 = vmatpush.msra.mxu0 0.0
  %3043 = vmatpush.msra.mxu0 0.0
  %3044 = vmatpush.msra.mxu0 %v3027
  %3045 = vmatmul.bf16.gmra.mxu0 %v2076
  %v3046 = vpop.f32.mrf.mxu0
  %v3047 = vadd.f32 0.0, %v3046
  %v3048 = vpop.f32.mrf.mxu0
  %3049 = vdwg.mxu0
  %3050 = vmatpush.msra.mxu0 0.0
  %3051 = vmatpush.msra.mxu0 0.0
  %3052 = vmatpush.msra.mxu0 0.0
  %3053 = vmatpush.msra.mxu0 0.0
  %3054 = vmatpush.msra.mxu0 0.0
  %3055 = vmatpush.msra.mxu0 0.0
  %3056 = vmatpush.msra.mxu0 0.0
  %3057 = vmatpush.msra.mxu0 0.0
  %3058 = vmatpush.msra.mxu0 0.0
  %3059 = vmatpush.msra.mxu0 0.0
  %3060 = vmatpush.msra.mxu0 0.0
  %3061 = vmatpush.msra.mxu0 0.0
  %3062 = vmatpush.msra.mxu0 0.0
  %3063 = vmatpush.msra.mxu0 0.0
  %3064 = vmatpush.msra.mxu0 0.0
  %3065 = vmatpush.msra.mxu0 %v3027
  %3066 = vmatmul.bf16.gmra.mxu0 %v2104
  %v3067 = vpop.f32.mrf.mxu0
  %v3068 = vadd.f32 0.0, %v3067
  %v3069 = vpop.f32.mrf.mxu0
  %3070 = vdwg.mxu0
  %v3071 = vmax.f32 %v3047, %v3068
  %v3072 = vpack.c.bf16 %v3071, %v3071
  %v3074 = vsel %vm2165, %v3072, 0
  %3076 = vmatpush.bf16.msra.mxu0 0
  %3077 = vmatpush.bf16.msra.mxu0 0
  %3078 = vmatpush.bf16.msra.mxu0 %v2158
  %3079 = vmatpush.bf16.msra.mxu0 %v2157
  %3080 = vmatpush.bf16.msra.mxu0 %v2156
  %3081 = vmatpush.bf16.msra.mxu0 %v2155
  %3082 = vmatpush.bf16.msra.mxu0 %v2154
  %3083 = vmatpush.bf16.msra.mxu0 %v2153
  %3084 = vmatmul.bf16.gmra.mxu0 %v3074
  %v3085 = vpop.f32.mrf.mxu0
  %v3086 = vadd.f32 0.0, %v3085
  %v3087 = vpop.f32.mrf.mxu0
  %3088 = vdwg.mxu0
  %v3089 = vadd.f32 %v374, %v3086
  %v3090 = vshrl.u32 %v3072, 16
  %v3093 = vsel %vm2165, %v3090, 0
  %3095 = vmatpush.bf16.msra.mxu0 0
  %3096 = vmatpush.bf16.msra.mxu0 0
  %3097 = vmatpush.bf16.msra.mxu0 %v2214
  %3098 = vmatpush.bf16.msra.mxu0 %v2213
  %3099 = vmatpush.bf16.msra.mxu0 %v2212
  %3100 = vmatpush.bf16.msra.mxu0 %v2211
  %3101 = vmatpush.bf16.msra.mxu0 %v2210
  %3102 = vmatpush.bf16.msra.mxu0 %v2209
  %3103 = vmatmul.bf16.gmra.mxu0 %v3093
  %v3104 = vpop.f32.mrf.mxu0
  %v3105 = vadd.f32 0.0, %v3104
  %v3106 = vpop.f32.mrf.mxu0
  %3107 = vdwg.mxu0
  %v3108 = vadd.f32 %v3089, %v3105
  %v3110 = vrot.slane %v3072, 1
  %v3112 = vsel %vm2165, %v3110, 0
  %3114 = vmatpush.bf16.msra.mxu0 0
  %3115 = vmatpush.bf16.msra.mxu0 0
  %3116 = vmatpush.bf16.msra.mxu0 %v2269
  %3117 = vmatpush.bf16.msra.mxu0 %v2268
  %3118 = vmatpush.bf16.msra.mxu0 %v2267
  %3119 = vmatpush.bf16.msra.mxu0 %v2266
  %3120 = vmatpush.bf16.msra.mxu0 %v2265
  %3121 = vmatpush.bf16.msra.mxu0 %v2264
  %3122 = vmatmul.bf16.gmra.mxu0 %v3112
  %v3123 = vpop.f32.mrf.mxu0
  %v3124 = vadd.f32 0.0, %v3123
  %v3125 = vpop.f32.mrf.mxu0
  %3126 = vdwg.mxu0
  %v3127 = vadd.f32 %v3108, %v3124
  %v3128 = vmax.f32 %v3127, 0.0
  %v3129 = vpack.c.bf16 %v3128, %v3128
  %v3131 = vsel %vm717, %v3129, 0
  %3133 = vmatpush.bf16.msra.mxu0 0
  %3134 = vmatpush.bf16.msra.mxu0 0
  %3135 = vmatpush.bf16.msra.mxu0 0
  %3136 = vmatpush.bf16.msra.mxu0 0
  %3137 = vmatpush.bf16.msra.mxu0 %v2314
  %3138 = vmatpush.bf16.msra.mxu0 %v2313
  %3139 = vmatpush.bf16.msra.mxu0 %v2312
  %3140 = vmatpush.bf16.msra.mxu0 %v2311
  %3141 = vmatmul.bf16.gmra.mxu0 %v3131
  %v3142 = vpop.f32.mrf.mxu0
  %v3143 = vadd.f32 %v383, %v3142
  %v3144 = vpop.f32.mrf.mxu0
  %3145 = vdwg.mxu0
  %s3146 = scalar_lea.vmem %s0, 64
  %v3147 = vld [vmem:[%s3146] sm:$0xff]
  %v3148 = vld [vmem:[%s3146 + $0x8] sm:$0xff]
  %v3149 = vld [vmem:[%s3146 + $0x10] sm:$0xff]
  %v3150 = vld [vmem:[%s3146 + $0x18] sm:$0x3]
  %v3151 = vpack.c.bf16 %v3148, %v3147
  %v3152 = vpack.c.bf16 %v3149, %v3149
  %v3154 = vsel %vm408, %v3151, 0
  %v3157 = vsel %vm408, %v3152, 0
  %3159 = vmatpush.bf16.msra.mxu0 0
  %3160 = vmatpush.bf16.msra.mxu0 0
  %3161 = vmatpush.bf16.msra.mxu0 0
  %3162 = vmatpush.bf16.msra.mxu0 0
  %3163 = vmatpush.bf16.msra.mxu0 0
  %3164 = vmatpush.bf16.msra.mxu0 0
  %3165 = vmatpush.bf16.msra.mxu0 %v417
  %3166 = vmatpush.bf16.msra.mxu0 %v402
  %3167 = vmatmul.bf16.gmra.mxu0 %v3154
  %v3168 = vpop.f32.mrf.mxu0
  %v3169 = vadd.f32 0.0, %v3168
  %v3170 = vpop.f32.mrf.mxu0
  %v3171 = vadd.f32 0.0, %v3170
  %3172 = vmatmul.bf16.gmra.mxu0 %v3157
  %v3173 = vpop.f32.mrf.mxu0
  %v3174 = vadd.f32 0.0, %v3173
  %v3175 = vpop.f32.mrf.mxu0
  %3176 = vdwg.mxu0
  %3177 = vmatpush.bf16.msra.mxu0 0
  %3178 = vmatpush.bf16.msra.mxu0 0
  %3179 = vmatpush.bf16.msra.mxu0 0
  %3180 = vmatpush.bf16.msra.mxu0 0
  %3181 = vmatpush.bf16.msra.mxu0 0
  %3182 = vmatpush.bf16.msra.mxu0 0
  %3183 = vmatpush.bf16.msra.mxu0 %v420
  %3184 = vmatpush.bf16.msra.mxu0 %v403
  %3185 = vmatmul.bf16.gmra.mxu0 %v3154
  %v3186 = vpop.f32.mrf.mxu0
  %v3187 = vadd.f32 0.0, %v3186
  %v3188 = vpop.f32.mrf.mxu0
  %v3189 = vadd.f32 0.0, %v3188
  %3190 = vmatmul.bf16.gmra.mxu0 %v3157
  %v3191 = vpop.f32.mrf.mxu0
  %v3192 = vadd.f32 0.0, %v3191
  %v3193 = vpop.f32.mrf.mxu0
  %3194 = vdwg.mxu0
  %v3195 = vadd.f32 %v459, %v3169
  %v3196 = vadd.f32 %v460, %v3187
  %v3197 = vadd.f32 %v459, %v3171
  %v3198 = vadd.f32 %v460, %v3189
  %v3199 = vadd.f32 %v459, %v3174
  %v3200 = vadd.f32 %v460, %v3192
  %v3201 = vpack.c.bf16 %v3150, %v3149
  %v3202 = vshrl.u32 %v3151, 16
  %v3204 = vshll.u32 %v3151, 16
  %v3206 = vrot.slane %v3204, 1
  %v3207 = vor.u32 %v3202, %v3206
  %v3209 = vshll.u32 %v3201, 16
  %v3211 = vrot.slane %v3209, 1
  %v3212 = vsel %vm470, %v3207, %v3211
  %v3213 = vshrl.u32 %v3201, 16
  %v3215 = vor.u32 %v3213, %v3211
  %v3217 = vsel %vm408, %v3212, 0
  %v3220 = vsel %vm408, %v3215, 0
  %3222 = vmatpush.bf16.msra.mxu0 0
  %3223 = vmatpush.bf16.msra.mxu0 0
  %3224 = vmatpush.bf16.msra.mxu0 0
  %3225 = vmatpush.bf16.msra.mxu0 0
  %3226 = vmatpush.bf16.msra.mxu0 0
  %3227 = vmatpush.bf16.msra.mxu0 0
  %3228 = vmatpush.bf16.msra.mxu0 %v510
  %3229 = vmatpush.bf16.msra.mxu0 %v497
  %3230 = vmatmul.bf16.gmra.mxu0 %v3217
  %v3231 = vpop.f32.mrf.mxu0
  %v3232 = vadd.f32 0.0, %v3231
  %v3233 = vpop.f32.mrf.mxu0
  %v3234 = vadd.f32 0.0, %v3233
  %3235 = vmatmul.bf16.gmra.mxu0 %v3220
  %v3236 = vpop.f32.mrf.mxu0
  %v3237 = vadd.f32 0.0, %v3236
  %v3238 = vpop.f32.mrf.mxu0
  %3239 = vdwg.mxu0
  %3240 = vmatpush.bf16.msra.mxu0 0
  %3241 = vmatpush.bf16.msra.mxu0 0
  %3242 = vmatpush.bf16.msra.mxu0 0
  %3243 = vmatpush.bf16.msra.mxu0 0
  %3244 = vmatpush.bf16.msra.mxu0 0
  %3245 = vmatpush.bf16.msra.mxu0 0
  %3246 = vmatpush.bf16.msra.mxu0 %v513
  %3247 = vmatpush.bf16.msra.mxu0 %v498
  %3248 = vmatmul.bf16.gmra.mxu0 %v3217
  %v3249 = vpop.f32.mrf.mxu0
  %v3250 = vadd.f32 0.0, %v3249
  %v3251 = vpop.f32.mrf.mxu0
  %v3252 = vadd.f32 0.0, %v3251
  %3253 = vmatmul.bf16.gmra.mxu0 %v3220
  %v3254 = vpop.f32.mrf.mxu0
  %v3255 = vadd.f32 0.0, %v3254
  %v3256 = vpop.f32.mrf.mxu0
  %3257 = vdwg.mxu0
  %v3258 = vadd.f32 %v3195, %v3232
  %v3259 = vadd.f32 %v3196, %v3250
  %v3260 = vadd.f32 %v3197, %v3234
  %v3261 = vadd.f32 %v3198, %v3252
  %v3262 = vadd.f32 %v3199, %v3237
  %v3263 = vadd.f32 %v3200, %v3255
  %v3266 = vrot.slane %v3151, 1
  %v3267 = vrot.slane %v3201, 1
  %v3268 = vsel %vm559, %v3266, %v3267
  %v3270 = vsel %vm408, %v3268, 0
  %v3273 = vsel %vm408, %v3267, 0
  %3275 = vmatpush.bf16.msra.mxu0 0
  %3276 = vmatpush.bf16.msra.mxu0 0
  %3277 = vmatpush.bf16.msra.mxu0 0
  %3278 = vmatpush.bf16.msra.mxu0 0
  %3279 = vmatpush.bf16.msra.mxu0 0
  %3280 = vmatpush.bf16.msra.mxu0 0
  %3281 = vmatpush.bf16.msra.mxu0 %v588
  %3282 = vmatpush.bf16.msra.mxu0 %v575
  %3283 = vmatmul.bf16.gmra.mxu0 %v3270
  %v3284 = vpop.f32.mrf.mxu0
  %v3285 = vadd.f32 0.0, %v3284
  %v3286 = vpop.f32.mrf.mxu0
  %v3287 = vadd.f32 0.0, %v3286
  %3288 = vmatmul.bf16.gmra.mxu0 %v3273
  %v3289 = vpop.f32.mrf.mxu0
  %v3290 = vadd.f32 0.0, %v3289
  %v3291 = vpop.f32.mrf.mxu0
  %3292 = vdwg.mxu0
  %3293 = vmatpush.bf16.msra.mxu0 0
  %3294 = vmatpush.bf16.msra.mxu0 0
  %3295 = vmatpush.bf16.msra.mxu0 0
  %3296 = vmatpush.bf16.msra.mxu0 0
  %3297 = vmatpush.bf16.msra.mxu0 0
  %3298 = vmatpush.bf16.msra.mxu0 0
  %3299 = vmatpush.bf16.msra.mxu0 %v591
  %3300 = vmatpush.bf16.msra.mxu0 %v576
  %3301 = vmatmul.bf16.gmra.mxu0 %v3270
  %v3302 = vpop.f32.mrf.mxu0
  %v3303 = vadd.f32 0.0, %v3302
  %v3304 = vpop.f32.mrf.mxu0
  %v3305 = vadd.f32 0.0, %v3304
  %3306 = vmatmul.bf16.gmra.mxu0 %v3273
  %v3307 = vpop.f32.mrf.mxu0
  %v3308 = vadd.f32 0.0, %v3307
  %v3309 = vpop.f32.mrf.mxu0
  %3310 = vdwg.mxu0
  %v3311 = vadd.f32 %v3258, %v3285
  %v3312 = vadd.f32 %v3259, %v3303
  %v3313 = vadd.f32 %v3260, %v3287
  %v3314 = vadd.f32 %v3261, %v3305
  %v3315 = vadd.f32 %v3262, %v3290
  %v3316 = vadd.f32 %v3263, %v3308
  %v3317 = vmax.f32 %v3311, 0.0
  %v3318 = vmax.f32 %v3312, 0.0
  %v3319 = vmax.f32 %v3313, 0.0
  %v3320 = vmax.f32 %v3314, 0.0
  %v3321 = vmax.f32 %v3315, 0.0
  %v3322 = vmax.f32 %v3316, 0.0
  %v3323 = vpack.c.bf16 %v3319, %v3317
  %v3324 = vpack.c.bf16 %v3320, %v3318
  %v3325 = vpack.c.bf16 %v3321, %v3321
  %v3326 = vpack.c.bf16 %v3322, %v3322
  %v3328 = vsel %vm717, %v3324, 0
  %v3331 = vsel %vm717, %v3326, 0
  %3333 = vmatpush.bf16.msra.mxu0 %v700
  %3334 = vmatpush.bf16.msra.mxu0 %v699
  %3335 = vmatpush.bf16.msra.mxu0 %v698
  %3336 = vmatpush.bf16.msra.mxu0 %v697
  %3337 = vmatpush.bf16.msra.mxu0 %v696
  %3338 = vmatpush.bf16.msra.mxu0 %v695
  %3339 = vmatpush.bf16.msra.mxu0 %v694
  %3340 = vmatpush.bf16.msra.mxu0 %v693
  %3341 = vmatmul.bf16.gmra.mxu0 %v3323
  %v3342 = vpop.f32.mrf.mxu0
  %v3343 = vadd.f32 0.0, %v3342
  %v3344 = vpop.f32.mrf.mxu0
  %v3345 = vadd.f32 0.0, %v3344
  %3346 = vmatmul.bf16.gmra.mxu0 %v3325
  %v3347 = vpop.f32.mrf.mxu0
  %v3348 = vadd.f32 0.0, %v3347
  %v3349 = vpop.f32.mrf.mxu0
  %3350 = vdwg.mxu0
  %3351 = vmatpush.bf16.msra.mxu0 0
  %3352 = vmatpush.bf16.msra.mxu0 0
  %3353 = vmatpush.bf16.msra.mxu0 0
  %3354 = vmatpush.bf16.msra.mxu0 0
  %3355 = vmatpush.bf16.msra.mxu0 %v704
  %3356 = vmatpush.bf16.msra.mxu0 %v703
  %3357 = vmatpush.bf16.msra.mxu0 %v702
  %3358 = vmatpush.bf16.msra.mxu0 %v701
  %3359 = vmatmul.bf16.gmra.mxu0 %v3328
  %v3360 = vpop.f32.mrf.mxu0
  %v3361 = vadd.f32 %v3343, %v3360
  %v3362 = vpop.f32.mrf.mxu0
  %v3363 = vadd.f32 %v3345, %v3362
  %3364 = vmatmul.bf16.gmra.mxu0 %v3331
  %v3365 = vpop.f32.mrf.mxu0
  %v3366 = vadd.f32 %v3348, %v3365
  %v3367 = vpop.f32.mrf.mxu0
  %3368 = vdwg.mxu0
  %3369 = vmatpush.bf16.msra.mxu0 %v815
  %3370 = vmatpush.bf16.msra.mxu0 %v814
  %3371 = vmatpush.bf16.msra.mxu0 %v813
  %3372 = vmatpush.bf16.msra.mxu0 %v812
  %3373 = vmatpush.bf16.msra.mxu0 %v811
  %3374 = vmatpush.bf16.msra.mxu0 %v810
  %3375 = vmatpush.bf16.msra.mxu0 %v809
  %3376 = vmatpush.bf16.msra.mxu0 %v808
  %3377 = vmatmul.bf16.gmra.mxu0 %v3323
  %v3378 = vpop.f32.mrf.mxu0
  %v3379 = vadd.f32 0.0, %v3378
  %v3380 = vpop.f32.mrf.mxu0
  %v3381 = vadd.f32 0.0, %v3380
  %3382 = vmatmul.bf16.gmra.mxu0 %v3325
  %v3383 = vpop.f32.mrf.mxu0
  %v3384 = vadd.f32 0.0, %v3383
  %v3385 = vpop.f32.mrf.mxu0
  %3386 = vdwg.mxu0
  %3387 = vmatpush.bf16.msra.mxu0 0
  %3388 = vmatpush.bf16.msra.mxu0 0
  %3389 = vmatpush.bf16.msra.mxu0 0
  %3390 = vmatpush.bf16.msra.mxu0 0
  %3391 = vmatpush.bf16.msra.mxu0 %v819
  %3392 = vmatpush.bf16.msra.mxu0 %v818
  %3393 = vmatpush.bf16.msra.mxu0 %v817
  %3394 = vmatpush.bf16.msra.mxu0 %v816
  %3395 = vmatmul.bf16.gmra.mxu0 %v3328
  %v3396 = vpop.f32.mrf.mxu0
  %v3397 = vadd.f32 %v3379, %v3396
  %v3398 = vpop.f32.mrf.mxu0
  %v3399 = vadd.f32 %v3381, %v3398
  %3400 = vmatmul.bf16.gmra.mxu0 %v3331
  %v3401 = vpop.f32.mrf.mxu0
  %v3402 = vadd.f32 %v3384, %v3401
  %v3403 = vpop.f32.mrf.mxu0
  %3404 = vdwg.mxu0
  %v3405 = vmax.f32 %v3361, %v3397
  %v3406 = vmax.f32 %v3363, %v3399
  %v3407 = vmax.f32 %v3366, %v3402
  %3408 = vmatpush.msra.mxu0 0.0
  %3409 = vmatpush.msra.mxu0 0.0
  %3410 = vmatpush.msra.mxu0 0.0
  %3411 = vmatpush.msra.mxu0 0.0
  %3412 = vmatpush.msra.mxu0 0.0
  %3413 = vmatpush.msra.mxu0 0.0
  %3414 = vmatpush.msra.mxu0 0.0
  %3415 = vmatpush.msra.mxu0 0.0
  %3416 = vmatpush.msra.mxu0 0.0
  %3417 = vmatpush.msra.mxu0 0.0
  %3418 = vmatpush.msra.mxu0 0.0
  %3419 = vmatpush.msra.mxu0 0.0
  %3420 = vmatpush.msra.mxu0 0.0
  %3421 = vmatpush.msra.mxu0 %v3407
  %3422 = vmatpush.msra.mxu0 %v3406
  %3423 = vmatpush.msra.mxu0 %v3405
  %3424 = vmatmul.bf16.gmra.mxu0 %v878
  %v3425 = vpop.f32.mrf.mxu0
  %v3426 = vadd.f32 0.0, %v3425
  %v3427 = vpop.f32.mrf.mxu0
  %v3428 = vadd.f32 0.0, %v3427
  %3429 = vdwg.mxu0
  %3430 = vmatpush.msra.mxu0 0.0
  %3431 = vmatpush.msra.mxu0 0.0
  %3432 = vmatpush.msra.mxu0 0.0
  %3433 = vmatpush.msra.mxu0 0.0
  %3434 = vmatpush.msra.mxu0 0.0
  %3435 = vmatpush.msra.mxu0 0.0
  %3436 = vmatpush.msra.mxu0 0.0
  %3437 = vmatpush.msra.mxu0 0.0
  %3438 = vmatpush.msra.mxu0 0.0
  %3439 = vmatpush.msra.mxu0 0.0
  %3440 = vmatpush.msra.mxu0 0.0
  %3441 = vmatpush.msra.mxu0 0.0
  %3442 = vmatpush.msra.mxu0 0.0
  %3443 = vmatpush.msra.mxu0 %v3407
  %3444 = vmatpush.msra.mxu0 %v3406
  %3445 = vmatpush.msra.mxu0 %v3405
  %3446 = vmatmul.bf16.gmra.mxu0 %v908
  %v3447 = vpop.f32.mrf.mxu0
  %v3448 = vadd.f32 0.0, %v3447
  %v3449 = vpop.f32.mrf.mxu0
  %v3450 = vadd.f32 0.0, %v3449
  %3451 = vdwg.mxu0
  %v3452 = vmax.f32 %v3426, %v3448
  %v3453 = vmax.f32 %v3428, %v3450
  %v3454 = vpack.c.bf16 %v3453, %v3452
  %v3456 = vsel %vm1005, %v3454, 0
  %3458 = vmatpush.bf16.msra.mxu0 0
  %3459 = vmatpush.bf16.msra.mxu0 %v989
  %3460 = vmatpush.bf16.msra.mxu0 %v987
  %3461 = vmatpush.bf16.msra.mxu0 %v985
  %3462 = vmatpush.bf16.msra.mxu0 %v983
  %3463 = vmatpush.bf16.msra.mxu0 %v981
  %3464 = vmatpush.bf16.msra.mxu0 %v979
  %3465 = vmatpush.bf16.msra.mxu0 %v977
  %3466 = vmatmul.bf16.gmra.mxu0 %v3456
  %v3467 = vpop.f32.mrf.mxu0
  %v3468 = vadd.f32 0.0, %v3467
  %v3469 = vpop.f32.mrf.mxu0
  %v3470 = vadd.f32 0.0, %v3469
  %3471 = vdwg.mxu0
  %3472 = vmatpush.bf16.msra.mxu0 0
  %3473 = vmatpush.bf16.msra.mxu0 %v990
  %3474 = vmatpush.bf16.msra.mxu0 %v988
  %3475 = vmatpush.bf16.msra.mxu0 %v986
  %3476 = vmatpush.bf16.msra.mxu0 %v984
  %3477 = vmatpush.bf16.msra.mxu0 %v982
  %3478 = vmatpush.bf16.msra.mxu0 %v980
  %3479 = vmatpush.bf16.msra.mxu0 %v978
  %3480 = vmatmul.bf16.gmra.mxu0 %v3456
  %v3481 = vpop.f32.mrf.mxu0
  %v3482 = vadd.f32 0.0, %v3481
  %v3483 = vpop.f32.mrf.mxu0
  %v3484 = vadd.f32 0.0, %v3483
  %3485 = vdwg.mxu0
  %v3486 = vadd.f32 %v1038, %v3468
  %v3487 = vadd.f32 %v1039, %v3482
  %v3488 = vadd.f32 %v1038, %v3470
  %v3489 = vadd.f32 %v1039, %v3484
  %v3490 = vshrl.u32 %v3454, 16
  %v3492 = vshll.u32 %v3454, 16
  %v3494 = vrot.slane %v3492, 1
  %v3495 = vor.u32 %v3490, %v3494
  %v3497 = vsel %vm1005, %v3495, 0
  %3499 = vmatpush.bf16.msra.mxu0 0
  %3500 = vmatpush.bf16.msra.mxu0 %v1106
  %3501 = vmatpush.bf16.msra.mxu0 %v1104
  %3502 = vmatpush.bf16.msra.mxu0 %v1102
  %3503 = vmatpush.bf16.msra.mxu0 %v1100
  %3504 = vmatpush.bf16.msra.mxu0 %v1098
  %3505 = vmatpush.bf16.msra.mxu0 %v1096
  %3506 = vmatpush.bf16.msra.mxu0 %v1094
  %3507 = vmatmul.bf16.gmra.mxu0 %v3497
  %v3508 = vpop.f32.mrf.mxu0
  %v3509 = vadd.f32 0.0, %v3508
  %v3510 = vpop.f32.mrf.mxu0
  %v3511 = vadd.f32 0.0, %v3510
  %3512 = vdwg.mxu0
  %3513 = vmatpush.bf16.msra.mxu0 0
  %3514 = vmatpush.bf16.msra.mxu0 %v1107
  %3515 = vmatpush.bf16.msra.mxu0 %v1105
  %3516 = vmatpush.bf16.msra.mxu0 %v1103
  %3517 = vmatpush.bf16.msra.mxu0 %v1101
  %3518 = vmatpush.bf16.msra.mxu0 %v1099
  %3519 = vmatpush.bf16.msra.mxu0 %v1097
  %3520 = vmatpush.bf16.msra.mxu0 %v1095
  %3521 = vmatmul.bf16.gmra.mxu0 %v3497
  %v3522 = vpop.f32.mrf.mxu0
  %v3523 = vadd.f32 0.0, %v3522
  %v3524 = vpop.f32.mrf.mxu0
  %v3525 = vadd.f32 0.0, %v3524
  %3526 = vdwg.mxu0
  %v3527 = vadd.f32 %v3486, %v3509
  %v3528 = vadd.f32 %v3487, %v3523
  %v3529 = vadd.f32 %v3488, %v3511
  %v3530 = vadd.f32 %v3489, %v3525
  %v3532 = vrot.slane %v3454, 1
  %v3534 = vsel %vm1005, %v3532, 0
  %3536 = vmatpush.bf16.msra.mxu0 0
  %3537 = vmatpush.bf16.msra.mxu0 %v1213
  %3538 = vmatpush.bf16.msra.mxu0 %v1211
  %3539 = vmatpush.bf16.msra.mxu0 %v1209
  %3540 = vmatpush.bf16.msra.mxu0 %v1207
  %3541 = vmatpush.bf16.msra.mxu0 %v1205
  %3542 = vmatpush.bf16.msra.mxu0 %v1203
  %3543 = vmatpush.bf16.msra.mxu0 %v1201
  %3544 = vmatmul.bf16.gmra.mxu0 %v3534
  %v3545 = vpop.f32.mrf.mxu0
  %v3546 = vadd.f32 0.0, %v3545
  %v3547 = vpop.f32.mrf.mxu0
  %v3548 = vadd.f32 0.0, %v3547
  %3549 = vdwg.mxu0
  %3550 = vmatpush.bf16.msra.mxu0 0
  %3551 = vmatpush.bf16.msra.mxu0 %v1214
  %3552 = vmatpush.bf16.msra.mxu0 %v1212
  %3553 = vmatpush.bf16.msra.mxu0 %v1210
  %3554 = vmatpush.bf16.msra.mxu0 %v1208
  %3555 = vmatpush.bf16.msra.mxu0 %v1206
  %3556 = vmatpush.bf16.msra.mxu0 %v1204
  %3557 = vmatpush.bf16.msra.mxu0 %v1202
  %3558 = vmatmul.bf16.gmra.mxu0 %v3534
  %v3559 = vpop.f32.mrf.mxu0
  %v3560 = vadd.f32 0.0, %v3559
  %v3561 = vpop.f32.mrf.mxu0
  %v3562 = vadd.f32 0.0, %v3561
  %3563 = vdwg.mxu0
  %v3564 = vadd.f32 %v3527, %v3546
  %v3565 = vadd.f32 %v3528, %v3560
  %v3566 = vadd.f32 %v3529, %v3548
  %v3567 = vadd.f32 %v3530, %v3562
  %v3568 = vmax.f32 %v3564, 0.0
  %v3569 = vmax.f32 %v3565, 0.0
  %v3570 = vmax.f32 %v3566, 0.0
  %v3571 = vmax.f32 %v3567, 0.0
  %v3572 = vpack.c.bf16 %v3570, %v3568
  %v3573 = vpack.c.bf16 %v3571, %v3569
  %v3575 = vsel %vm717, %v3573, 0
  %3577 = vmatpush.bf16.msra.mxu0 %v1325
  %3578 = vmatpush.bf16.msra.mxu0 %v1324
  %3579 = vmatpush.bf16.msra.mxu0 %v1323
  %3580 = vmatpush.bf16.msra.mxu0 %v1322
  %3581 = vmatpush.bf16.msra.mxu0 %v1321
  %3582 = vmatpush.bf16.msra.mxu0 %v1320
  %3583 = vmatpush.bf16.msra.mxu0 %v1319
  %3584 = vmatpush.bf16.msra.mxu0 %v1318
  %3585 = vmatmul.bf16.gmra.mxu0 %v3572
  %v3586 = vpop.f32.mrf.mxu0
  %v3587 = vadd.f32 0.0, %v3586
  %v3588 = vpop.f32.mrf.mxu0
  %v3589 = vadd.f32 0.0, %v3588
  %3590 = vdwg.mxu0
  %3591 = vmatpush.bf16.msra.mxu0 0
  %3592 = vmatpush.bf16.msra.mxu0 0
  %3593 = vmatpush.bf16.msra.mxu0 0
  %3594 = vmatpush.bf16.msra.mxu0 0
  %3595 = vmatpush.bf16.msra.mxu0 %v1329
  %3596 = vmatpush.bf16.msra.mxu0 %v1328
  %3597 = vmatpush.bf16.msra.mxu0 %v1327
  %3598 = vmatpush.bf16.msra.mxu0 %v1326
  %3599 = vmatmul.bf16.gmra.mxu0 %v3575
  %v3600 = vpop.f32.mrf.mxu0
  %v3601 = vadd.f32 %v3587, %v3600
  %v3602 = vpop.f32.mrf.mxu0
  %v3603 = vadd.f32 %v3589, %v3602
  %3604 = vdwg.mxu0
  %3605 = vmatpush.bf16.msra.mxu0 %v1428
  %3606 = vmatpush.bf16.msra.mxu0 %v1427
  %3607 = vmatpush.bf16.msra.mxu0 %v1426
  %3608 = vmatpush.bf16.msra.mxu0 %v1425
  %3609 = vmatpush.bf16.msra.mxu0 %v1424
  %3610 = vmatpush.bf16.msra.mxu0 %v1423
  %3611 = vmatpush.bf16.msra.mxu0 %v1422
  %3612 = vmatpush.bf16.msra.mxu0 %v1421
  %3613 = vmatmul.bf16.gmra.mxu0 %v3572
  %v3614 = vpop.f32.mrf.mxu0
  %v3615 = vadd.f32 0.0, %v3614
  %v3616 = vpop.f32.mrf.mxu0
  %v3617 = vadd.f32 0.0, %v3616
  %3618 = vdwg.mxu0
  %3619 = vmatpush.bf16.msra.mxu0 0
  %3620 = vmatpush.bf16.msra.mxu0 0
  %3621 = vmatpush.bf16.msra.mxu0 0
  %3622 = vmatpush.bf16.msra.mxu0 0
  %3623 = vmatpush.bf16.msra.mxu0 %v1432
  %3624 = vmatpush.bf16.msra.mxu0 %v1431
  %3625 = vmatpush.bf16.msra.mxu0 %v1430
  %3626 = vmatpush.bf16.msra.mxu0 %v1429
  %3627 = vmatmul.bf16.gmra.mxu0 %v3575
  %v3628 = vpop.f32.mrf.mxu0
  %v3629 = vadd.f32 %v3615, %v3628
  %v3630 = vpop.f32.mrf.mxu0
  %v3631 = vadd.f32 %v3617, %v3630
  %3632 = vdwg.mxu0
  %v3633 = vmax.f32 %v3601, %v3629
  %v3634 = vmax.f32 %v3603, %v3631
  %v3636 = vsel %vm1479, %v3634, 0
  %3638 = vmatpush.msra.mxu0 0.0
  %3639 = vmatpush.msra.mxu0 0.0
  %3640 = vmatpush.msra.mxu0 0.0
  %3641 = vmatpush.msra.mxu0 0.0
  %3642 = vmatpush.msra.mxu0 0.0
  %3643 = vmatpush.msra.mxu0 0.0
  %3644 = vmatpush.msra.mxu0 0.0
  %3645 = vmatpush.msra.mxu0 0.0
  %3646 = vmatpush.msra.mxu0 0.0
  %3647 = vmatpush.msra.mxu0 0.0
  %3648 = vmatpush.msra.mxu0 0.0
  %3649 = vmatpush.msra.mxu0 0.0
  %3650 = vmatpush.msra.mxu0 0.0
  %3651 = vmatpush.msra.mxu0 0.0
  %3652 = vmatpush.msra.mxu0 %v3636
  %3653 = vmatpush.msra.mxu0 %v3633
  %3654 = vmatmul.bf16.gmra.mxu0 %v1477
  %v3655 = vpop.f32.mrf.mxu0
  %v3656 = vadd.f32 0.0, %v3655
  %v3657 = vpop.f32.mrf.mxu0
  %3658 = vdwg.mxu0
  %3659 = vmatpush.msra.mxu0 0.0
  %3660 = vmatpush.msra.mxu0 0.0
  %3661 = vmatpush.msra.mxu0 0.0
  %3662 = vmatpush.msra.mxu0 0.0
  %3663 = vmatpush.msra.mxu0 0.0
  %3664 = vmatpush.msra.mxu0 0.0
  %3665 = vmatpush.msra.mxu0 0.0
  %3666 = vmatpush.msra.mxu0 0.0
  %3667 = vmatpush.msra.mxu0 0.0
  %3668 = vmatpush.msra.mxu0 0.0
  %3669 = vmatpush.msra.mxu0 0.0
  %3670 = vmatpush.msra.mxu0 0.0
  %3671 = vmatpush.msra.mxu0 0.0
  %3672 = vmatpush.msra.mxu0 0.0
  %3673 = vmatpush.msra.mxu0 %v3636
  %3674 = vmatpush.msra.mxu0 %v3633
  %3675 = vmatmul.bf16.gmra.mxu0 %v1505
  %v3676 = vpop.f32.mrf.mxu0
  %v3677 = vadd.f32 0.0, %v3676
  %v3678 = vpop.f32.mrf.mxu0
  %3679 = vdwg.mxu0
  %v3680 = vmax.f32 %v3656, %v3677
  %v3681 = vpack.c.bf16 %v3680, %v3680
  %3682 = vmatpush.bf16.msra.mxu0 %v1592
  %3683 = vmatpush.bf16.msra.mxu0 %v1590
  %3684 = vmatpush.bf16.msra.mxu0 %v1588
  %3685 = vmatpush.bf16.msra.mxu0 %v1586
  %3686 = vmatpush.bf16.msra.mxu0 %v1584
  %3687 = vmatpush.bf16.msra.mxu0 %v1582
  %3688 = vmatpush.bf16.msra.mxu0 %v1580
  %3689 = vmatpush.bf16.msra.mxu0 %v1578
  %3690 = vmatmul.bf16.gmra.mxu0 %v3681
  %v3691 = vpop.f32.mrf.mxu0
  %v3692 = vadd.f32 0.0, %v3691
  %v3693 = vpop.f32.mrf.mxu0
  %3694 = vdwg.mxu0
  %3695 = vmatpush.bf16.msra.mxu0 %v1593
  %3696 = vmatpush.bf16.msra.mxu0 %v1591
  %3697 = vmatpush.bf16.msra.mxu0 %v1589
  %3698 = vmatpush.bf16.msra.mxu0 %v1587
  %3699 = vmatpush.bf16.msra.mxu0 %v1585
  %3700 = vmatpush.bf16.msra.mxu0 %v1583
  %3701 = vmatpush.bf16.msra.mxu0 %v1581
  %3702 = vmatpush.bf16.msra.mxu0 %v1579
  %3703 = vmatmul.bf16.gmra.mxu0 %v3681
  %v3704 = vpop.f32.mrf.mxu0
  %v3705 = vadd.f32 0.0, %v3704
  %v3706 = vpop.f32.mrf.mxu0
  %3707 = vdwg.mxu0
  %v3708 = vadd.f32 %v1637, %v3692
  %v3709 = vadd.f32 %v1638, %v3705
  %v3711 = vshrl.u32 %v3681, 16
  %v3713 = vshll.u32 %v3681, 16
  %v3715 = vrot.slane %v3713, 1
  %v3716 = vor.u32 %v3711, %v3715
  %3718 = vmatpush.bf16.msra.mxu0 %v1713
  %3719 = vmatpush.bf16.msra.mxu0 %v1711
  %3720 = vmatpush.bf16.msra.mxu0 %v1709
  %3721 = vmatpush.bf16.msra.mxu0 %v1707
  %3722 = vmatpush.bf16.msra.mxu0 %v1705
  %3723 = vmatpush.bf16.msra.mxu0 %v1703
  %3724 = vmatpush.bf16.msra.mxu0 %v1701
  %3725 = vmatpush.bf16.msra.mxu0 %v1699
  %3726 = vmatmul.bf16.gmra.mxu0 %v3716
  %v3727 = vpop.f32.mrf.mxu0
  %v3728 = vadd.f32 0.0, %v3727
  %v3729 = vpop.f32.mrf.mxu0
  %3730 = vdwg.mxu0
  %3731 = vmatpush.bf16.msra.mxu0 %v1714
  %3732 = vmatpush.bf16.msra.mxu0 %v1712
  %3733 = vmatpush.bf16.msra.mxu0 %v1710
  %3734 = vmatpush.bf16.msra.mxu0 %v1708
  %3735 = vmatpush.bf16.msra.mxu0 %v1706
  %3736 = vmatpush.bf16.msra.mxu0 %v1704
  %3737 = vmatpush.bf16.msra.mxu0 %v1702
  %3738 = vmatpush.bf16.msra.mxu0 %v1700
  %3739 = vmatmul.bf16.gmra.mxu0 %v3716
  %v3740 = vpop.f32.mrf.mxu0
  %v3741 = vadd.f32 0.0, %v3740
  %v3742 = vpop.f32.mrf.mxu0
  %3743 = vdwg.mxu0
  %v3744 = vadd.f32 %v3708, %v3728
  %v3745 = vadd.f32 %v3709, %v3741
  %v3747 = vrot.slane %v3681, 1
  %3749 = vmatpush.bf16.msra.mxu0 %v1824
  %3750 = vmatpush.bf16.msra.mxu0 %v1822
  %3751 = vmatpush.bf16.msra.mxu0 %v1820
  %3752 = vmatpush.bf16.msra.mxu0 %v1818
  %3753 = vmatpush.bf16.msra.mxu0 %v1816
  %3754 = vmatpush.bf16.msra.mxu0 %v1814
  %3755 = vmatpush.bf16.msra.mxu0 %v1812
  %3756 = vmatpush.bf16.msra.mxu0 %v1810
  %3757 = vmatmul.bf16.gmra.mxu0 %v3747
  %v3758 = vpop.f32.mrf.mxu0
  %v3759 = vadd.f32 0.0, %v3758
  %v3760 = vpop.f32.mrf.mxu0
  %3761 = vdwg.mxu0
  %3762 = vmatpush.bf16.msra.mxu0 %v1825
  %3763 = vmatpush.bf16.msra.mxu0 %v1823
  %3764 = vmatpush.bf16.msra.mxu0 %v1821
  %3765 = vmatpush.bf16.msra.mxu0 %v1819
  %3766 = vmatpush.bf16.msra.mxu0 %v1817
  %3767 = vmatpush.bf16.msra.mxu0 %v1815
  %3768 = vmatpush.bf16.msra.mxu0 %v1813
  %3769 = vmatpush.bf16.msra.mxu0 %v1811
  %3770 = vmatmul.bf16.gmra.mxu0 %v3747
  %v3771 = vpop.f32.mrf.mxu0
  %v3772 = vadd.f32 0.0, %v3771
  %v3773 = vpop.f32.mrf.mxu0
  %3774 = vdwg.mxu0
  %v3775 = vadd.f32 %v3744, %v3759
  %v3776 = vadd.f32 %v3745, %v3772
  %v3777 = vmax.f32 %v3775, 0.0
  %v3778 = vmax.f32 %v3776, 0.0
  %v3779 = vpack.c.bf16 %v3777, %v3777
  %v3780 = vpack.c.bf16 %v3778, %v3778
  %v3782 = vsel %vm717, %v3780, 0
  %3784 = vmatpush.bf16.msra.mxu0 %v1929
  %3785 = vmatpush.bf16.msra.mxu0 %v1928
  %3786 = vmatpush.bf16.msra.mxu0 %v1927
  %3787 = vmatpush.bf16.msra.mxu0 %v1926
  %3788 = vmatpush.bf16.msra.mxu0 %v1925
  %3789 = vmatpush.bf16.msra.mxu0 %v1924
  %3790 = vmatpush.bf16.msra.mxu0 %v1923
  %3791 = vmatpush.bf16.msra.mxu0 %v1922
  %3792 = vmatmul.bf16.gmra.mxu0 %v3779
  %v3793 = vpop.f32.mrf.mxu0
  %v3794 = vadd.f32 0.0, %v3793
  %v3795 = vpop.f32.mrf.mxu0
  %3796 = vdwg.mxu0
  %3797 = vmatpush.bf16.msra.mxu0 0
  %3798 = vmatpush.bf16.msra.mxu0 0
  %3799 = vmatpush.bf16.msra.mxu0 0
  %3800 = vmatpush.bf16.msra.mxu0 0
  %3801 = vmatpush.bf16.msra.mxu0 %v1933
  %3802 = vmatpush.bf16.msra.mxu0 %v1932
  %3803 = vmatpush.bf16.msra.mxu0 %v1931
  %3804 = vmatpush.bf16.msra.mxu0 %v1930
  %3805 = vmatmul.bf16.gmra.mxu0 %v3782
  %v3806 = vpop.f32.mrf.mxu0
  %v3807 = vadd.f32 %v3794, %v3806
  %v3808 = vpop.f32.mrf.mxu0
  %3809 = vdwg.mxu0
  %3810 = vmatpush.bf16.msra.mxu0 %v2030
  %3811 = vmatpush.bf16.msra.mxu0 %v2029
  %3812 = vmatpush.bf16.msra.mxu0 %v2028
  %3813 = vmatpush.bf16.msra.mxu0 %v2027
  %3814 = vmatpush.bf16.msra.mxu0 %v2026
  %3815 = vmatpush.bf16.msra.mxu0 %v2025
  %3816 = vmatpush.bf16.msra.mxu0 %v2024
  %3817 = vmatpush.bf16.msra.mxu0 %v2023
  %3818 = vmatmul.bf16.gmra.mxu0 %v3779
  %v3819 = vpop.f32.mrf.mxu0
  %v3820 = vadd.f32 0.0, %v3819
  %v3821 = vpop.f32.mrf.mxu0
  %3822 = vdwg.mxu0
  %3823 = vmatpush.bf16.msra.mxu0 0
  %3824 = vmatpush.bf16.msra.mxu0 0
  %3825 = vmatpush.bf16.msra.mxu0 0
  %3826 = vmatpush.bf16.msra.mxu0 0
  %3827 = vmatpush.bf16.msra.mxu0 %v2034
  %3828 = vmatpush.bf16.msra.mxu0 %v2033
  %3829 = vmatpush.bf16.msra.mxu0 %v2032
  %3830 = vmatpush.bf16.msra.mxu0 %v2031
  %3831 = vmatmul.bf16.gmra.mxu0 %v3782
  %v3832 = vpop.f32.mrf.mxu0
  %v3833 = vadd.f32 %v3820, %v3832
  %v3834 = vpop.f32.mrf.mxu0
  %3835 = vdwg.mxu0
  %v3836 = vmax.f32 %v3807, %v3833
  %v3838 = vsel %vm2078, %v3836, 0
  %3840 = vmatpush.msra.mxu0 0.0
  %3841 = vmatpush.msra.mxu0 0.0
  %3842 = vmatpush.msra.mxu0 0.0
  %3843 = vmatpush.msra.mxu0 0.0
  %3844 = vmatpush.msra.mxu0 0.0
  %3845 = vmatpush.msra.mxu0 0.0
  %3846 = vmatpush.msra.mxu0 0.0
  %3847 = vmatpush.msra.mxu0 0.0
  %3848 = vmatpush.msra.mxu0 0.0
  %3849 = vmatpush.msra.mxu0 0.0
  %3850 = vmatpush.msra.mxu0 0.0
  %3851 = vmatpush.msra.mxu0 0.0
  %3852 = vmatpush.msra.mxu0 0.0
  %3853 = vmatpush.msra.mxu0 0.0
  %3854 = vmatpush.msra.mxu0 0.0
  %3855 = vmatpush.msra.mxu0 %v3838
  %3856 = vmatmul.bf16.gmra.mxu0 %v2076
  %v3857 = vpop.f32.mrf.mxu0
  %v3858 = vadd.f32 0.0, %v3857
  %v3859 = vpop.f32.mrf.mxu0
  %3860 = vdwg.mxu0
  %3861 = vmatpush.msra.mxu0 0.0
  %3862 = vmatpush.msra.mxu0 0.0
  %3863 = vmatpush.msra.mxu0 0.0
  %3864 = vmatpush.msra.mxu0 0.0
  %3865 = vmatpush.msra.mxu0 0.0
  %3866 = vmatpush.msra.mxu0 0.0
  %3867 = vmatpush.msra.mxu0 0.0
  %3868 = vmatpush.msra.mxu0 0.0
  %3869 = vmatpush.msra.mxu0 0.0
  %3870 = vmatpush.msra.mxu0 0.0
  %3871 = vmatpush.msra.mxu0 0.0
  %3872 = vmatpush.msra.mxu0 0.0
  %3873 = vmatpush.msra.mxu0 0.0
  %3874 = vmatpush.msra.mxu0 0.0
  %3875 = vmatpush.msra.mxu0 0.0
  %3876 = vmatpush.msra.mxu0 %v3838
  %3877 = vmatmul.bf16.gmra.mxu0 %v2104
  %v3878 = vpop.f32.mrf.mxu0
  %v3879 = vadd.f32 0.0, %v3878
  %v3880 = vpop.f32.mrf.mxu0
  %3881 = vdwg.mxu0
  %v3882 = vmax.f32 %v3858, %v3879
  %v3883 = vpack.c.bf16 %v3882, %v3882
  %v3885 = vsel %vm2165, %v3883, 0
  %3887 = vmatpush.bf16.msra.mxu0 0
  %3888 = vmatpush.bf16.msra.mxu0 0
  %3889 = vmatpush.bf16.msra.mxu0 %v2158
  %3890 = vmatpush.bf16.msra.mxu0 %v2157
  %3891 = vmatpush.bf16.msra.mxu0 %v2156
  %3892 = vmatpush.bf16.msra.mxu0 %v2155
  %3893 = vmatpush.bf16.msra.mxu0 %v2154
  %3894 = vmatpush.bf16.msra.mxu0 %v2153
  %3895 = vmatmul.bf16.gmra.mxu0 %v3885
  %v3896 = vpop.f32.mrf.mxu0
  %v3897 = vadd.f32 0.0, %v3896
  %v3898 = vpop.f32.mrf.mxu0
  %3899 = vdwg.mxu0
  %v3900 = vadd.f32 %v374, %v3897
  %v3901 = vshrl.u32 %v3883, 16
  %v3904 = vsel %vm2165, %v3901, 0
  %3906 = vmatpush.bf16.msra.mxu0 0
  %3907 = vmatpush.bf16.msra.mxu0 0
  %3908 = vmatpush.bf16.msra.mxu0 %v2214
  %3909 = vmatpush.bf16.msra.mxu0 %v2213
  %3910 = vmatpush.bf16.msra.mxu0 %v2212
  %3911 = vmatpush.bf16.msra.mxu0 %v2211
  %3912 = vmatpush.bf16.msra.mxu0 %v2210
  %3913 = vmatpush.bf16.msra.mxu0 %v2209
  %3914 = vmatmul.bf16.gmra.mxu0 %v3904
  %v3915 = vpop.f32.mrf.mxu0
  %v3916 = vadd.f32 0.0, %v3915
  %v3917 = vpop.f32.mrf.mxu0
  %3918 = vdwg.mxu0
  %v3919 = vadd.f32 %v3900, %v3916
  %v3921 = vrot.slane %v3883, 1
  %v3923 = vsel %vm2165, %v3921, 0
  %3925 = vmatpush.bf16.msra.mxu0 0
  %3926 = vmatpush.bf16.msra.mxu0 0
  %3927 = vmatpush.bf16.msra.mxu0 %v2269
  %3928 = vmatpush.bf16.msra.mxu0 %v2268
  %3929 = vmatpush.bf16.msra.mxu0 %v2267
  %3930 = vmatpush.bf16.msra.mxu0 %v2266
  %3931 = vmatpush.bf16.msra.mxu0 %v2265
  %3932 = vmatpush.bf16.msra.mxu0 %v2264
  %3933 = vmatmul.bf16.gmra.mxu0 %v3923
  %v3934 = vpop.f32.mrf.mxu0
  %v3935 = vadd.f32 0.0, %v3934
  %v3936 = vpop.f32.mrf.mxu0
  %3937 = vdwg.mxu0
  %v3938 = vadd.f32 %v3919, %v3935
  %v3939 = vmax.f32 %v3938, 0.0
  %v3940 = vpack.c.bf16 %v3939, %v3939
  %v3942 = vsel %vm717, %v3940, 0
  %3944 = vmatpush.bf16.msra.mxu0 0
  %3945 = vmatpush.bf16.msra.mxu0 0
  %3946 = vmatpush.bf16.msra.mxu0 0
  %3947 = vmatpush.bf16.msra.mxu0 0
  %3948 = vmatpush.bf16.msra.mxu0 %v2314
  %3949 = vmatpush.bf16.msra.mxu0 %v2313
  %3950 = vmatpush.bf16.msra.mxu0 %v2312
  %3951 = vmatpush.bf16.msra.mxu0 %v2311
  %3952 = vmatmul.bf16.gmra.mxu0 %v3942
  %v3953 = vpop.f32.mrf.mxu0
  %v3954 = vadd.f32 %v383, %v3953
  %v3955 = vpop.f32.mrf.mxu0
  %3956 = vdwg.mxu0
  %s3957 = scalar_lea.vmem %s0, 96
  %v3958 = vld [vmem:[%s3957] sm:$0xff]
  %v3959 = vld [vmem:[%s3957 + $0x8] sm:$0xff]
  %v3960 = vld [vmem:[%s3957 + $0x10] sm:$0xff]
  %v3961 = vld [vmem:[%s3957 + $0x18] sm:$0x3]
  %v3962 = vpack.c.bf16 %v3959, %v3958
  %v3963 = vpack.c.bf16 %v3960, %v3960
  %v3965 = vsel %vm408, %v3962, 0
  %v3968 = vsel %vm408, %v3963, 0
  %3970 = vmatpush.bf16.msra.mxu0 0
  %3971 = vmatpush.bf16.msra.mxu0 0
  %3972 = vmatpush.bf16.msra.mxu0 0
  %3973 = vmatpush.bf16.msra.mxu0 0
  %3974 = vmatpush.bf16.msra.mxu0 0
  %3975 = vmatpush.bf16.msra.mxu0 0
  %3976 = vmatpush.bf16.msra.mxu0 %v417
  %3977 = vmatpush.bf16.msra.mxu0 %v402
  %3978 = vmatmul.bf16.gmra.mxu0 %v3965
  %v3979 = vpop.f32.mrf.mxu0
  %v3980 = vadd.f32 0.0, %v3979
  %v3981 = vpop.f32.mrf.mxu0
  %v3982 = vadd.f32 0.0, %v3981
  %3983 = vmatmul.bf16.gmra.mxu0 %v3968
  %v3984 = vpop.f32.mrf.mxu0
  %v3985 = vadd.f32 0.0, %v3984
  %v3986 = vpop.f32.mrf.mxu0
  %3987 = vdwg.mxu0
  %3988 = vmatpush.bf16.msra.mxu0 0
  %3989 = vmatpush.bf16.msra.mxu0 0
  %3990 = vmatpush.bf16.msra.mxu0 0
  %3991 = vmatpush.bf16.msra.mxu0 0
  %3992 = vmatpush.bf16.msra.mxu0 0
  %3993 = vmatpush.bf16.msra.mxu0 0
  %3994 = vmatpush.bf16.msra.mxu0 %v420
  %3995 = vmatpush.bf16.msra.mxu0 %v403
  %3996 = vmatmul.bf16.gmra.mxu0 %v3965
  %v3997 = vpop.f32.mrf.mxu0
  %v3998 = vadd.f32 0.0, %v3997
  %v3999 = vpop.f32.mrf.mxu0
  %v4000 = vadd.f32 0.0, %v3999
  %4001 = vmatmul.bf16.gmra.mxu0 %v3968
  %v4002 = vpop.f32.mrf.mxu0
  %v4003 = vadd.f32 0.0, %v4002
  %v4004 = vpop.f32.mrf.mxu0
  %4005 = vdwg.mxu0
  %v4006 = vadd.f32 %v459, %v3980
  %v4007 = vadd.f32 %v460, %v3998
  %v4008 = vadd.f32 %v459, %v3982
  %v4009 = vadd.f32 %v460, %v4000
  %v4010 = vadd.f32 %v459, %v3985
  %v4011 = vadd.f32 %v460, %v4003
  %v4012 = vpack.c.bf16 %v3961, %v3960
  %v4013 = vshrl.u32 %v3962, 16
  %v4015 = vshll.u32 %v3962, 16
  %v4017 = vrot.slane %v4015, 1
  %v4018 = vor.u32 %v4013, %v4017
  %v4020 = vshll.u32 %v4012, 16
  %v4022 = vrot.slane %v4020, 1
  %v4023 = vsel %vm470, %v4018, %v4022
  %v4024 = vshrl.u32 %v4012, 16
  %v4026 = vor.u32 %v4024, %v4022
  %v4028 = vsel %vm408, %v4023, 0
  %v4031 = vsel %vm408, %v4026, 0
  %4033 = vmatpush.bf16.msra.mxu0 0
  %4034 = vmatpush.bf16.msra.mxu0 0
  %4035 = vmatpush.bf16.msra.mxu0 0
  %4036 = vmatpush.bf16.msra.mxu0 0
  %4037 = vmatpush.bf16.msra.mxu0 0
  %4038 = vmatpush.bf16.msra.mxu0 0
  %4039 = vmatpush.bf16.msra.mxu0 %v510
  %4040 = vmatpush.bf16.msra.mxu0 %v497
  %4041 = vmatmul.bf16.gmra.mxu0 %v4028
  %v4042 = vpop.f32.mrf.mxu0
  %v4043 = vadd.f32 0.0, %v4042
  %v4044 = vpop.f32.mrf.mxu0
  %v4045 = vadd.f32 0.0, %v4044
  %4046 = vmatmul.bf16.gmra.mxu0 %v4031
  %v4047 = vpop.f32.mrf.mxu0
  %v4048 = vadd.f32 0.0, %v4047
  %v4049 = vpop.f32.mrf.mxu0
  %4050 = vdwg.mxu0
  %4051 = vmatpush.bf16.msra.mxu0 0
  %4052 = vmatpush.bf16.msra.mxu0 0
  %4053 = vmatpush.bf16.msra.mxu0 0
  %4054 = vmatpush.bf16.msra.mxu0 0
  %4055 = vmatpush.bf16.msra.mxu0 0
  %4056 = vmatpush.bf16.msra.mxu0 0
  %4057 = vmatpush.bf16.msra.mxu0 %v513
  %4058 = vmatpush.bf16.msra.mxu0 %v498
  %4059 = vmatmul.bf16.gmra.mxu0 %v4028
  %v4060 = vpop.f32.mrf.mxu0
  %v4061 = vadd.f32 0.0, %v4060
  %v4062 = vpop.f32.mrf.mxu0
  %v4063 = vadd.f32 0.0, %v4062
  %4064 = vmatmul.bf16.gmra.mxu0 %v4031
  %v4065 = vpop.f32.mrf.mxu0
  %v4066 = vadd.f32 0.0, %v4065
  %v4067 = vpop.f32.mrf.mxu0
  %4068 = vdwg.mxu0
  %v4069 = vadd.f32 %v4006, %v4043
  %v4070 = vadd.f32 %v4007, %v4061
  %v4071 = vadd.f32 %v4008, %v4045
  %v4072 = vadd.f32 %v4009, %v4063
  %v4073 = vadd.f32 %v4010, %v4048
  %v4074 = vadd.f32 %v4011, %v4066
  %v4077 = vrot.slane %v3962, 1
  %v4078 = vrot.slane %v4012, 1
  %v4079 = vsel %vm559, %v4077, %v4078
  %v4081 = vsel %vm408, %v4079, 0
  %v4084 = vsel %vm408, %v4078, 0
  %4086 = vmatpush.bf16.msra.mxu0 0
  %4087 = vmatpush.bf16.msra.mxu0 0
  %4088 = vmatpush.bf16.msra.mxu0 0
  %4089 = vmatpush.bf16.msra.mxu0 0
  %4090 = vmatpush.bf16.msra.mxu0 0
  %4091 = vmatpush.bf16.msra.mxu0 0
  %4092 = vmatpush.bf16.msra.mxu0 %v588
  %4093 = vmatpush.bf16.msra.mxu0 %v575
  %4094 = vmatmul.bf16.gmra.mxu0 %v4081
  %v4095 = vpop.f32.mrf.mxu0
  %v4096 = vadd.f32 0.0, %v4095
  %v4097 = vpop.f32.mrf.mxu0
  %v4098 = vadd.f32 0.0, %v4097
  %4099 = vmatmul.bf16.gmra.mxu0 %v4084
  %v4100 = vpop.f32.mrf.mxu0
  %v4101 = vadd.f32 0.0, %v4100
  %v4102 = vpop.f32.mrf.mxu0
  %4103 = vdwg.mxu0
  %4104 = vmatpush.bf16.msra.mxu0 0
  %4105 = vmatpush.bf16.msra.mxu0 0
  %4106 = vmatpush.bf16.msra.mxu0 0
  %4107 = vmatpush.bf16.msra.mxu0 0
  %4108 = vmatpush.bf16.msra.mxu0 0
  %4109 = vmatpush.bf16.msra.mxu0 0
  %4110 = vmatpush.bf16.msra.mxu0 %v591
  %4111 = vmatpush.bf16.msra.mxu0 %v576
  %4112 = vmatmul.bf16.gmra.mxu0 %v4081
  %v4113 = vpop.f32.mrf.mxu0
  %v4114 = vadd.f32 0.0, %v4113
  %v4115 = vpop.f32.mrf.mxu0
  %v4116 = vadd.f32 0.0, %v4115
  %4117 = vmatmul.bf16.gmra.mxu0 %v4084
  %v4118 = vpop.f32.mrf.mxu0
  %v4119 = vadd.f32 0.0, %v4118
  %v4120 = vpop.f32.mrf.mxu0
  %4121 = vdwg.mxu0
  %v4122 = vadd.f32 %v4069, %v4096
  %v4123 = vadd.f32 %v4070, %v4114
  %v4124 = vadd.f32 %v4071, %v4098
  %v4125 = vadd.f32 %v4072, %v4116
  %v4126 = vadd.f32 %v4073, %v4101
  %v4127 = vadd.f32 %v4074, %v4119
  %v4128 = vmax.f32 %v4122, 0.0
  %v4129 = vmax.f32 %v4123, 0.0
  %v4130 = vmax.f32 %v4124, 0.0
  %v4131 = vmax.f32 %v4125, 0.0
  %v4132 = vmax.f32 %v4126, 0.0
  %v4133 = vmax.f32 %v4127, 0.0
  %v4134 = vpack.c.bf16 %v4130, %v4128
  %v4135 = vpack.c.bf16 %v4131, %v4129
  %v4136 = vpack.c.bf16 %v4132, %v4132
  %v4137 = vpack.c.bf16 %v4133, %v4133
  %v4139 = vsel %vm717, %v4135, 0
  %v4142 = vsel %vm717, %v4137, 0
  %4144 = vmatpush.bf16.msra.mxu0 %v700
  %4145 = vmatpush.bf16.msra.mxu0 %v699
  %4146 = vmatpush.bf16.msra.mxu0 %v698
  %4147 = vmatpush.bf16.msra.mxu0 %v697
  %4148 = vmatpush.bf16.msra.mxu0 %v696
  %4149 = vmatpush.bf16.msra.mxu0 %v695
  %4150 = vmatpush.bf16.msra.mxu0 %v694
  %4151 = vmatpush.bf16.msra.mxu0 %v693
  %4152 = vmatmul.bf16.gmra.mxu0 %v4134
  %v4153 = vpop.f32.mrf.mxu0
  %v4154 = vadd.f32 0.0, %v4153
  %v4155 = vpop.f32.mrf.mxu0
  %v4156 = vadd.f32 0.0, %v4155
  %4157 = vmatmul.bf16.gmra.mxu0 %v4136
  %v4158 = vpop.f32.mrf.mxu0
  %v4159 = vadd.f32 0.0, %v4158
  %v4160 = vpop.f32.mrf.mxu0
  %4161 = vdwg.mxu0
  %4162 = vmatpush.bf16.msra.mxu0 0
  %4163 = vmatpush.bf16.msra.mxu0 0
  %4164 = vmatpush.bf16.msra.mxu0 0
  %4165 = vmatpush.bf16.msra.mxu0 0
  %4166 = vmatpush.bf16.msra.mxu0 %v704
  %4167 = vmatpush.bf16.msra.mxu0 %v703
  %4168 = vmatpush.bf16.msra.mxu0 %v702
  %4169 = vmatpush.bf16.msra.mxu0 %v701
  %4170 = vmatmul.bf16.gmra.mxu0 %v4139
  %v4171 = vpop.f32.mrf.mxu0
  %v4172 = vadd.f32 %v4154, %v4171
  %v4173 = vpop.f32.mrf.mxu0
  %v4174 = vadd.f32 %v4156, %v4173
  %4175 = vmatmul.bf16.gmra.mxu0 %v4142
  %v4176 = vpop.f32.mrf.mxu0
  %v4177 = vadd.f32 %v4159, %v4176
  %v4178 = vpop.f32.mrf.mxu0
  %4179 = vdwg.mxu0
  %4180 = vmatpush.bf16.msra.mxu0 %v815
  %4181 = vmatpush.bf16.msra.mxu0 %v814
  %4182 = vmatpush.bf16.msra.mxu0 %v813
  %4183 = vmatpush.bf16.msra.mxu0 %v812
  %4184 = vmatpush.bf16.msra.mxu0 %v811
  %4185 = vmatpush.bf16.msra.mxu0 %v810
  %4186 = vmatpush.bf16.msra.mxu0 %v809
  %4187 = vmatpush.bf16.msra.mxu0 %v808
  %4188 = vmatmul.bf16.gmra.mxu0 %v4134
  %v4189 = vpop.f32.mrf.mxu0
  %v4190 = vadd.f32 0.0, %v4189
  %v4191 = vpop.f32.mrf.mxu0
  %v4192 = vadd.f32 0.0, %v4191
  %4193 = vmatmul.bf16.gmra.mxu0 %v4136
  %v4194 = vpop.f32.mrf.mxu0
  %v4195 = vadd.f32 0.0, %v4194
  %v4196 = vpop.f32.mrf.mxu0
  %4197 = vdwg.mxu0
  %4198 = vmatpush.bf16.msra.mxu0 0
  %4199 = vmatpush.bf16.msra.mxu0 0
  %4200 = vmatpush.bf16.msra.mxu0 0
  %4201 = vmatpush.bf16.msra.mxu0 0
  %4202 = vmatpush.bf16.msra.mxu0 %v819
  %4203 = vmatpush.bf16.msra.mxu0 %v818
  %4204 = vmatpush.bf16.msra.mxu0 %v817
  %4205 = vmatpush.bf16.msra.mxu0 %v816
  %4206 = vmatmul.bf16.gmra.mxu0 %v4139
  %v4207 = vpop.f32.mrf.mxu0
  %v4208 = vadd.f32 %v4190, %v4207
  %v4209 = vpop.f32.mrf.mxu0
  %v4210 = vadd.f32 %v4192, %v4209
  %4211 = vmatmul.bf16.gmra.mxu0 %v4142
  %v4212 = vpop.f32.mrf.mxu0
  %v4213 = vadd.f32 %v4195, %v4212
  %v4214 = vpop.f32.mrf.mxu0
  %4215 = vdwg.mxu0
  %v4216 = vmax.f32 %v4172, %v4208
  %v4217 = vmax.f32 %v4174, %v4210
  %v4218 = vmax.f32 %v4177, %v4213
  %4219 = vmatpush.msra.mxu0 0.0
  %4220 = vmatpush.msra.mxu0 0.0
  %4221 = vmatpush.msra.mxu0 0.0
  %4222 = vmatpush.msra.mxu0 0.0
  %4223 = vmatpush.msra.mxu0 0.0
  %4224 = vmatpush.msra.mxu0 0.0
  %4225 = vmatpush.msra.mxu0 0.0
  %4226 = vmatpush.msra.mxu0 0.0
  %4227 = vmatpush.msra.mxu0 0.0
  %4228 = vmatpush.msra.mxu0 0.0
  %4229 = vmatpush.msra.mxu0 0.0
  %4230 = vmatpush.msra.mxu0 0.0
  %4231 = vmatpush.msra.mxu0 0.0
  %4232 = vmatpush.msra.mxu0 %v4218
  %4233 = vmatpush.msra.mxu0 %v4217
  %4234 = vmatpush.msra.mxu0 %v4216
  %4235 = vmatmul.bf16.gmra.mxu0 %v878
  %v4236 = vpop.f32.mrf.mxu0
  %v4237 = vadd.f32 0.0, %v4236
  %v4238 = vpop.f32.mrf.mxu0
  %v4239 = vadd.f32 0.0, %v4238
  %4240 = vdwg.mxu0
  %4241 = vmatpush.msra.mxu0 0.0
  %4242 = vmatpush.msra.mxu0 0.0
  %4243 = vmatpush.msra.mxu0 0.0
  %4244 = vmatpush.msra.mxu0 0.0
  %4245 = vmatpush.msra.mxu0 0.0
  %4246 = vmatpush.msra.mxu0 0.0
  %4247 = vmatpush.msra.mxu0 0.0
  %4248 = vmatpush.msra.mxu0 0.0
  %4249 = vmatpush.msra.mxu0 0.0
  %4250 = vmatpush.msra.mxu0 0.0
  %4251 = vmatpush.msra.mxu0 0.0
  %4252 = vmatpush.msra.mxu0 0.0
  %4253 = vmatpush.msra.mxu0 0.0
  %4254 = vmatpush.msra.mxu0 %v4218
  %4255 = vmatpush.msra.mxu0 %v4217
  %4256 = vmatpush.msra.mxu0 %v4216
  %4257 = vmatmul.bf16.gmra.mxu0 %v908
  %v4258 = vpop.f32.mrf.mxu0
  %v4259 = vadd.f32 0.0, %v4258
  %v4260 = vpop.f32.mrf.mxu0
  %v4261 = vadd.f32 0.0, %v4260
  %4262 = vdwg.mxu0
  %v4263 = vmax.f32 %v4237, %v4259
  %v4264 = vmax.f32 %v4239, %v4261
  %v4265 = vpack.c.bf16 %v4264, %v4263
  %v4267 = vsel %vm1005, %v4265, 0
  %4269 = vmatpush.bf16.msra.mxu0 0
  %4270 = vmatpush.bf16.msra.mxu0 %v989
  %4271 = vmatpush.bf16.msra.mxu0 %v987
  %4272 = vmatpush.bf16.msra.mxu0 %v985
  %4273 = vmatpush.bf16.msra.mxu0 %v983
  %4274 = vmatpush.bf16.msra.mxu0 %v981
  %4275 = vmatpush.bf16.msra.mxu0 %v979
  %4276 = vmatpush.bf16.msra.mxu0 %v977
  %4277 = vmatmul.bf16.gmra.mxu0 %v4267
  %v4278 = vpop.f32.mrf.mxu0
  %v4279 = vadd.f32 0.0, %v4278
  %v4280 = vpop.f32.mrf.mxu0
  %v4281 = vadd.f32 0.0, %v4280
  %4282 = vdwg.mxu0
  %4283 = vmatpush.bf16.msra.mxu0 0
  %4284 = vmatpush.bf16.msra.mxu0 %v990
  %4285 = vmatpush.bf16.msra.mxu0 %v988
  %4286 = vmatpush.bf16.msra.mxu0 %v986
  %4287 = vmatpush.bf16.msra.mxu0 %v984
  %4288 = vmatpush.bf16.msra.mxu0 %v982
  %4289 = vmatpush.bf16.msra.mxu0 %v980
  %4290 = vmatpush.bf16.msra.mxu0 %v978
  %4291 = vmatmul.bf16.gmra.mxu0 %v4267
  %v4292 = vpop.f32.mrf.mxu0
  %v4293 = vadd.f32 0.0, %v4292
  %v4294 = vpop.f32.mrf.mxu0
  %v4295 = vadd.f32 0.0, %v4294
  %4296 = vdwg.mxu0
  %v4297 = vadd.f32 %v1038, %v4279
  %v4298 = vadd.f32 %v1039, %v4293
  %v4299 = vadd.f32 %v1038, %v4281
  %v4300 = vadd.f32 %v1039, %v4295
  %v4301 = vshrl.u32 %v4265, 16
  %v4303 = vshll.u32 %v4265, 16
  %v4305 = vrot.slane %v4303, 1
  %v4306 = vor.u32 %v4301, %v4305
  %v4308 = vsel %vm1005, %v4306, 0
  %4310 = vmatpush.bf16.msra.mxu0 0
  %4311 = vmatpush.bf16.msra.mxu0 %v1106
  %4312 = vmatpush.bf16.msra.mxu0 %v1104
  %4313 = vmatpush.bf16.msra.mxu0 %v1102
  %4314 = vmatpush.bf16.msra.mxu0 %v1100
  %4315 = vmatpush.bf16.msra.mxu0 %v1098
  %4316 = vmatpush.bf16.msra.mxu0 %v1096
  %4317 = vmatpush.bf16.msra.mxu0 %v1094
  %4318 = vmatmul.bf16.gmra.mxu0 %v4308
  %v4319 = vpop.f32.mrf.mxu0
  %v4320 = vadd.f32 0.0, %v4319
  %v4321 = vpop.f32.mrf.mxu0
  %v4322 = vadd.f32 0.0, %v4321
  %4323 = vdwg.mxu0
  %4324 = vmatpush.bf16.msra.mxu0 0
  %4325 = vmatpush.bf16.msra.mxu0 %v1107
  %4326 = vmatpush.bf16.msra.mxu0 %v1105
  %4327 = vmatpush.bf16.msra.mxu0 %v1103
  %4328 = vmatpush.bf16.msra.mxu0 %v1101
  %4329 = vmatpush.bf16.msra.mxu0 %v1099
  %4330 = vmatpush.bf16.msra.mxu0 %v1097
  %4331 = vmatpush.bf16.msra.mxu0 %v1095
  %4332 = vmatmul.bf16.gmra.mxu0 %v4308
  %v4333 = vpop.f32.mrf.mxu0
  %v4334 = vadd.f32 0.0, %v4333
  %v4335 = vpop.f32.mrf.mxu0
  %v4336 = vadd.f32 0.0, %v4335
  %4337 = vdwg.mxu0
  %v4338 = vadd.f32 %v4297, %v4320
  %v4339 = vadd.f32 %v4298, %v4334
  %v4340 = vadd.f32 %v4299, %v4322
  %v4341 = vadd.f32 %v4300, %v4336
  %v4343 = vrot.slane %v4265, 1
  %v4345 = vsel %vm1005, %v4343, 0
  %4347 = vmatpush.bf16.msra.mxu0 0
  %4348 = vmatpush.bf16.msra.mxu0 %v1213
  %4349 = vmatpush.bf16.msra.mxu0 %v1211
  %4350 = vmatpush.bf16.msra.mxu0 %v1209
  %4351 = vmatpush.bf16.msra.mxu0 %v1207
  %4352 = vmatpush.bf16.msra.mxu0 %v1205
  %4353 = vmatpush.bf16.msra.mxu0 %v1203
  %4354 = vmatpush.bf16.msra.mxu0 %v1201
  %4355 = vmatmul.bf16.gmra.mxu0 %v4345
  %v4356 = vpop.f32.mrf.mxu0
  %v4357 = vadd.f32 0.0, %v4356
  %v4358 = vpop.f32.mrf.mxu0
  %v4359 = vadd.f32 0.0, %v4358
  %4360 = vdwg.mxu0
  %4361 = vmatpush.bf16.msra.mxu0 0
  %4362 = vmatpush.bf16.msra.mxu0 %v1214
  %4363 = vmatpush.bf16.msra.mxu0 %v1212
  %4364 = vmatpush.bf16.msra.mxu0 %v1210
  %4365 = vmatpush.bf16.msra.mxu0 %v1208
  %4366 = vmatpush.bf16.msra.mxu0 %v1206
  %4367 = vmatpush.bf16.msra.mxu0 %v1204
  %4368 = vmatpush.bf16.msra.mxu0 %v1202
  %4369 = vmatmul.bf16.gmra.mxu0 %v4345
  %v4370 = vpop.f32.mrf.mxu0
  %v4371 = vadd.f32 0.0, %v4370
  %v4372 = vpop.f32.mrf.mxu0
  %v4373 = vadd.f32 0.0, %v4372
  %4374 = vdwg.mxu0
  %v4375 = vadd.f32 %v4338, %v4357
  %v4376 = vadd.f32 %v4339, %v4371
  %v4377 = vadd.f32 %v4340, %v4359
  %v4378 = vadd.f32 %v4341, %v4373
  %v4379 = vmax.f32 %v4375, 0.0
  %v4380 = vmax.f32 %v4376, 0.0
  %v4381 = vmax.f32 %v4377, 0.0
  %v4382 = vmax.f32 %v4378, 0.0
  %v4383 = vpack.c.bf16 %v4381, %v4379
  %v4384 = vpack.c.bf16 %v4382, %v4380
  %v4386 = vsel %vm717, %v4384, 0
  %4388 = vmatpush.bf16.msra.mxu0 %v1325
  %4389 = vmatpush.bf16.msra.mxu0 %v1324
  %4390 = vmatpush.bf16.msra.mxu0 %v1323
  %4391 = vmatpush.bf16.msra.mxu0 %v1322
  %4392 = vmatpush.bf16.msra.mxu0 %v1321
  %4393 = vmatpush.bf16.msra.mxu0 %v1320
  %4394 = vmatpush.bf16.msra.mxu0 %v1319
  %4395 = vmatpush.bf16.msra.mxu0 %v1318
  %4396 = vmatmul.bf16.gmra.mxu0 %v4383
  %v4397 = vpop.f32.mrf.mxu0
  %v4398 = vadd.f32 0.0, %v4397
  %v4399 = vpop.f32.mrf.mxu0
  %v4400 = vadd.f32 0.0, %v4399
  %4401 = vdwg.mxu0
  %4402 = vmatpush.bf16.msra.mxu0 0
  %4403 = vmatpush.bf16.msra.mxu0 0
  %4404 = vmatpush.bf16.msra.mxu0 0
  %4405 = vmatpush.bf16.msra.mxu0 0
  %4406 = vmatpush.bf16.msra.mxu0 %v1329
  %4407 = vmatpush.bf16.msra.mxu0 %v1328
  %4408 = vmatpush.bf16.msra.mxu0 %v1327
  %4409 = vmatpush.bf16.msra.mxu0 %v1326
  %4410 = vmatmul.bf16.gmra.mxu0 %v4386
  %v4411 = vpop.f32.mrf.mxu0
  %v4412 = vadd.f32 %v4398, %v4411
  %v4413 = vpop.f32.mrf.mxu0
  %v4414 = vadd.f32 %v4400, %v4413
  %4415 = vdwg.mxu0
  %4416 = vmatpush.bf16.msra.mxu0 %v1428
  %4417 = vmatpush.bf16.msra.mxu0 %v1427
  %4418 = vmatpush.bf16.msra.mxu0 %v1426
  %4419 = vmatpush.bf16.msra.mxu0 %v1425
  %4420 = vmatpush.bf16.msra.mxu0 %v1424
  %4421 = vmatpush.bf16.msra.mxu0 %v1423
  %4422 = vmatpush.bf16.msra.mxu0 %v1422
  %4423 = vmatpush.bf16.msra.mxu0 %v1421
  %4424 = vmatmul.bf16.gmra.mxu0 %v4383
  %v4425 = vpop.f32.mrf.mxu0
  %v4426 = vadd.f32 0.0, %v4425
  %v4427 = vpop.f32.mrf.mxu0
  %v4428 = vadd.f32 0.0, %v4427
  %4429 = vdwg.mxu0
  %4430 = vmatpush.bf16.msra.mxu0 0
  %4431 = vmatpush.bf16.msra.mxu0 0
  %4432 = vmatpush.bf16.msra.mxu0 0
  %4433 = vmatpush.bf16.msra.mxu0 0
  %4434 = vmatpush.bf16.msra.mxu0 %v1432
  %4435 = vmatpush.bf16.msra.mxu0 %v1431
  %4436 = vmatpush.bf16.msra.mxu0 %v1430
  %4437 = vmatpush.bf16.msra.mxu0 %v1429
  %4438 = vmatmul.bf16.gmra.mxu0 %v4386
  %v4439 = vpop.f32.mrf.mxu0
  %v4440 = vadd.f32 %v4426, %v4439
  %v4441 = vpop.f32.mrf.mxu0
  %v4442 = vadd.f32 %v4428, %v4441
  %4443 = vdwg.mxu0
  %v4444 = vmax.f32 %v4412, %v4440
  %v4445 = vmax.f32 %v4414, %v4442
  %v4447 = vsel %vm1479, %v4445, 0
  %4449 = vmatpush.msra.mxu0 0.0
  %4450 = vmatpush.msra.mxu0 0.0
  %4451 = vmatpush.msra.mxu0 0.0
  %4452 = vmatpush.msra.mxu0 0.0
  %4453 = vmatpush.msra.mxu0 0.0
  %4454 = vmatpush.msra.mxu0 0.0
  %4455 = vmatpush.msra.mxu0 0.0
  %4456 = vmatpush.msra.mxu0 0.0
  %4457 = vmatpush.msra.mxu0 0.0
  %4458 = vmatpush.msra.mxu0 0.0
  %4459 = vmatpush.msra.mxu0 0.0
  %4460 = vmatpush.msra.mxu0 0.0
  %4461 = vmatpush.msra.mxu0 0.0
  %4462 = vmatpush.msra.mxu0 0.0
  %4463 = vmatpush.msra.mxu0 %v4447
  %4464 = vmatpush.msra.mxu0 %v4444
  %4465 = vmatmul.bf16.gmra.mxu0 %v1477
  %v4466 = vpop.f32.mrf.mxu0
  %v4467 = vadd.f32 0.0, %v4466
  %v4468 = vpop.f32.mrf.mxu0
  %4469 = vdwg.mxu0
  %4470 = vmatpush.msra.mxu0 0.0
  %4471 = vmatpush.msra.mxu0 0.0
  %4472 = vmatpush.msra.mxu0 0.0
  %4473 = vmatpush.msra.mxu0 0.0
  %4474 = vmatpush.msra.mxu0 0.0
  %4475 = vmatpush.msra.mxu0 0.0
  %4476 = vmatpush.msra.mxu0 0.0
  %4477 = vmatpush.msra.mxu0 0.0
  %4478 = vmatpush.msra.mxu0 0.0
  %4479 = vmatpush.msra.mxu0 0.0
  %4480 = vmatpush.msra.mxu0 0.0
  %4481 = vmatpush.msra.mxu0 0.0
  %4482 = vmatpush.msra.mxu0 0.0
  %4483 = vmatpush.msra.mxu0 0.0
  %4484 = vmatpush.msra.mxu0 %v4447
  %4485 = vmatpush.msra.mxu0 %v4444
  %4486 = vmatmul.bf16.gmra.mxu0 %v1505
  %v4487 = vpop.f32.mrf.mxu0
  %v4488 = vadd.f32 0.0, %v4487
  %v4489 = vpop.f32.mrf.mxu0
  %4490 = vdwg.mxu0
  %v4491 = vmax.f32 %v4467, %v4488
  %v4492 = vpack.c.bf16 %v4491, %v4491
  %4493 = vmatpush.bf16.msra.mxu0 %v1592
  %4494 = vmatpush.bf16.msra.mxu0 %v1590
  %4495 = vmatpush.bf16.msra.mxu0 %v1588
  %4496 = vmatpush.bf16.msra.mxu0 %v1586
  %4497 = vmatpush.bf16.msra.mxu0 %v1584
  %4498 = vmatpush.bf16.msra.mxu0 %v1582
  %4499 = vmatpush.bf16.msra.mxu0 %v1580
  %4500 = vmatpush.bf16.msra.mxu0 %v1578
  %4501 = vmatmul.bf16.gmra.mxu0 %v4492
  %v4502 = vpop.f32.mrf.mxu0
  %v4503 = vadd.f32 0.0, %v4502
  %v4504 = vpop.f32.mrf.mxu0
  %4505 = vdwg.mxu0
  %4506 = vmatpush.bf16.msra.mxu0 %v1593
  %4507 = vmatpush.bf16.msra.mxu0 %v1591
  %4508 = vmatpush.bf16.msra.mxu0 %v1589
  %4509 = vmatpush.bf16.msra.mxu0 %v1587
  %4510 = vmatpush.bf16.msra.mxu0 %v1585
  %4511 = vmatpush.bf16.msra.mxu0 %v1583
  %4512 = vmatpush.bf16.msra.mxu0 %v1581
  %4513 = vmatpush.bf16.msra.mxu0 %v1579
  %4514 = vmatmul.bf16.gmra.mxu0 %v4492
  %v4515 = vpop.f32.mrf.mxu0
  %v4516 = vadd.f32 0.0, %v4515
  %v4517 = vpop.f32.mrf.mxu0
  %4518 = vdwg.mxu0
  %v4519 = vadd.f32 %v1637, %v4503
  %v4520 = vadd.f32 %v1638, %v4516
  %v4522 = vshrl.u32 %v4492, 16
  %v4524 = vshll.u32 %v4492, 16
  %v4526 = vrot.slane %v4524, 1
  %v4527 = vor.u32 %v4522, %v4526
  %4529 = vmatpush.bf16.msra.mxu0 %v1713
  %4530 = vmatpush.bf16.msra.mxu0 %v1711
  %4531 = vmatpush.bf16.msra.mxu0 %v1709
  %4532 = vmatpush.bf16.msra.mxu0 %v1707
  %4533 = vmatpush.bf16.msra.mxu0 %v1705
  %4534 = vmatpush.bf16.msra.mxu0 %v1703
  %4535 = vmatpush.bf16.msra.mxu0 %v1701
  %4536 = vmatpush.bf16.msra.mxu0 %v1699
  %4537 = vmatmul.bf16.gmra.mxu0 %v4527
  %v4538 = vpop.f32.mrf.mxu0
  %v4539 = vadd.f32 0.0, %v4538
  %v4540 = vpop.f32.mrf.mxu0
  %4541 = vdwg.mxu0
  %4542 = vmatpush.bf16.msra.mxu0 %v1714
  %4543 = vmatpush.bf16.msra.mxu0 %v1712
  %4544 = vmatpush.bf16.msra.mxu0 %v1710
  %4545 = vmatpush.bf16.msra.mxu0 %v1708
  %4546 = vmatpush.bf16.msra.mxu0 %v1706
  %4547 = vmatpush.bf16.msra.mxu0 %v1704
  %4548 = vmatpush.bf16.msra.mxu0 %v1702
  %4549 = vmatpush.bf16.msra.mxu0 %v1700
  %4550 = vmatmul.bf16.gmra.mxu0 %v4527
  %v4551 = vpop.f32.mrf.mxu0
  %v4552 = vadd.f32 0.0, %v4551
  %v4553 = vpop.f32.mrf.mxu0
  %4554 = vdwg.mxu0
  %v4555 = vadd.f32 %v4519, %v4539
  %v4556 = vadd.f32 %v4520, %v4552
  %v4558 = vrot.slane %v4492, 1
  %4560 = vmatpush.bf16.msra.mxu0 %v1824
  %4561 = vmatpush.bf16.msra.mxu0 %v1822
  %4562 = vmatpush.bf16.msra.mxu0 %v1820
  %4563 = vmatpush.bf16.msra.mxu0 %v1818
  %4564 = vmatpush.bf16.msra.mxu0 %v1816
  %4565 = vmatpush.bf16.msra.mxu0 %v1814
  %4566 = vmatpush.bf16.msra.mxu0 %v1812
  %4567 = vmatpush.bf16.msra.mxu0 %v1810
  %4568 = vmatmul.bf16.gmra.mxu0 %v4558
  %v4569 = vpop.f32.mrf.mxu0
  %v4570 = vadd.f32 0.0, %v4569
  %v4571 = vpop.f32.mrf.mxu0
  %4572 = vdwg.mxu0
  %4573 = vmatpush.bf16.msra.mxu0 %v1825
  %4574 = vmatpush.bf16.msra.mxu0 %v1823
  %4575 = vmatpush.bf16.msra.mxu0 %v1821
  %4576 = vmatpush.bf16.msra.mxu0 %v1819
  %4577 = vmatpush.bf16.msra.mxu0 %v1817
  %4578 = vmatpush.bf16.msra.mxu0 %v1815
  %4579 = vmatpush.bf16.msra.mxu0 %v1813
  %4580 = vmatpush.bf16.msra.mxu0 %v1811
  %4581 = vmatmul.bf16.gmra.mxu0 %v4558
  %v4582 = vpop.f32.mrf.mxu0
  %v4583 = vadd.f32 0.0, %v4582
  %v4584 = vpop.f32.mrf.mxu0
  %4585 = vdwg.mxu0
  %v4586 = vadd.f32 %v4555, %v4570
  %v4587 = vadd.f32 %v4556, %v4583
  %v4588 = vmax.f32 %v4586, 0.0
  %v4589 = vmax.f32 %v4587, 0.0
  %v4590 = vpack.c.bf16 %v4588, %v4588
  %v4591 = vpack.c.bf16 %v4589, %v4589
  %v4593 = vsel %vm717, %v4591, 0
  %4595 = vmatpush.bf16.msra.mxu0 %v1929
  %4596 = vmatpush.bf16.msra.mxu0 %v1928
  %4597 = vmatpush.bf16.msra.mxu0 %v1927
  %4598 = vmatpush.bf16.msra.mxu0 %v1926
  %4599 = vmatpush.bf16.msra.mxu0 %v1925
  %4600 = vmatpush.bf16.msra.mxu0 %v1924
  %4601 = vmatpush.bf16.msra.mxu0 %v1923
  %4602 = vmatpush.bf16.msra.mxu0 %v1922
  %4603 = vmatmul.bf16.gmra.mxu0 %v4590
  %v4604 = vpop.f32.mrf.mxu0
  %v4605 = vadd.f32 0.0, %v4604
  %v4606 = vpop.f32.mrf.mxu0
  %4607 = vdwg.mxu0
  %4608 = vmatpush.bf16.msra.mxu0 0
  %4609 = vmatpush.bf16.msra.mxu0 0
  %4610 = vmatpush.bf16.msra.mxu0 0
  %4611 = vmatpush.bf16.msra.mxu0 0
  %4612 = vmatpush.bf16.msra.mxu0 %v1933
  %4613 = vmatpush.bf16.msra.mxu0 %v1932
  %4614 = vmatpush.bf16.msra.mxu0 %v1931
  %4615 = vmatpush.bf16.msra.mxu0 %v1930
  %4616 = vmatmul.bf16.gmra.mxu0 %v4593
  %v4617 = vpop.f32.mrf.mxu0
  %v4618 = vadd.f32 %v4605, %v4617
  %v4619 = vpop.f32.mrf.mxu0
  %4620 = vdwg.mxu0
  %4621 = vmatpush.bf16.msra.mxu0 %v2030
  %4622 = vmatpush.bf16.msra.mxu0 %v2029
  %4623 = vmatpush.bf16.msra.mxu0 %v2028
  %4624 = vmatpush.bf16.msra.mxu0 %v2027
  %4625 = vmatpush.bf16.msra.mxu0 %v2026
  %4626 = vmatpush.bf16.msra.mxu0 %v2025
  %4627 = vmatpush.bf16.msra.mxu0 %v2024
  %4628 = vmatpush.bf16.msra.mxu0 %v2023
  %4629 = vmatmul.bf16.gmra.mxu0 %v4590
  %v4630 = vpop.f32.mrf.mxu0
  %v4631 = vadd.f32 0.0, %v4630
  %v4632 = vpop.f32.mrf.mxu0
  %4633 = vdwg.mxu0
  %4634 = vmatpush.bf16.msra.mxu0 0
  %4635 = vmatpush.bf16.msra.mxu0 0
  %4636 = vmatpush.bf16.msra.mxu0 0
  %4637 = vmatpush.bf16.msra.mxu0 0
  %4638 = vmatpush.bf16.msra.mxu0 %v2034
  %4639 = vmatpush.bf16.msra.mxu0 %v2033
  %4640 = vmatpush.bf16.msra.mxu0 %v2032
  %4641 = vmatpush.bf16.msra.mxu0 %v2031
  %4642 = vmatmul.bf16.gmra.mxu0 %v4593
  %v4643 = vpop.f32.mrf.mxu0
  %v4644 = vadd.f32 %v4631, %v4643
  %v4645 = vpop.f32.mrf.mxu0
  %4646 = vdwg.mxu0
  %v4647 = vmax.f32 %v4618, %v4644
  %v4649 = vsel %vm2078, %v4647, 0
  %4651 = vmatpush.msra.mxu0 0.0
  %4652 = vmatpush.msra.mxu0 0.0
  %4653 = vmatpush.msra.mxu0 0.0
  %4654 = vmatpush.msra.mxu0 0.0
  %4655 = vmatpush.msra.mxu0 0.0
  %4656 = vmatpush.msra.mxu0 0.0
  %4657 = vmatpush.msra.mxu0 0.0
  %4658 = vmatpush.msra.mxu0 0.0
  %4659 = vmatpush.msra.mxu0 0.0
  %4660 = vmatpush.msra.mxu0 0.0
  %4661 = vmatpush.msra.mxu0 0.0
  %4662 = vmatpush.msra.mxu0 0.0
  %4663 = vmatpush.msra.mxu0 0.0
  %4664 = vmatpush.msra.mxu0 0.0
  %4665 = vmatpush.msra.mxu0 0.0
  %4666 = vmatpush.msra.mxu0 %v4649
  %4667 = vmatmul.bf16.gmra.mxu0 %v2076
  %v4668 = vpop.f32.mrf.mxu0
  %v4669 = vadd.f32 0.0, %v4668
  %v4670 = vpop.f32.mrf.mxu0
  %4671 = vdwg.mxu0
  %4672 = vmatpush.msra.mxu0 0.0
  %4673 = vmatpush.msra.mxu0 0.0
  %4674 = vmatpush.msra.mxu0 0.0
  %4675 = vmatpush.msra.mxu0 0.0
  %4676 = vmatpush.msra.mxu0 0.0
  %4677 = vmatpush.msra.mxu0 0.0
  %4678 = vmatpush.msra.mxu0 0.0
  %4679 = vmatpush.msra.mxu0 0.0
  %4680 = vmatpush.msra.mxu0 0.0
  %4681 = vmatpush.msra.mxu0 0.0
  %4682 = vmatpush.msra.mxu0 0.0
  %4683 = vmatpush.msra.mxu0 0.0
  %4684 = vmatpush.msra.mxu0 0.0
  %4685 = vmatpush.msra.mxu0 0.0
  %4686 = vmatpush.msra.mxu0 0.0
  %4687 = vmatpush.msra.mxu0 %v4649
  %4688 = vmatmul.bf16.gmra.mxu0 %v2104
  %v4689 = vpop.f32.mrf.mxu0
  %v4690 = vadd.f32 0.0, %v4689
  %v4691 = vpop.f32.mrf.mxu0
  %4692 = vdwg.mxu0
  %v4693 = vmax.f32 %v4669, %v4690
  %v4694 = vpack.c.bf16 %v4693, %v4693
  %v4696 = vsel %vm2165, %v4694, 0
  %4698 = vmatpush.bf16.msra.mxu0 0
  %4699 = vmatpush.bf16.msra.mxu0 0
  %4700 = vmatpush.bf16.msra.mxu0 %v2158
  %4701 = vmatpush.bf16.msra.mxu0 %v2157
  %4702 = vmatpush.bf16.msra.mxu0 %v2156
  %4703 = vmatpush.bf16.msra.mxu0 %v2155
  %4704 = vmatpush.bf16.msra.mxu0 %v2154
  %4705 = vmatpush.bf16.msra.mxu0 %v2153
  %4706 = vmatmul.bf16.gmra.mxu0 %v4696
  %v4707 = vpop.f32.mrf.mxu0
  %v4708 = vadd.f32 0.0, %v4707
  %v4709 = vpop.f32.mrf.mxu0
  %4710 = vdwg.mxu0
  %v4711 = vadd.f32 %v374, %v4708
  %v4712 = vshrl.u32 %v4694, 16
  %v4715 = vsel %vm2165, %v4712, 0
  %4717 = vmatpush.bf16.msra.mxu0 0
  %4718 = vmatpush.bf16.msra.mxu0 0
  %4719 = vmatpush.bf16.msra.mxu0 %v2214
  %4720 = vmatpush.bf16.msra.mxu0 %v2213
  %4721 = vmatpush.bf16.msra.mxu0 %v2212
  %4722 = vmatpush.bf16.msra.mxu0 %v2211
  %4723 = vmatpush.bf16.msra.mxu0 %v2210
  %4724 = vmatpush.bf16.msra.mxu0 %v2209
  %4725 = vmatmul.bf16.gmra.mxu0 %v4715
  %v4726 = vpop.f32.mrf.mxu0
  %v4727 = vadd.f32 0.0, %v4726
  %v4728 = vpop.f32.mrf.mxu0
  %4729 = vdwg.mxu0
  %v4730 = vadd.f32 %v4711, %v4727
  %v4732 = vrot.slane %v4694, 1
  %v4734 = vsel %vm2165, %v4732, 0
  %4736 = vmatpush.bf16.msra.mxu0 0
  %4737 = vmatpush.bf16.msra.mxu0 0
  %4738 = vmatpush.bf16.msra.mxu0 %v2269
  %4739 = vmatpush.bf16.msra.mxu0 %v2268
  %4740 = vmatpush.bf16.msra.mxu0 %v2267
  %4741 = vmatpush.bf16.msra.mxu0 %v2266
  %4742 = vmatpush.bf16.msra.mxu0 %v2265
  %4743 = vmatpush.bf16.msra.mxu0 %v2264
  %4744 = vmatmul.bf16.gmra.mxu0 %v4734
  %v4745 = vpop.f32.mrf.mxu0
  %v4746 = vadd.f32 0.0, %v4745
  %v4747 = vpop.f32.mrf.mxu0
  %4748 = vdwg.mxu0
  %v4749 = vadd.f32 %v4730, %v4746
  %v4750 = vmax.f32 %v4749, 0.0
  %v4751 = vpack.c.bf16 %v4750, %v4750
  %v4753 = vsel %vm717, %v4751, 0
  %4755 = vmatpush.bf16.msra.mxu0 0
  %4756 = vmatpush.bf16.msra.mxu0 0
  %4757 = vmatpush.bf16.msra.mxu0 0
  %4758 = vmatpush.bf16.msra.mxu0 0
  %4759 = vmatpush.bf16.msra.mxu0 %v2314
  %4760 = vmatpush.bf16.msra.mxu0 %v2313
  %4761 = vmatpush.bf16.msra.mxu0 %v2312
  %4762 = vmatpush.bf16.msra.mxu0 %v2311
  %4763 = vmatmul.bf16.gmra.mxu0 %v4753
  %v4764 = vpop.f32.mrf.mxu0
  %v4765 = vadd.f32 %v383, %v4764
  %v4766 = vpop.f32.mrf.mxu0
  %4767 = vdwg.mxu0
  %s4768 = scalar_lea.vmem %s0, 128
  %v4769 = vld [vmem:[%s4768] sm:$0xff]
  %v4770 = vld [vmem:[%s4768 + $0x8] sm:$0xff]
  %v4771 = vld [vmem:[%s4768 + $0x10] sm:$0xff]
  %v4772 = vld [vmem:[%s4768 + $0x18] sm:$0x3]
  %v4773 = vpack.c.bf16 %v4770, %v4769
  %v4774 = vpack.c.bf16 %v4771, %v4771
  %v4776 = vsel %vm408, %v4773, 0
  %v4779 = vsel %vm408, %v4774, 0
  %4781 = vmatpush.bf16.msra.mxu0 0
  %4782 = vmatpush.bf16.msra.mxu0 0
  %4783 = vmatpush.bf16.msra.mxu0 0
  %4784 = vmatpush.bf16.msra.mxu0 0
  %4785 = vmatpush.bf16.msra.mxu0 0
  %4786 = vmatpush.bf16.msra.mxu0 0
  %4787 = vmatpush.bf16.msra.mxu0 %v417
  %4788 = vmatpush.bf16.msra.mxu0 %v402
  %4789 = vmatmul.bf16.gmra.mxu0 %v4776
  %v4790 = vpop.f32.mrf.mxu0
  %v4791 = vadd.f32 0.0, %v4790
  %v4792 = vpop.f32.mrf.mxu0
  %v4793 = vadd.f32 0.0, %v4792
  %4794 = vmatmul.bf16.gmra.mxu0 %v4779
  %v4795 = vpop.f32.mrf.mxu0
  %v4796 = vadd.f32 0.0, %v4795
  %v4797 = vpop.f32.mrf.mxu0
  %4798 = vdwg.mxu0
  %4799 = vmatpush.bf16.msra.mxu0 0
  %4800 = vmatpush.bf16.msra.mxu0 0
  %4801 = vmatpush.bf16.msra.mxu0 0
  %4802 = vmatpush.bf16.msra.mxu0 0
  %4803 = vmatpush.bf16.msra.mxu0 0
  %4804 = vmatpush.bf16.msra.mxu0 0
  %4805 = vmatpush.bf16.msra.mxu0 %v420
  %4806 = vmatpush.bf16.msra.mxu0 %v403
  %4807 = vmatmul.bf16.gmra.mxu0 %v4776
  %v4808 = vpop.f32.mrf.mxu0
  %v4809 = vadd.f32 0.0, %v4808
  %v4810 = vpop.f32.mrf.mxu0
  %v4811 = vadd.f32 0.0, %v4810
  %4812 = vmatmul.bf16.gmra.mxu0 %v4779
  %v4813 = vpop.f32.mrf.mxu0
  %v4814 = vadd.f32 0.0, %v4813
  %v4815 = vpop.f32.mrf.mxu0
  %4816 = vdwg.mxu0
  %v4817 = vadd.f32 %v459, %v4791
  %v4818 = vadd.f32 %v460, %v4809
  %v4819 = vadd.f32 %v459, %v4793
  %v4820 = vadd.f32 %v460, %v4811
  %v4821 = vadd.f32 %v459, %v4796
  %v4822 = vadd.f32 %v460, %v4814
  %v4823 = vpack.c.bf16 %v4772, %v4771
  %v4824 = vshrl.u32 %v4773, 16
  %v4826 = vshll.u32 %v4773, 16
  %v4828 = vrot.slane %v4826, 1
  %v4829 = vor.u32 %v4824, %v4828
  %v4831 = vshll.u32 %v4823, 16
  %v4833 = vrot.slane %v4831, 1
  %v4834 = vsel %vm470, %v4829, %v4833
  %v4835 = vshrl.u32 %v4823, 16
  %v4837 = vor.u32 %v4835, %v4833
  %v4839 = vsel %vm408, %v4834, 0
  %v4842 = vsel %vm408, %v4837, 0
  %4844 = vmatpush.bf16.msra.mxu0 0
  %4845 = vmatpush.bf16.msra.mxu0 0
  %4846 = vmatpush.bf16.msra.mxu0 0
  %4847 = vmatpush.bf16.msra.mxu0 0
  %4848 = vmatpush.bf16.msra.mxu0 0
  %4849 = vmatpush.bf16.msra.mxu0 0
  %4850 = vmatpush.bf16.msra.mxu0 %v510
  %4851 = vmatpush.bf16.msra.mxu0 %v497
  %4852 = vmatmul.bf16.gmra.mxu0 %v4839
  %v4853 = vpop.f32.mrf.mxu0
  %v4854 = vadd.f32 0.0, %v4853
  %v4855 = vpop.f32.mrf.mxu0
  %v4856 = vadd.f32 0.0, %v4855
  %4857 = vmatmul.bf16.gmra.mxu0 %v4842
  %v4858 = vpop.f32.mrf.mxu0
  %v4859 = vadd.f32 0.0, %v4858
  %v4860 = vpop.f32.mrf.mxu0
  %4861 = vdwg.mxu0
  %4862 = vmatpush.bf16.msra.mxu0 0
  %4863 = vmatpush.bf16.msra.mxu0 0
  %4864 = vmatpush.bf16.msra.mxu0 0
  %4865 = vmatpush.bf16.msra.mxu0 0
  %4866 = vmatpush.bf16.msra.mxu0 0
  %4867 = vmatpush.bf16.msra.mxu0 0
  %4868 = vmatpush.bf16.msra.mxu0 %v513
  %4869 = vmatpush.bf16.msra.mxu0 %v498
  %4870 = vmatmul.bf16.gmra.mxu0 %v4839
  %v4871 = vpop.f32.mrf.mxu0
  %v4872 = vadd.f32 0.0, %v4871
  %v4873 = vpop.f32.mrf.mxu0
  %v4874 = vadd.f32 0.0, %v4873
  %4875 = vmatmul.bf16.gmra.mxu0 %v4842
  %v4876 = vpop.f32.mrf.mxu0
  %v4877 = vadd.f32 0.0, %v4876
  %v4878 = vpop.f32.mrf.mxu0
  %4879 = vdwg.mxu0
  %v4880 = vadd.f32 %v4817, %v4854
  %v4881 = vadd.f32 %v4818, %v4872
  %v4882 = vadd.f32 %v4819, %v4856
  %v4883 = vadd.f32 %v4820, %v4874
  %v4884 = vadd.f32 %v4821, %v4859
  %v4885 = vadd.f32 %v4822, %v4877
  %v4888 = vrot.slane %v4773, 1
  %v4889 = vrot.slane %v4823, 1
  %v4890 = vsel %vm559, %v4888, %v4889
  %v4892 = vsel %vm408, %v4890, 0
  %v4895 = vsel %vm408, %v4889, 0
  %4897 = vmatpush.bf16.msra.mxu0 0
  %4898 = vmatpush.bf16.msra.mxu0 0
  %4899 = vmatpush.bf16.msra.mxu0 0
  %4900 = vmatpush.bf16.msra.mxu0 0
  %4901 = vmatpush.bf16.msra.mxu0 0
  %4902 = vmatpush.bf16.msra.mxu0 0
  %4903 = vmatpush.bf16.msra.mxu0 %v588
  %4904 = vmatpush.bf16.msra.mxu0 %v575
  %4905 = vmatmul.bf16.gmra.mxu0 %v4892
  %v4906 = vpop.f32.mrf.mxu0
  %v4907 = vadd.f32 0.0, %v4906
  %v4908 = vpop.f32.mrf.mxu0
  %v4909 = vadd.f32 0.0, %v4908
  %4910 = vmatmul.bf16.gmra.mxu0 %v4895
  %v4911 = vpop.f32.mrf.mxu0
  %v4912 = vadd.f32 0.0, %v4911
  %v4913 = vpop.f32.mrf.mxu0
  %4914 = vdwg.mxu0
  %4915 = vmatpush.bf16.msra.mxu0 0
  %4916 = vmatpush.bf16.msra.mxu0 0
  %4917 = vmatpush.bf16.msra.mxu0 0
  %4918 = vmatpush.bf16.msra.mxu0 0
  %4919 = vmatpush.bf16.msra.mxu0 0
  %4920 = vmatpush.bf16.msra.mxu0 0
  %4921 = vmatpush.bf16.msra.mxu0 %v591
  %4922 = vmatpush.bf16.msra.mxu0 %v576
  %4923 = vmatmul.bf16.gmra.mxu0 %v4892
  %v4924 = vpop.f32.mrf.mxu0
  %v4925 = vadd.f32 0.0, %v4924
  %v4926 = vpop.f32.mrf.mxu0
  %v4927 = vadd.f32 0.0, %v4926
  %4928 = vmatmul.bf16.gmra.mxu0 %v4895
  %v4929 = vpop.f32.mrf.mxu0
  %v4930 = vadd.f32 0.0, %v4929
  %v4931 = vpop.f32.mrf.mxu0
  %4932 = vdwg.mxu0
  %v4933 = vadd.f32 %v4880, %v4907
  %v4934 = vadd.f32 %v4881, %v4925
  %v4935 = vadd.f32 %v4882, %v4909
  %v4936 = vadd.f32 %v4883, %v4927
  %v4937 = vadd.f32 %v4884, %v4912
  %v4938 = vadd.f32 %v4885, %v4930
  %v4939 = vmax.f32 %v4933, 0.0
  %v4940 = vmax.f32 %v4934, 0.0
  %v4941 = vmax.f32 %v4935, 0.0
  %v4942 = vmax.f32 %v4936, 0.0
  %v4943 = vmax.f32 %v4937, 0.0
  %v4944 = vmax.f32 %v4938, 0.0
  %v4945 = vpack.c.bf16 %v4941, %v4939
  %v4946 = vpack.c.bf16 %v4942, %v4940
  %v4947 = vpack.c.bf16 %v4943, %v4943
  %v4948 = vpack.c.bf16 %v4944, %v4944
  %v4950 = vsel %vm717, %v4946, 0
  %v4953 = vsel %vm717, %v4948, 0
  %4955 = vmatpush.bf16.msra.mxu0 %v700
  %4956 = vmatpush.bf16.msra.mxu0 %v699
  %4957 = vmatpush.bf16.msra.mxu0 %v698
  %4958 = vmatpush.bf16.msra.mxu0 %v697
  %4959 = vmatpush.bf16.msra.mxu0 %v696
  %4960 = vmatpush.bf16.msra.mxu0 %v695
  %4961 = vmatpush.bf16.msra.mxu0 %v694
  %4962 = vmatpush.bf16.msra.mxu0 %v693
  %4963 = vmatmul.bf16.gmra.mxu0 %v4945
  %v4964 = vpop.f32.mrf.mxu0
  %v4965 = vadd.f32 0.0, %v4964
  %v4966 = vpop.f32.mrf.mxu0
  %v4967 = vadd.f32 0.0, %v4966
  %4968 = vmatmul.bf16.gmra.mxu0 %v4947
  %v4969 = vpop.f32.mrf.mxu0
  %v4970 = vadd.f32 0.0, %v4969
  %v4971 = vpop.f32.mrf.mxu0
  %4972 = vdwg.mxu0
  %4973 = vmatpush.bf16.msra.mxu0 0
  %4974 = vmatpush.bf16.msra.mxu0 0
  %4975 = vmatpush.bf16.msra.mxu0 0
  %4976 = vmatpush.bf16.msra.mxu0 0
  %4977 = vmatpush.bf16.msra.mxu0 %v704
  %4978 = vmatpush.bf16.msra.mxu0 %v703
  %4979 = vmatpush.bf16.msra.mxu0 %v702
  %4980 = vmatpush.bf16.msra.mxu0 %v701
  %4981 = vmatmul.bf16.gmra.mxu0 %v4950
  %v4982 = vpop.f32.mrf.mxu0
  %v4983 = vadd.f32 %v4965, %v4982
  %v4984 = vpop.f32.mrf.mxu0
  %v4985 = vadd.f32 %v4967, %v4984
  %4986 = vmatmul.bf16.gmra.mxu0 %v4953
  %v4987 = vpop.f32.mrf.mxu0
  %v4988 = vadd.f32 %v4970, %v4987
  %v4989 = vpop.f32.mrf.mxu0
  %4990 = vdwg.mxu0
  %4991 = vmatpush.bf16.msra.mxu0 %v815
  %4992 = vmatpush.bf16.msra.mxu0 %v814
  %4993 = vmatpush.bf16.msra.mxu0 %v813
  %4994 = vmatpush.bf16.msra.mxu0 %v812
  %4995 = vmatpush.bf16.msra.mxu0 %v811
  %4996 = vmatpush.bf16.msra.mxu0 %v810
  %4997 = vmatpush.bf16.msra.mxu0 %v809
  %4998 = vmatpush.bf16.msra.mxu0 %v808
  %4999 = vmatmul.bf16.gmra.mxu0 %v4945
  %v5000 = vpop.f32.mrf.mxu0
  %v5001 = vadd.f32 0.0, %v5000
  %v5002 = vpop.f32.mrf.mxu0
  %v5003 = vadd.f32 0.0, %v5002
  %5004 = vmatmul.bf16.gmra.mxu0 %v4947
  %v5005 = vpop.f32.mrf.mxu0
  %v5006 = vadd.f32 0.0, %v5005
  %v5007 = vpop.f32.mrf.mxu0
  %5008 = vdwg.mxu0
  %5009 = vmatpush.bf16.msra.mxu0 0
  %5010 = vmatpush.bf16.msra.mxu0 0
  %5011 = vmatpush.bf16.msra.mxu0 0
  %5012 = vmatpush.bf16.msra.mxu0 0
  %5013 = vmatpush.bf16.msra.mxu0 %v819
  %5014 = vmatpush.bf16.msra.mxu0 %v818
  %5015 = vmatpush.bf16.msra.mxu0 %v817
  %5016 = vmatpush.bf16.msra.mxu0 %v816
  %5017 = vmatmul.bf16.gmra.mxu0 %v4950
  %v5018 = vpop.f32.mrf.mxu0
  %v5019 = vadd.f32 %v5001, %v5018
  %v5020 = vpop.f32.mrf.mxu0
  %v5021 = vadd.f32 %v5003, %v5020
  %5022 = vmatmul.bf16.gmra.mxu0 %v4953
  %v5023 = vpop.f32.mrf.mxu0
  %v5024 = vadd.f32 %v5006, %v5023
  %v5025 = vpop.f32.mrf.mxu0
  %5026 = vdwg.mxu0
  %v5027 = vmax.f32 %v4983, %v5019
  %v5028 = vmax.f32 %v4985, %v5021
  %v5029 = vmax.f32 %v4988, %v5024
  %5030 = vmatpush.msra.mxu0 0.0
  %5031 = vmatpush.msra.mxu0 0.0
  %5032 = vmatpush.msra.mxu0 0.0
  %5033 = vmatpush.msra.mxu0 0.0
  %5034 = vmatpush.msra.mxu0 0.0
  %5035 = vmatpush.msra.mxu0 0.0
  %5036 = vmatpush.msra.mxu0 0.0
  %5037 = vmatpush.msra.mxu0 0.0
  %5038 = vmatpush.msra.mxu0 0.0
  %5039 = vmatpush.msra.mxu0 0.0
  %5040 = vmatpush.msra.mxu0 0.0
  %5041 = vmatpush.msra.mxu0 0.0
  %5042 = vmatpush.msra.mxu0 0.0
  %5043 = vmatpush.msra.mxu0 %v5029
  %5044 = vmatpush.msra.mxu0 %v5028
  %5045 = vmatpush.msra.mxu0 %v5027
  %5046 = vmatmul.bf16.gmra.mxu0 %v878
  %v5047 = vpop.f32.mrf.mxu0
  %v5048 = vadd.f32 0.0, %v5047
  %v5049 = vpop.f32.mrf.mxu0
  %v5050 = vadd.f32 0.0, %v5049
  %5051 = vdwg.mxu0
  %5052 = vmatpush.msra.mxu0 0.0
  %5053 = vmatpush.msra.mxu0 0.0
  %5054 = vmatpush.msra.mxu0 0.0
  %5055 = vmatpush.msra.mxu0 0.0
  %5056 = vmatpush.msra.mxu0 0.0
  %5057 = vmatpush.msra.mxu0 0.0
  %5058 = vmatpush.msra.mxu0 0.0
  %5059 = vmatpush.msra.mxu0 0.0
  %5060 = vmatpush.msra.mxu0 0.0
  %5061 = vmatpush.msra.mxu0 0.0
  %5062 = vmatpush.msra.mxu0 0.0
  %5063 = vmatpush.msra.mxu0 0.0
  %5064 = vmatpush.msra.mxu0 0.0
  %5065 = vmatpush.msra.mxu0 %v5029
  %5066 = vmatpush.msra.mxu0 %v5028
  %5067 = vmatpush.msra.mxu0 %v5027
  %5068 = vmatmul.bf16.gmra.mxu0 %v908
  %v5069 = vpop.f32.mrf.mxu0
  %v5070 = vadd.f32 0.0, %v5069
  %v5071 = vpop.f32.mrf.mxu0
  %v5072 = vadd.f32 0.0, %v5071
  %5073 = vdwg.mxu0
  %v5074 = vmax.f32 %v5048, %v5070
  %v5075 = vmax.f32 %v5050, %v5072
  %v5076 = vpack.c.bf16 %v5075, %v5074
  %v5078 = vsel %vm1005, %v5076, 0
  %5080 = vmatpush.bf16.msra.mxu0 0
  %5081 = vmatpush.bf16.msra.mxu0 %v989
  %5082 = vmatpush.bf16.msra.mxu0 %v987
  %5083 = vmatpush.bf16.msra.mxu0 %v985
  %5084 = vmatpush.bf16.msra.mxu0 %v983
  %5085 = vmatpush.bf16.msra.mxu0 %v981
  %5086 = vmatpush.bf16.msra.mxu0 %v979
  %5087 = vmatpush.bf16.msra.mxu0 %v977
  %5088 = vmatmul.bf16.gmra.mxu0 %v5078
  %v5089 = vpop.f32.mrf.mxu0
  %v5090 = vadd.f32 0.0, %v5089
  %v5091 = vpop.f32.mrf.mxu0
  %v5092 = vadd.f32 0.0, %v5091
  %5093 = vdwg.mxu0
  %5094 = vmatpush.bf16.msra.mxu0 0
  %5095 = vmatpush.bf16.msra.mxu0 %v990
  %5096 = vmatpush.bf16.msra.mxu0 %v988
  %5097 = vmatpush.bf16.msra.mxu0 %v986
  %5098 = vmatpush.bf16.msra.mxu0 %v984
  %5099 = vmatpush.bf16.msra.mxu0 %v982
  %5100 = vmatpush.bf16.msra.mxu0 %v980
  %5101 = vmatpush.bf16.msra.mxu0 %v978
  %5102 = vmatmul.bf16.gmra.mxu0 %v5078
  %v5103 = vpop.f32.mrf.mxu0
  %v5104 = vadd.f32 0.0, %v5103
  %v5105 = vpop.f32.mrf.mxu0
  %v5106 = vadd.f32 0.0, %v5105
  %5107 = vdwg.mxu0
  %v5108 = vadd.f32 %v1038, %v5090
  %v5109 = vadd.f32 %v1039, %v5104
  %v5110 = vadd.f32 %v1038, %v5092
  %v5111 = vadd.f32 %v1039, %v5106
  %v5112 = vshrl.u32 %v5076, 16
  %v5114 = vshll.u32 %v5076, 16
  %v5116 = vrot.slane %v5114, 1
  %v5117 = vor.u32 %v5112, %v5116
  %v5119 = vsel %vm1005, %v5117, 0
  %5121 = vmatpush.bf16.msra.mxu0 0
  %5122 = vmatpush.bf16.msra.mxu0 %v1106
  %5123 = vmatpush.bf16.msra.mxu0 %v1104
  %5124 = vmatpush.bf16.msra.mxu0 %v1102
  %5125 = vmatpush.bf16.msra.mxu0 %v1100
  %5126 = vmatpush.bf16.msra.mxu0 %v1098
  %5127 = vmatpush.bf16.msra.mxu0 %v1096
  %5128 = vmatpush.bf16.msra.mxu0 %v1094
  %5129 = vmatmul.bf16.gmra.mxu0 %v5119
  %v5130 = vpop.f32.mrf.mxu0
  %v5131 = vadd.f32 0.0, %v5130
  %v5132 = vpop.f32.mrf.mxu0
  %v5133 = vadd.f32 0.0, %v5132
  %5134 = vdwg.mxu0
  %5135 = vmatpush.bf16.msra.mxu0 0
  %5136 = vmatpush.bf16.msra.mxu0 %v1107
  %5137 = vmatpush.bf16.msra.mxu0 %v1105
  %5138 = vmatpush.bf16.msra.mxu0 %v1103
  %5139 = vmatpush.bf16.msra.mxu0 %v1101
  %5140 = vmatpush.bf16.msra.mxu0 %v1099
  %5141 = vmatpush.bf16.msra.mxu0 %v1097
  %5142 = vmatpush.bf16.msra.mxu0 %v1095
  %5143 = vmatmul.bf16.gmra.mxu0 %v5119
  %v5144 = vpop.f32.mrf.mxu0
  %v5145 = vadd.f32 0.0, %v5144
  %v5146 = vpop.f32.mrf.mxu0
  %v5147 = vadd.f32 0.0, %v5146
  %5148 = vdwg.mxu0
  %v5149 = vadd.f32 %v5108, %v5131
  %v5150 = vadd.f32 %v5109, %v5145
  %v5151 = vadd.f32 %v5110, %v5133
  %v5152 = vadd.f32 %v5111, %v5147
  %v5154 = vrot.slane %v5076, 1
  %v5156 = vsel %vm1005, %v5154, 0
  %5158 = vmatpush.bf16.msra.mxu0 0
  %5159 = vmatpush.bf16.msra.mxu0 %v1213
  %5160 = vmatpush.bf16.msra.mxu0 %v1211
  %5161 = vmatpush.bf16.msra.mxu0 %v1209
  %5162 = vmatpush.bf16.msra.mxu0 %v1207
  %5163 = vmatpush.bf16.msra.mxu0 %v1205
  %5164 = vmatpush.bf16.msra.mxu0 %v1203
  %5165 = vmatpush.bf16.msra.mxu0 %v1201
  %5166 = vmatmul.bf16.gmra.mxu0 %v5156
  %v5167 = vpop.f32.mrf.mxu0
  %v5168 = vadd.f32 0.0, %v5167
  %v5169 = vpop.f32.mrf.mxu0
  %v5170 = vadd.f32 0.0, %v5169
  %5171 = vdwg.mxu0
  %5172 = vmatpush.bf16.msra.mxu0 0
  %5173 = vmatpush.bf16.msra.mxu0 %v1214
  %5174 = vmatpush.bf16.msra.mxu0 %v1212
  %5175 = vmatpush.bf16.msra.mxu0 %v1210
  %5176 = vmatpush.bf16.msra.mxu0 %v1208
  %5177 = vmatpush.bf16.msra.mxu0 %v1206
  %5178 = vmatpush.bf16.msra.mxu0 %v1204
  %5179 = vmatpush.bf16.msra.mxu0 %v1202
  %5180 = vmatmul.bf16.gmra.mxu0 %v5156
  %v5181 = vpop.f32.mrf.mxu0
  %v5182 = vadd.f32 0.0, %v5181
  %v5183 = vpop.f32.mrf.mxu0
  %v5184 = vadd.f32 0.0, %v5183
  %5185 = vdwg.mxu0
  %v5186 = vadd.f32 %v5149, %v5168
  %v5187 = vadd.f32 %v5150, %v5182
  %v5188 = vadd.f32 %v5151, %v5170
  %v5189 = vadd.f32 %v5152, %v5184
  %v5190 = vmax.f32 %v5186, 0.0
  %v5191 = vmax.f32 %v5187, 0.0
  %v5192 = vmax.f32 %v5188, 0.0
  %v5193 = vmax.f32 %v5189, 0.0
  %v5194 = vpack.c.bf16 %v5192, %v5190
  %v5195 = vpack.c.bf16 %v5193, %v5191
  %v5197 = vsel %vm717, %v5195, 0
  %5199 = vmatpush.bf16.msra.mxu0 %v1325
  %5200 = vmatpush.bf16.msra.mxu0 %v1324
  %5201 = vmatpush.bf16.msra.mxu0 %v1323
  %5202 = vmatpush.bf16.msra.mxu0 %v1322
  %5203 = vmatpush.bf16.msra.mxu0 %v1321
  %5204 = vmatpush.bf16.msra.mxu0 %v1320
  %5205 = vmatpush.bf16.msra.mxu0 %v1319
  %5206 = vmatpush.bf16.msra.mxu0 %v1318
  %5207 = vmatmul.bf16.gmra.mxu0 %v5194
  %v5208 = vpop.f32.mrf.mxu0
  %v5209 = vadd.f32 0.0, %v5208
  %v5210 = vpop.f32.mrf.mxu0
  %v5211 = vadd.f32 0.0, %v5210
  %5212 = vdwg.mxu0
  %5213 = vmatpush.bf16.msra.mxu0 0
  %5214 = vmatpush.bf16.msra.mxu0 0
  %5215 = vmatpush.bf16.msra.mxu0 0
  %5216 = vmatpush.bf16.msra.mxu0 0
  %5217 = vmatpush.bf16.msra.mxu0 %v1329
  %5218 = vmatpush.bf16.msra.mxu0 %v1328
  %5219 = vmatpush.bf16.msra.mxu0 %v1327
  %5220 = vmatpush.bf16.msra.mxu0 %v1326
  %5221 = vmatmul.bf16.gmra.mxu0 %v5197
  %v5222 = vpop.f32.mrf.mxu0
  %v5223 = vadd.f32 %v5209, %v5222
  %v5224 = vpop.f32.mrf.mxu0
  %v5225 = vadd.f32 %v5211, %v5224
  %5226 = vdwg.mxu0
  %5227 = vmatpush.bf16.msra.mxu0 %v1428
  %5228 = vmatpush.bf16.msra.mxu0 %v1427
  %5229 = vmatpush.bf16.msra.mxu0 %v1426
  %5230 = vmatpush.bf16.msra.mxu0 %v1425
  %5231 = vmatpush.bf16.msra.mxu0 %v1424
  %5232 = vmatpush.bf16.msra.mxu0 %v1423
  %5233 = vmatpush.bf16.msra.mxu0 %v1422
  %5234 = vmatpush.bf16.msra.mxu0 %v1421
  %5235 = vmatmul.bf16.gmra.mxu0 %v5194
  %v5236 = vpop.f32.mrf.mxu0
  %v5237 = vadd.f32 0.0, %v5236
  %v5238 = vpop.f32.mrf.mxu0
  %v5239 = vadd.f32 0.0, %v5238
  %5240 = vdwg.mxu0
  %5241 = vmatpush.bf16.msra.mxu0 0
  %5242 = vmatpush.bf16.msra.mxu0 0
  %5243 = vmatpush.bf16.msra.mxu0 0
  %5244 = vmatpush.bf16.msra.mxu0 0
  %5245 = vmatpush.bf16.msra.mxu0 %v1432
  %5246 = vmatpush.bf16.msra.mxu0 %v1431
  %5247 = vmatpush.bf16.msra.mxu0 %v1430
  %5248 = vmatpush.bf16.msra.mxu0 %v1429
  %5249 = vmatmul.bf16.gmra.mxu0 %v5197
  %v5250 = vpop.f32.mrf.mxu0
  %v5251 = vadd.f32 %v5237, %v5250
  %v5252 = vpop.f32.mrf.mxu0
  %v5253 = vadd.f32 %v5239, %v5252
  %5254 = vdwg.mxu0
  %v5255 = vmax.f32 %v5223, %v5251
  %v5256 = vmax.f32 %v5225, %v5253
  %v5258 = vsel %vm1479, %v5256, 0
  %5260 = vmatpush.msra.mxu0 0.0
  %5261 = vmatpush.msra.mxu0 0.0
  %5262 = vmatpush.msra.mxu0 0.0
  %5263 = vmatpush.msra.mxu0 0.0
  %5264 = vmatpush.msra.mxu0 0.0
  %5265 = vmatpush.msra.mxu0 0.0
  %5266 = vmatpush.msra.mxu0 0.0
  %5267 = vmatpush.msra.mxu0 0.0
  %5268 = vmatpush.msra.mxu0 0.0
  %5269 = vmatpush.msra.mxu0 0.0
  %5270 = vmatpush.msra.mxu0 0.0
  %5271 = vmatpush.msra.mxu0 0.0
  %5272 = vmatpush.msra.mxu0 0.0
  %5273 = vmatpush.msra.mxu0 0.0
  %5274 = vmatpush.msra.mxu0 %v5258
  %5275 = vmatpush.msra.mxu0 %v5255
  %5276 = vmatmul.bf16.gmra.mxu0 %v1477
  %v5277 = vpop.f32.mrf.mxu0
  %v5278 = vadd.f32 0.0, %v5277
  %v5279 = vpop.f32.mrf.mxu0
  %5280 = vdwg.mxu0
  %5281 = vmatpush.msra.mxu0 0.0
  %5282 = vmatpush.msra.mxu0 0.0
  %5283 = vmatpush.msra.mxu0 0.0
  %5284 = vmatpush.msra.mxu0 0.0
  %5285 = vmatpush.msra.mxu0 0.0
  %5286 = vmatpush.msra.mxu0 0.0
  %5287 = vmatpush.msra.mxu0 0.0
  %5288 = vmatpush.msra.mxu0 0.0
  %5289 = vmatpush.msra.mxu0 0.0
  %5290 = vmatpush.msra.mxu0 0.0
  %5291 = vmatpush.msra.mxu0 0.0
  %5292 = vmatpush.msra.mxu0 0.0
  %5293 = vmatpush.msra.mxu0 0.0
  %5294 = vmatpush.msra.mxu0 0.0
  %5295 = vmatpush.msra.mxu0 %v5258
  %5296 = vmatpush.msra.mxu0 %v5255
  %5297 = vmatmul.bf16.gmra.mxu0 %v1505
  %v5298 = vpop.f32.mrf.mxu0
  %v5299 = vadd.f32 0.0, %v5298
  %v5300 = vpop.f32.mrf.mxu0
  %5301 = vdwg.mxu0
  %v5302 = vmax.f32 %v5278, %v5299
  %v5303 = vpack.c.bf16 %v5302, %v5302
  %5304 = vmatpush.bf16.msra.mxu0 %v1592
  %5305 = vmatpush.bf16.msra.mxu0 %v1590
  %5306 = vmatpush.bf16.msra.mxu0 %v1588
  %5307 = vmatpush.bf16.msra.mxu0 %v1586
  %5308 = vmatpush.bf16.msra.mxu0 %v1584
  %5309 = vmatpush.bf16.msra.mxu0 %v1582
  %5310 = vmatpush.bf16.msra.mxu0 %v1580
  %5311 = vmatpush.bf16.msra.mxu0 %v1578
  %5312 = vmatmul.bf16.gmra.mxu0 %v5303
  %v5313 = vpop.f32.mrf.mxu0
  %v5314 = vadd.f32 0.0, %v5313
  %v5315 = vpop.f32.mrf.mxu0
  %5316 = vdwg.mxu0
  %5317 = vmatpush.bf16.msra.mxu0 %v1593
  %5318 = vmatpush.bf16.msra.mxu0 %v1591
  %5319 = vmatpush.bf16.msra.mxu0 %v1589
  %5320 = vmatpush.bf16.msra.mxu0 %v1587
  %5321 = vmatpush.bf16.msra.mxu0 %v1585
  %5322 = vmatpush.bf16.msra.mxu0 %v1583
  %5323 = vmatpush.bf16.msra.mxu0 %v1581
  %5324 = vmatpush.bf16.msra.mxu0 %v1579
  %5325 = vmatmul.bf16.gmra.mxu0 %v5303
  %v5326 = vpop.f32.mrf.mxu0
  %v5327 = vadd.f32 0.0, %v5326
  %v5328 = vpop.f32.mrf.mxu0
  %5329 = vdwg.mxu0
  %v5330 = vadd.f32 %v1637, %v5314
  %v5331 = vadd.f32 %v1638, %v5327
  %v5333 = vshrl.u32 %v5303, 16
  %v5335 = vshll.u32 %v5303, 16
  %v5337 = vrot.slane %v5335, 1
  %v5338 = vor.u32 %v5333, %v5337
  %5340 = vmatpush.bf16.msra.mxu0 %v1713
  %5341 = vmatpush.bf16.msra.mxu0 %v1711
  %5342 = vmatpush.bf16.msra.mxu0 %v1709
  %5343 = vmatpush.bf16.msra.mxu0 %v1707
  %5344 = vmatpush.bf16.msra.mxu0 %v1705
  %5345 = vmatpush.bf16.msra.mxu0 %v1703
  %5346 = vmatpush.bf16.msra.mxu0 %v1701
  %5347 = vmatpush.bf16.msra.mxu0 %v1699
  %5348 = vmatmul.bf16.gmra.mxu0 %v5338
  %v5349 = vpop.f32.mrf.mxu0
  %v5350 = vadd.f32 0.0, %v5349
  %v5351 = vpop.f32.mrf.mxu0
  %5352 = vdwg.mxu0
  %5353 = vmatpush.bf16.msra.mxu0 %v1714
  %5354 = vmatpush.bf16.msra.mxu0 %v1712
  %5355 = vmatpush.bf16.msra.mxu0 %v1710
  %5356 = vmatpush.bf16.msra.mxu0 %v1708
  %5357 = vmatpush.bf16.msra.mxu0 %v1706
  %5358 = vmatpush.bf16.msra.mxu0 %v1704
  %5359 = vmatpush.bf16.msra.mxu0 %v1702
  %5360 = vmatpush.bf16.msra.mxu0 %v1700
  %5361 = vmatmul.bf16.gmra.mxu0 %v5338
  %v5362 = vpop.f32.mrf.mxu0
  %v5363 = vadd.f32 0.0, %v5362
  %v5364 = vpop.f32.mrf.mxu0
  %5365 = vdwg.mxu0
  %v5366 = vadd.f32 %v5330, %v5350
  %v5367 = vadd.f32 %v5331, %v5363
  %v5369 = vrot.slane %v5303, 1
  %5371 = vmatpush.bf16.msra.mxu0 %v1824
  %5372 = vmatpush.bf16.msra.mxu0 %v1822
  %5373 = vmatpush.bf16.msra.mxu0 %v1820
  %5374 = vmatpush.bf16.msra.mxu0 %v1818
  %5375 = vmatpush.bf16.msra.mxu0 %v1816
  %5376 = vmatpush.bf16.msra.mxu0 %v1814
  %5377 = vmatpush.bf16.msra.mxu0 %v1812
  %5378 = vmatpush.bf16.msra.mxu0 %v1810
  %5379 = vmatmul.bf16.gmra.mxu0 %v5369
  %v5380 = vpop.f32.mrf.mxu0
  %v5381 = vadd.f32 0.0, %v5380
  %v5382 = vpop.f32.mrf.mxu0
  %5383 = vdwg.mxu0
  %5384 = vmatpush.bf16.msra.mxu0 %v1825
  %5385 = vmatpush.bf16.msra.mxu0 %v1823
  %5386 = vmatpush.bf16.msra.mxu0 %v1821
  %5387 = vmatpush.bf16.msra.mxu0 %v1819
  %5388 = vmatpush.bf16.msra.mxu0 %v1817
  %5389 = vmatpush.bf16.msra.mxu0 %v1815
  %5390 = vmatpush.bf16.msra.mxu0 %v1813
  %5391 = vmatpush.bf16.msra.mxu0 %v1811
  %5392 = vmatmul.bf16.gmra.mxu0 %v5369
  %v5393 = vpop.f32.mrf.mxu0
  %v5394 = vadd.f32 0.0, %v5393
  %v5395 = vpop.f32.mrf.mxu0
  %5396 = vdwg.mxu0
  %v5397 = vadd.f32 %v5366, %v5381
  %v5398 = vadd.f32 %v5367, %v5394
  %v5399 = vmax.f32 %v5397, 0.0
  %v5400 = vmax.f32 %v5398, 0.0
  %v5401 = vpack.c.bf16 %v5399, %v5399
  %v5402 = vpack.c.bf16 %v5400, %v5400
  %v5404 = vsel %vm717, %v5402, 0
  %5406 = vmatpush.bf16.msra.mxu0 %v1929
  %5407 = vmatpush.bf16.msra.mxu0 %v1928
  %5408 = vmatpush.bf16.msra.mxu0 %v1927
  %5409 = vmatpush.bf16.msra.mxu0 %v1926
  %5410 = vmatpush.bf16.msra.mxu0 %v1925
  %5411 = vmatpush.bf16.msra.mxu0 %v1924
  %5412 = vmatpush.bf16.msra.mxu0 %v1923
  %5413 = vmatpush.bf16.msra.mxu0 %v1922
  %5414 = vmatmul.bf16.gmra.mxu0 %v5401
  %v5415 = vpop.f32.mrf.mxu0
  %v5416 = vadd.f32 0.0, %v5415
  %v5417 = vpop.f32.mrf.mxu0
  %5418 = vdwg.mxu0
  %5419 = vmatpush.bf16.msra.mxu0 0
  %5420 = vmatpush.bf16.msra.mxu0 0
  %5421 = vmatpush.bf16.msra.mxu0 0
  %5422 = vmatpush.bf16.msra.mxu0 0
  %5423 = vmatpush.bf16.msra.mxu0 %v1933
  %5424 = vmatpush.bf16.msra.mxu0 %v1932
  %5425 = vmatpush.bf16.msra.mxu0 %v1931
  %5426 = vmatpush.bf16.msra.mxu0 %v1930
  %5427 = vmatmul.bf16.gmra.mxu0 %v5404
  %v5428 = vpop.f32.mrf.mxu0
  %v5429 = vadd.f32 %v5416, %v5428
  %v5430 = vpop.f32.mrf.mxu0
  %5431 = vdwg.mxu0
  %5432 = vmatpush.bf16.msra.mxu0 %v2030
  %5433 = vmatpush.bf16.msra.mxu0 %v2029
  %5434 = vmatpush.bf16.msra.mxu0 %v2028
  %5435 = vmatpush.bf16.msra.mxu0 %v2027
  %5436 = vmatpush.bf16.msra.mxu0 %v2026
  %5437 = vmatpush.bf16.msra.mxu0 %v2025
  %5438 = vmatpush.bf16.msra.mxu0 %v2024
  %5439 = vmatpush.bf16.msra.mxu0 %v2023
  %5440 = vmatmul.bf16.gmra.mxu0 %v5401
  %v5441 = vpop.f32.mrf.mxu0
  %v5442 = vadd.f32 0.0, %v5441
  %v5443 = vpop.f32.mrf.mxu0
  %5444 = vdwg.mxu0
  %5445 = vmatpush.bf16.msra.mxu0 0
  %5446 = vmatpush.bf16.msra.mxu0 0
  %5447 = vmatpush.bf16.msra.mxu0 0
  %5448 = vmatpush.bf16.msra.mxu0 0
  %5449 = vmatpush.bf16.msra.mxu0 %v2034
  %5450 = vmatpush.bf16.msra.mxu0 %v2033
  %5451 = vmatpush.bf16.msra.mxu0 %v2032
  %5452 = vmatpush.bf16.msra.mxu0 %v2031
  %5453 = vmatmul.bf16.gmra.mxu0 %v5404
  %v5454 = vpop.f32.mrf.mxu0
  %v5455 = vadd.f32 %v5442, %v5454
  %v5456 = vpop.f32.mrf.mxu0
  %5457 = vdwg.mxu0
  %v5458 = vmax.f32 %v5429, %v5455
  %v5460 = vsel %vm2078, %v5458, 0
  %5462 = vmatpush.msra.mxu0 0.0
  %5463 = vmatpush.msra.mxu0 0.0
  %5464 = vmatpush.msra.mxu0 0.0
  %5465 = vmatpush.msra.mxu0 0.0
  %5466 = vmatpush.msra.mxu0 0.0
  %5467 = vmatpush.msra.mxu0 0.0
  %5468 = vmatpush.msra.mxu0 0.0
  %5469 = vmatpush.msra.mxu0 0.0
  %5470 = vmatpush.msra.mxu0 0.0
  %5471 = vmatpush.msra.mxu0 0.0
  %5472 = vmatpush.msra.mxu0 0.0
  %5473 = vmatpush.msra.mxu0 0.0
  %5474 = vmatpush.msra.mxu0 0.0
  %5475 = vmatpush.msra.mxu0 0.0
  %5476 = vmatpush.msra.mxu0 0.0
  %5477 = vmatpush.msra.mxu0 %v5460
  %5478 = vmatmul.bf16.gmra.mxu0 %v2076
  %v5479 = vpop.f32.mrf.mxu0
  %v5480 = vadd.f32 0.0, %v5479
  %v5481 = vpop.f32.mrf.mxu0
  %5482 = vdwg.mxu0
  %5483 = vmatpush.msra.mxu0 0.0
  %5484 = vmatpush.msra.mxu0 0.0
  %5485 = vmatpush.msra.mxu0 0.0
  %5486 = vmatpush.msra.mxu0 0.0
  %5487 = vmatpush.msra.mxu0 0.0
  %5488 = vmatpush.msra.mxu0 0.0
  %5489 = vmatpush.msra.mxu0 0.0
  %5490 = vmatpush.msra.mxu0 0.0
  %5491 = vmatpush.msra.mxu0 0.0
  %5492 = vmatpush.msra.mxu0 0.0
  %5493 = vmatpush.msra.mxu0 0.0
  %5494 = vmatpush.msra.mxu0 0.0
  %5495 = vmatpush.msra.mxu0 0.0
  %5496 = vmatpush.msra.mxu0 0.0
  %5497 = vmatpush.msra.mxu0 0.0
  %5498 = vmatpush.msra.mxu0 %v5460
  %5499 = vmatmul.bf16.gmra.mxu0 %v2104
  %v5500 = vpop.f32.mrf.mxu0
  %v5501 = vadd.f32 0.0, %v5500
  %v5502 = vpop.f32.mrf.mxu0
  %5503 = vdwg.mxu0
  %v5504 = vmax.f32 %v5480, %v5501
  %v5505 = vpack.c.bf16 %v5504, %v5504
  %v5507 = vsel %vm2165, %v5505, 0
  %5509 = vmatpush.bf16.msra.mxu0 0
  %5510 = vmatpush.bf16.msra.mxu0 0
  %5511 = vmatpush.bf16.msra.mxu0 %v2158
  %5512 = vmatpush.bf16.msra.mxu0 %v2157
  %5513 = vmatpush.bf16.msra.mxu0 %v2156
  %5514 = vmatpush.bf16.msra.mxu0 %v2155
  %5515 = vmatpush.bf16.msra.mxu0 %v2154
  %5516 = vmatpush.bf16.msra.mxu0 %v2153
  %5517 = vmatmul.bf16.gmra.mxu0 %v5507
  %v5518 = vpop.f32.mrf.mxu0
  %v5519 = vadd.f32 0.0, %v5518
  %v5520 = vpop.f32.mrf.mxu0
  %5521 = vdwg.mxu0
  %v5522 = vadd.f32 %v374, %v5519
  %v5523 = vshrl.u32 %v5505, 16
  %v5526 = vsel %vm2165, %v5523, 0
  %5528 = vmatpush.bf16.msra.mxu0 0
  %5529 = vmatpush.bf16.msra.mxu0 0
  %5530 = vmatpush.bf16.msra.mxu0 %v2214
  %5531 = vmatpush.bf16.msra.mxu0 %v2213
  %5532 = vmatpush.bf16.msra.mxu0 %v2212
  %5533 = vmatpush.bf16.msra.mxu0 %v2211
  %5534 = vmatpush.bf16.msra.mxu0 %v2210
  %5535 = vmatpush.bf16.msra.mxu0 %v2209
  %5536 = vmatmul.bf16.gmra.mxu0 %v5526
  %v5537 = vpop.f32.mrf.mxu0
  %v5538 = vadd.f32 0.0, %v5537
  %v5539 = vpop.f32.mrf.mxu0
  %5540 = vdwg.mxu0
  %v5541 = vadd.f32 %v5522, %v5538
  %v5543 = vrot.slane %v5505, 1
  %v5545 = vsel %vm2165, %v5543, 0
  %5547 = vmatpush.bf16.msra.mxu0 0
  %5548 = vmatpush.bf16.msra.mxu0 0
  %5549 = vmatpush.bf16.msra.mxu0 %v2269
  %5550 = vmatpush.bf16.msra.mxu0 %v2268
  %5551 = vmatpush.bf16.msra.mxu0 %v2267
  %5552 = vmatpush.bf16.msra.mxu0 %v2266
  %5553 = vmatpush.bf16.msra.mxu0 %v2265
  %5554 = vmatpush.bf16.msra.mxu0 %v2264
  %5555 = vmatmul.bf16.gmra.mxu0 %v5545
  %v5556 = vpop.f32.mrf.mxu0
  %v5557 = vadd.f32 0.0, %v5556
  %v5558 = vpop.f32.mrf.mxu0
  %5559 = vdwg.mxu0
  %v5560 = vadd.f32 %v5541, %v5557
  %v5561 = vmax.f32 %v5560, 0.0
  %v5562 = vpack.c.bf16 %v5561, %v5561
  %v5564 = vsel %vm717, %v5562, 0
  %5566 = vmatpush.bf16.msra.mxu0 0
  %5567 = vmatpush.bf16.msra.mxu0 0
  %5568 = vmatpush.bf16.msra.mxu0 0
  %5569 = vmatpush.bf16.msra.mxu0 0
  %5570 = vmatpush.bf16.msra.mxu0 %v2314
  %5571 = vmatpush.bf16.msra.mxu0 %v2313
  %5572 = vmatpush.bf16.msra.mxu0 %v2312
  %5573 = vmatpush.bf16.msra.mxu0 %v2311
  %5574 = vmatmul.bf16.gmra.mxu0 %v5564
  %v5575 = vpop.f32.mrf.mxu0
  %v5576 = vadd.f32 %v383, %v5575
  %v5577 = vpop.f32.mrf.mxu0
  %5578 = vdwg.mxu0
  %s5579 = scalar_lea.vmem %s0, 160
  %v5580 = vld [vmem:[%s5579] sm:$0xff]
  %v5581 = vld [vmem:[%s5579 + $0x8] sm:$0xff]
  %v5582 = vld [vmem:[%s5579 + $0x10] sm:$0xff]
  %v5583 = vld [vmem:[%s5579 + $0x18] sm:$0x3]
  %v5584 = vpack.c.bf16 %v5581, %v5580
  %v5585 = vpack.c.bf16 %v5582, %v5582
  %v5587 = vsel %vm408, %v5584, 0
  %v5590 = vsel %vm408, %v5585, 0
  %5592 = vmatpush.bf16.msra.mxu0 0
  %5593 = vmatpush.bf16.msra.mxu0 0
  %5594 = vmatpush.bf16.msra.mxu0 0
  %5595 = vmatpush.bf16.msra.mxu0 0
  %5596 = vmatpush.bf16.msra.mxu0 0
  %5597 = vmatpush.bf16.msra.mxu0 0
  %5598 = vmatpush.bf16.msra.mxu0 %v417
  %5599 = vmatpush.bf16.msra.mxu0 %v402
  %5600 = vmatmul.bf16.gmra.mxu0 %v5587
  %v5601 = vpop.f32.mrf.mxu0
  %v5602 = vadd.f32 0.0, %v5601
  %v5603 = vpop.f32.mrf.mxu0
  %v5604 = vadd.f32 0.0, %v5603
  %5605 = vmatmul.bf16.gmra.mxu0 %v5590
  %v5606 = vpop.f32.mrf.mxu0
  %v5607 = vadd.f32 0.0, %v5606
  %v5608 = vpop.f32.mrf.mxu0
  %5609 = vdwg.mxu0
  %5610 = vmatpush.bf16.msra.mxu0 0
  %5611 = vmatpush.bf16.msra.mxu0 0
  %5612 = vmatpush.bf16.msra.mxu0 0
  %5613 = vmatpush.bf16.msra.mxu0 0
  %5614 = vmatpush.bf16.msra.mxu0 0
  %5615 = vmatpush.bf16.msra.mxu0 0
  %5616 = vmatpush.bf16.msra.mxu0 %v420
  %5617 = vmatpush.bf16.msra.mxu0 %v403
  %5618 = vmatmul.bf16.gmra.mxu0 %v5587
  %v5619 = vpop.f32.mrf.mxu0
  %v5620 = vadd.f32 0.0, %v5619
  %v5621 = vpop.f32.mrf.mxu0
  %v5622 = vadd.f32 0.0, %v5621
  %5623 = vmatmul.bf16.gmra.mxu0 %v5590
  %v5624 = vpop.f32.mrf.mxu0
  %v5625 = vadd.f32 0.0, %v5624
  %v5626 = vpop.f32.mrf.mxu0
  %5627 = vdwg.mxu0
  %v5628 = vadd.f32 %v459, %v5602
  %v5629 = vadd.f32 %v460, %v5620
  %v5630 = vadd.f32 %v459, %v5604
  %v5631 = vadd.f32 %v460, %v5622
  %v5632 = vadd.f32 %v459, %v5607
  %v5633 = vadd.f32 %v460, %v5625
  %v5634 = vpack.c.bf16 %v5583, %v5582
  %v5635 = vshrl.u32 %v5584, 16
  %v5637 = vshll.u32 %v5584, 16
  %v5639 = vrot.slane %v5637, 1
  %v5640 = vor.u32 %v5635, %v5639
  %v5642 = vshll.u32 %v5634, 16
  %v5644 = vrot.slane %v5642, 1
  %v5645 = vsel %vm470, %v5640, %v5644
  %v5646 = vshrl.u32 %v5634, 16
  %v5648 = vor.u32 %v5646, %v5644
  %v5650 = vsel %vm408, %v5645, 0
  %v5653 = vsel %vm408, %v5648, 0
  %5655 = vmatpush.bf16.msra.mxu0 0
  %5656 = vmatpush.bf16.msra.mxu0 0
  %5657 = vmatpush.bf16.msra.mxu0 0
  %5658 = vmatpush.bf16.msra.mxu0 0
  %5659 = vmatpush.bf16.msra.mxu0 0
  %5660 = vmatpush.bf16.msra.mxu0 0
  %5661 = vmatpush.bf16.msra.mxu0 %v510
  %5662 = vmatpush.bf16.msra.mxu0 %v497
  %5663 = vmatmul.bf16.gmra.mxu0 %v5650
  %v5664 = vpop.f32.mrf.mxu0
  %v5665 = vadd.f32 0.0, %v5664
  %v5666 = vpop.f32.mrf.mxu0
  %v5667 = vadd.f32 0.0, %v5666
  %5668 = vmatmul.bf16.gmra.mxu0 %v5653
  %v5669 = vpop.f32.mrf.mxu0
  %v5670 = vadd.f32 0.0, %v5669
  %v5671 = vpop.f32.mrf.mxu0
  %5672 = vdwg.mxu0
  %5673 = vmatpush.bf16.msra.mxu0 0
  %5674 = vmatpush.bf16.msra.mxu0 0
  %5675 = vmatpush.bf16.msra.mxu0 0
  %5676 = vmatpush.bf16.msra.mxu0 0
  %5677 = vmatpush.bf16.msra.mxu0 0
  %5678 = vmatpush.bf16.msra.mxu0 0
  %5679 = vmatpush.bf16.msra.mxu0 %v513
  %5680 = vmatpush.bf16.msra.mxu0 %v498
  %5681 = vmatmul.bf16.gmra.mxu0 %v5650
  %v5682 = vpop.f32.mrf.mxu0
  %v5683 = vadd.f32 0.0, %v5682
  %v5684 = vpop.f32.mrf.mxu0
  %v5685 = vadd.f32 0.0, %v5684
  %5686 = vmatmul.bf16.gmra.mxu0 %v5653
  %v5687 = vpop.f32.mrf.mxu0
  %v5688 = vadd.f32 0.0, %v5687
  %v5689 = vpop.f32.mrf.mxu0
  %5690 = vdwg.mxu0
  %v5691 = vadd.f32 %v5628, %v5665
  %v5692 = vadd.f32 %v5629, %v5683
  %v5693 = vadd.f32 %v5630, %v5667
  %v5694 = vadd.f32 %v5631, %v5685
  %v5695 = vadd.f32 %v5632, %v5670
  %v5696 = vadd.f32 %v5633, %v5688
  %v5699 = vrot.slane %v5584, 1
  %v5700 = vrot.slane %v5634, 1
  %v5701 = vsel %vm559, %v5699, %v5700
  %v5703 = vsel %vm408, %v5701, 0
  %v5706 = vsel %vm408, %v5700, 0
  %5708 = vmatpush.bf16.msra.mxu0 0
  %5709 = vmatpush.bf16.msra.mxu0 0
  %5710 = vmatpush.bf16.msra.mxu0 0
  %5711 = vmatpush.bf16.msra.mxu0 0
  %5712 = vmatpush.bf16.msra.mxu0 0
  %5713 = vmatpush.bf16.msra.mxu0 0
  %5714 = vmatpush.bf16.msra.mxu0 %v588
  %5715 = vmatpush.bf16.msra.mxu0 %v575
  %5716 = vmatmul.bf16.gmra.mxu0 %v5703
  %v5717 = vpop.f32.mrf.mxu0
  %v5718 = vadd.f32 0.0, %v5717
  %v5719 = vpop.f32.mrf.mxu0
  %v5720 = vadd.f32 0.0, %v5719
  %5721 = vmatmul.bf16.gmra.mxu0 %v5706
  %v5722 = vpop.f32.mrf.mxu0
  %v5723 = vadd.f32 0.0, %v5722
  %v5724 = vpop.f32.mrf.mxu0
  %5725 = vdwg.mxu0
  %5726 = vmatpush.bf16.msra.mxu0 0
  %5727 = vmatpush.bf16.msra.mxu0 0
  %5728 = vmatpush.bf16.msra.mxu0 0
  %5729 = vmatpush.bf16.msra.mxu0 0
  %5730 = vmatpush.bf16.msra.mxu0 0
  %5731 = vmatpush.bf16.msra.mxu0 0
  %5732 = vmatpush.bf16.msra.mxu0 %v591
  %5733 = vmatpush.bf16.msra.mxu0 %v576
  %5734 = vmatmul.bf16.gmra.mxu0 %v5703
  %v5735 = vpop.f32.mrf.mxu0
  %v5736 = vadd.f32 0.0, %v5735
  %v5737 = vpop.f32.mrf.mxu0
  %v5738 = vadd.f32 0.0, %v5737
  %5739 = vmatmul.bf16.gmra.mxu0 %v5706
  %v5740 = vpop.f32.mrf.mxu0
  %v5741 = vadd.f32 0.0, %v5740
  %v5742 = vpop.f32.mrf.mxu0
  %5743 = vdwg.mxu0
  %v5744 = vadd.f32 %v5691, %v5718
  %v5745 = vadd.f32 %v5692, %v5736
  %v5746 = vadd.f32 %v5693, %v5720
  %v5747 = vadd.f32 %v5694, %v5738
  %v5748 = vadd.f32 %v5695, %v5723
  %v5749 = vadd.f32 %v5696, %v5741
  %v5750 = vmax.f32 %v5744, 0.0
  %v5751 = vmax.f32 %v5745, 0.0
  %v5752 = vmax.f32 %v5746, 0.0
  %v5753 = vmax.f32 %v5747, 0.0
  %v5754 = vmax.f32 %v5748, 0.0
  %v5755 = vmax.f32 %v5749, 0.0
  %v5756 = vpack.c.bf16 %v5752, %v5750
  %v5757 = vpack.c.bf16 %v5753, %v5751
  %v5758 = vpack.c.bf16 %v5754, %v5754
  %v5759 = vpack.c.bf16 %v5755, %v5755
  %v5761 = vsel %vm717, %v5757, 0
  %v5764 = vsel %vm717, %v5759, 0
  %5766 = vmatpush.bf16.msra.mxu0 %v700
  %5767 = vmatpush.bf16.msra.mxu0 %v699
  %5768 = vmatpush.bf16.msra.mxu0 %v698
  %5769 = vmatpush.bf16.msra.mxu0 %v697
  %5770 = vmatpush.bf16.msra.mxu0 %v696
  %5771 = vmatpush.bf16.msra.mxu0 %v695
  %5772 = vmatpush.bf16.msra.mxu0 %v694
  %5773 = vmatpush.bf16.msra.mxu0 %v693
  %5774 = vmatmul.bf16.gmra.mxu0 %v5756
  %v5775 = vpop.f32.mrf.mxu0
  %v5776 = vadd.f32 0.0, %v5775
  %v5777 = vpop.f32.mrf.mxu0
  %v5778 = vadd.f32 0.0, %v5777
  %5779 = vmatmul.bf16.gmra.mxu0 %v5758
  %v5780 = vpop.f32.mrf.mxu0
  %v5781 = vadd.f32 0.0, %v5780
  %v5782 = vpop.f32.mrf.mxu0
  %5783 = vdwg.mxu0
  %5784 = vmatpush.bf16.msra.mxu0 0
  %5785 = vmatpush.bf16.msra.mxu0 0
  %5786 = vmatpush.bf16.msra.mxu0 0
  %5787 = vmatpush.bf16.msra.mxu0 0
  %5788 = vmatpush.bf16.msra.mxu0 %v704
  %5789 = vmatpush.bf16.msra.mxu0 %v703
  %5790 = vmatpush.bf16.msra.mxu0 %v702
  %5791 = vmatpush.bf16.msra.mxu0 %v701
  %5792 = vmatmul.bf16.gmra.mxu0 %v5761
  %v5793 = vpop.f32.mrf.mxu0
  %v5794 = vadd.f32 %v5776, %v5793
  %v5795 = vpop.f32.mrf.mxu0
  %v5796 = vadd.f32 %v5778, %v5795
  %5797 = vmatmul.bf16.gmra.mxu0 %v5764
  %v5798 = vpop.f32.mrf.mxu0
  %v5799 = vadd.f32 %v5781, %v5798
  %v5800 = vpop.f32.mrf.mxu0
  %5801 = vdwg.mxu0
  %5802 = vmatpush.bf16.msra.mxu0 %v815
  %5803 = vmatpush.bf16.msra.mxu0 %v814
  %5804 = vmatpush.bf16.msra.mxu0 %v813
  %5805 = vmatpush.bf16.msra.mxu0 %v812
  %5806 = vmatpush.bf16.msra.mxu0 %v811
  %5807 = vmatpush.bf16.msra.mxu0 %v810
  %5808 = vmatpush.bf16.msra.mxu0 %v809
  %5809 = vmatpush.bf16.msra.mxu0 %v808
  %5810 = vmatmul.bf16.gmra.mxu0 %v5756
  %v5811 = vpop.f32.mrf.mxu0
  %v5812 = vadd.f32 0.0, %v5811
  %v5813 = vpop.f32.mrf.mxu0
  %v5814 = vadd.f32 0.0, %v5813
  %5815 = vmatmul.bf16.gmra.mxu0 %v5758
  %v5816 = vpop.f32.mrf.mxu0
  %v5817 = vadd.f32 0.0, %v5816
  %v5818 = vpop.f32.mrf.mxu0
  %5819 = vdwg.mxu0
  %5820 = vmatpush.bf16.msra.mxu0 0
  %5821 = vmatpush.bf16.msra.mxu0 0
  %5822 = vmatpush.bf16.msra.mxu0 0
  %5823 = vmatpush.bf16.msra.mxu0 0
  %5824 = vmatpush.bf16.msra.mxu0 %v819
  %5825 = vmatpush.bf16.msra.mxu0 %v818
  %5826 = vmatpush.bf16.msra.mxu0 %v817
  %5827 = vmatpush.bf16.msra.mxu0 %v816
  %5828 = vmatmul.bf16.gmra.mxu0 %v5761
  %v5829 = vpop.f32.mrf.mxu0
  %v5830 = vadd.f32 %v5812, %v5829
  %v5831 = vpop.f32.mrf.mxu0
  %v5832 = vadd.f32 %v5814, %v5831
  %5833 = vmatmul.bf16.gmra.mxu0 %v5764
  %v5834 = vpop.f32.mrf.mxu0
  %v5835 = vadd.f32 %v5817, %v5834
  %v5836 = vpop.f32.mrf.mxu0
  %5837 = vdwg.mxu0
  %v5838 = vmax.f32 %v5794, %v5830
  %v5839 = vmax.f32 %v5796, %v5832
  %v5840 = vmax.f32 %v5799, %v5835
  %5841 = vmatpush.msra.mxu0 0.0
  %5842 = vmatpush.msra.mxu0 0.0
  %5843 = vmatpush.msra.mxu0 0.0
  %5844 = vmatpush.msra.mxu0 0.0
  %5845 = vmatpush.msra.mxu0 0.0
  %5846 = vmatpush.msra.mxu0 0.0
  %5847 = vmatpush.msra.mxu0 0.0
  %5848 = vmatpush.msra.mxu0 0.0
  %5849 = vmatpush.msra.mxu0 0.0
  %5850 = vmatpush.msra.mxu0 0.0
  %5851 = vmatpush.msra.mxu0 0.0
  %5852 = vmatpush.msra.mxu0 0.0
  %5853 = vmatpush.msra.mxu0 0.0
  %5854 = vmatpush.msra.mxu0 %v5840
  %5855 = vmatpush.msra.mxu0 %v5839
  %5856 = vmatpush.msra.mxu0 %v5838
  %5857 = vmatmul.bf16.gmra.mxu0 %v878
  %v5858 = vpop.f32.mrf.mxu0
  %v5859 = vadd.f32 0.0, %v5858
  %v5860 = vpop.f32.mrf.mxu0
  %v5861 = vadd.f32 0.0, %v5860
  %5862 = vdwg.mxu0
  %5863 = vmatpush.msra.mxu0 0.0
  %5864 = vmatpush.msra.mxu0 0.0
  %5865 = vmatpush.msra.mxu0 0.0
  %5866 = vmatpush.msra.mxu0 0.0
  %5867 = vmatpush.msra.mxu0 0.0
  %5868 = vmatpush.msra.mxu0 0.0
  %5869 = vmatpush.msra.mxu0 0.0
  %5870 = vmatpush.msra.mxu0 0.0
  %5871 = vmatpush.msra.mxu0 0.0
  %5872 = vmatpush.msra.mxu0 0.0
  %5873 = vmatpush.msra.mxu0 0.0
  %5874 = vmatpush.msra.mxu0 0.0
  %5875 = vmatpush.msra.mxu0 0.0
  %5876 = vmatpush.msra.mxu0 %v5840
  %5877 = vmatpush.msra.mxu0 %v5839
  %5878 = vmatpush.msra.mxu0 %v5838
  %5879 = vmatmul.bf16.gmra.mxu0 %v908
  %v5880 = vpop.f32.mrf.mxu0
  %v5881 = vadd.f32 0.0, %v5880
  %v5882 = vpop.f32.mrf.mxu0
  %v5883 = vadd.f32 0.0, %v5882
  %5884 = vdwg.mxu0
  %v5885 = vmax.f32 %v5859, %v5881
  %v5886 = vmax.f32 %v5861, %v5883
  %v5887 = vpack.c.bf16 %v5886, %v5885
  %v5889 = vsel %vm1005, %v5887, 0
  %5891 = vmatpush.bf16.msra.mxu0 0
  %5892 = vmatpush.bf16.msra.mxu0 %v989
  %5893 = vmatpush.bf16.msra.mxu0 %v987
  %5894 = vmatpush.bf16.msra.mxu0 %v985
  %5895 = vmatpush.bf16.msra.mxu0 %v983
  %5896 = vmatpush.bf16.msra.mxu0 %v981
  %5897 = vmatpush.bf16.msra.mxu0 %v979
  %5898 = vmatpush.bf16.msra.mxu0 %v977
  %5899 = vmatmul.bf16.gmra.mxu0 %v5889
  %v5900 = vpop.f32.mrf.mxu0
  %v5901 = vadd.f32 0.0, %v5900
  %v5902 = vpop.f32.mrf.mxu0
  %v5903 = vadd.f32 0.0, %v5902
  %5904 = vdwg.mxu0
  %5905 = vmatpush.bf16.msra.mxu0 0
  %5906 = vmatpush.bf16.msra.mxu0 %v990
  %5907 = vmatpush.bf16.msra.mxu0 %v988
  %5908 = vmatpush.bf16.msra.mxu0 %v986
  %5909 = vmatpush.bf16.msra.mxu0 %v984
  %5910 = vmatpush.bf16.msra.mxu0 %v982
  %5911 = vmatpush.bf16.msra.mxu0 %v980
  %5912 = vmatpush.bf16.msra.mxu0 %v978
  %5913 = vmatmul.bf16.gmra.mxu0 %v5889
  %v5914 = vpop.f32.mrf.mxu0
  %v5915 = vadd.f32 0.0, %v5914
  %v5916 = vpop.f32.mrf.mxu0
  %v5917 = vadd.f32 0.0, %v5916
  %5918 = vdwg.mxu0
  %v5919 = vadd.f32 %v1038, %v5901
  %v5920 = vadd.f32 %v1039, %v5915
  %v5921 = vadd.f32 %v1038, %v5903
  %v5922 = vadd.f32 %v1039, %v5917
  %v5923 = vshrl.u32 %v5887, 16
  %v5925 = vshll.u32 %v5887, 16
  %v5927 = vrot.slane %v5925, 1
  %v5928 = vor.u32 %v5923, %v5927
  %v5930 = vsel %vm1005, %v5928, 0
  %5932 = vmatpush.bf16.msra.mxu0 0
  %5933 = vmatpush.bf16.msra.mxu0 %v1106
  %5934 = vmatpush.bf16.msra.mxu0 %v1104
  %5935 = vmatpush.bf16.msra.mxu0 %v1102
  %5936 = vmatpush.bf16.msra.mxu0 %v1100
  %5937 = vmatpush.bf16.msra.mxu0 %v1098
  %5938 = vmatpush.bf16.msra.mxu0 %v1096
  %5939 = vmatpush.bf16.msra.mxu0 %v1094
  %5940 = vmatmul.bf16.gmra.mxu0 %v5930
  %v5941 = vpop.f32.mrf.mxu0
  %v5942 = vadd.f32 0.0, %v5941
  %v5943 = vpop.f32.mrf.mxu0
  %v5944 = vadd.f32 0.0, %v5943
  %5945 = vdwg.mxu0
  %5946 = vmatpush.bf16.msra.mxu0 0
  %5947 = vmatpush.bf16.msra.mxu0 %v1107
  %5948 = vmatpush.bf16.msra.mxu0 %v1105
  %5949 = vmatpush.bf16.msra.mxu0 %v1103
  %5950 = vmatpush.bf16.msra.mxu0 %v1101
  %5951 = vmatpush.bf16.msra.mxu0 %v1099
  %5952 = vmatpush.bf16.msra.mxu0 %v1097
  %5953 = vmatpush.bf16.msra.mxu0 %v1095
  %5954 = vmatmul.bf16.gmra.mxu0 %v5930
  %v5955 = vpop.f32.mrf.mxu0
  %v5956 = vadd.f32 0.0, %v5955
  %v5957 = vpop.f32.mrf.mxu0
  %v5958 = vadd.f32 0.0, %v5957
  %5959 = vdwg.mxu0
  %v5960 = vadd.f32 %v5919, %v5942
  %v5961 = vadd.f32 %v5920, %v5956
  %v5962 = vadd.f32 %v5921, %v5944
  %v5963 = vadd.f32 %v5922, %v5958
  %v5965 = vrot.slane %v5887, 1
  %v5967 = vsel %vm1005, %v5965, 0
  %5969 = vmatpush.bf16.msra.mxu0 0
  %5970 = vmatpush.bf16.msra.mxu0 %v1213
  %5971 = vmatpush.bf16.msra.mxu0 %v1211
  %5972 = vmatpush.bf16.msra.mxu0 %v1209
  %5973 = vmatpush.bf16.msra.mxu0 %v1207
  %5974 = vmatpush.bf16.msra.mxu0 %v1205
  %5975 = vmatpush.bf16.msra.mxu0 %v1203
  %5976 = vmatpush.bf16.msra.mxu0 %v1201
  %5977 = vmatmul.bf16.gmra.mxu0 %v5967
  %v5978 = vpop.f32.mrf.mxu0
  %v5979 = vadd.f32 0.0, %v5978
  %v5980 = vpop.f32.mrf.mxu0
  %v5981 = vadd.f32 0.0, %v5980
  %5982 = vdwg.mxu0
  %5983 = vmatpush.bf16.msra.mxu0 0
  %5984 = vmatpush.bf16.msra.mxu0 %v1214
  %5985 = vmatpush.bf16.msra.mxu0 %v1212
  %5986 = vmatpush.bf16.msra.mxu0 %v1210
  %5987 = vmatpush.bf16.msra.mxu0 %v1208
  %5988 = vmatpush.bf16.msra.mxu0 %v1206
  %5989 = vmatpush.bf16.msra.mxu0 %v1204
  %5990 = vmatpush.bf16.msra.mxu0 %v1202
  %5991 = vmatmul.bf16.gmra.mxu0 %v5967
  %v5992 = vpop.f32.mrf.mxu0
  %v5993 = vadd.f32 0.0, %v5992
  %v5994 = vpop.f32.mrf.mxu0
  %v5995 = vadd.f32 0.0, %v5994
  %5996 = vdwg.mxu0
  %v5997 = vadd.f32 %v5960, %v5979
  %v5998 = vadd.f32 %v5961, %v5993
  %v5999 = vadd.f32 %v5962, %v5981
  %v6000 = vadd.f32 %v5963, %v5995
  %v6001 = vmax.f32 %v5997, 0.0
  %v6002 = vmax.f32 %v5998, 0.0
  %v6003 = vmax.f32 %v5999, 0.0
  %v6004 = vmax.f32 %v6000, 0.0
  %v6005 = vpack.c.bf16 %v6003, %v6001
  %v6006 = vpack.c.bf16 %v6004, %v6002
  %v6008 = vsel %vm717, %v6006, 0
  %6010 = vmatpush.bf16.msra.mxu0 %v1325
  %6011 = vmatpush.bf16.msra.mxu0 %v1324
  %6012 = vmatpush.bf16.msra.mxu0 %v1323
  %6013 = vmatpush.bf16.msra.mxu0 %v1322
  %6014 = vmatpush.bf16.msra.mxu0 %v1321
  %6015 = vmatpush.bf16.msra.mxu0 %v1320
  %6016 = vmatpush.bf16.msra.mxu0 %v1319
  %6017 = vmatpush.bf16.msra.mxu0 %v1318
  %6018 = vmatmul.bf16.gmra.mxu0 %v6005
  %v6019 = vpop.f32.mrf.mxu0
  %v6020 = vadd.f32 0.0, %v6019
  %v6021 = vpop.f32.mrf.mxu0
  %v6022 = vadd.f32 0.0, %v6021
  %6023 = vdwg.mxu0
  %6024 = vmatpush.bf16.msra.mxu0 0
  %6025 = vmatpush.bf16.msra.mxu0 0
  %6026 = vmatpush.bf16.msra.mxu0 0
  %6027 = vmatpush.bf16.msra.mxu0 0
  %6028 = vmatpush.bf16.msra.mxu0 %v1329
  %6029 = vmatpush.bf16.msra.mxu0 %v1328
  %6030 = vmatpush.bf16.msra.mxu0 %v1327
  %6031 = vmatpush.bf16.msra.mxu0 %v1326
  %6032 = vmatmul.bf16.gmra.mxu0 %v6008
  %v6033 = vpop.f32.mrf.mxu0
  %v6034 = vadd.f32 %v6020, %v6033
  %v6035 = vpop.f32.mrf.mxu0
  %v6036 = vadd.f32 %v6022, %v6035
  %6037 = vdwg.mxu0
  %6038 = vmatpush.bf16.msra.mxu0 %v1428
  %6039 = vmatpush.bf16.msra.mxu0 %v1427
  %6040 = vmatpush.bf16.msra.mxu0 %v1426
  %6041 = vmatpush.bf16.msra.mxu0 %v1425
  %6042 = vmatpush.bf16.msra.mxu0 %v1424
  %6043 = vmatpush.bf16.msra.mxu0 %v1423
  %6044 = vmatpush.bf16.msra.mxu0 %v1422
  %6045 = vmatpush.bf16.msra.mxu0 %v1421
  %6046 = vmatmul.bf16.gmra.mxu0 %v6005
  %v6047 = vpop.f32.mrf.mxu0
  %v6048 = vadd.f32 0.0, %v6047
  %v6049 = vpop.f32.mrf.mxu0
  %v6050 = vadd.f32 0.0, %v6049
  %6051 = vdwg.mxu0
  %6052 = vmatpush.bf16.msra.mxu0 0
  %6053 = vmatpush.bf16.msra.mxu0 0
  %6054 = vmatpush.bf16.msra.mxu0 0
  %6055 = vmatpush.bf16.msra.mxu0 0
  %6056 = vmatpush.bf16.msra.mxu0 %v1432
  %6057 = vmatpush.bf16.msra.mxu0 %v1431
  %6058 = vmatpush.bf16.msra.mxu0 %v1430
  %6059 = vmatpush.bf16.msra.mxu0 %v1429
  %6060 = vmatmul.bf16.gmra.mxu0 %v6008
  %v6061 = vpop.f32.mrf.mxu0
  %v6062 = vadd.f32 %v6048, %v6061
  %v6063 = vpop.f32.mrf.mxu0
  %v6064 = vadd.f32 %v6050, %v6063
  %6065 = vdwg.mxu0
  %v6066 = vmax.f32 %v6034, %v6062
  %v6067 = vmax.f32 %v6036, %v6064
  %v6069 = vsel %vm1479, %v6067, 0
  %6071 = vmatpush.msra.mxu0 0.0
  %6072 = vmatpush.msra.mxu0 0.0
  %6073 = vmatpush.msra.mxu0 0.0
  %6074 = vmatpush.msra.mxu0 0.0
  %6075 = vmatpush.msra.mxu0 0.0
  %6076 = vmatpush.msra.mxu0 0.0
  %6077 = vmatpush.msra.mxu0 0.0
  %6078 = vmatpush.msra.mxu0 0.0
  %6079 = vmatpush.msra.mxu0 0.0
  %6080 = vmatpush.msra.mxu0 0.0
  %6081 = vmatpush.msra.mxu0 0.0
  %6082 = vmatpush.msra.mxu0 0.0
  %6083 = vmatpush.msra.mxu0 0.0
  %6084 = vmatpush.msra.mxu0 0.0
  %6085 = vmatpush.msra.mxu0 %v6069
  %6086 = vmatpush.msra.mxu0 %v6066
  %6087 = vmatmul.bf16.gmra.mxu0 %v1477
  %v6088 = vpop.f32.mrf.mxu0
  %v6089 = vadd.f32 0.0, %v6088
  %v6090 = vpop.f32.mrf.mxu0
  %6091 = vdwg.mxu0
  %6092 = vmatpush.msra.mxu0 0.0
  %6093 = vmatpush.msra.mxu0 0.0
  %6094 = vmatpush.msra.mxu0 0.0
  %6095 = vmatpush.msra.mxu0 0.0
  %6096 = vmatpush.msra.mxu0 0.0
  %6097 = vmatpush.msra.mxu0 0.0
  %6098 = vmatpush.msra.mxu0 0.0
  %6099 = vmatpush.msra.mxu0 0.0
  %6100 = vmatpush.msra.mxu0 0.0
  %6101 = vmatpush.msra.mxu0 0.0
  %6102 = vmatpush.msra.mxu0 0.0
  %6103 = vmatpush.msra.mxu0 0.0
  %6104 = vmatpush.msra.mxu0 0.0
  %6105 = vmatpush.msra.mxu0 0.0
  %6106 = vmatpush.msra.mxu0 %v6069
  %6107 = vmatpush.msra.mxu0 %v6066
  %6108 = vmatmul.bf16.gmra.mxu0 %v1505
  %v6109 = vpop.f32.mrf.mxu0
  %v6110 = vadd.f32 0.0, %v6109
  %v6111 = vpop.f32.mrf.mxu0
  %6112 = vdwg.mxu0
  %v6113 = vmax.f32 %v6089, %v6110
  %v6114 = vpack.c.bf16 %v6113, %v6113
  %6115 = vmatpush.bf16.msra.mxu0 %v1592
  %6116 = vmatpush.bf16.msra.mxu0 %v1590
  %6117 = vmatpush.bf16.msra.mxu0 %v1588
  %6118 = vmatpush.bf16.msra.mxu0 %v1586
  %6119 = vmatpush.bf16.msra.mxu0 %v1584
  %6120 = vmatpush.bf16.msra.mxu0 %v1582
  %6121 = vmatpush.bf16.msra.mxu0 %v1580
  %6122 = vmatpush.bf16.msra.mxu0 %v1578
  %6123 = vmatmul.bf16.gmra.mxu0 %v6114
  %v6124 = vpop.f32.mrf.mxu0
  %v6125 = vadd.f32 0.0, %v6124
  %v6126 = vpop.f32.mrf.mxu0
  %6127 = vdwg.mxu0
  %6128 = vmatpush.bf16.msra.mxu0 %v1593
  %6129 = vmatpush.bf16.msra.mxu0 %v1591
  %6130 = vmatpush.bf16.msra.mxu0 %v1589
  %6131 = vmatpush.bf16.msra.mxu0 %v1587
  %6132 = vmatpush.bf16.msra.mxu0 %v1585
  %6133 = vmatpush.bf16.msra.mxu0 %v1583
  %6134 = vmatpush.bf16.msra.mxu0 %v1581
  %6135 = vmatpush.bf16.msra.mxu0 %v1579
  %6136 = vmatmul.bf16.gmra.mxu0 %v6114
  %v6137 = vpop.f32.mrf.mxu0
  %v6138 = vadd.f32 0.0, %v6137
  %v6139 = vpop.f32.mrf.mxu0
  %6140 = vdwg.mxu0
  %v6141 = vadd.f32 %v1637, %v6125
  %v6142 = vadd.f32 %v1638, %v6138
  %v6144 = vshrl.u32 %v6114, 16
  %v6146 = vshll.u32 %v6114, 16
  %v6148 = vrot.slane %v6146, 1
  %v6149 = vor.u32 %v6144, %v6148
  %6151 = vmatpush.bf16.msra.mxu0 %v1713
  %6152 = vmatpush.bf16.msra.mxu0 %v1711
  %6153 = vmatpush.bf16.msra.mxu0 %v1709
  %6154 = vmatpush.bf16.msra.mxu0 %v1707
  %6155 = vmatpush.bf16.msra.mxu0 %v1705
  %6156 = vmatpush.bf16.msra.mxu0 %v1703
  %6157 = vmatpush.bf16.msra.mxu0 %v1701
  %6158 = vmatpush.bf16.msra.mxu0 %v1699
  %6159 = vmatmul.bf16.gmra.mxu0 %v6149
  %v6160 = vpop.f32.mrf.mxu0
  %v6161 = vadd.f32 0.0, %v6160
  %v6162 = vpop.f32.mrf.mxu0
  %6163 = vdwg.mxu0
  %6164 = vmatpush.bf16.msra.mxu0 %v1714
  %6165 = vmatpush.bf16.msra.mxu0 %v1712
  %6166 = vmatpush.bf16.msra.mxu0 %v1710
  %6167 = vmatpush.bf16.msra.mxu0 %v1708
  %6168 = vmatpush.bf16.msra.mxu0 %v1706
  %6169 = vmatpush.bf16.msra.mxu0 %v1704
  %6170 = vmatpush.bf16.msra.mxu0 %v1702
  %6171 = vmatpush.bf16.msra.mxu0 %v1700
  %6172 = vmatmul.bf16.gmra.mxu0 %v6149
  %v6173 = vpop.f32.mrf.mxu0
  %v6174 = vadd.f32 0.0, %v6173
  %v6175 = vpop.f32.mrf.mxu0
  %6176 = vdwg.mxu0
  %v6177 = vadd.f32 %v6141, %v6161
  %v6178 = vadd.f32 %v6142, %v6174
  %v6180 = vrot.slane %v6114, 1
  %6182 = vmatpush.bf16.msra.mxu0 %v1824
  %6183 = vmatpush.bf16.msra.mxu0 %v1822
  %6184 = vmatpush.bf16.msra.mxu0 %v1820
  %6185 = vmatpush.bf16.msra.mxu0 %v1818
  %6186 = vmatpush.bf16.msra.mxu0 %v1816
  %6187 = vmatpush.bf16.msra.mxu0 %v1814
  %6188 = vmatpush.bf16.msra.mxu0 %v1812
  %6189 = vmatpush.bf16.msra.mxu0 %v1810
  %6190 = vmatmul.bf16.gmra.mxu0 %v6180
  %v6191 = vpop.f32.mrf.mxu0
  %v6192 = vadd.f32 0.0, %v6191
  %v6193 = vpop.f32.mrf.mxu0
  %6194 = vdwg.mxu0
  %6195 = vmatpush.bf16.msra.mxu0 %v1825
  %6196 = vmatpush.bf16.msra.mxu0 %v1823
  %6197 = vmatpush.bf16.msra.mxu0 %v1821
  %6198 = vmatpush.bf16.msra.mxu0 %v1819
  %6199 = vmatpush.bf16.msra.mxu0 %v1817
  %6200 = vmatpush.bf16.msra.mxu0 %v1815
  %6201 = vmatpush.bf16.msra.mxu0 %v1813
  %6202 = vmatpush.bf16.msra.mxu0 %v1811
  %6203 = vmatmul.bf16.gmra.mxu0 %v6180
  %v6204 = vpop.f32.mrf.mxu0
  %v6205 = vadd.f32 0.0, %v6204
  %v6206 = vpop.f32.mrf.mxu0
  %6207 = vdwg.mxu0
  %v6208 = vadd.f32 %v6177, %v6192
  %v6209 = vadd.f32 %v6178, %v6205
  %v6210 = vmax.f32 %v6208, 0.0
  %v6211 = vmax.f32 %v6209, 0.0
  %v6212 = vpack.c.bf16 %v6210, %v6210
  %v6213 = vpack.c.bf16 %v6211, %v6211
  %v6215 = vsel %vm717, %v6213, 0
  %6217 = vmatpush.bf16.msra.mxu0 %v1929
  %6218 = vmatpush.bf16.msra.mxu0 %v1928
  %6219 = vmatpush.bf16.msra.mxu0 %v1927
  %6220 = vmatpush.bf16.msra.mxu0 %v1926
  %6221 = vmatpush.bf16.msra.mxu0 %v1925
  %6222 = vmatpush.bf16.msra.mxu0 %v1924
  %6223 = vmatpush.bf16.msra.mxu0 %v1923
  %6224 = vmatpush.bf16.msra.mxu0 %v1922
  %6225 = vmatmul.bf16.gmra.mxu0 %v6212
  %v6226 = vpop.f32.mrf.mxu0
  %v6227 = vadd.f32 0.0, %v6226
  %v6228 = vpop.f32.mrf.mxu0
  %6229 = vdwg.mxu0
  %6230 = vmatpush.bf16.msra.mxu0 0
  %6231 = vmatpush.bf16.msra.mxu0 0
  %6232 = vmatpush.bf16.msra.mxu0 0
  %6233 = vmatpush.bf16.msra.mxu0 0
  %6234 = vmatpush.bf16.msra.mxu0 %v1933
  %6235 = vmatpush.bf16.msra.mxu0 %v1932
  %6236 = vmatpush.bf16.msra.mxu0 %v1931
  %6237 = vmatpush.bf16.msra.mxu0 %v1930
  %6238 = vmatmul.bf16.gmra.mxu0 %v6215
  %v6239 = vpop.f32.mrf.mxu0
  %v6240 = vadd.f32 %v6227, %v6239
  %v6241 = vpop.f32.mrf.mxu0
  %6242 = vdwg.mxu0
  %6243 = vmatpush.bf16.msra.mxu0 %v2030
  %6244 = vmatpush.bf16.msra.mxu0 %v2029
  %6245 = vmatpush.bf16.msra.mxu0 %v2028
  %6246 = vmatpush.bf16.msra.mxu0 %v2027
  %6247 = vmatpush.bf16.msra.mxu0 %v2026
  %6248 = vmatpush.bf16.msra.mxu0 %v2025
  %6249 = vmatpush.bf16.msra.mxu0 %v2024
  %6250 = vmatpush.bf16.msra.mxu0 %v2023
  %6251 = vmatmul.bf16.gmra.mxu0 %v6212
  %v6252 = vpop.f32.mrf.mxu0
  %v6253 = vadd.f32 0.0, %v6252
  %v6254 = vpop.f32.mrf.mxu0
  %6255 = vdwg.mxu0
  %6256 = vmatpush.bf16.msra.mxu0 0
  %6257 = vmatpush.bf16.msra.mxu0 0
  %6258 = vmatpush.bf16.msra.mxu0 0
  %6259 = vmatpush.bf16.msra.mxu0 0
  %6260 = vmatpush.bf16.msra.mxu0 %v2034
  %6261 = vmatpush.bf16.msra.mxu0 %v2033
  %6262 = vmatpush.bf16.msra.mxu0 %v2032
  %6263 = vmatpush.bf16.msra.mxu0 %v2031
  %6264 = vmatmul.bf16.gmra.mxu0 %v6215
  %v6265 = vpop.f32.mrf.mxu0
  %v6266 = vadd.f32 %v6253, %v6265
  %v6267 = vpop.f32.mrf.mxu0
  %6268 = vdwg.mxu0
  %v6269 = vmax.f32 %v6240, %v6266
  %v6271 = vsel %vm2078, %v6269, 0
  %6273 = vmatpush.msra.mxu0 0.0
  %6274 = vmatpush.msra.mxu0 0.0
  %6275 = vmatpush.msra.mxu0 0.0
  %6276 = vmatpush.msra.mxu0 0.0
  %6277 = vmatpush.msra.mxu0 0.0
  %6278 = vmatpush.msra.mxu0 0.0
  %6279 = vmatpush.msra.mxu0 0.0
  %6280 = vmatpush.msra.mxu0 0.0
  %6281 = vmatpush.msra.mxu0 0.0
  %6282 = vmatpush.msra.mxu0 0.0
  %6283 = vmatpush.msra.mxu0 0.0
  %6284 = vmatpush.msra.mxu0 0.0
  %6285 = vmatpush.msra.mxu0 0.0
  %6286 = vmatpush.msra.mxu0 0.0
  %6287 = vmatpush.msra.mxu0 0.0
  %6288 = vmatpush.msra.mxu0 %v6271
  %6289 = vmatmul.bf16.gmra.mxu0 %v2076
  %v6290 = vpop.f32.mrf.mxu0
  %v6291 = vadd.f32 0.0, %v6290
  %v6292 = vpop.f32.mrf.mxu0
  %6293 = vdwg.mxu0
  %6294 = vmatpush.msra.mxu0 0.0
  %6295 = vmatpush.msra.mxu0 0.0
  %6296 = vmatpush.msra.mxu0 0.0
  %6297 = vmatpush.msra.mxu0 0.0
  %6298 = vmatpush.msra.mxu0 0.0
  %6299 = vmatpush.msra.mxu0 0.0
  %6300 = vmatpush.msra.mxu0 0.0
  %6301 = vmatpush.msra.mxu0 0.0
  %6302 = vmatpush.msra.mxu0 0.0
  %6303 = vmatpush.msra.mxu0 0.0
  %6304 = vmatpush.msra.mxu0 0.0
  %6305 = vmatpush.msra.mxu0 0.0
  %6306 = vmatpush.msra.mxu0 0.0
  %6307 = vmatpush.msra.mxu0 0.0
  %6308 = vmatpush.msra.mxu0 0.0
  %6309 = vmatpush.msra.mxu0 %v6271
  %6310 = vmatmul.bf16.gmra.mxu0 %v2104
  %v6311 = vpop.f32.mrf.mxu0
  %v6312 = vadd.f32 0.0, %v6311
  %v6313 = vpop.f32.mrf.mxu0
  %6314 = vdwg.mxu0
  %v6315 = vmax.f32 %v6291, %v6312
  %v6316 = vpack.c.bf16 %v6315, %v6315
  %v6318 = vsel %vm2165, %v6316, 0
  %6320 = vmatpush.bf16.msra.mxu0 0
  %6321 = vmatpush.bf16.msra.mxu0 0
  %6322 = vmatpush.bf16.msra.mxu0 %v2158
  %6323 = vmatpush.bf16.msra.mxu0 %v2157
  %6324 = vmatpush.bf16.msra.mxu0 %v2156
  %6325 = vmatpush.bf16.msra.mxu0 %v2155
  %6326 = vmatpush.bf16.msra.mxu0 %v2154
  %6327 = vmatpush.bf16.msra.mxu0 %v2153
  %6328 = vmatmul.bf16.gmra.mxu0 %v6318
  %v6329 = vpop.f32.mrf.mxu0
  %v6330 = vadd.f32 0.0, %v6329
  %v6331 = vpop.f32.mrf.mxu0
  %6332 = vdwg.mxu0
  %v6333 = vadd.f32 %v374, %v6330
  %v6334 = vshrl.u32 %v6316, 16
  %v6337 = vsel %vm2165, %v6334, 0
  %6339 = vmatpush.bf16.msra.mxu0 0
  %6340 = vmatpush.bf16.msra.mxu0 0
  %6341 = vmatpush.bf16.msra.mxu0 %v2214
  %6342 = vmatpush.bf16.msra.mxu0 %v2213
  %6343 = vmatpush.bf16.msra.mxu0 %v2212
  %6344 = vmatpush.bf16.msra.mxu0 %v2211
  %6345 = vmatpush.bf16.msra.mxu0 %v2210
  %6346 = vmatpush.bf16.msra.mxu0 %v2209
  %6347 = vmatmul.bf16.gmra.mxu0 %v6337
  %v6348 = vpop.f32.mrf.mxu0
  %v6349 = vadd.f32 0.0, %v6348
  %v6350 = vpop.f32.mrf.mxu0
  %6351 = vdwg.mxu0
  %v6352 = vadd.f32 %v6333, %v6349
  %v6354 = vrot.slane %v6316, 1
  %v6356 = vsel %vm2165, %v6354, 0
  %6358 = vmatpush.bf16.msra.mxu0 0
  %6359 = vmatpush.bf16.msra.mxu0 0
  %6360 = vmatpush.bf16.msra.mxu0 %v2269
  %6361 = vmatpush.bf16.msra.mxu0 %v2268
  %6362 = vmatpush.bf16.msra.mxu0 %v2267
  %6363 = vmatpush.bf16.msra.mxu0 %v2266
  %6364 = vmatpush.bf16.msra.mxu0 %v2265
  %6365 = vmatpush.bf16.msra.mxu0 %v2264
  %6366 = vmatmul.bf16.gmra.mxu0 %v6356
  %v6367 = vpop.f32.mrf.mxu0
  %v6368 = vadd.f32 0.0, %v6367
  %v6369 = vpop.f32.mrf.mxu0
  %6370 = vdwg.mxu0
  %v6371 = vadd.f32 %v6352, %v6368
  %v6372 = vmax.f32 %v6371, 0.0
  %v6373 = vpack.c.bf16 %v6372, %v6372
  %v6375 = vsel %vm717, %v6373, 0
  %6377 = vmatpush.bf16.msra.mxu0 0
  %6378 = vmatpush.bf16.msra.mxu0 0
  %6379 = vmatpush.bf16.msra.mxu0 0
  %6380 = vmatpush.bf16.msra.mxu0 0
  %6381 = vmatpush.bf16.msra.mxu0 %v2314
  %6382 = vmatpush.bf16.msra.mxu0 %v2313
  %6383 = vmatpush.bf16.msra.mxu0 %v2312
  %6384 = vmatpush.bf16.msra.mxu0 %v2311
  %6385 = vmatmul.bf16.gmra.mxu0 %v6375
  %v6386 = vpop.f32.mrf.mxu0
  %v6387 = vadd.f32 %v383, %v6386
  %v6388 = vpop.f32.mrf.mxu0
  %6389 = vdwg.mxu0
  %s6390 = scalar_lea.vmem %s0, 192
  %v6391 = vld [vmem:[%s6390] sm:$0xff]
  %v6392 = vld [vmem:[%s6390 + $0x8] sm:$0xff]
  %v6393 = vld [vmem:[%s6390 + $0x10] sm:$0xff]
  %v6394 = vld [vmem:[%s6390 + $0x18] sm:$0x3]
  %v6395 = vpack.c.bf16 %v6392, %v6391
  %v6396 = vpack.c.bf16 %v6393, %v6393
  %v6398 = vsel %vm408, %v6395, 0
  %v6401 = vsel %vm408, %v6396, 0
  %6403 = vmatpush.bf16.msra.mxu0 0
  %6404 = vmatpush.bf16.msra.mxu0 0
  %6405 = vmatpush.bf16.msra.mxu0 0
  %6406 = vmatpush.bf16.msra.mxu0 0
  %6407 = vmatpush.bf16.msra.mxu0 0
  %6408 = vmatpush.bf16.msra.mxu0 0
  %6409 = vmatpush.bf16.msra.mxu0 %v417
  %6410 = vmatpush.bf16.msra.mxu0 %v402
  %6411 = vmatmul.bf16.gmra.mxu0 %v6398
  %v6412 = vpop.f32.mrf.mxu0
  %v6413 = vadd.f32 0.0, %v6412
  %v6414 = vpop.f32.mrf.mxu0
  %v6415 = vadd.f32 0.0, %v6414
  %6416 = vmatmul.bf16.gmra.mxu0 %v6401
  %v6417 = vpop.f32.mrf.mxu0
  %v6418 = vadd.f32 0.0, %v6417
  %v6419 = vpop.f32.mrf.mxu0
  %6420 = vdwg.mxu0
  %6421 = vmatpush.bf16.msra.mxu0 0
  %6422 = vmatpush.bf16.msra.mxu0 0
  %6423 = vmatpush.bf16.msra.mxu0 0
  %6424 = vmatpush.bf16.msra.mxu0 0
  %6425 = vmatpush.bf16.msra.mxu0 0
  %6426 = vmatpush.bf16.msra.mxu0 0
  %6427 = vmatpush.bf16.msra.mxu0 %v420
  %6428 = vmatpush.bf16.msra.mxu0 %v403
  %6429 = vmatmul.bf16.gmra.mxu0 %v6398
  %v6430 = vpop.f32.mrf.mxu0
  %v6431 = vadd.f32 0.0, %v6430
  %v6432 = vpop.f32.mrf.mxu0
  %v6433 = vadd.f32 0.0, %v6432
  %6434 = vmatmul.bf16.gmra.mxu0 %v6401
  %v6435 = vpop.f32.mrf.mxu0
  %v6436 = vadd.f32 0.0, %v6435
  %v6437 = vpop.f32.mrf.mxu0
  %6438 = vdwg.mxu0
  %v6439 = vadd.f32 %v459, %v6413
  %v6440 = vadd.f32 %v460, %v6431
  %v6441 = vadd.f32 %v459, %v6415
  %v6442 = vadd.f32 %v460, %v6433
  %v6443 = vadd.f32 %v459, %v6418
  %v6444 = vadd.f32 %v460, %v6436
  %v6445 = vpack.c.bf16 %v6394, %v6393
  %v6446 = vshrl.u32 %v6395, 16
  %v6448 = vshll.u32 %v6395, 16
  %v6450 = vrot.slane %v6448, 1
  %v6451 = vor.u32 %v6446, %v6450
  %v6453 = vshll.u32 %v6445, 16
  %v6455 = vrot.slane %v6453, 1
  %v6456 = vsel %vm470, %v6451, %v6455
  %v6457 = vshrl.u32 %v6445, 16
  %v6459 = vor.u32 %v6457, %v6455
  %v6461 = vsel %vm408, %v6456, 0
  %v6464 = vsel %vm408, %v6459, 0
  %6466 = vmatpush.bf16.msra.mxu0 0
  %6467 = vmatpush.bf16.msra.mxu0 0
  %6468 = vmatpush.bf16.msra.mxu0 0
  %6469 = vmatpush.bf16.msra.mxu0 0
  %6470 = vmatpush.bf16.msra.mxu0 0
  %6471 = vmatpush.bf16.msra.mxu0 0
  %6472 = vmatpush.bf16.msra.mxu0 %v510
  %6473 = vmatpush.bf16.msra.mxu0 %v497
  %6474 = vmatmul.bf16.gmra.mxu0 %v6461
  %v6475 = vpop.f32.mrf.mxu0
  %v6476 = vadd.f32 0.0, %v6475
  %v6477 = vpop.f32.mrf.mxu0
  %v6478 = vadd.f32 0.0, %v6477
  %6479 = vmatmul.bf16.gmra.mxu0 %v6464
  %v6480 = vpop.f32.mrf.mxu0
  %v6481 = vadd.f32 0.0, %v6480
  %v6482 = vpop.f32.mrf.mxu0
  %6483 = vdwg.mxu0
  %6484 = vmatpush.bf16.msra.mxu0 0
  %6485 = vmatpush.bf16.msra.mxu0 0
  %6486 = vmatpush.bf16.msra.mxu0 0
  %6487 = vmatpush.bf16.msra.mxu0 0
  %6488 = vmatpush.bf16.msra.mxu0 0
  %6489 = vmatpush.bf16.msra.mxu0 0
  %6490 = vmatpush.bf16.msra.mxu0 %v513
  %6491 = vmatpush.bf16.msra.mxu0 %v498
  %6492 = vmatmul.bf16.gmra.mxu0 %v6461
  %v6493 = vpop.f32.mrf.mxu0
  %v6494 = vadd.f32 0.0, %v6493
  %v6495 = vpop.f32.mrf.mxu0
  %v6496 = vadd.f32 0.0, %v6495
  %6497 = vmatmul.bf16.gmra.mxu0 %v6464
  %v6498 = vpop.f32.mrf.mxu0
  %v6499 = vadd.f32 0.0, %v6498
  %v6500 = vpop.f32.mrf.mxu0
  %6501 = vdwg.mxu0
  %v6502 = vadd.f32 %v6439, %v6476
  %v6503 = vadd.f32 %v6440, %v6494
  %v6504 = vadd.f32 %v6441, %v6478
  %v6505 = vadd.f32 %v6442, %v6496
  %v6506 = vadd.f32 %v6443, %v6481
  %v6507 = vadd.f32 %v6444, %v6499
  %v6510 = vrot.slane %v6395, 1
  %v6511 = vrot.slane %v6445, 1
  %v6512 = vsel %vm559, %v6510, %v6511
  %v6514 = vsel %vm408, %v6512, 0
  %v6517 = vsel %vm408, %v6511, 0
  %6519 = vmatpush.bf16.msra.mxu0 0
  %6520 = vmatpush.bf16.msra.mxu0 0
  %6521 = vmatpush.bf16.msra.mxu0 0
  %6522 = vmatpush.bf16.msra.mxu0 0
  %6523 = vmatpush.bf16.msra.mxu0 0
  %6524 = vmatpush.bf16.msra.mxu0 0
  %6525 = vmatpush.bf16.msra.mxu0 %v588
  %6526 = vmatpush.bf16.msra.mxu0 %v575
  %6527 = vmatmul.bf16.gmra.mxu0 %v6514
  %v6528 = vpop.f32.mrf.mxu0
  %v6529 = vadd.f32 0.0, %v6528
  %v6530 = vpop.f32.mrf.mxu0
  %v6531 = vadd.f32 0.0, %v6530
  %6532 = vmatmul.bf16.gmra.mxu0 %v6517
  %v6533 = vpop.f32.mrf.mxu0
  %v6534 = vadd.f32 0.0, %v6533
  %v6535 = vpop.f32.mrf.mxu0
  %6536 = vdwg.mxu0
  %6537 = vmatpush.bf16.msra.mxu0 0
  %6538 = vmatpush.bf16.msra.mxu0 0
  %6539 = vmatpush.bf16.msra.mxu0 0
  %6540 = vmatpush.bf16.msra.mxu0 0
  %6541 = vmatpush.bf16.msra.mxu0 0
  %6542 = vmatpush.bf16.msra.mxu0 0
  %6543 = vmatpush.bf16.msra.mxu0 %v591
  %6544 = vmatpush.bf16.msra.mxu0 %v576
  %6545 = vmatmul.bf16.gmra.mxu0 %v6514
  %v6546 = vpop.f32.mrf.mxu0
  %v6547 = vadd.f32 0.0, %v6546
  %v6548 = vpop.f32.mrf.mxu0
  %v6549 = vadd.f32 0.0, %v6548
  %6550 = vmatmul.bf16.gmra.mxu0 %v6517
  %v6551 = vpop.f32.mrf.mxu0
  %v6552 = vadd.f32 0.0, %v6551
  %v6553 = vpop.f32.mrf.mxu0
  %6554 = vdwg.mxu0
  %v6555 = vadd.f32 %v6502, %v6529
  %v6556 = vadd.f32 %v6503, %v6547
  %v6557 = vadd.f32 %v6504, %v6531
  %v6558 = vadd.f32 %v6505, %v6549
  %v6559 = vadd.f32 %v6506, %v6534
  %v6560 = vadd.f32 %v6507, %v6552
  %v6561 = vmax.f32 %v6555, 0.0
  %v6562 = vmax.f32 %v6556, 0.0
  %v6563 = vmax.f32 %v6557, 0.0
  %v6564 = vmax.f32 %v6558, 0.0
  %v6565 = vmax.f32 %v6559, 0.0
  %v6566 = vmax.f32 %v6560, 0.0
  %v6567 = vpack.c.bf16 %v6563, %v6561
  %v6568 = vpack.c.bf16 %v6564, %v6562
  %v6569 = vpack.c.bf16 %v6565, %v6565
  %v6570 = vpack.c.bf16 %v6566, %v6566
  %v6572 = vsel %vm717, %v6568, 0
  %v6575 = vsel %vm717, %v6570, 0
  %6577 = vmatpush.bf16.msra.mxu0 %v700
  %6578 = vmatpush.bf16.msra.mxu0 %v699
  %6579 = vmatpush.bf16.msra.mxu0 %v698
  %6580 = vmatpush.bf16.msra.mxu0 %v697
  %6581 = vmatpush.bf16.msra.mxu0 %v696
  %6582 = vmatpush.bf16.msra.mxu0 %v695
  %6583 = vmatpush.bf16.msra.mxu0 %v694
  %6584 = vmatpush.bf16.msra.mxu0 %v693
  %6585 = vmatmul.bf16.gmra.mxu0 %v6567
  %v6586 = vpop.f32.mrf.mxu0
  %v6587 = vadd.f32 0.0, %v6586
  %v6588 = vpop.f32.mrf.mxu0
  %v6589 = vadd.f32 0.0, %v6588
  %6590 = vmatmul.bf16.gmra.mxu0 %v6569
  %v6591 = vpop.f32.mrf.mxu0
  %v6592 = vadd.f32 0.0, %v6591
  %v6593 = vpop.f32.mrf.mxu0
  %6594 = vdwg.mxu0
  %6595 = vmatpush.bf16.msra.mxu0 0
  %6596 = vmatpush.bf16.msra.mxu0 0
  %6597 = vmatpush.bf16.msra.mxu0 0
  %6598 = vmatpush.bf16.msra.mxu0 0
  %6599 = vmatpush.bf16.msra.mxu0 %v704
  %6600 = vmatpush.bf16.msra.mxu0 %v703
  %6601 = vmatpush.bf16.msra.mxu0 %v702
  %6602 = vmatpush.bf16.msra.mxu0 %v701
  %6603 = vmatmul.bf16.gmra.mxu0 %v6572
  %v6604 = vpop.f32.mrf.mxu0
  %v6605 = vadd.f32 %v6587, %v6604
  %v6606 = vpop.f32.mrf.mxu0
  %v6607 = vadd.f32 %v6589, %v6606
  %6608 = vmatmul.bf16.gmra.mxu0 %v6575
  %v6609 = vpop.f32.mrf.mxu0
  %v6610 = vadd.f32 %v6592, %v6609
  %v6611 = vpop.f32.mrf.mxu0
  %6612 = vdwg.mxu0
  %6613 = vmatpush.bf16.msra.mxu0 %v815
  %6614 = vmatpush.bf16.msra.mxu0 %v814
  %6615 = vmatpush.bf16.msra.mxu0 %v813
  %6616 = vmatpush.bf16.msra.mxu0 %v812
  %6617 = vmatpush.bf16.msra.mxu0 %v811
  %6618 = vmatpush.bf16.msra.mxu0 %v810
  %6619 = vmatpush.bf16.msra.mxu0 %v809
  %6620 = vmatpush.bf16.msra.mxu0 %v808
  %6621 = vmatmul.bf16.gmra.mxu0 %v6567
  %v6622 = vpop.f32.mrf.mxu0
  %v6623 = vadd.f32 0.0, %v6622
  %v6624 = vpop.f32.mrf.mxu0
  %v6625 = vadd.f32 0.0, %v6624
  %6626 = vmatmul.bf16.gmra.mxu0 %v6569
  %v6627 = vpop.f32.mrf.mxu0
  %v6628 = vadd.f32 0.0, %v6627
  %v6629 = vpop.f32.mrf.mxu0
  %6630 = vdwg.mxu0
  %6631 = vmatpush.bf16.msra.mxu0 0
  %6632 = vmatpush.bf16.msra.mxu0 0
  %6633 = vmatpush.bf16.msra.mxu0 0
  %6634 = vmatpush.bf16.msra.mxu0 0
  %6635 = vmatpush.bf16.msra.mxu0 %v819
  %6636 = vmatpush.bf16.msra.mxu0 %v818
  %6637 = vmatpush.bf16.msra.mxu0 %v817
  %6638 = vmatpush.bf16.msra.mxu0 %v816
  %6639 = vmatmul.bf16.gmra.mxu0 %v6572
  %v6640 = vpop.f32.mrf.mxu0
  %v6641 = vadd.f32 %v6623, %v6640
  %v6642 = vpop.f32.mrf.mxu0
  %v6643 = vadd.f32 %v6625, %v6642
  %6644 = vmatmul.bf16.gmra.mxu0 %v6575
  %v6645 = vpop.f32.mrf.mxu0
  %v6646 = vadd.f32 %v6628, %v6645
  %v6647 = vpop.f32.mrf.mxu0
  %6648 = vdwg.mxu0
  %v6649 = vmax.f32 %v6605, %v6641
  %v6650 = vmax.f32 %v6607, %v6643
  %v6651 = vmax.f32 %v6610, %v6646
  %6652 = vmatpush.msra.mxu0 0.0
  %6653 = vmatpush.msra.mxu0 0.0
  %6654 = vmatpush.msra.mxu0 0.0
  %6655 = vmatpush.msra.mxu0 0.0
  %6656 = vmatpush.msra.mxu0 0.0
  %6657 = vmatpush.msra.mxu0 0.0
  %6658 = vmatpush.msra.mxu0 0.0
  %6659 = vmatpush.msra.mxu0 0.0
  %6660 = vmatpush.msra.mxu0 0.0
  %6661 = vmatpush.msra.mxu0 0.0
  %6662 = vmatpush.msra.mxu0 0.0
  %6663 = vmatpush.msra.mxu0 0.0
  %6664 = vmatpush.msra.mxu0 0.0
  %6665 = vmatpush.msra.mxu0 %v6651
  %6666 = vmatpush.msra.mxu0 %v6650
  %6667 = vmatpush.msra.mxu0 %v6649
  %6668 = vmatmul.bf16.gmra.mxu0 %v878
  %v6669 = vpop.f32.mrf.mxu0
  %v6670 = vadd.f32 0.0, %v6669
  %v6671 = vpop.f32.mrf.mxu0
  %v6672 = vadd.f32 0.0, %v6671
  %6673 = vdwg.mxu0
  %6674 = vmatpush.msra.mxu0 0.0
  %6675 = vmatpush.msra.mxu0 0.0
  %6676 = vmatpush.msra.mxu0 0.0
  %6677 = vmatpush.msra.mxu0 0.0
  %6678 = vmatpush.msra.mxu0 0.0
  %6679 = vmatpush.msra.mxu0 0.0
  %6680 = vmatpush.msra.mxu0 0.0
  %6681 = vmatpush.msra.mxu0 0.0
  %6682 = vmatpush.msra.mxu0 0.0
  %6683 = vmatpush.msra.mxu0 0.0
  %6684 = vmatpush.msra.mxu0 0.0
  %6685 = vmatpush.msra.mxu0 0.0
  %6686 = vmatpush.msra.mxu0 0.0
  %6687 = vmatpush.msra.mxu0 %v6651
  %6688 = vmatpush.msra.mxu0 %v6650
  %6689 = vmatpush.msra.mxu0 %v6649
  %6690 = vmatmul.bf16.gmra.mxu0 %v908
  %v6691 = vpop.f32.mrf.mxu0
  %v6692 = vadd.f32 0.0, %v6691
  %v6693 = vpop.f32.mrf.mxu0
  %v6694 = vadd.f32 0.0, %v6693
  %6695 = vdwg.mxu0
  %v6696 = vmax.f32 %v6670, %v6692
  %v6697 = vmax.f32 %v6672, %v6694
  %v6698 = vpack.c.bf16 %v6697, %v6696
  %v6700 = vsel %vm1005, %v6698, 0
  %6702 = vmatpush.bf16.msra.mxu0 0
  %6703 = vmatpush.bf16.msra.mxu0 %v989
  %6704 = vmatpush.bf16.msra.mxu0 %v987
  %6705 = vmatpush.bf16.msra.mxu0 %v985
  %6706 = vmatpush.bf16.msra.mxu0 %v983
  %6707 = vmatpush.bf16.msra.mxu0 %v981
  %6708 = vmatpush.bf16.msra.mxu0 %v979
  %6709 = vmatpush.bf16.msra.mxu0 %v977
  %6710 = vmatmul.bf16.gmra.mxu0 %v6700
  %v6711 = vpop.f32.mrf.mxu0
  %v6712 = vadd.f32 0.0, %v6711
  %v6713 = vpop.f32.mrf.mxu0
  %v6714 = vadd.f32 0.0, %v6713
  %6715 = vdwg.mxu0
  %6716 = vmatpush.bf16.msra.mxu0 0
  %6717 = vmatpush.bf16.msra.mxu0 %v990
  %6718 = vmatpush.bf16.msra.mxu0 %v988
  %6719 = vmatpush.bf16.msra.mxu0 %v986
  %6720 = vmatpush.bf16.msra.mxu0 %v984
  %6721 = vmatpush.bf16.msra.mxu0 %v982
  %6722 = vmatpush.bf16.msra.mxu0 %v980
  %6723 = vmatpush.bf16.msra.mxu0 %v978
  %6724 = vmatmul.bf16.gmra.mxu0 %v6700
  %v6725 = vpop.f32.mrf.mxu0
  %v6726 = vadd.f32 0.0, %v6725
  %v6727 = vpop.f32.mrf.mxu0
  %v6728 = vadd.f32 0.0, %v6727
  %6729 = vdwg.mxu0
  %v6730 = vadd.f32 %v1038, %v6712
  %v6731 = vadd.f32 %v1039, %v6726
  %v6732 = vadd.f32 %v1038, %v6714
  %v6733 = vadd.f32 %v1039, %v6728
  %v6734 = vshrl.u32 %v6698, 16
  %v6736 = vshll.u32 %v6698, 16
  %v6738 = vrot.slane %v6736, 1
  %v6739 = vor.u32 %v6734, %v6738
  %v6741 = vsel %vm1005, %v6739, 0
  %6743 = vmatpush.bf16.msra.mxu0 0
  %6744 = vmatpush.bf16.msra.mxu0 %v1106
  %6745 = vmatpush.bf16.msra.mxu0 %v1104
  %6746 = vmatpush.bf16.msra.mxu0 %v1102
  %6747 = vmatpush.bf16.msra.mxu0 %v1100
  %6748 = vmatpush.bf16.msra.mxu0 %v1098
  %6749 = vmatpush.bf16.msra.mxu0 %v1096
  %6750 = vmatpush.bf16.msra.mxu0 %v1094
  %6751 = vmatmul.bf16.gmra.mxu0 %v6741
  %v6752 = vpop.f32.mrf.mxu0
  %v6753 = vadd.f32 0.0, %v6752
  %v6754 = vpop.f32.mrf.mxu0
  %v6755 = vadd.f32 0.0, %v6754
  %6756 = vdwg.mxu0
  %6757 = vmatpush.bf16.msra.mxu0 0
  %6758 = vmatpush.bf16.msra.mxu0 %v1107
  %6759 = vmatpush.bf16.msra.mxu0 %v1105
  %6760 = vmatpush.bf16.msra.mxu0 %v1103
  %6761 = vmatpush.bf16.msra.mxu0 %v1101
  %6762 = vmatpush.bf16.msra.mxu0 %v1099
  %6763 = vmatpush.bf16.msra.mxu0 %v1097
  %6764 = vmatpush.bf16.msra.mxu0 %v1095
  %6765 = vmatmul.bf16.gmra.mxu0 %v6741
  %v6766 = vpop.f32.mrf.mxu0
  %v6767 = vadd.f32 0.0, %v6766
  %v6768 = vpop.f32.mrf.mxu0
  %v6769 = vadd.f32 0.0, %v6768
  %6770 = vdwg.mxu0
  %v6771 = vadd.f32 %v6730, %v6753
  %v6772 = vadd.f32 %v6731, %v6767
  %v6773 = vadd.f32 %v6732, %v6755
  %v6774 = vadd.f32 %v6733, %v6769
  %v6776 = vrot.slane %v6698, 1
  %v6778 = vsel %vm1005, %v6776, 0
  %6780 = vmatpush.bf16.msra.mxu0 0
  %6781 = vmatpush.bf16.msra.mxu0 %v1213
  %6782 = vmatpush.bf16.msra.mxu0 %v1211
  %6783 = vmatpush.bf16.msra.mxu0 %v1209
  %6784 = vmatpush.bf16.msra.mxu0 %v1207
  %6785 = vmatpush.bf16.msra.mxu0 %v1205
  %6786 = vmatpush.bf16.msra.mxu0 %v1203
  %6787 = vmatpush.bf16.msra.mxu0 %v1201
  %6788 = vmatmul.bf16.gmra.mxu0 %v6778
  %v6789 = vpop.f32.mrf.mxu0
  %v6790 = vadd.f32 0.0, %v6789
  %v6791 = vpop.f32.mrf.mxu0
  %v6792 = vadd.f32 0.0, %v6791
  %6793 = vdwg.mxu0
  %6794 = vmatpush.bf16.msra.mxu0 0
  %6795 = vmatpush.bf16.msra.mxu0 %v1214
  %6796 = vmatpush.bf16.msra.mxu0 %v1212
  %6797 = vmatpush.bf16.msra.mxu0 %v1210
  %6798 = vmatpush.bf16.msra.mxu0 %v1208
  %6799 = vmatpush.bf16.msra.mxu0 %v1206
  %6800 = vmatpush.bf16.msra.mxu0 %v1204
  %6801 = vmatpush.bf16.msra.mxu0 %v1202
  %6802 = vmatmul.bf16.gmra.mxu0 %v6778
  %v6803 = vpop.f32.mrf.mxu0
  %v6804 = vadd.f32 0.0, %v6803
  %v6805 = vpop.f32.mrf.mxu0
  %v6806 = vadd.f32 0.0, %v6805
  %6807 = vdwg.mxu0
  %v6808 = vadd.f32 %v6771, %v6790
  %v6809 = vadd.f32 %v6772, %v6804
  %v6810 = vadd.f32 %v6773, %v6792
  %v6811 = vadd.f32 %v6774, %v6806
  %v6812 = vmax.f32 %v6808, 0.0
  %v6813 = vmax.f32 %v6809, 0.0
  %v6814 = vmax.f32 %v6810, 0.0
  %v6815 = vmax.f32 %v6811, 0.0
  %v6816 = vpack.c.bf16 %v6814, %v6812
  %v6817 = vpack.c.bf16 %v6815, %v6813
  %v6819 = vsel %vm717, %v6817, 0
  %6821 = vmatpush.bf16.msra.mxu0 %v1325
  %6822 = vmatpush.bf16.msra.mxu0 %v1324
  %6823 = vmatpush.bf16.msra.mxu0 %v1323
  %6824 = vmatpush.bf16.msra.mxu0 %v1322
  %6825 = vmatpush.bf16.msra.mxu0 %v1321
  %6826 = vmatpush.bf16.msra.mxu0 %v1320
  %6827 = vmatpush.bf16.msra.mxu0 %v1319
  %6828 = vmatpush.bf16.msra.mxu0 %v1318
  %6829 = vmatmul.bf16.gmra.mxu0 %v6816
  %v6830 = vpop.f32.mrf.mxu0
  %v6831 = vadd.f32 0.0, %v6830
  %v6832 = vpop.f32.mrf.mxu0
  %v6833 = vadd.f32 0.0, %v6832
  %6834 = vdwg.mxu0
  %6835 = vmatpush.bf16.msra.mxu0 0
  %6836 = vmatpush.bf16.msra.mxu0 0
  %6837 = vmatpush.bf16.msra.mxu0 0
  %6838 = vmatpush.bf16.msra.mxu0 0
  %6839 = vmatpush.bf16.msra.mxu0 %v1329
  %6840 = vmatpush.bf16.msra.mxu0 %v1328
  %6841 = vmatpush.bf16.msra.mxu0 %v1327
  %6842 = vmatpush.bf16.msra.mxu0 %v1326
  %6843 = vmatmul.bf16.gmra.mxu0 %v6819
  %v6844 = vpop.f32.mrf.mxu0
  %v6845 = vadd.f32 %v6831, %v6844
  %v6846 = vpop.f32.mrf.mxu0
  %v6847 = vadd.f32 %v6833, %v6846
  %6848 = vdwg.mxu0
  %6849 = vmatpush.bf16.msra.mxu0 %v1428
  %6850 = vmatpush.bf16.msra.mxu0 %v1427
  %6851 = vmatpush.bf16.msra.mxu0 %v1426
  %6852 = vmatpush.bf16.msra.mxu0 %v1425
  %6853 = vmatpush.bf16.msra.mxu0 %v1424
  %6854 = vmatpush.bf16.msra.mxu0 %v1423
  %6855 = vmatpush.bf16.msra.mxu0 %v1422
  %6856 = vmatpush.bf16.msra.mxu0 %v1421
  %6857 = vmatmul.bf16.gmra.mxu0 %v6816
  %v6858 = vpop.f32.mrf.mxu0
  %v6859 = vadd.f32 0.0, %v6858
  %v6860 = vpop.f32.mrf.mxu0
  %v6861 = vadd.f32 0.0, %v6860
  %6862 = vdwg.mxu0
  %6863 = vmatpush.bf16.msra.mxu0 0
  %6864 = vmatpush.bf16.msra.mxu0 0
  %6865 = vmatpush.bf16.msra.mxu0 0
  %6866 = vmatpush.bf16.msra.mxu0 0
  %6867 = vmatpush.bf16.msra.mxu0 %v1432
  %6868 = vmatpush.bf16.msra.mxu0 %v1431
  %6869 = vmatpush.bf16.msra.mxu0 %v1430
  %6870 = vmatpush.bf16.msra.mxu0 %v1429
  %6871 = vmatmul.bf16.gmra.mxu0 %v6819
  %v6872 = vpop.f32.mrf.mxu0
  %v6873 = vadd.f32 %v6859, %v6872
  %v6874 = vpop.f32.mrf.mxu0
  %v6875 = vadd.f32 %v6861, %v6874
  %6876 = vdwg.mxu0
  %v6877 = vmax.f32 %v6845, %v6873
  %v6878 = vmax.f32 %v6847, %v6875
  %v6880 = vsel %vm1479, %v6878, 0
  %6882 = vmatpush.msra.mxu0 0.0
  %6883 = vmatpush.msra.mxu0 0.0
  %6884 = vmatpush.msra.mxu0 0.0
  %6885 = vmatpush.msra.mxu0 0.0
  %6886 = vmatpush.msra.mxu0 0.0
  %6887 = vmatpush.msra.mxu0 0.0
  %6888 = vmatpush.msra.mxu0 0.0
  %6889 = vmatpush.msra.mxu0 0.0
  %6890 = vmatpush.msra.mxu0 0.0
  %6891 = vmatpush.msra.mxu0 0.0
  %6892 = vmatpush.msra.mxu0 0.0
  %6893 = vmatpush.msra.mxu0 0.0
  %6894 = vmatpush.msra.mxu0 0.0
  %6895 = vmatpush.msra.mxu0 0.0
  %6896 = vmatpush.msra.mxu0 %v6880
  %6897 = vmatpush.msra.mxu0 %v6877
  %6898 = vmatmul.bf16.gmra.mxu0 %v1477
  %v6899 = vpop.f32.mrf.mxu0
  %v6900 = vadd.f32 0.0, %v6899
  %v6901 = vpop.f32.mrf.mxu0
  %6902 = vdwg.mxu0
  %6903 = vmatpush.msra.mxu0 0.0
  %6904 = vmatpush.msra.mxu0 0.0
  %6905 = vmatpush.msra.mxu0 0.0
  %6906 = vmatpush.msra.mxu0 0.0
  %6907 = vmatpush.msra.mxu0 0.0
  %6908 = vmatpush.msra.mxu0 0.0
  %6909 = vmatpush.msra.mxu0 0.0
  %6910 = vmatpush.msra.mxu0 0.0
  %6911 = vmatpush.msra.mxu0 0.0
  %6912 = vmatpush.msra.mxu0 0.0
  %6913 = vmatpush.msra.mxu0 0.0
  %6914 = vmatpush.msra.mxu0 0.0
  %6915 = vmatpush.msra.mxu0 0.0
  %6916 = vmatpush.msra.mxu0 0.0
  %6917 = vmatpush.msra.mxu0 %v6880
  %6918 = vmatpush.msra.mxu0 %v6877
  %6919 = vmatmul.bf16.gmra.mxu0 %v1505
  %v6920 = vpop.f32.mrf.mxu0
  %v6921 = vadd.f32 0.0, %v6920
  %v6922 = vpop.f32.mrf.mxu0
  %6923 = vdwg.mxu0
  %v6924 = vmax.f32 %v6900, %v6921
  %v6925 = vpack.c.bf16 %v6924, %v6924
  %6926 = vmatpush.bf16.msra.mxu0 %v1592
  %6927 = vmatpush.bf16.msra.mxu0 %v1590
  %6928 = vmatpush.bf16.msra.mxu0 %v1588
  %6929 = vmatpush.bf16.msra.mxu0 %v1586
  %6930 = vmatpush.bf16.msra.mxu0 %v1584
  %6931 = vmatpush.bf16.msra.mxu0 %v1582
  %6932 = vmatpush.bf16.msra.mxu0 %v1580
  %6933 = vmatpush.bf16.msra.mxu0 %v1578
  %6934 = vmatmul.bf16.gmra.mxu0 %v6925
  %v6935 = vpop.f32.mrf.mxu0
  %v6936 = vadd.f32 0.0, %v6935
  %v6937 = vpop.f32.mrf.mxu0
  %6938 = vdwg.mxu0
  %6939 = vmatpush.bf16.msra.mxu0 %v1593
  %6940 = vmatpush.bf16.msra.mxu0 %v1591
  %6941 = vmatpush.bf16.msra.mxu0 %v1589
  %6942 = vmatpush.bf16.msra.mxu0 %v1587
  %6943 = vmatpush.bf16.msra.mxu0 %v1585
  %6944 = vmatpush.bf16.msra.mxu0 %v1583
  %6945 = vmatpush.bf16.msra.mxu0 %v1581
  %6946 = vmatpush.bf16.msra.mxu0 %v1579
  %6947 = vmatmul.bf16.gmra.mxu0 %v6925
  %v6948 = vpop.f32.mrf.mxu0
  %v6949 = vadd.f32 0.0, %v6948
  %v6950 = vpop.f32.mrf.mxu0
  %6951 = vdwg.mxu0
  %v6952 = vadd.f32 %v1637, %v6936
  %v6953 = vadd.f32 %v1638, %v6949
  %v6955 = vshrl.u32 %v6925, 16
  %v6957 = vshll.u32 %v6925, 16
  %v6959 = vrot.slane %v6957, 1
  %v6960 = vor.u32 %v6955, %v6959
  %6962 = vmatpush.bf16.msra.mxu0 %v1713
  %6963 = vmatpush.bf16.msra.mxu0 %v1711
  %6964 = vmatpush.bf16.msra.mxu0 %v1709
  %6965 = vmatpush.bf16.msra.mxu0 %v1707
  %6966 = vmatpush.bf16.msra.mxu0 %v1705
  %6967 = vmatpush.bf16.msra.mxu0 %v1703
  %6968 = vmatpush.bf16.msra.mxu0 %v1701
  %6969 = vmatpush.bf16.msra.mxu0 %v1699
  %6970 = vmatmul.bf16.gmra.mxu0 %v6960
  %v6971 = vpop.f32.mrf.mxu0
  %v6972 = vadd.f32 0.0, %v6971
  %v6973 = vpop.f32.mrf.mxu0
  %6974 = vdwg.mxu0
  %6975 = vmatpush.bf16.msra.mxu0 %v1714
  %6976 = vmatpush.bf16.msra.mxu0 %v1712
  %6977 = vmatpush.bf16.msra.mxu0 %v1710
  %6978 = vmatpush.bf16.msra.mxu0 %v1708
  %6979 = vmatpush.bf16.msra.mxu0 %v1706
  %6980 = vmatpush.bf16.msra.mxu0 %v1704
  %6981 = vmatpush.bf16.msra.mxu0 %v1702
  %6982 = vmatpush.bf16.msra.mxu0 %v1700
  %6983 = vmatmul.bf16.gmra.mxu0 %v6960
  %v6984 = vpop.f32.mrf.mxu0
  %v6985 = vadd.f32 0.0, %v6984
  %v6986 = vpop.f32.mrf.mxu0
  %6987 = vdwg.mxu0
  %v6988 = vadd.f32 %v6952, %v6972
  %v6989 = vadd.f32 %v6953, %v6985
  %v6991 = vrot.slane %v6925, 1
  %6993 = vmatpush.bf16.msra.mxu0 %v1824
  %6994 = vmatpush.bf16.msra.mxu0 %v1822
  %6995 = vmatpush.bf16.msra.mxu0 %v1820
  %6996 = vmatpush.bf16.msra.mxu0 %v1818
  %6997 = vmatpush.bf16.msra.mxu0 %v1816
  %6998 = vmatpush.bf16.msra.mxu0 %v1814
  %6999 = vmatpush.bf16.msra.mxu0 %v1812
  %7000 = vmatpush.bf16.msra.mxu0 %v1810
  %7001 = vmatmul.bf16.gmra.mxu0 %v6991
  %v7002 = vpop.f32.mrf.mxu0
  %v7003 = vadd.f32 0.0, %v7002
  %v7004 = vpop.f32.mrf.mxu0
  %7005 = vdwg.mxu0
  %7006 = vmatpush.bf16.msra.mxu0 %v1825
  %7007 = vmatpush.bf16.msra.mxu0 %v1823
  %7008 = vmatpush.bf16.msra.mxu0 %v1821
  %7009 = vmatpush.bf16.msra.mxu0 %v1819
  %7010 = vmatpush.bf16.msra.mxu0 %v1817
  %7011 = vmatpush.bf16.msra.mxu0 %v1815
  %7012 = vmatpush.bf16.msra.mxu0 %v1813
  %7013 = vmatpush.bf16.msra.mxu0 %v1811
  %7014 = vmatmul.bf16.gmra.mxu0 %v6991
  %v7015 = vpop.f32.mrf.mxu0
  %v7016 = vadd.f32 0.0, %v7015
  %v7017 = vpop.f32.mrf.mxu0
  %7018 = vdwg.mxu0
  %v7019 = vadd.f32 %v6988, %v7003
  %v7020 = vadd.f32 %v6989, %v7016
  %v7021 = vmax.f32 %v7019, 0.0
  %v7022 = vmax.f32 %v7020, 0.0
  %v7023 = vpack.c.bf16 %v7021, %v7021
  %v7024 = vpack.c.bf16 %v7022, %v7022
  %v7026 = vsel %vm717, %v7024, 0
  %7028 = vmatpush.bf16.msra.mxu0 %v1929
  %7029 = vmatpush.bf16.msra.mxu0 %v1928
  %7030 = vmatpush.bf16.msra.mxu0 %v1927
  %7031 = vmatpush.bf16.msra.mxu0 %v1926
  %7032 = vmatpush.bf16.msra.mxu0 %v1925
  %7033 = vmatpush.bf16.msra.mxu0 %v1924
  %7034 = vmatpush.bf16.msra.mxu0 %v1923
  %7035 = vmatpush.bf16.msra.mxu0 %v1922
  %7036 = vmatmul.bf16.gmra.mxu0 %v7023
  %v7037 = vpop.f32.mrf.mxu0
  %v7038 = vadd.f32 0.0, %v7037
  %v7039 = vpop.f32.mrf.mxu0
  %7040 = vdwg.mxu0
  %7041 = vmatpush.bf16.msra.mxu0 0
  %7042 = vmatpush.bf16.msra.mxu0 0
  %7043 = vmatpush.bf16.msra.mxu0 0
  %7044 = vmatpush.bf16.msra.mxu0 0
  %7045 = vmatpush.bf16.msra.mxu0 %v1933
  %7046 = vmatpush.bf16.msra.mxu0 %v1932
  %7047 = vmatpush.bf16.msra.mxu0 %v1931
  %7048 = vmatpush.bf16.msra.mxu0 %v1930
  %7049 = vmatmul.bf16.gmra.mxu0 %v7026
  %v7050 = vpop.f32.mrf.mxu0
  %v7051 = vadd.f32 %v7038, %v7050
  %v7052 = vpop.f32.mrf.mxu0
  %7053 = vdwg.mxu0
  %7054 = vmatpush.bf16.msra.mxu0 %v2030
  %7055 = vmatpush.bf16.msra.mxu0 %v2029
  %7056 = vmatpush.bf16.msra.mxu0 %v2028
  %7057 = vmatpush.bf16.msra.mxu0 %v2027
  %7058 = vmatpush.bf16.msra.mxu0 %v2026
  %7059 = vmatpush.bf16.msra.mxu0 %v2025
  %7060 = vmatpush.bf16.msra.mxu0 %v2024
  %7061 = vmatpush.bf16.msra.mxu0 %v2023
  %7062 = vmatmul.bf16.gmra.mxu0 %v7023
  %v7063 = vpop.f32.mrf.mxu0
  %v7064 = vadd.f32 0.0, %v7063
  %v7065 = vpop.f32.mrf.mxu0
  %7066 = vdwg.mxu0
  %7067 = vmatpush.bf16.msra.mxu0 0
  %7068 = vmatpush.bf16.msra.mxu0 0
  %7069 = vmatpush.bf16.msra.mxu0 0
  %7070 = vmatpush.bf16.msra.mxu0 0
  %7071 = vmatpush.bf16.msra.mxu0 %v2034
  %7072 = vmatpush.bf16.msra.mxu0 %v2033
  %7073 = vmatpush.bf16.msra.mxu0 %v2032
  %7074 = vmatpush.bf16.msra.mxu0 %v2031
  %7075 = vmatmul.bf16.gmra.mxu0 %v7026
  %v7076 = vpop.f32.mrf.mxu0
  %v7077 = vadd.f32 %v7064, %v7076
  %v7078 = vpop.f32.mrf.mxu0
  %7079 = vdwg.mxu0
  %v7080 = vmax.f32 %v7051, %v7077
  %v7082 = vsel %vm2078, %v7080, 0
  %7084 = vmatpush.msra.mxu0 0.0
  %7085 = vmatpush.msra.mxu0 0.0
  %7086 = vmatpush.msra.mxu0 0.0
  %7087 = vmatpush.msra.mxu0 0.0
  %7088 = vmatpush.msra.mxu0 0.0
  %7089 = vmatpush.msra.mxu0 0.0
  %7090 = vmatpush.msra.mxu0 0.0
  %7091 = vmatpush.msra.mxu0 0.0
  %7092 = vmatpush.msra.mxu0 0.0
  %7093 = vmatpush.msra.mxu0 0.0
  %7094 = vmatpush.msra.mxu0 0.0
  %7095 = vmatpush.msra.mxu0 0.0
  %7096 = vmatpush.msra.mxu0 0.0
  %7097 = vmatpush.msra.mxu0 0.0
  %7098 = vmatpush.msra.mxu0 0.0
  %7099 = vmatpush.msra.mxu0 %v7082
  %7100 = vmatmul.bf16.gmra.mxu0 %v2076
  %v7101 = vpop.f32.mrf.mxu0
  %v7102 = vadd.f32 0.0, %v7101
  %v7103 = vpop.f32.mrf.mxu0
  %7104 = vdwg.mxu0
  %7105 = vmatpush.msra.mxu0 0.0
  %7106 = vmatpush.msra.mxu0 0.0
  %7107 = vmatpush.msra.mxu0 0.0
  %7108 = vmatpush.msra.mxu0 0.0
  %7109 = vmatpush.msra.mxu0 0.0
  %7110 = vmatpush.msra.mxu0 0.0
  %7111 = vmatpush.msra.mxu0 0.0
  %7112 = vmatpush.msra.mxu0 0.0
  %7113 = vmatpush.msra.mxu0 0.0
  %7114 = vmatpush.msra.mxu0 0.0
  %7115 = vmatpush.msra.mxu0 0.0
  %7116 = vmatpush.msra.mxu0 0.0
  %7117 = vmatpush.msra.mxu0 0.0
  %7118 = vmatpush.msra.mxu0 0.0
  %7119 = vmatpush.msra.mxu0 0.0
  %7120 = vmatpush.msra.mxu0 %v7082
  %7121 = vmatmul.bf16.gmra.mxu0 %v2104
  %v7122 = vpop.f32.mrf.mxu0
  %v7123 = vadd.f32 0.0, %v7122
  %v7124 = vpop.f32.mrf.mxu0
  %7125 = vdwg.mxu0
  %v7126 = vmax.f32 %v7102, %v7123
  %v7127 = vpack.c.bf16 %v7126, %v7126
  %v7129 = vsel %vm2165, %v7127, 0
  %7131 = vmatpush.bf16.msra.mxu0 0
  %7132 = vmatpush.bf16.msra.mxu0 0
  %7133 = vmatpush.bf16.msra.mxu0 %v2158
  %7134 = vmatpush.bf16.msra.mxu0 %v2157
  %7135 = vmatpush.bf16.msra.mxu0 %v2156
  %7136 = vmatpush.bf16.msra.mxu0 %v2155
  %7137 = vmatpush.bf16.msra.mxu0 %v2154
  %7138 = vmatpush.bf16.msra.mxu0 %v2153
  %7139 = vmatmul.bf16.gmra.mxu0 %v7129
  %v7140 = vpop.f32.mrf.mxu0
  %v7141 = vadd.f32 0.0, %v7140
  %v7142 = vpop.f32.mrf.mxu0
  %7143 = vdwg.mxu0
  %v7144 = vadd.f32 %v374, %v7141
  %v7145 = vshrl.u32 %v7127, 16
  %v7148 = vsel %vm2165, %v7145, 0
  %7150 = vmatpush.bf16.msra.mxu0 0
  %7151 = vmatpush.bf16.msra.mxu0 0
  %7152 = vmatpush.bf16.msra.mxu0 %v2214
  %7153 = vmatpush.bf16.msra.mxu0 %v2213
  %7154 = vmatpush.bf16.msra.mxu0 %v2212
  %7155 = vmatpush.bf16.msra.mxu0 %v2211
  %7156 = vmatpush.bf16.msra.mxu0 %v2210
  %7157 = vmatpush.bf16.msra.mxu0 %v2209
  %7158 = vmatmul.bf16.gmra.mxu0 %v7148
  %v7159 = vpop.f32.mrf.mxu0
  %v7160 = vadd.f32 0.0, %v7159
  %v7161 = vpop.f32.mrf.mxu0
  %7162 = vdwg.mxu0
  %v7163 = vadd.f32 %v7144, %v7160
  %v7165 = vrot.slane %v7127, 1
  %v7167 = vsel %vm2165, %v7165, 0
  %7169 = vmatpush.bf16.msra.mxu0 0
  %7170 = vmatpush.bf16.msra.mxu0 0
  %7171 = vmatpush.bf16.msra.mxu0 %v2269
  %7172 = vmatpush.bf16.msra.mxu0 %v2268
  %7173 = vmatpush.bf16.msra.mxu0 %v2267
  %7174 = vmatpush.bf16.msra.mxu0 %v2266
  %7175 = vmatpush.bf16.msra.mxu0 %v2265
  %7176 = vmatpush.bf16.msra.mxu0 %v2264
  %7177 = vmatmul.bf16.gmra.mxu0 %v7167
  %v7178 = vpop.f32.mrf.mxu0
  %v7179 = vadd.f32 0.0, %v7178
  %v7180 = vpop.f32.mrf.mxu0
  %7181 = vdwg.mxu0
  %v7182 = vadd.f32 %v7163, %v7179
  %v7183 = vmax.f32 %v7182, 0.0
  %v7184 = vpack.c.bf16 %v7183, %v7183
  %v7186 = vsel %vm717, %v7184, 0
  %7188 = vmatpush.bf16.msra.mxu0 0
  %7189 = vmatpush.bf16.msra.mxu0 0
  %7190 = vmatpush.bf16.msra.mxu0 0
  %7191 = vmatpush.bf16.msra.mxu0 0
  %7192 = vmatpush.bf16.msra.mxu0 %v2314
  %7193 = vmatpush.bf16.msra.mxu0 %v2313
  %7194 = vmatpush.bf16.msra.mxu0 %v2312
  %7195 = vmatpush.bf16.msra.mxu0 %v2311
  %7196 = vmatmul.bf16.gmra.mxu0 %v7186
  %v7197 = vpop.f32.mrf.mxu0
  %v7198 = vadd.f32 %v383, %v7197
  %v7199 = vpop.f32.mrf.mxu0
  %7200 = vdwg.mxu0
  %s7201 = scalar_lea.vmem %s0, 224
  %v7202 = vld [vmem:[%s7201] sm:$0xff]
  %v7203 = vld [vmem:[%s7201 + $0x8] sm:$0xff]
  %v7204 = vld [vmem:[%s7201 + $0x10] sm:$0xff]
  %v7205 = vld [vmem:[%s7201 + $0x18] sm:$0x3]
  %v7206 = vpack.c.bf16 %v7203, %v7202
  %v7207 = vpack.c.bf16 %v7204, %v7204
  %v7209 = vsel %vm408, %v7206, 0
  %v7212 = vsel %vm408, %v7207, 0
  %7214 = vmatpush.bf16.msra.mxu0 0
  %7215 = vmatpush.bf16.msra.mxu0 0
  %7216 = vmatpush.bf16.msra.mxu0 0
  %7217 = vmatpush.bf16.msra.mxu0 0
  %7218 = vmatpush.bf16.msra.mxu0 0
  %7219 = vmatpush.bf16.msra.mxu0 0
  %7220 = vmatpush.bf16.msra.mxu0 %v417
  %7221 = vmatpush.bf16.msra.mxu0 %v402
  %7222 = vmatmul.bf16.gmra.mxu0 %v7209
  %v7223 = vpop.f32.mrf.mxu0
  %v7224 = vadd.f32 0.0, %v7223
  %v7225 = vpop.f32.mrf.mxu0
  %v7226 = vadd.f32 0.0, %v7225
  %7227 = vmatmul.bf16.gmra.mxu0 %v7212
  %v7228 = vpop.f32.mrf.mxu0
  %v7229 = vadd.f32 0.0, %v7228
  %v7230 = vpop.f32.mrf.mxu0
  %7231 = vdwg.mxu0
  %7232 = vmatpush.bf16.msra.mxu0 0
  %7233 = vmatpush.bf16.msra.mxu0 0
  %7234 = vmatpush.bf16.msra.mxu0 0
  %7235 = vmatpush.bf16.msra.mxu0 0
  %7236 = vmatpush.bf16.msra.mxu0 0
  %7237 = vmatpush.bf16.msra.mxu0 0
  %7238 = vmatpush.bf16.msra.mxu0 %v420
  %7239 = vmatpush.bf16.msra.mxu0 %v403
  %7240 = vmatmul.bf16.gmra.mxu0 %v7209
  %v7241 = vpop.f32.mrf.mxu0
  %v7242 = vadd.f32 0.0, %v7241
  %v7243 = vpop.f32.mrf.mxu0
  %v7244 = vadd.f32 0.0, %v7243
  %7245 = vmatmul.bf16.gmra.mxu0 %v7212
  %v7246 = vpop.f32.mrf.mxu0
  %v7247 = vadd.f32 0.0, %v7246
  %v7248 = vpop.f32.mrf.mxu0
  %7249 = vdwg.mxu0
  %v7250 = vadd.f32 %v459, %v7224
  %v7251 = vadd.f32 %v460, %v7242
  %v7252 = vadd.f32 %v459, %v7226
  %v7253 = vadd.f32 %v460, %v7244
  %v7254 = vadd.f32 %v459, %v7229
  %v7255 = vadd.f32 %v460, %v7247
  %v7256 = vpack.c.bf16 %v7205, %v7204
  %v7257 = vshrl.u32 %v7206, 16
  %v7259 = vshll.u32 %v7206, 16
  %v7261 = vrot.slane %v7259, 1
  %v7262 = vor.u32 %v7257, %v7261
  %v7264 = vshll.u32 %v7256, 16
  %v7266 = vrot.slane %v7264, 1
  %v7267 = vsel %vm470, %v7262, %v7266
  %v7268 = vshrl.u32 %v7256, 16
  %v7270 = vor.u32 %v7268, %v7266
  %v7272 = vsel %vm408, %v7267, 0
  %v7275 = vsel %vm408, %v7270, 0
  %7277 = vmatpush.bf16.msra.mxu0 0
  %7278 = vmatpush.bf16.msra.mxu0 0
  %7279 = vmatpush.bf16.msra.mxu0 0
  %7280 = vmatpush.bf16.msra.mxu0 0
  %7281 = vmatpush.bf16.msra.mxu0 0
  %7282 = vmatpush.bf16.msra.mxu0 0
  %7283 = vmatpush.bf16.msra.mxu0 %v510
  %7284 = vmatpush.bf16.msra.mxu0 %v497
  %7285 = vmatmul.bf16.gmra.mxu0 %v7272
  %v7286 = vpop.f32.mrf.mxu0
  %v7287 = vadd.f32 0.0, %v7286
  %v7288 = vpop.f32.mrf.mxu0
  %v7289 = vadd.f32 0.0, %v7288
  %7290 = vmatmul.bf16.gmra.mxu0 %v7275
  %v7291 = vpop.f32.mrf.mxu0
  %v7292 = vadd.f32 0.0, %v7291
  %v7293 = vpop.f32.mrf.mxu0
  %7294 = vdwg.mxu0
  %7295 = vmatpush.bf16.msra.mxu0 0
  %7296 = vmatpush.bf16.msra.mxu0 0
  %7297 = vmatpush.bf16.msra.mxu0 0
  %7298 = vmatpush.bf16.msra.mxu0 0
  %7299 = vmatpush.bf16.msra.mxu0 0
  %7300 = vmatpush.bf16.msra.mxu0 0
  %7301 = vmatpush.bf16.msra.mxu0 %v513
  %7302 = vmatpush.bf16.msra.mxu0 %v498
  %7303 = vmatmul.bf16.gmra.mxu0 %v7272
  %v7304 = vpop.f32.mrf.mxu0
  %v7305 = vadd.f32 0.0, %v7304
  %v7306 = vpop.f32.mrf.mxu0
  %v7307 = vadd.f32 0.0, %v7306
  %7308 = vmatmul.bf16.gmra.mxu0 %v7275
  %v7309 = vpop.f32.mrf.mxu0
  %v7310 = vadd.f32 0.0, %v7309
  %v7311 = vpop.f32.mrf.mxu0
  %7312 = vdwg.mxu0
  %v7313 = vadd.f32 %v7250, %v7287
  %v7314 = vadd.f32 %v7251, %v7305
  %v7315 = vadd.f32 %v7252, %v7289
  %v7316 = vadd.f32 %v7253, %v7307
  %v7317 = vadd.f32 %v7254, %v7292
  %v7318 = vadd.f32 %v7255, %v7310
  %v7321 = vrot.slane %v7206, 1
  %v7322 = vrot.slane %v7256, 1
  %v7323 = vsel %vm559, %v7321, %v7322
  %v7325 = vsel %vm408, %v7323, 0
  %v7328 = vsel %vm408, %v7322, 0
  %7330 = vmatpush.bf16.msra.mxu0 0
  %7331 = vmatpush.bf16.msra.mxu0 0
  %7332 = vmatpush.bf16.msra.mxu0 0
  %7333 = vmatpush.bf16.msra.mxu0 0
  %7334 = vmatpush.bf16.msra.mxu0 0
  %7335 = vmatpush.bf16.msra.mxu0 0
  %7336 = vmatpush.bf16.msra.mxu0 %v588
  %7337 = vmatpush.bf16.msra.mxu0 %v575
  %7338 = vmatmul.bf16.gmra.mxu0 %v7325
  %v7339 = vpop.f32.mrf.mxu0
  %v7340 = vadd.f32 0.0, %v7339
  %v7341 = vpop.f32.mrf.mxu0
  %v7342 = vadd.f32 0.0, %v7341
  %7343 = vmatmul.bf16.gmra.mxu0 %v7328
  %v7344 = vpop.f32.mrf.mxu0
  %v7345 = vadd.f32 0.0, %v7344
  %v7346 = vpop.f32.mrf.mxu0
  %7347 = vdwg.mxu0
  %7348 = vmatpush.bf16.msra.mxu0 0
  %7349 = vmatpush.bf16.msra.mxu0 0
  %7350 = vmatpush.bf16.msra.mxu0 0
  %7351 = vmatpush.bf16.msra.mxu0 0
  %7352 = vmatpush.bf16.msra.mxu0 0
  %7353 = vmatpush.bf16.msra.mxu0 0
  %7354 = vmatpush.bf16.msra.mxu0 %v591
  %7355 = vmatpush.bf16.msra.mxu0 %v576
  %7356 = vmatmul.bf16.gmra.mxu0 %v7325
  %v7357 = vpop.f32.mrf.mxu0
  %v7358 = vadd.f32 0.0, %v7357
  %v7359 = vpop.f32.mrf.mxu0
  %v7360 = vadd.f32 0.0, %v7359
  %7361 = vmatmul.bf16.gmra.mxu0 %v7328
  %v7362 = vpop.f32.mrf.mxu0
  %v7363 = vadd.f32 0.0, %v7362
  %v7364 = vpop.f32.mrf.mxu0
  %7365 = vdwg.mxu0
  %v7366 = vadd.f32 %v7313, %v7340
  %v7367 = vadd.f32 %v7314, %v7358
  %v7368 = vadd.f32 %v7315, %v7342
  %v7369 = vadd.f32 %v7316, %v7360
  %v7370 = vadd.f32 %v7317, %v7345
  %v7371 = vadd.f32 %v7318, %v7363
  %v7372 = vmax.f32 %v7366, 0.0
  %v7373 = vmax.f32 %v7367, 0.0
  %v7374 = vmax.f32 %v7368, 0.0
  %v7375 = vmax.f32 %v7369, 0.0
  %v7376 = vmax.f32 %v7370, 0.0
  %v7377 = vmax.f32 %v7371, 0.0
  %v7378 = vpack.c.bf16 %v7374, %v7372
  %v7379 = vpack.c.bf16 %v7375, %v7373
  %v7380 = vpack.c.bf16 %v7376, %v7376
  %v7381 = vpack.c.bf16 %v7377, %v7377
  %v7383 = vsel %vm717, %v7379, 0
  %v7386 = vsel %vm717, %v7381, 0
  %7388 = vmatpush.bf16.msra.mxu0 %v700
  %7389 = vmatpush.bf16.msra.mxu0 %v699
  %7390 = vmatpush.bf16.msra.mxu0 %v698
  %7391 = vmatpush.bf16.msra.mxu0 %v697
  %7392 = vmatpush.bf16.msra.mxu0 %v696
  %7393 = vmatpush.bf16.msra.mxu0 %v695
  %7394 = vmatpush.bf16.msra.mxu0 %v694
  %7395 = vmatpush.bf16.msra.mxu0 %v693
  %7396 = vmatmul.bf16.gmra.mxu0 %v7378
  %v7397 = vpop.f32.mrf.mxu0
  %v7398 = vadd.f32 0.0, %v7397
  %v7399 = vpop.f32.mrf.mxu0
  %v7400 = vadd.f32 0.0, %v7399
  %7401 = vmatmul.bf16.gmra.mxu0 %v7380
  %v7402 = vpop.f32.mrf.mxu0
  %v7403 = vadd.f32 0.0, %v7402
  %v7404 = vpop.f32.mrf.mxu0
  %7405 = vdwg.mxu0
  %7406 = vmatpush.bf16.msra.mxu0 0
  %7407 = vmatpush.bf16.msra.mxu0 0
  %7408 = vmatpush.bf16.msra.mxu0 0
  %7409 = vmatpush.bf16.msra.mxu0 0
  %7410 = vmatpush.bf16.msra.mxu0 %v704
  %7411 = vmatpush.bf16.msra.mxu0 %v703
  %7412 = vmatpush.bf16.msra.mxu0 %v702
  %7413 = vmatpush.bf16.msra.mxu0 %v701
  %7414 = vmatmul.bf16.gmra.mxu0 %v7383
  %v7415 = vpop.f32.mrf.mxu0
  %v7416 = vadd.f32 %v7398, %v7415
  %v7417 = vpop.f32.mrf.mxu0
  %v7418 = vadd.f32 %v7400, %v7417
  %7419 = vmatmul.bf16.gmra.mxu0 %v7386
  %v7420 = vpop.f32.mrf.mxu0
  %v7421 = vadd.f32 %v7403, %v7420
  %v7422 = vpop.f32.mrf.mxu0
  %7423 = vdwg.mxu0
  %7424 = vmatpush.bf16.msra.mxu0 %v815
  %7425 = vmatpush.bf16.msra.mxu0 %v814
  %7426 = vmatpush.bf16.msra.mxu0 %v813
  %7427 = vmatpush.bf16.msra.mxu0 %v812
  %7428 = vmatpush.bf16.msra.mxu0 %v811
  %7429 = vmatpush.bf16.msra.mxu0 %v810
  %7430 = vmatpush.bf16.msra.mxu0 %v809
  %7431 = vmatpush.bf16.msra.mxu0 %v808
  %7432 = vmatmul.bf16.gmra.mxu0 %v7378
  %v7433 = vpop.f32.mrf.mxu0
  %v7434 = vadd.f32 0.0, %v7433
  %v7435 = vpop.f32.mrf.mxu0
  %v7436 = vadd.f32 0.0, %v7435
  %7437 = vmatmul.bf16.gmra.mxu0 %v7380
  %v7438 = vpop.f32.mrf.mxu0
  %v7439 = vadd.f32 0.0, %v7438
  %v7440 = vpop.f32.mrf.mxu0
  %7441 = vdwg.mxu0
  %7442 = vmatpush.bf16.msra.mxu0 0
  %7443 = vmatpush.bf16.msra.mxu0 0
  %7444 = vmatpush.bf16.msra.mxu0 0
  %7445 = vmatpush.bf16.msra.mxu0 0
  %7446 = vmatpush.bf16.msra.mxu0 %v819
  %7447 = vmatpush.bf16.msra.mxu0 %v818
  %7448 = vmatpush.bf16.msra.mxu0 %v817
  %7449 = vmatpush.bf16.msra.mxu0 %v816
  %7450 = vmatmul.bf16.gmra.mxu0 %v7383
  %v7451 = vpop.f32.mrf.mxu0
  %v7452 = vadd.f32 %v7434, %v7451
  %v7453 = vpop.f32.mrf.mxu0
  %v7454 = vadd.f32 %v7436, %v7453
  %7455 = vmatmul.bf16.gmra.mxu0 %v7386
  %v7456 = vpop.f32.mrf.mxu0
  %v7457 = vadd.f32 %v7439, %v7456
  %v7458 = vpop.f32.mrf.mxu0
  %7459 = vdwg.mxu0
  %v7460 = vmax.f32 %v7416, %v7452
  %v7461 = vmax.f32 %v7418, %v7454
  %v7462 = vmax.f32 %v7421, %v7457
  %7463 = vmatpush.msra.mxu0 0.0
  %7464 = vmatpush.msra.mxu0 0.0
  %7465 = vmatpush.msra.mxu0 0.0
  %7466 = vmatpush.msra.mxu0 0.0
  %7467 = vmatpush.msra.mxu0 0.0
  %7468 = vmatpush.msra.mxu0 0.0
  %7469 = vmatpush.msra.mxu0 0.0
  %7470 = vmatpush.msra.mxu0 0.0
  %7471 = vmatpush.msra.mxu0 0.0
  %7472 = vmatpush.msra.mxu0 0.0
  %7473 = vmatpush.msra.mxu0 0.0
  %7474 = vmatpush.msra.mxu0 0.0
  %7475 = vmatpush.msra.mxu0 0.0
  %7476 = vmatpush.msra.mxu0 %v7462
  %7477 = vmatpush.msra.mxu0 %v7461
  %7478 = vmatpush.msra.mxu0 %v7460
  %7479 = vmatmul.bf16.gmra.mxu0 %v878
  %v7480 = vpop.f32.mrf.mxu0
  %v7481 = vadd.f32 0.0, %v7480
  %v7482 = vpop.f32.mrf.mxu0
  %v7483 = vadd.f32 0.0, %v7482
  %7484 = vdwg.mxu0
  %7485 = vmatpush.msra.mxu0 0.0
  %7486 = vmatpush.msra.mxu0 0.0
  %7487 = vmatpush.msra.mxu0 0.0
  %7488 = vmatpush.msra.mxu0 0.0
  %7489 = vmatpush.msra.mxu0 0.0
  %7490 = vmatpush.msra.mxu0 0.0
  %7491 = vmatpush.msra.mxu0 0.0
  %7492 = vmatpush.msra.mxu0 0.0
  %7493 = vmatpush.msra.mxu0 0.0
  %7494 = vmatpush.msra.mxu0 0.0
  %7495 = vmatpush.msra.mxu0 0.0
  %7496 = vmatpush.msra.mxu0 0.0
  %7497 = vmatpush.msra.mxu0 0.0
  %7498 = vmatpush.msra.mxu0 %v7462
  %7499 = vmatpush.msra.mxu0 %v7461
  %7500 = vmatpush.msra.mxu0 %v7460
  %7501 = vmatmul.bf16.gmra.mxu0 %v908
  %v7502 = vpop.f32.mrf.mxu0
  %v7503 = vadd.f32 0.0, %v7502
  %v7504 = vpop.f32.mrf.mxu0
  %v7505 = vadd.f32 0.0, %v7504
  %7506 = vdwg.mxu0
  %v7507 = vmax.f32 %v7481, %v7503
  %v7508 = vmax.f32 %v7483, %v7505
  %v7509 = vpack.c.bf16 %v7508, %v7507
  %v7511 = vsel %vm1005, %v7509, 0
  %7513 = vmatpush.bf16.msra.mxu0 0
  %7514 = vmatpush.bf16.msra.mxu0 %v989
  %7515 = vmatpush.bf16.msra.mxu0 %v987
  %7516 = vmatpush.bf16.msra.mxu0 %v985
  %7517 = vmatpush.bf16.msra.mxu0 %v983
  %7518 = vmatpush.bf16.msra.mxu0 %v981
  %7519 = vmatpush.bf16.msra.mxu0 %v979
  %7520 = vmatpush.bf16.msra.mxu0 %v977
  %7521 = vmatmul.bf16.gmra.mxu0 %v7511
  %v7522 = vpop.f32.mrf.mxu0
  %v7523 = vadd.f32 0.0, %v7522
  %v7524 = vpop.f32.mrf.mxu0
  %v7525 = vadd.f32 0.0, %v7524
  %7526 = vdwg.mxu0
  %7527 = vmatpush.bf16.msra.mxu0 0
  %7528 = vmatpush.bf16.msra.mxu0 %v990
  %7529 = vmatpush.bf16.msra.mxu0 %v988
  %7530 = vmatpush.bf16.msra.mxu0 %v986
  %7531 = vmatpush.bf16.msra.mxu0 %v984
  %7532 = vmatpush.bf16.msra.mxu0 %v982
  %7533 = vmatpush.bf16.msra.mxu0 %v980
  %7534 = vmatpush.bf16.msra.mxu0 %v978
  %7535 = vmatmul.bf16.gmra.mxu0 %v7511
  %v7536 = vpop.f32.mrf.mxu0
  %v7537 = vadd.f32 0.0, %v7536
  %v7538 = vpop.f32.mrf.mxu0
  %v7539 = vadd.f32 0.0, %v7538
  %7540 = vdwg.mxu0
  %v7541 = vadd.f32 %v1038, %v7523
  %v7542 = vadd.f32 %v1039, %v7537
  %v7543 = vadd.f32 %v1038, %v7525
  %v7544 = vadd.f32 %v1039, %v7539
  %v7545 = vshrl.u32 %v7509, 16
  %v7547 = vshll.u32 %v7509, 16
  %v7549 = vrot.slane %v7547, 1
  %v7550 = vor.u32 %v7545, %v7549
  %v7552 = vsel %vm1005, %v7550, 0
  %7554 = vmatpush.bf16.msra.mxu0 0
  %7555 = vmatpush.bf16.msra.mxu0 %v1106
  %7556 = vmatpush.bf16.msra.mxu0 %v1104
  %7557 = vmatpush.bf16.msra.mxu0 %v1102
  %7558 = vmatpush.bf16.msra.mxu0 %v1100
  %7559 = vmatpush.bf16.msra.mxu0 %v1098
  %7560 = vmatpush.bf16.msra.mxu0 %v1096
  %7561 = vmatpush.bf16.msra.mxu0 %v1094
  %7562 = vmatmul.bf16.gmra.mxu0 %v7552
  %v7563 = vpop.f32.mrf.mxu0
  %v7564 = vadd.f32 0.0, %v7563
  %v7565 = vpop.f32.mrf.mxu0
  %v7566 = vadd.f32 0.0, %v7565
  %7567 = vdwg.mxu0
  %7568 = vmatpush.bf16.msra.mxu0 0
  %7569 = vmatpush.bf16.msra.mxu0 %v1107
  %7570 = vmatpush.bf16.msra.mxu0 %v1105
  %7571 = vmatpush.bf16.msra.mxu0 %v1103
  %7572 = vmatpush.bf16.msra.mxu0 %v1101
  %7573 = vmatpush.bf16.msra.mxu0 %v1099
  %7574 = vmatpush.bf16.msra.mxu0 %v1097
  %7575 = vmatpush.bf16.msra.mxu0 %v1095
  %7576 = vmatmul.bf16.gmra.mxu0 %v7552
  %v7577 = vpop.f32.mrf.mxu0
  %v7578 = vadd.f32 0.0, %v7577
  %v7579 = vpop.f32.mrf.mxu0
  %v7580 = vadd.f32 0.0, %v7579
  %7581 = vdwg.mxu0
  %v7582 = vadd.f32 %v7541, %v7564
  %v7583 = vadd.f32 %v7542, %v7578
  %v7584 = vadd.f32 %v7543, %v7566
  %v7585 = vadd.f32 %v7544, %v7580
  %v7587 = vrot.slane %v7509, 1
  %v7589 = vsel %vm1005, %v7587, 0
  %7591 = vmatpush.bf16.msra.mxu0 0
  %7592 = vmatpush.bf16.msra.mxu0 %v1213
  %7593 = vmatpush.bf16.msra.mxu0 %v1211
  %7594 = vmatpush.bf16.msra.mxu0 %v1209
  %7595 = vmatpush.bf16.msra.mxu0 %v1207
  %7596 = vmatpush.bf16.msra.mxu0 %v1205
  %7597 = vmatpush.bf16.msra.mxu0 %v1203
  %7598 = vmatpush.bf16.msra.mxu0 %v1201
  %7599 = vmatmul.bf16.gmra.mxu0 %v7589
  %v7600 = vpop.f32.mrf.mxu0
  %v7601 = vadd.f32 0.0, %v7600
  %v7602 = vpop.f32.mrf.mxu0
  %v7603 = vadd.f32 0.0, %v7602
  %7604 = vdwg.mxu0
  %7605 = vmatpush.bf16.msra.mxu0 0
  %7606 = vmatpush.bf16.msra.mxu0 %v1214
  %7607 = vmatpush.bf16.msra.mxu0 %v1212
  %7608 = vmatpush.bf16.msra.mxu0 %v1210
  %7609 = vmatpush.bf16.msra.mxu0 %v1208
  %7610 = vmatpush.bf16.msra.mxu0 %v1206
  %7611 = vmatpush.bf16.msra.mxu0 %v1204
  %7612 = vmatpush.bf16.msra.mxu0 %v1202
  %7613 = vmatmul.bf16.gmra.mxu0 %v7589
  %v7614 = vpop.f32.mrf.mxu0
  %v7615 = vadd.f32 0.0, %v7614
  %v7616 = vpop.f32.mrf.mxu0
  %v7617 = vadd.f32 0.0, %v7616
  %7618 = vdwg.mxu0
  %v7619 = vadd.f32 %v7582, %v7601
  %v7620 = vadd.f32 %v7583, %v7615
  %v7621 = vadd.f32 %v7584, %v7603
  %v7622 = vadd.f32 %v7585, %v7617
  %v7623 = vmax.f32 %v7619, 0.0
  %v7624 = vmax.f32 %v7620, 0.0
  %v7625 = vmax.f32 %v7621, 0.0
  %v7626 = vmax.f32 %v7622, 0.0
  %v7627 = vpack.c.bf16 %v7625, %v7623
  %v7628 = vpack.c.bf16 %v7626, %v7624
  %v7630 = vsel %vm717, %v7628, 0
  %7632 = vmatpush.bf16.msra.mxu0 %v1325
  %7633 = vmatpush.bf16.msra.mxu0 %v1324
  %7634 = vmatpush.bf16.msra.mxu0 %v1323
  %7635 = vmatpush.bf16.msra.mxu0 %v1322
  %7636 = vmatpush.bf16.msra.mxu0 %v1321
  %7637 = vmatpush.bf16.msra.mxu0 %v1320
  %7638 = vmatpush.bf16.msra.mxu0 %v1319
  %7639 = vmatpush.bf16.msra.mxu0 %v1318
  %7640 = vmatmul.bf16.gmra.mxu0 %v7627
  %v7641 = vpop.f32.mrf.mxu0
  %v7642 = vadd.f32 0.0, %v7641
  %v7643 = vpop.f32.mrf.mxu0
  %v7644 = vadd.f32 0.0, %v7643
  %7645 = vdwg.mxu0
  %7646 = vmatpush.bf16.msra.mxu0 0
  %7647 = vmatpush.bf16.msra.mxu0 0
  %7648 = vmatpush.bf16.msra.mxu0 0
  %7649 = vmatpush.bf16.msra.mxu0 0
  %7650 = vmatpush.bf16.msra.mxu0 %v1329
  %7651 = vmatpush.bf16.msra.mxu0 %v1328
  %7652 = vmatpush.bf16.msra.mxu0 %v1327
  %7653 = vmatpush.bf16.msra.mxu0 %v1326
  %7654 = vmatmul.bf16.gmra.mxu0 %v7630
  %v7655 = vpop.f32.mrf.mxu0
  %v7656 = vadd.f32 %v7642, %v7655
  %v7657 = vpop.f32.mrf.mxu0
  %v7658 = vadd.f32 %v7644, %v7657
  %7659 = vdwg.mxu0
  %7660 = vmatpush.bf16.msra.mxu0 %v1428
  %7661 = vmatpush.bf16.msra.mxu0 %v1427
  %7662 = vmatpush.bf16.msra.mxu0 %v1426
  %7663 = vmatpush.bf16.msra.mxu0 %v1425
  %7664 = vmatpush.bf16.msra.mxu0 %v1424
  %7665 = vmatpush.bf16.msra.mxu0 %v1423
  %7666 = vmatpush.bf16.msra.mxu0 %v1422
  %7667 = vmatpush.bf16.msra.mxu0 %v1421
  %7668 = vmatmul.bf16.gmra.mxu0 %v7627
  %v7669 = vpop.f32.mrf.mxu0
  %v7670 = vadd.f32 0.0, %v7669
  %v7671 = vpop.f32.mrf.mxu0
  %v7672 = vadd.f32 0.0, %v7671
  %7673 = vdwg.mxu0
  %7674 = vmatpush.bf16.msra.mxu0 0
  %7675 = vmatpush.bf16.msra.mxu0 0
  %7676 = vmatpush.bf16.msra.mxu0 0
  %7677 = vmatpush.bf16.msra.mxu0 0
  %7678 = vmatpush.bf16.msra.mxu0 %v1432
  %7679 = vmatpush.bf16.msra.mxu0 %v1431
  %7680 = vmatpush.bf16.msra.mxu0 %v1430
  %7681 = vmatpush.bf16.msra.mxu0 %v1429
  %7682 = vmatmul.bf16.gmra.mxu0 %v7630
  %v7683 = vpop.f32.mrf.mxu0
  %v7684 = vadd.f32 %v7670, %v7683
  %v7685 = vpop.f32.mrf.mxu0
  %v7686 = vadd.f32 %v7672, %v7685
  %7687 = vdwg.mxu0
  %v7688 = vmax.f32 %v7656, %v7684
  %v7689 = vmax.f32 %v7658, %v7686
  %v7691 = vsel %vm1479, %v7689, 0
  %7693 = vmatpush.msra.mxu0 0.0
  %7694 = vmatpush.msra.mxu0 0.0
  %7695 = vmatpush.msra.mxu0 0.0
  %7696 = vmatpush.msra.mxu0 0.0
  %7697 = vmatpush.msra.mxu0 0.0
  %7698 = vmatpush.msra.mxu0 0.0
  %7699 = vmatpush.msra.mxu0 0.0
  %7700 = vmatpush.msra.mxu0 0.0
  %7701 = vmatpush.msra.mxu0 0.0
  %7702 = vmatpush.msra.mxu0 0.0
  %7703 = vmatpush.msra.mxu0 0.0
  %7704 = vmatpush.msra.mxu0 0.0
  %7705 = vmatpush.msra.mxu0 0.0
  %7706 = vmatpush.msra.mxu0 0.0
  %7707 = vmatpush.msra.mxu0 %v7691
  %7708 = vmatpush.msra.mxu0 %v7688
  %7709 = vmatmul.bf16.gmra.mxu0 %v1477
  %v7710 = vpop.f32.mrf.mxu0
  %v7711 = vadd.f32 0.0, %v7710
  %v7712 = vpop.f32.mrf.mxu0
  %7713 = vdwg.mxu0
  %7714 = vmatpush.msra.mxu0 0.0
  %7715 = vmatpush.msra.mxu0 0.0
  %7716 = vmatpush.msra.mxu0 0.0
  %7717 = vmatpush.msra.mxu0 0.0
  %7718 = vmatpush.msra.mxu0 0.0
  %7719 = vmatpush.msra.mxu0 0.0
  %7720 = vmatpush.msra.mxu0 0.0
  %7721 = vmatpush.msra.mxu0 0.0
  %7722 = vmatpush.msra.mxu0 0.0
  %7723 = vmatpush.msra.mxu0 0.0
  %7724 = vmatpush.msra.mxu0 0.0
  %7725 = vmatpush.msra.mxu0 0.0
  %7726 = vmatpush.msra.mxu0 0.0
  %7727 = vmatpush.msra.mxu0 0.0
  %7728 = vmatpush.msra.mxu0 %v7691
  %7729 = vmatpush.msra.mxu0 %v7688
  %7730 = vmatmul.bf16.gmra.mxu0 %v1505
  %v7731 = vpop.f32.mrf.mxu0
  %v7732 = vadd.f32 0.0, %v7731
  %v7733 = vpop.f32.mrf.mxu0
  %7734 = vdwg.mxu0
  %v7735 = vmax.f32 %v7711, %v7732
  %v7736 = vpack.c.bf16 %v7735, %v7735
  %7737 = vmatpush.bf16.msra.mxu0 %v1592
  %7738 = vmatpush.bf16.msra.mxu0 %v1590
  %7739 = vmatpush.bf16.msra.mxu0 %v1588
  %7740 = vmatpush.bf16.msra.mxu0 %v1586
  %7741 = vmatpush.bf16.msra.mxu0 %v1584
  %7742 = vmatpush.bf16.msra.mxu0 %v1582
  %7743 = vmatpush.bf16.msra.mxu0 %v1580
  %7744 = vmatpush.bf16.msra.mxu0 %v1578
  %7745 = vmatmul.bf16.gmra.mxu0 %v7736
  %v7746 = vpop.f32.mrf.mxu0
  %v7747 = vadd.f32 0.0, %v7746
  %v7748 = vpop.f32.mrf.mxu0
  %7749 = vdwg.mxu0
  %7750 = vmatpush.bf16.msra.mxu0 %v1593
  %7751 = vmatpush.bf16.msra.mxu0 %v1591
  %7752 = vmatpush.bf16.msra.mxu0 %v1589
  %7753 = vmatpush.bf16.msra.mxu0 %v1587
  %7754 = vmatpush.bf16.msra.mxu0 %v1585
  %7755 = vmatpush.bf16.msra.mxu0 %v1583
  %7756 = vmatpush.bf16.msra.mxu0 %v1581
  %7757 = vmatpush.bf16.msra.mxu0 %v1579
  %7758 = vmatmul.bf16.gmra.mxu0 %v7736
  %v7759 = vpop.f32.mrf.mxu0
  %v7760 = vadd.f32 0.0, %v7759
  %v7761 = vpop.f32.mrf.mxu0
  %7762 = vdwg.mxu0
  %v7763 = vadd.f32 %v1637, %v7747
  %v7764 = vadd.f32 %v1638, %v7760
  %v7766 = vshrl.u32 %v7736, 16
  %v7768 = vshll.u32 %v7736, 16
  %v7770 = vrot.slane %v7768, 1
  %v7771 = vor.u32 %v7766, %v7770
  %7773 = vmatpush.bf16.msra.mxu0 %v1713
  %7774 = vmatpush.bf16.msra.mxu0 %v1711
  %7775 = vmatpush.bf16.msra.mxu0 %v1709
  %7776 = vmatpush.bf16.msra.mxu0 %v1707
  %7777 = vmatpush.bf16.msra.mxu0 %v1705
  %7778 = vmatpush.bf16.msra.mxu0 %v1703
  %7779 = vmatpush.bf16.msra.mxu0 %v1701
  %7780 = vmatpush.bf16.msra.mxu0 %v1699
  %7781 = vmatmul.bf16.gmra.mxu0 %v7771
  %v7782 = vpop.f32.mrf.mxu0
  %v7783 = vadd.f32 0.0, %v7782
  %v7784 = vpop.f32.mrf.mxu0
  %7785 = vdwg.mxu0
  %7786 = vmatpush.bf16.msra.mxu0 %v1714
  %7787 = vmatpush.bf16.msra.mxu0 %v1712
  %7788 = vmatpush.bf16.msra.mxu0 %v1710
  %7789 = vmatpush.bf16.msra.mxu0 %v1708
  %7790 = vmatpush.bf16.msra.mxu0 %v1706
  %7791 = vmatpush.bf16.msra.mxu0 %v1704
  %7792 = vmatpush.bf16.msra.mxu0 %v1702
  %7793 = vmatpush.bf16.msra.mxu0 %v1700
  %7794 = vmatmul.bf16.gmra.mxu0 %v7771
  %v7795 = vpop.f32.mrf.mxu0
  %v7796 = vadd.f32 0.0, %v7795
  %v7797 = vpop.f32.mrf.mxu0
  %7798 = vdwg.mxu0
  %v7799 = vadd.f32 %v7763, %v7783
  %v7800 = vadd.f32 %v7764, %v7796
  %v7802 = vrot.slane %v7736, 1
  %7804 = vmatpush.bf16.msra.mxu0 %v1824
  %7805 = vmatpush.bf16.msra.mxu0 %v1822
  %7806 = vmatpush.bf16.msra.mxu0 %v1820
  %7807 = vmatpush.bf16.msra.mxu0 %v1818
  %7808 = vmatpush.bf16.msra.mxu0 %v1816
  %7809 = vmatpush.bf16.msra.mxu0 %v1814
  %7810 = vmatpush.bf16.msra.mxu0 %v1812
  %7811 = vmatpush.bf16.msra.mxu0 %v1810
  %7812 = vmatmul.bf16.gmra.mxu0 %v7802
  %v7813 = vpop.f32.mrf.mxu0
  %v7814 = vadd.f32 0.0, %v7813
  %v7815 = vpop.f32.mrf.mxu0
  %7816 = vdwg.mxu0
  %7817 = vmatpush.bf16.msra.mxu0 %v1825
  %7818 = vmatpush.bf16.msra.mxu0 %v1823
  %7819 = vmatpush.bf16.msra.mxu0 %v1821
  %7820 = vmatpush.bf16.msra.mxu0 %v1819
  %7821 = vmatpush.bf16.msra.mxu0 %v1817
  %7822 = vmatpush.bf16.msra.mxu0 %v1815
  %7823 = vmatpush.bf16.msra.mxu0 %v1813
  %7824 = vmatpush.bf16.msra.mxu0 %v1811
  %7825 = vmatmul.bf16.gmra.mxu0 %v7802
  %v7826 = vpop.f32.mrf.mxu0
  %v7827 = vadd.f32 0.0, %v7826
  %v7828 = vpop.f32.mrf.mxu0
  %7829 = vdwg.mxu0
  %v7830 = vadd.f32 %v7799, %v7814
  %v7831 = vadd.f32 %v7800, %v7827
  %v7832 = vmax.f32 %v7830, 0.0
  %v7833 = vmax.f32 %v7831, 0.0
  %v7834 = vpack.c.bf16 %v7832, %v7832
  %v7835 = vpack.c.bf16 %v7833, %v7833
  %v7837 = vsel %vm717, %v7835, 0
  %7839 = vmatpush.bf16.msra.mxu0 %v1929
  %7840 = vmatpush.bf16.msra.mxu0 %v1928
  %7841 = vmatpush.bf16.msra.mxu0 %v1927
  %7842 = vmatpush.bf16.msra.mxu0 %v1926
  %7843 = vmatpush.bf16.msra.mxu0 %v1925
  %7844 = vmatpush.bf16.msra.mxu0 %v1924
  %7845 = vmatpush.bf16.msra.mxu0 %v1923
  %7846 = vmatpush.bf16.msra.mxu0 %v1922
  %7847 = vmatmul.bf16.gmra.mxu0 %v7834
  %v7848 = vpop.f32.mrf.mxu0
  %v7849 = vadd.f32 0.0, %v7848
  %v7850 = vpop.f32.mrf.mxu0
  %7851 = vdwg.mxu0
  %7852 = vmatpush.bf16.msra.mxu0 0
  %7853 = vmatpush.bf16.msra.mxu0 0
  %7854 = vmatpush.bf16.msra.mxu0 0
  %7855 = vmatpush.bf16.msra.mxu0 0
  %7856 = vmatpush.bf16.msra.mxu0 %v1933
  %7857 = vmatpush.bf16.msra.mxu0 %v1932
  %7858 = vmatpush.bf16.msra.mxu0 %v1931
  %7859 = vmatpush.bf16.msra.mxu0 %v1930
  %7860 = vmatmul.bf16.gmra.mxu0 %v7837
  %v7861 = vpop.f32.mrf.mxu0
  %v7862 = vadd.f32 %v7849, %v7861
  %v7863 = vpop.f32.mrf.mxu0
  %7864 = vdwg.mxu0
  %7865 = vmatpush.bf16.msra.mxu0 %v2030
  %7866 = vmatpush.bf16.msra.mxu0 %v2029
  %7867 = vmatpush.bf16.msra.mxu0 %v2028
  %7868 = vmatpush.bf16.msra.mxu0 %v2027
  %7869 = vmatpush.bf16.msra.mxu0 %v2026
  %7870 = vmatpush.bf16.msra.mxu0 %v2025
  %7871 = vmatpush.bf16.msra.mxu0 %v2024
  %7872 = vmatpush.bf16.msra.mxu0 %v2023
  %7873 = vmatmul.bf16.gmra.mxu0 %v7834
  %v7874 = vpop.f32.mrf.mxu0
  %v7875 = vadd.f32 0.0, %v7874
  %v7876 = vpop.f32.mrf.mxu0
  %7877 = vdwg.mxu0
  %7878 = vmatpush.bf16.msra.mxu0 0
  %7879 = vmatpush.bf16.msra.mxu0 0
  %7880 = vmatpush.bf16.msra.mxu0 0
  %7881 = vmatpush.bf16.msra.mxu0 0
  %7882 = vmatpush.bf16.msra.mxu0 %v2034
  %7883 = vmatpush.bf16.msra.mxu0 %v2033
  %7884 = vmatpush.bf16.msra.mxu0 %v2032
  %7885 = vmatpush.bf16.msra.mxu0 %v2031
  %7886 = vmatmul.bf16.gmra.mxu0 %v7837
  %v7887 = vpop.f32.mrf.mxu0
  %v7888 = vadd.f32 %v7875, %v7887
  %v7889 = vpop.f32.mrf.mxu0
  %7890 = vdwg.mxu0
  %v7891 = vmax.f32 %v7862, %v7888
  %v7893 = vsel %vm2078, %v7891, 0
  %7895 = vmatpush.msra.mxu0 0.0
  %7896 = vmatpush.msra.mxu0 0.0
  %7897 = vmatpush.msra.mxu0 0.0
  %7898 = vmatpush.msra.mxu0 0.0
  %7899 = vmatpush.msra.mxu0 0.0
  %7900 = vmatpush.msra.mxu0 0.0
  %7901 = vmatpush.msra.mxu0 0.0
  %7902 = vmatpush.msra.mxu0 0.0
  %7903 = vmatpush.msra.mxu0 0.0
  %7904 = vmatpush.msra.mxu0 0.0
  %7905 = vmatpush.msra.mxu0 0.0
  %7906 = vmatpush.msra.mxu0 0.0
  %7907 = vmatpush.msra.mxu0 0.0
  %7908 = vmatpush.msra.mxu0 0.0
  %7909 = vmatpush.msra.mxu0 0.0
  %7910 = vmatpush.msra.mxu0 %v7893
  %7911 = vmatmul.bf16.gmra.mxu0 %v2076
  %v7912 = vpop.f32.mrf.mxu0
  %v7913 = vadd.f32 0.0, %v7912
  %v7914 = vpop.f32.mrf.mxu0
  %7915 = vdwg.mxu0
  %7916 = vmatpush.msra.mxu0 0.0
  %7917 = vmatpush.msra.mxu0 0.0
  %7918 = vmatpush.msra.mxu0 0.0
  %7919 = vmatpush.msra.mxu0 0.0
  %7920 = vmatpush.msra.mxu0 0.0
  %7921 = vmatpush.msra.mxu0 0.0
  %7922 = vmatpush.msra.mxu0 0.0
  %7923 = vmatpush.msra.mxu0 0.0
  %7924 = vmatpush.msra.mxu0 0.0
  %7925 = vmatpush.msra.mxu0 0.0
  %7926 = vmatpush.msra.mxu0 0.0
  %7927 = vmatpush.msra.mxu0 0.0
  %7928 = vmatpush.msra.mxu0 0.0
  %7929 = vmatpush.msra.mxu0 0.0
  %7930 = vmatpush.msra.mxu0 0.0
  %7931 = vmatpush.msra.mxu0 %v7893
  %7932 = vmatmul.bf16.gmra.mxu0 %v2104
  %v7933 = vpop.f32.mrf.mxu0
  %v7934 = vadd.f32 0.0, %v7933
  %v7935 = vpop.f32.mrf.mxu0
  %7936 = vdwg.mxu0
  %v7937 = vmax.f32 %v7913, %v7934
  %v7938 = vpack.c.bf16 %v7937, %v7937
  %v7940 = vsel %vm2165, %v7938, 0
  %7942 = vmatpush.bf16.msra.mxu0 0
  %7943 = vmatpush.bf16.msra.mxu0 0
  %7944 = vmatpush.bf16.msra.mxu0 %v2158
  %7945 = vmatpush.bf16.msra.mxu0 %v2157
  %7946 = vmatpush.bf16.msra.mxu0 %v2156
  %7947 = vmatpush.bf16.msra.mxu0 %v2155
  %7948 = vmatpush.bf16.msra.mxu0 %v2154
  %7949 = vmatpush.bf16.msra.mxu0 %v2153
  %7950 = vmatmul.bf16.gmra.mxu0 %v7940
  %v7951 = vpop.f32.mrf.mxu0
  %v7952 = vadd.f32 0.0, %v7951
  %v7953 = vpop.f32.mrf.mxu0
  %7954 = vdwg.mxu0
  %v7955 = vadd.f32 %v374, %v7952
  %v7956 = vshrl.u32 %v7938, 16
  %v7959 = vsel %vm2165, %v7956, 0
  %7961 = vmatpush.bf16.msra.mxu0 0
  %7962 = vmatpush.bf16.msra.mxu0 0
  %7963 = vmatpush.bf16.msra.mxu0 %v2214
  %7964 = vmatpush.bf16.msra.mxu0 %v2213
  %7965 = vmatpush.bf16.msra.mxu0 %v2212
  %7966 = vmatpush.bf16.msra.mxu0 %v2211
  %7967 = vmatpush.bf16.msra.mxu0 %v2210
  %7968 = vmatpush.bf16.msra.mxu0 %v2209
  %7969 = vmatmul.bf16.gmra.mxu0 %v7959
  %v7970 = vpop.f32.mrf.mxu0
  %v7971 = vadd.f32 0.0, %v7970
  %v7972 = vpop.f32.mrf.mxu0
  %7973 = vdwg.mxu0
  %v7974 = vadd.f32 %v7955, %v7971
  %v7976 = vrot.slane %v7938, 1
  %v7978 = vsel %vm2165, %v7976, 0
  %7980 = vmatpush.bf16.msra.mxu0 0
  %7981 = vmatpush.bf16.msra.mxu0 0
  %7982 = vmatpush.bf16.msra.mxu0 %v2269
  %7983 = vmatpush.bf16.msra.mxu0 %v2268
  %7984 = vmatpush.bf16.msra.mxu0 %v2267
  %7985 = vmatpush.bf16.msra.mxu0 %v2266
  %7986 = vmatpush.bf16.msra.mxu0 %v2265
  %7987 = vmatpush.bf16.msra.mxu0 %v2264
  %7988 = vmatmul.bf16.gmra.mxu0 %v7978
  %v7989 = vpop.f32.mrf.mxu0
  %v7990 = vadd.f32 0.0, %v7989
  %v7991 = vpop.f32.mrf.mxu0
  %7992 = vdwg.mxu0
  %v7993 = vadd.f32 %v7974, %v7990
  %v7994 = vmax.f32 %v7993, 0.0
  %v7995 = vpack.c.bf16 %v7994, %v7994
  %v7997 = vsel %vm717, %v7995, 0
  %7999 = vmatpush.bf16.msra.mxu0 0
  %8000 = vmatpush.bf16.msra.mxu0 0
  %8001 = vmatpush.bf16.msra.mxu0 0
  %8002 = vmatpush.bf16.msra.mxu0 0
  %8003 = vmatpush.bf16.msra.mxu0 %v2314
  %8004 = vmatpush.bf16.msra.mxu0 %v2313
  %8005 = vmatpush.bf16.msra.mxu0 %v2312
  %8006 = vmatpush.bf16.msra.mxu0 %v2311
  %8007 = vmatmul.bf16.gmra.mxu0 %v7997
  %v8008 = vpop.f32.mrf.mxu0
  %v8009 = vadd.f32 %v383, %v8008
  %v8010 = vpop.f32.mrf.mxu0
  %8011 = vdwg.mxu0
  %v8013 = vrot.slane %v3143, 7
  %v8016 = vrot.slane %v3954, 6
  %v8019 = vrot.slane %v4765, 5
  %v8022 = vrot.slane %v5576, 4
  %v8025 = vrot.slane %v6387, 3
  %v8028 = vrot.slane %v7198, 2
  %v8031 = vrot.slane %v8009, 1
  %vm8033 = vcmask 1040384
  %v8034 = vsel %vm8033, %v2332, %v8013
  %vm8035 = vcmask 1041408
  %v8036 = vsel %vm8035, %v8034, %v8016
  %vm8037 = vcmask 1042432
  %v8038 = vsel %vm8037, %v8036, %v8019
  %v8039 = vsel %vm1479, %v8038, %v8022
  %v8040 = vsel %vm415, %v8039, %v8025
  %v8041 = vsel %vm2078, %v8040, %v8028
  %vm8042 = vcmask 1046528
  %v8043 = vsel %vm8042, %v8041, %v8031
  %8044 = vst [vmem:[%s23] sm:$0xff] %v8043
  // Predicated region
  $region94: #{from_scratch_forward.1} parent=0 // pred_check
    _
  $region95: #{from_scratch_forward.1} parent=0 // pred_check_branch
    %8046 = sbr.rel (0) target = $region97
  $region96: #{from_scratch_forward.1} parent=0 // pred_region
    _
  $region97: #{from_scratch_forward.1} parent=0 // pred_fallthru
    _
  // Predicated region
  $region98: #{from_scratch_forward.1} parent=0 // pred_check
    _
  $region99: #{from_scratch_forward.1} parent=0 // pred_check_branch
    %8048 = sbr.rel (0) target = $region101
  $region100: #{from_scratch_forward.1} parent=0 // pred_region
    _
  $region101: #{from_scratch_forward.1} parent=0 // pred_fallthru
    _

</llo_original>
